<compile_context>
chip_gen: v7x
topology: tpu7x:2x2x1
jax: 0.10.0
libtpu: 0.0.40
codegen_flags: <defaults>
</compile_context>

<pallas_src>
import functools

import jax
import jax.numpy as jnp
import numpy as np
from jax import lax
from jax.experimental import pallas as pl
from jax.experimental.pallas import tpu as pltpu


# ----------------------------------------------------------------------------
# Host-side weight re-layouts (run once in prepare_params).
# ----------------------------------------------------------------------------
def _build_rowpair_conv_weights(w, w_in):
    """w: (Cout, Cin, k, k) f32; w_in: input canvas width.

    Returns (we, wo), each (KP, 2*w_in*Cin, (w_in-k+1)*Cout), such that with the
    row-pair canvas xp[p, (r, iw, ci)] = x[2p + r, iw, ci]:
        conv[2*ph,   :, :] = sum_kp xp[ph + kp] @ we[kp]
        conv[2*ph+1, :, :] = sum_kp xp[ph + kp] @ wo[kp]
    (valid conv, stride 1).  The kw/ci contraction is folded into the matrices."""
    cout, cin, k, _ = w.shape
    wv = w_in - k + 1
    kp_n = (k + 2) // 2
    wt = np.transpose(w, (2, 3, 1, 0))                        # (kh, kw, cin, cout)
    we = np.zeros((kp_n, 2, w_in, cin, wv, cout), np.float32)
    wo = np.zeros((kp_n, 2, w_in, cin, wv, cout), np.float32)
    for kp in range(kp_n):
        for r in range(2):
            kh_e = 2 * kp + r
            kh_o = 2 * kp + r - 1
            for kw in range(k):
                for ow in range(wv):
                    iw = ow + kw
                    if kh_e < k:
                        we[kp, r, iw, :, ow, :] = wt[kh_e, kw]
                    if 0 <= kh_o < k:
                        wo[kp, r, iw, :, ow, :] = wt[kh_o, kw]
    shape = (kp_n, 2 * w_in * cin, wv * cout)
    return we.reshape(shape), wo.reshape(shape)


def _build_pool_select(wv, c):
    """Exact 0/1 matrices selecting even / odd w positions: (wv*c, (wv//2)*c)."""
    wh = wv // 2
    se = np.zeros((wv * c, wh * c), np.float32)
    so = np.zeros((wv * c, wh * c), np.float32)
    eye = np.eye(c, dtype=np.float32)
    for pw in range(wh):
        se[(2 * pw) * c:(2 * pw + 1) * c, pw * c:(pw + 1) * c] = eye
        so[(2 * pw + 1) * c:(2 * pw + 2) * c, pw * c:(pw + 1) * c] = eye
    return se, so


# ----------------------------------------------------------------------------
# Stage 1: conv1 (5x5 valid) + bias + ReLU + 2x2/2 max-pool.  One image / step.
# ----------------------------------------------------------------------------
def _conv_pool_kernel(x_ref, we_ref, wo_ref, b_ref, se_ref, so_ref, o_ref,
                      *, n_taps, hh):
    # x_ref : (1, Hp, 2*W*Cin)  bf16   row-pair input canvas of one image
    # we/wo : (n_taps, 2*W*Cin, Wv*Cout) bf16  even/odd-row Toeplitz weights
    # b_ref : (1, Wv*Cout) f32          bias tiled over ow
    # se/so : (Wv*Cout, Wh*Cout) bf16   0/1 w-pair selection
    # o_ref : (1, hh, Wh*Cout) bf16     pooled rows of this image
    xs = x_ref[0, 0:hh, :]
    acc_e = jnp.dot(xs, we_ref[0], preferred_element_type=jnp.float32)
    acc_o = jnp.dot(xs, wo_ref[0], preferred_element_type=jnp.float32)
    for kp in range(1, n_taps):
        xs = x_ref[0, kp:kp + hh, :]
        acc_e = acc_e + jnp.dot(xs, we_ref[kp], preferred_element_type=jnp.float32)
        acc_o = acc_o + jnp.dot(xs, wo_ref[kp], preferred_element_type=jnp.float32)
    b = b_ref[...]
    hm = jnp.maximum(jnp.maximum(acc_e + b, 0.0),
                     jnp.maximum(acc_o + b, 0.0)).astype(jnp.bfloat16)
    pe = jnp.dot(hm, se_ref[...], preferred_element_type=jnp.float32)
    po = jnp.dot(hm, so_ref[...], preferred_element_type=jnp.float32)
    o_ref[0] = jnp.maximum(pe, po).astype(o_ref.dtype)


def _conv_pool_call(x_canvas, we, wo, cb, se, so, *, hh):
    B, hp, kdim = x_canvas.shape
    n_taps, _, n_conv = we.shape
    n_pool = se.shape[1]
    full = lambda a: pl.BlockSpec(a.shape, lambda *_: (0,) * a.ndim)
    flops = 2 * B * (2 * n_taps * hh * kdim * n_conv + 2 * hh * n_conv * n_pool)
    bytes_acc = (x_canvas.size + B * hh * n_pool
                 + we.size + wo.size + se.size + so.size) * 2 + cb.size * 4
    kernel = functools.partial(_conv_pool_kernel, n_taps=n_taps, hh=hh)
    return pl.pallas_call(
        kernel,
        out_shape=jax.ShapeDtypeStruct((B, hh, n_pool), jnp.bfloat16),
        grid=(B,),
        in_specs=[
            pl.BlockSpec((1, hp, kdim), lambda i: (i, 0, 0)),
            full(we), full(wo), full(cb), full(se), full(so),
        ],
        out_specs=pl.BlockSpec((1, hh, n_pool), lambda i: (i, 0, 0)),
        compiler_params=pltpu.CompilerParams(dimension_semantics=("parallel",)),
        cost_estimate=pl.CostEstimate(flops=flops, transcendentals=0,
                                      bytes_accessed=bytes_acc),
    )(x_canvas, we, wo, cb, se, so)


# ----------------------------------------------------------------------------
# Stage 2: conv2 + ReLU + pool2 + fc1 + ReLU + fc2 + ReLU + fc3.  One image / step.
# ----------------------------------------------------------------------------
def _conv_pool_fc_kernel(x_ref, we_ref, wo_ref, cb_ref, se_ref, so_ref,
                         w1_ref, b1_ref, w2_ref, b2_ref, w3_ref, b3_ref,
                         o_ref, *, n_taps, hh):
    xs = x_ref[0, 0:hh, :]
    acc_e = jnp.dot(xs, we_ref[0], preferred_element_type=jnp.float32)
    acc_o = jnp.dot(xs, wo_ref[0], preferred_element_type=jnp.float32)
    for kp in range(1, n_taps):
        xs = x_ref[0, kp:kp + hh, :]
        acc_e = acc_e + jnp.dot(xs, we_ref[kp], preferred_element_type=jnp.float32)
        acc_o = acc_o + jnp.dot(xs, wo_ref[kp], preferred_element_type=jnp.float32)
    b = cb_ref[...]
    hm = jnp.maximum(jnp.maximum(acc_e + b, 0.0),
                     jnp.maximum(acc_o + b, 0.0)).astype(jnp.bfloat16)
    pe = jnp.dot(hm, se_ref[...], preferred_element_type=jnp.float32)
    po = jnp.dot(hm, so_ref[...], preferred_element_type=jnp.float32)
    pooled = jnp.maximum(pe, po).astype(jnp.bfloat16)          # (hh, Wh*C) bf16
    # fc1: contraction over (h, w, c).  w1_ref is pre-permuted to the pooled
    # canvas's (h, (w, c)) order (torch .view flattens (c, h, w)); the h part of
    # the contraction is the f32 accumulation below.
    h1 = b1_ref[...]
    for h in range(hh):
        h1 = h1 + jnp.dot(pooled[h:h + 1, :], w1_ref[h],
                          preferred_element_type=jnp.float32)
    h1 = jnp.maximum(h1, 0.0).astype(jnp.bfloat16)
    h2 = jnp.dot(h1, w2_ref[...], preferred_element_type=jnp.float32) + b2_ref[...]
    h2 = jnp.maximum(h2, 0.0).astype(jnp.bfloat16)
    o_ref[0] = (jnp.dot(h2, w3_ref[...], preferred_element_type=jnp.float32)
                + b3_ref[...])


def _conv_pool_fc_call(x2, prep, *, hh):
    B, hp, kdim = x2.shape
    we, wo = prep["we2"], prep["wo2"]
    n_taps, _, n_conv = we.shape
    n_pool = prep["se2"].shape[1]
    n1 = prep["w1s"].shape[2]
    n2 = prep["w2"].shape[1]
    n3 = prep["w3"].shape[1]
    full = lambda a: pl.BlockSpec(a.shape, lambda *_: (0,) * a.ndim)
    flops = 2 * B * (2 * n_taps * hh * kdim * n_conv + 2 * hh * n_conv * n_pool
                     + hh * n_pool * n1 + n1 * n2 + n2 * n3)
    bytes_acc = x2.size * 2 + B * n3 * 4 + (we.size + wo.size + prep["w1s"].size
                                            + prep["w2"].size + prep["w3"].size) * 2
    kernel = functools.partial(_conv_pool_fc_kernel, n_taps=n_taps, hh=hh)
    return pl.pallas_call(
        kernel,
        out_shape=jax.ShapeDtypeStruct((B, 1, n3), jnp.float32),
        grid=(B,),
        in_specs=[
            pl.BlockSpec((1, hp, kdim), lambda i: (i, 0, 0)),
            full(we), full(wo), full(prep["cb2"]),
            full(prep["se2"]), full(prep["so2"]),
            full(prep["w1s"]), full(prep["b1"]),
            full(prep["w2"]), full(prep["b2"]),
            full(prep["w3"]), full(prep["b3"]),
        ],
        out_specs=pl.BlockSpec((1, 1, n3), lambda i: (i, 0, 0)),
        compiler_params=pltpu.CompilerParams(dimension_semantics=("parallel",)),
        cost_estimate=pl.CostEstimate(flops=flops, transcendentals=0,
                                      bytes_accessed=bytes_acc),
    )(x2, we, wo, prep["cb2"], prep["se2"], prep["so2"],
      prep["w1s"], prep["b1"], prep["w2"], prep["b2"], prep["w3"], prep["b3"])


# ----------------------------------------------------------------------------
# Parameters, one-time prep, and the forward pass.
# ----------------------------------------------------------------------------
def init_params(key, convolution_layer_width=16, kernel1_size=5, kernel2_size=5,
                linear_layer_width=128, output_layer_width=10):
    cw = convolution_layer_width
    fc1_in = cw * (((32 - kernel1_size + 1) // 2 - kernel2_size + 1) // 2) ** 2
    keys = jax.random.split(key, 10)

    def uinit(k, shape, fan_in):
        bound = 1.0 / jnp.sqrt(jnp.float32(fan_in))
        return jax.random.uniform(k, shape, jnp.float32, -bound, bound)

    return {
        "conv1_w": uinit(keys[0], (cw, 3, kernel1_size, kernel1_size), 3 * kernel1_size ** 2),
        "conv1_b": uinit(keys[1], (cw,), 3 * kernel1_size ** 2),
        "conv2_w": uinit(keys[2], (cw, cw, kernel2_size, kernel2_size), cw * kernel2_size ** 2),
        "conv2_b": uinit(keys[3], (cw,), cw * kernel2_size ** 2),
        "fc1_w": uinit(keys[4], (fc1_in, linear_layer_width), fc1_in),
        "fc1_b": uinit(keys[5], (linear_layer_width,), fc1_in),
        "fc2_w": uinit(keys[6], (linear_layer_width, linear_layer_width), linear_layer_width),
        "fc2_b": uinit(keys[7], (linear_layer_width,), linear_layer_width),
        "fc3_w": uinit(keys[8], (linear_layer_width, output_layer_width), linear_layer_width),
        # FIX: fc3 bias has output_layer_width entries (was linear_layer_width).
        "fc3_b": uinit(keys[9], (output_layer_width,), linear_layer_width),
    }


def prepare_params(params, input_hw=32):
    """One-time host-side weight re-layouts for the Pallas forward."""
    cw = params["conv1_w"].shape[0]
    k1 = params["conv1_w"].shape[2]
    k2 = params["conv2_w"].shape[2]
    lw = params["fc2_w"].shape[0]
    out_dim = params["fc3_w"].shape[1]
    w0 = input_hw                  # 32
    wv1 = w0 - k1 + 1              # 28
    w1 = wv1 // 2                  # 14
    wv2 = w1 - k2 + 1              # 10
    wh2 = wv2 // 2                 # 5

    we1, wo1 = _build_rowpair_conv_weights(np.asarray(params["conv1_w"], np.float32), w0)
    we2, wo2 = _build_rowpair_conv_weights(np.asarray(params["conv2_w"], np.float32), w1)
    se1, so1 = _build_pool_select(wv1, cw)
    se2, so2 = _build_pool_select(wv2, cw)
    cb1 = np.tile(np.asarray(params["conv1_b"], np.float32), wv1)[None, :]
    cb2 = np.tile(np.asarray(params["conv2_b"], np.float32), wv2)[None, :]
    # fc1: torch flatten order is (c, h, w); pooled canvas rows are (h, (w, c)).
    w1s = (np.asarray(params["fc1_w"], np.float32)
           .reshape(cw, wh2, wh2, lw).transpose(1, 2, 0, 3).reshape(wh2, wh2 * cw, lw))
    # fc3 padded to 128 output lanes -> full-width final matmul and store.
    n3 = max(128, out_dim)
    w3p = np.zeros((lw, n3), np.float32)
    w3p[:, :out_dim] = np.asarray(params["fc3_w"], np.float32)
    b3p = np.zeros((1, n3), np.float32)
    b3p[0, :out_dim] = np.asarray(params["fc3_b"], np.float32)

    bf, f32 = jnp.bfloat16, jnp.float32
    return {
        "we1": jnp.asarray(we1, bf), "wo1": jnp.asarray(wo1, bf),
        "cb1": jnp.asarray(cb1, f32),
        "se1": jnp.asarray(se1, bf), "so1": jnp.asarray(so1, bf),
        "we2": jnp.asarray(we2, bf), "wo2": jnp.asarray(wo2, bf),
        "cb2": jnp.asarray(cb2, f32),
        "se2": jnp.asarray(se2, bf), "so2": jnp.asarray(so2, bf),
        "w1s": jnp.asarray(w1s, bf),
        "b1": jnp.asarray(params["fc1_b"], f32).reshape(1, -1),
        "w2": jnp.asarray(params["fc2_w"], bf),
        "b2": jnp.asarray(params["fc2_b"], f32).reshape(1, -1),
        "w3": jnp.asarray(w3p, bf), "b3": jnp.asarray(b3p, f32),
    }


def make_forward(params, input_hw=32):
    prep = prepare_params(params, input_hw)
    k1 = params["conv1_w"].shape[2]
    k2 = params["conv2_w"].shape[2]
    out_dim = params["fc3_w"].shape[1]

    @jax.jit
    def forward(x_nchw, prep):
        B, cin, H, W = x_nchw.shape
        assert H == input_hw and W == input_hw and H % 2 == 0
        # NCHW -> NHWC once; every later reshape is a free row-major relabel.
        x = jnp.transpose(x_nchw, (0, 2, 3, 1)).astype(jnp.bfloat16)
        x1 = x.reshape(B, H // 2, 2 * W * cin)                      # row-pair canvas
        assert x1.shape[2] == prep["we1"].shape[1]
        hh1 = (H - k1 + 1) // 2
        y1 = _conv_pool_call(x1, prep["we1"], prep["wo1"], prep["cb1"],
                             prep["se1"], prep["so1"], hh=hh1)      # (B, 14, 224) bf16
        if hh1 % 2:                                                 # keep row pairing clean
            y1 = jnp.pad(y1, ((0, 0), (0, 1), (0, 0)))
        x2 = y1.reshape(B, y1.shape[1] // 2, 2 * y1.shape[2])       # (B, 7, 448) bf16
        hh2 = (hh1 - k2 + 1) // 2
        out = _conv_pool_fc_call(x2, prep, hh=hh2)                  # (B, 1, 128) f32
        return out.reshape(B, -1)[:, :out_dim]

    return lambda x: forward(x, prep)


@jax.jit
def reference_forward(x_nchw, params):
    """Pure-XLA reference with the same rounding points (bf16 operands, f32 acc)."""
    f32 = jnp.float32
    y = lax.conv_general_dilated(
        x_nchw.astype(jnp.bfloat16), params["conv1_w"].astype(jnp.bfloat16),
        (1, 1), "VALID", dimension_numbers=("NCHW", "OIHW", "NCHW"),
        preferred_element_type=f32)
    y = jnp.maximum(y + params["conv1_b"][None, :, None, None], 0.0)
    y = lax.reduce_window(y, -jnp.inf, lax.max, (1, 1, 2, 2), (1, 1, 2, 2), "VALID")
    y = y.astype(jnp.bfloat16)
    y = lax.conv_general_dilated(
        y, params["conv2_w"].astype(jnp.bfloat16),
        (1, 1), "VALID", dimension_numbers=("NCHW", "OIHW", "NCHW"),
        preferred_element_type=f32)
    y = jnp.maximum(y + params["conv2_b"][None, :, None, None], 0.0)
    y = lax.reduce_window(y, -jnp.inf, lax.max, (1, 1, 2, 2), (1, 1, 2, 2), "VALID")
    y = y.astype(jnp.bfloat16).reshape(y.shape[0], -1)          # NCHW flatten == torch .view
    h = jnp.dot(y, params["fc1_w"].astype(jnp.bfloat16),
                preferred_element_type=f32) + params["fc1_b"]
    h = jnp.maximum(h, 0.0).astype(jnp.bfloat16)
    h = jnp.dot(h, params["fc2_w"].astype(jnp.bfloat16),
                preferred_element_type=f32) + params["fc2_b"]
    h = jnp.maximum(h, 0.0).astype(jnp.bfloat16)
    return jnp.dot(h, params["fc3_w"].astype(jnp.bfloat16),
                   preferred_element_type=f32) + params["fc3_b"]


if __name__ == "__main__":
    key = jax.random.PRNGKey(0)
    pkey, xkey = jax.random.split(key)
    params = init_params(pkey)
    # Spatial size 32 / 3 input channels are fixed by the module's fc1.in_features formula.
    x = jax.random.normal(xkey, (2, 3, 32, 32), dtype=jnp.float32)

    forward = make_forward(params)
    out = jax.block_until_ready(forward(x))
    assert out.shape == (2, 10) and out.dtype == jnp.float32

    ref = jax.block_until_ready(reference_forward(x, params))
    assert bool(jnp.allclose(out, ref, atol=1e-2, rtol=1e-2)), "mismatch vs XLA reference"

    print("KERNEL_OK")
</pallas_src>

<mosaic_0001>
module attributes {stable_mosaic.version = 11 : i64} {
  func.func @_conv_pool_kernel(%arg0: i32, %arg1: memref<1x16x192xbf16, #tpu.memory_space<vmem>>, %arg2: memref<3x192x448xbf16, #tpu.memory_space<vmem>>, %arg3: memref<3x192x448xbf16, #tpu.memory_space<vmem>>, %arg4: memref<1x448xf32, #tpu.memory_space<vmem>>, %arg5: memref<448x224xbf16, #tpu.memory_space<vmem>>, %arg6: memref<448x224xbf16, #tpu.memory_space<vmem>>, %arg7: memref<1x14x224xbf16, #tpu.memory_space<vmem>>) attributes {dimension_semantics = [#tpu.dimension_semantics<parallel>], iteration_bounds = array<i64: 2>, scalar_prefetch = 0 : i64, scratch_operands = 0 : i64, tpu.core_type = #tpu.core_type<tc>, window_params = [{transform_indices = @transform_0, window_bounds = array<i64: 1, 16, 192>}, {pipeline_mode = #tpu.pipeline_mode<synchronous>, transform_indices = @transform_1, window_bounds = array<i64: 3, 192, 448>}, {pipeline_mode = #tpu.pipeline_mode<synchronous>, transform_indices = @transform_2, window_bounds = array<i64: 3, 192, 448>}, {pipeline_mode = #tpu.pipeline_mode<synchronous>, transform_indices = @transform_3, window_bounds = array<i64: 1, 448>}, {pipeline_mode = #tpu.pipeline_mode<synchronous>, transform_indices = @transform_4, window_bounds = array<i64: 448, 224>}, {pipeline_mode = #tpu.pipeline_mode<synchronous>, transform_indices = @transform_5, window_bounds = array<i64: 448, 224>}, {transform_indices = @transform_6, window_bounds = array<i64: 1, 14, 224>}]} {
    %c0 = arith.constant 0 : index
    %c0_0 = arith.constant 0 : index
    %c0_1 = arith.constant 0 : index
    %0 = vector.load %arg1[%c0, %c0_0, %c0_1] : memref<1x16x192xbf16, #tpu.memory_space<vmem>>, vector<1x14x192xbf16>
    %1 = vector.shape_cast %0 : vector<1x14x192xbf16> to vector<14x192xbf16>
    %c0_2 = arith.constant 0 : index
    %c0_3 = arith.constant 0 : index
    %c0_4 = arith.constant 0 : index
    %2 = vector.load %arg2[%c0_2, %c0_3, %c0_4] : memref<3x192x448xbf16, #tpu.memory_space<vmem>>, vector<1x192x448xbf16>
    %3 = vector.shape_cast %2 : vector<1x192x448xbf16> to vector<192x448xbf16>
    %cst = arith.constant dense<0.000000e+00> : vector<14x448xf32>
    %4 = tpu.matmul %1, %3, %cst {dimension_numbers = #tpu.dot_dimension_numbers<[1], [0], [0], [1], [0, 0, 1, 1], [], []>} : vector<14x192xbf16>, vector<192x448xbf16>, vector<14x448xf32> -> vector<14x448xf32>
    %c0_5 = arith.constant 0 : index
    %c0_6 = arith.constant 0 : index
    %c0_7 = arith.constant 0 : index
    %5 = vector.load %arg3[%c0_5, %c0_6, %c0_7] : memref<3x192x448xbf16, #tpu.memory_space<vmem>>, vector<1x192x448xbf16>
    %6 = vector.shape_cast %5 : vector<1x192x448xbf16> to vector<192x448xbf16>
    %cst_8 = arith.constant dense<0.000000e+00> : vector<14x448xf32>
    %7 = tpu.matmul %1, %6, %cst_8 {dimension_numbers = #tpu.dot_dimension_numbers<[1], [0], [0], [1], [0, 0, 1, 1], [], []>} : vector<14x192xbf16>, vector<192x448xbf16>, vector<14x448xf32> -> vector<14x448xf32>
    %c0_9 = arith.constant 0 : index
    %c1 = arith.constant 1 : index
    %c0_10 = arith.constant 0 : index
    %8 = vector.load %arg1[%c0_9, %c1, %c0_10] : memref<1x16x192xbf16, #tpu.memory_space<vmem>>, vector<1x14x192xbf16>
    %9 = vector.shape_cast %8 : vector<1x14x192xbf16> to vector<14x192xbf16>
    %c1_11 = arith.constant 1 : index
    %c0_12 = arith.constant 0 : index
    %c0_13 = arith.constant 0 : index
    %10 = vector.load %arg2[%c1_11, %c0_12, %c0_13] : memref<3x192x448xbf16, #tpu.memory_space<vmem>>, vector<1x192x448xbf16>
    %11 = vector.shape_cast %10 : vector<1x192x448xbf16> to vector<192x448xbf16>
    %cst_14 = arith.constant dense<0.000000e+00> : vector<14x448xf32>
    %12 = tpu.matmul %9, %11, %cst_14 {dimension_numbers = #tpu.dot_dimension_numbers<[1], [0], [0], [1], [0, 0, 1, 1], [], []>} : vector<14x192xbf16>, vector<192x448xbf16>, vector<14x448xf32> -> vector<14x448xf32>
    %13 = arith.addf %4, %12 : vector<14x448xf32>
    %c1_15 = arith.constant 1 : index
    %c0_16 = arith.constant 0 : index
    %c0_17 = arith.constant 0 : index
    %14 = vector.load %arg3[%c1_15, %c0_16, %c0_17] : memref<3x192x448xbf16, #tpu.memory_space<vmem>>, vector<1x192x448xbf16>
    %15 = vector.shape_cast %14 : vector<1x192x448xbf16> to vector<192x448xbf16>
    %cst_18 = arith.constant dense<0.000000e+00> : vector<14x448xf32>
    %16 = tpu.matmul %9, %15, %cst_18 {dimension_numbers = #tpu.dot_dimension_numbers<[1], [0], [0], [1], [0, 0, 1, 1], [], []>} : vector<14x192xbf16>, vector<192x448xbf16>, vector<14x448xf32> -> vector<14x448xf32>
    %17 = arith.addf %7, %16 : vector<14x448xf32>
    %c0_19 = arith.constant 0 : index
    %c2 = arith.constant 2 : index
    %c0_20 = arith.constant 0 : index
    %18 = vector.load %arg1[%c0_19, %c2, %c0_20] : memref<1x16x192xbf16, #tpu.memory_space<vmem>>, vector<1x14x192xbf16>
    %19 = vector.shape_cast %18 : vector<1x14x192xbf16> to vector<14x192xbf16>
    %c2_21 = arith.constant 2 : index
    %c0_22 = arith.constant 0 : index
    %c0_23 = arith.constant 0 : index
    %20 = vector.load %arg2[%c2_21, %c0_22, %c0_23] : memref<3x192x448xbf16, #tpu.memory_space<vmem>>, vector<1x192x448xbf16>
    %21 = vector.shape_cast %20 : vector<1x192x448xbf16> to vector<192x448xbf16>
    %cst_24 = arith.constant dense<0.000000e+00> : vector<14x448xf32>
    %22 = tpu.matmul %19, %21, %cst_24 {dimension_numbers = #tpu.dot_dimension_numbers<[1], [0], [0], [1], [0, 0, 1, 1], [], []>} : vector<14x192xbf16>, vector<192x448xbf16>, vector<14x448xf32> -> vector<14x448xf32>
    %23 = arith.addf %13, %22 : vector<14x448xf32>
    %c2_25 = arith.constant 2 : index
    %c0_26 = arith.constant 0 : index
    %c0_27 = arith.constant 0 : index
    %24 = vector.load %arg3[%c2_25, %c0_26, %c0_27] : memref<3x192x448xbf16, #tpu.memory_space<vmem>>, vector<1x192x448xbf16>
    %25 = vector.shape_cast %24 : vector<1x192x448xbf16> to vector<192x448xbf16>
    %cst_28 = arith.constant dense<0.000000e+00> : vector<14x448xf32>
    %26 = tpu.matmul %19, %25, %cst_28 {dimension_numbers = #tpu.dot_dimension_numbers<[1], [0], [0], [1], [0, 0, 1, 1], [], []>} : vector<14x192xbf16>, vector<192x448xbf16>, vector<14x448xf32> -> vector<14x448xf32>
    %27 = arith.addf %17, %26 : vector<14x448xf32>
    %c0_29 = arith.constant 0 : index
    %c0_30 = arith.constant 0 : index
    %28 = vector.load %arg4[%c0_29, %c0_30] : memref<1x448xf32, #tpu.memory_space<vmem>>, vector<1x448xf32>
    %29 = vector.broadcast %28 : vector<1x448xf32> to vector<14x448xf32>
    %30 = arith.addf %23, %29 : vector<14x448xf32>
    %cst_31 = arith.constant 0.000000e+00 : f32
    %31 = vector.broadcast %cst_31 : f32 to vector<14x448xf32>
    %32 = arith.maximumf %30, %31 : vector<14x448xf32>
    %33 = vector.broadcast %28 : vector<1x448xf32> to vector<14x448xf32>
    %34 = arith.addf %27, %33 : vector<14x448xf32>
    %cst_32 = arith.constant 0.000000e+00 : f32
    %35 = vector.broadcast %cst_32 : f32 to vector<14x448xf32>
    %36 = arith.maximumf %34, %35 : vector<14x448xf32>
    %37 = arith.maximumf %32, %36 : vector<14x448xf32>
    %38 = arith.truncf %37 : vector<14x448xf32> to vector<14x448xbf16>
    %c0_33 = arith.constant 0 : index
    %c0_34 = arith.constant 0 : index
    %39 = vector.load %arg5[%c0_33, %c0_34] : memref<448x224xbf16, #tpu.memory_space<vmem>>, vector<448x224xbf16>
    %cst_35 = arith.constant dense<0.000000e+00> : vector<14x224xf32>
    %40 = tpu.matmul %38, %39, %cst_35 {dimension_numbers = #tpu.dot_dimension_numbers<[1], [0], [0], [1], [0, 0, 1, 1], [], []>} : vector<14x448xbf16>, vector<448x224xbf16>, vector<14x224xf32> -> vector<14x224xf32>
    %c0_36 = arith.constant 0 : index
    %c0_37 = arith.constant 0 : index
    %41 = vector.load %arg6[%c0_36, %c0_37] : memref<448x224xbf16, #tpu.memory_space<vmem>>, vector<448x224xbf16>
    %cst_38 = arith.constant dense<0.000000e+00> : vector<14x224xf32>
    %42 = tpu.matmul %38, %41, %cst_38 {dimension_numbers = #tpu.dot_dimension_numbers<[1], [0], [0], [1], [0, 0, 1, 1], [], []>} : vector<14x448xbf16>, vector<448x224xbf16>, vector<14x224xf32> -> vector<14x224xf32>
    %43 = arith.maximumf %40, %42 : vector<14x224xf32>
    %44 = arith.truncf %43 : vector<14x224xf32> to vector<14x224xbf16>
    %c0_39 = arith.constant 0 : index
    %c0_40 = arith.constant 0 : index
    %c0_41 = arith.constant 0 : index
    %45 = vector.load %arg7[%c0_39, %c0_40, %c0_41] : memref<1x14x224xbf16, #tpu.memory_space<vmem>>, vector<1x14x224xbf16>
    %46 = vector.shape_cast %45 : vector<1x14x224xbf16> to vector<14x224xbf16>
    %47 = vector.shape_cast %44 : vector<14x224xbf16> to vector<1x14x224xbf16>
    tpu.vector_store %arg7[%c0_39, %c0_40, %c0_41], %47 {strides = array<i32>} : memref<1x14x224xbf16, #tpu.memory_space<vmem>>, vector<1x14x224xbf16>,
    return
  }
  func.func @transform_0(%arg0: i32) -> (i32, i32, i32) {
    %c0_i32 = arith.constant 0 : i32
    %c0_i32_0 = arith.constant 0 : i32
    %c0_i32_1 = arith.constant 0 : i32
    return %arg0, %c0_i32, %c0_i32_0 : i32, i32, i32
  }
  func.func @transform_1(%arg0: i32) -> (i32, i32, i32) {
    %c0_i32 = arith.constant 0 : i32
    %c0_i32_0 = arith.constant 0 : i32
    %c0_i32_1 = arith.constant 0 : i32
    %c0_i32_2 = arith.constant 0 : i32
    return %c0_i32, %c0_i32_0, %c0_i32_1 : i32, i32, i32
  }
  func.func @transform_2(%arg0: i32) -> (i32, i32, i32) {
    %c0_i32 = arith.constant 0 : i32
    %c0_i32_0 = arith.constant 0 : i32
    %c0_i32_1 = arith.constant 0 : i32
    %c0_i32_2 = arith.constant 0 : i32
    return %c0_i32, %c0_i32_0, %c0_i32_1 : i32, i32, i32
  }
  func.func @transform_3(%arg0: i32) -> (i32, i32) {
    %c0_i32 = arith.constant 0 : i32
    %c0_i32_0 = arith.constant 0 : i32
    %c0_i32_1 = arith.constant 0 : i32
    return %c0_i32, %c0_i32_0 : i32, i32
  }
  func.func @transform_4(%arg0: i32) -> (i32, i32) {
    %c0_i32 = arith.constant 0 : i32
    %c0_i32_0 = arith.constant 0 : i32
    %c0_i32_1 = arith.constant 0 : i32
    return %c0_i32, %c0_i32_0 : i32, i32
  }
  func.func @transform_5(%arg0: i32) -> (i32, i32) {
    %c0_i32 = arith.constant 0 : i32
    %c0_i32_0 = arith.constant 0 : i32
    %c0_i32_1 = arith.constant 0 : i32
    return %c0_i32, %c0_i32_0 : i32, i32
  }
  func.func @transform_6(%arg0: i32) -> (i32, i32, i32) {
    %c0_i32 = arith.constant 0 : i32
    %c0_i32_0 = arith.constant 0 : i32
    %c0_i32_1 = arith.constant 0 : i32
    return %arg0, %c0_i32, %c0_i32_0 : i32, i32, i32
  }
}

module attributes {stable_mosaic.version = 11 : i64} {
  func.func @_conv_pool_fc_kernel(%arg0: i32, %arg1: memref<1x7x448xbf16, #tpu.memory_space<vmem>>, %arg2: memref<3x448x160xbf16, #tpu.memory_space<vmem>>, %arg3: memref<3x448x160xbf16, #tpu.memory_space<vmem>>, %arg4: memref<1x160xf32, #tpu.memory_space<vmem>>, %arg5: memref<160x80xbf16, #tpu.memory_space<vmem>>, %arg6: memref<160x80xbf16, #tpu.memory_space<vmem>>, %arg7: memref<5x80x128xbf16, #tpu.memory_space<vmem>>, %arg8: memref<1x128xf32, #tpu.memory_space<vmem>>, %arg9: memref<128x128xbf16, #tpu.memory_space<vmem>>, %arg10: memref<1x128xf32, #tpu.memory_space<vmem>>, %arg11: memref<128x128xbf16, #tpu.memory_space<vmem>>, %arg12: memref<1x128xf32, #tpu.memory_space<vmem>>, %arg13: memref<1x1x128xf32, #tpu.memory_space<vmem>>) attributes {dimension_semantics = [#tpu.dimension_semantics<parallel>], iteration_bounds = array<i64: 2>, scalar_prefetch = 0 : i64, scratch_operands = 0 : i64, tpu.core_type = #tpu.core_type<tc>, window_params = [{transform_indices = @transform_0, window_bounds = array<i64: 1, 7, 448>}, {pipeline_mode = #tpu.pipeline_mode<synchronous>, transform_indices = @transform_1, window_bounds = array<i64: 3, 448, 160>}, {pipeline_mode = #tpu.pipeline_mode<synchronous>, transform_indices = @transform_2, window_bounds = array<i64: 3, 448, 160>}, {pipeline_mode = #tpu.pipeline_mode<synchronous>, transform_indices = @transform_3, window_bounds = array<i64: 1, 160>}, {pipeline_mode = #tpu.pipeline_mode<synchronous>, transform_indices = @transform_4, window_bounds = array<i64: 160, 80>}, {pipeline_mode = #tpu.pipeline_mode<synchronous>, transform_indices = @transform_5, window_bounds = array<i64: 160, 80>}, {pipeline_mode = #tpu.pipeline_mode<synchronous>, transform_indices = @transform_6, window_bounds = array<i64: 5, 80, 128>}, {pipeline_mode = #tpu.pipeline_mode<synchronous>, transform_indices = @transform_7, window_bounds = array<i64: 1, 128>}, {pipeline_mode = #tpu.pipeline_mode<synchronous>, transform_indices = @transform_8, window_bounds = array<i64: 128, 128>}, {pipeline_mode = #tpu.pipeline_mode<synchronous>, transform_indices = @transform_9, window_bounds = array<i64: 1, 128>}, {pipeline_mode = #tpu.pipeline_mode<synchronous>, transform_indices = @transform_10, window_bounds = array<i64: 128, 128>}, {pipeline_mode = #tpu.pipeline_mode<synchronous>, transform_indices = @transform_11, window_bounds = array<i64: 1, 128>}, {transform_indices = @transform_12, window_bounds = array<i64: 1, 1, 128>}]} {
    %c0 = arith.constant 0 : index
    %c0_0 = arith.constant 0 : index
    %c0_1 = arith.constant 0 : index
    %0 = vector.load %arg1[%c0, %c0_0, %c0_1] : memref<1x7x448xbf16, #tpu.memory_space<vmem>>, vector<1x5x448xbf16>
    %1 = vector.shape_cast %0 : vector<1x5x448xbf16> to vector<5x448xbf16>
    %c0_2 = arith.constant 0 : index
    %c0_3 = arith.constant 0 : index
    %c0_4 = arith.constant 0 : index
    %2 = vector.load %arg2[%c0_2, %c0_3, %c0_4] : memref<3x448x160xbf16, #tpu.memory_space<vmem>>, vector<1x448x160xbf16>
    %3 = vector.shape_cast %2 : vector<1x448x160xbf16> to vector<448x160xbf16>
    %cst = arith.constant dense<0.000000e+00> : vector<5x160xf32>
    %4 = tpu.matmul %1, %3, %cst {dimension_numbers = #tpu.dot_dimension_numbers<[1], [0], [0], [1], [0, 0, 1, 1], [], []>} : vector<5x448xbf16>, vector<448x160xbf16>, vector<5x160xf32> -> vector<5x160xf32>
    %c0_5 = arith.constant 0 : index
    %c0_6 = arith.constant 0 : index
    %c0_7 = arith.constant 0 : index
    %5 = vector.load %arg3[%c0_5, %c0_6, %c0_7] : memref<3x448x160xbf16, #tpu.memory_space<vmem>>, vector<1x448x160xbf16>
    %6 = vector.shape_cast %5 : vector<1x448x160xbf16> to vector<448x160xbf16>
    %cst_8 = arith.constant dense<0.000000e+00> : vector<5x160xf32>
    %7 = tpu.matmul %1, %6, %cst_8 {dimension_numbers = #tpu.dot_dimension_numbers<[1], [0], [0], [1], [0, 0, 1, 1], [], []>} : vector<5x448xbf16>, vector<448x160xbf16>, vector<5x160xf32> -> vector<5x160xf32>
    %c0_9 = arith.constant 0 : index
    %c1 = arith.constant 1 : index
    %c0_10 = arith.constant 0 : index
    %8 = vector.load %arg1[%c0_9, %c1, %c0_10] : memref<1x7x448xbf16, #tpu.memory_space<vmem>>, vector<1x5x448xbf16>
    %9 = vector.shape_cast %8 : vector<1x5x448xbf16> to vector<5x448xbf16>
    %c1_11 = arith.constant 1 : index
    %c0_12 = arith.constant 0 : index
    %c0_13 = arith.constant 0 : index
    %10 = vector.load %arg2[%c1_11, %c0_12, %c0_13] : memref<3x448x160xbf16, #tpu.memory_space<vmem>>, vector<1x448x160xbf16>
    %11 = vector.shape_cast %10 : vector<1x448x160xbf16> to vector<448x160xbf16>
    %cst_14 = arith.constant dense<0.000000e+00> : vector<5x160xf32>
    %12 = tpu.matmul %9, %11, %cst_14 {dimension_numbers = #tpu.dot_dimension_numbers<[1], [0], [0], [1], [0, 0, 1, 1], [], []>} : vector<5x448xbf16>, vector<448x160xbf16>, vector<5x160xf32> -> vector<5x160xf32>
    %13 = arith.addf %4, %12 : vector<5x160xf32>
    %c1_15 = arith.constant 1 : index
    %c0_16 = arith.constant 0 : index
    %c0_17 = arith.constant 0 : index
    %14 = vector.load %arg3[%c1_15, %c0_16, %c0_17] : memref<3x448x160xbf16, #tpu.memory_space<vmem>>, vector<1x448x160xbf16>
    %15 = vector.shape_cast %14 : vector<1x448x160xbf16> to vector<448x160xbf16>
    %cst_18 = arith.constant dense<0.000000e+00> : vector<5x160xf32>
    %16 = tpu.matmul %9, %15, %cst_18 {dimension_numbers = #tpu.dot_dimension_numbers<[1], [0], [0], [1], [0, 0, 1, 1], [], []>} : vector<5x448xbf16>, vector<448x160xbf16>, vector<5x160xf32> -> vector<5x160xf32>
    %17 = arith.addf %7, %16 : vector<5x160xf32>
    %c0_19 = arith.constant 0 : index
    %c2 = arith.constant 2 : index
    %c0_20 = arith.constant 0 : index
    %18 = vector.load %arg1[%c0_19, %c2, %c0_20] : memref<1x7x448xbf16, #tpu.memory_space<vmem>>, vector<1x5x448xbf16>
    %19 = vector.shape_cast %18 : vector<1x5x448xbf16> to vector<5x448xbf16>
    %c2_21 = arith.constant 2 : index
    %c0_22 = arith.constant 0 : index
    %c0_23 = arith.constant 0 : index
    %20 = vector.load %arg2[%c2_21, %c0_22, %c0_23] : memref<3x448x160xbf16, #tpu.memory_space<vmem>>, vector<1x448x160xbf16>
    %21 = vector.shape_cast %20 : vector<1x448x160xbf16> to vector<448x160xbf16>
    %cst_24 = arith.constant dense<0.000000e+00> : vector<5x160xf32>
    %22 = tpu.matmul %19, %21, %cst_24 {dimension_numbers = #tpu.dot_dimension_numbers<[1], [0], [0], [1], [0, 0, 1, 1], [], []>} : vector<5x448xbf16>, vector<448x160xbf16>, vector<5x160xf32> -> vector<5x160xf32>
    %23 = arith.addf %13, %22 : vector<5x160xf32>
    %c2_25 = arith.constant 2 : index
    %c0_26 = arith.constant 0 : index
    %c0_27 = arith.constant 0 : index
    %24 = vector.load %arg3[%c2_25, %c0_26, %c0_27] : memref<3x448x160xbf16, #tpu.memory_space<vmem>>, vector<1x448x160xbf16>
    %25 = vector.shape_cast %24 : vector<1x448x160xbf16> to vector<448x160xbf16>
    %cst_28 = arith.constant dense<0.000000e+00> : vector<5x160xf32>
    %26 = tpu.matmul %19, %25, %cst_28 {dimension_numbers = #tpu.dot_dimension_numbers<[1], [0], [0], [1], [0, 0, 1, 1], [], []>} : vector<5x448xbf16>, vector<448x160xbf16>, vector<5x160xf32> -> vector<5x160xf32>
    %27 = arith.addf %17, %26 : vector<5x160xf32>
    %c0_29 = arith.constant 0 : index
    %c0_30 = arith.constant 0 : index
    %28 = vector.load %arg4[%c0_29, %c0_30] : memref<1x160xf32, #tpu.memory_space<vmem>>, vector<1x160xf32>
    %29 = vector.broadcast %28 : vector<1x160xf32> to vector<5x160xf32>
    %30 = arith.addf %23, %29 : vector<5x160xf32>
    %cst_31 = arith.constant 0.000000e+00 : f32
    %31 = vector.broadcast %cst_31 : f32 to vector<5x160xf32>
    %32 = arith.maximumf %30, %31 : vector<5x160xf32>
    %33 = vector.broadcast %28 : vector<1x160xf32> to vector<5x160xf32>
    %34 = arith.addf %27, %33 : vector<5x160xf32>
    %cst_32 = arith.constant 0.000000e+00 : f32
    %35 = vector.broadcast %cst_32 : f32 to vector<5x160xf32>
    %36 = arith.maximumf %34, %35 : vector<5x160xf32>
    %37 = arith.maximumf %32, %36 : vector<5x160xf32>
    %38 = arith.truncf %37 : vector<5x160xf32> to vector<5x160xbf16>
    %c0_33 = arith.constant 0 : index
    %c0_34 = arith.constant 0 : index
    %39 = vector.load %arg5[%c0_33, %c0_34] : memref<160x80xbf16, #tpu.memory_space<vmem>>, vector<160x80xbf16>
    %cst_35 = arith.constant dense<0.000000e+00> : vector<5x80xf32>
    %40 = tpu.matmul %38, %39, %cst_35 {dimension_numbers = #tpu.dot_dimension_numbers<[1], [0], [0], [1], [0, 0, 1, 1], [], []>} : vector<5x160xbf16>, vector<160x80xbf16>, vector<5x80xf32> -> vector<5x80xf32>
    %c0_36 = arith.constant 0 : index
    %c0_37 = arith.constant 0 : index
    %41 = vector.load %arg6[%c0_36, %c0_37] : memref<160x80xbf16, #tpu.memory_space<vmem>>, vector<160x80xbf16>
    %cst_38 = arith.constant dense<0.000000e+00> : vector<5x80xf32>
    %42 = tpu.matmul %38, %41, %cst_38 {dimension_numbers = #tpu.dot_dimension_numbers<[1], [0], [0], [1], [0, 0, 1, 1], [], []>} : vector<5x160xbf16>, vector<160x80xbf16>, vector<5x80xf32> -> vector<5x80xf32>
    %43 = arith.maximumf %40, %42 : vector<5x80xf32>
    %44 = arith.truncf %43 : vector<5x80xf32> to vector<5x80xbf16>
    %c0_39 = arith.constant 0 : index
    %c0_40 = arith.constant 0 : index
    %45 = vector.load %arg8[%c0_39, %c0_40] : memref<1x128xf32, #tpu.memory_space<vmem>>, vector<1x128xf32>
    %46 = vector.extract_strided_slice %44 {offsets = [0, 0], sizes = [1, 80], strides = [1, 1]} : vector<5x80xbf16> to vector<1x80xbf16>
    %c0_41 = arith.constant 0 : index
    %c0_42 = arith.constant 0 : index
    %c0_43 = arith.constant 0 : index
    %47 = vector.load %arg7[%c0_41, %c0_42, %c0_43] : memref<5x80x128xbf16, #tpu.memory_space<vmem>>, vector<1x80x128xbf16>
    %48 = vector.shape_cast %47 : vector<1x80x128xbf16> to vector<80x128xbf16>
    %cst_44 = arith.constant dense<0.000000e+00> : vector<1x128xf32>
    %49 = tpu.matmul %46, %48, %cst_44 {dimension_numbers = #tpu.dot_dimension_numbers<[1], [0], [0], [1], [0, 0, 1, 1], [], []>} : vector<1x80xbf16>, vector<80x128xbf16>, vector<1x128xf32> -> vector<1x128xf32>
    %50 = arith.addf %45, %49 : vector<1x128xf32>
    %51 = vector.extract_strided_slice %44 {offsets = [1, 0], sizes = [1, 80], strides = [1, 1]} : vector<5x80xbf16> to vector<1x80xbf16>
    %c1_45 = arith.constant 1 : index
    %c0_46 = arith.constant 0 : index
    %c0_47 = arith.constant 0 : index
    %52 = vector.load %arg7[%c1_45, %c0_46, %c0_47] : memref<5x80x128xbf16, #tpu.memory_space<vmem>>, vector<1x80x128xbf16>
    %53 = vector.shape_cast %52 : vector<1x80x128xbf16> to vector<80x128xbf16>
    %cst_48 = arith.constant dense<0.000000e+00> : vector<1x128xf32>
    %54 = tpu.matmul %51, %53, %cst_48 {dimension_numbers = #tpu.dot_dimension_numbers<[1], [0], [0], [1], [0, 0, 1, 1], [], []>} : vector<1x80xbf16>, vector<80x128xbf16>, vector<1x128xf32> -> vector<1x128xf32>
    %55 = arith.addf %50, %54 : vector<1x128xf32>
    %56 = vector.extract_strided_slice %44 {offsets = [2, 0], sizes = [1, 80], strides = [1, 1]} : vector<5x80xbf16> to vector<1x80xbf16>
    %c2_49 = arith.constant 2 : index
    %c0_50 = arith.constant 0 : index
    %c0_51 = arith.constant 0 : index
    %57 = vector.load %arg7[%c2_49, %c0_50, %c0_51] : memref<5x80x128xbf16, #tpu.memory_space<vmem>>, vector<1x80x128xbf16>
    %58 = vector.shape_cast %57 : vector<1x80x128xbf16> to vector<80x128xbf16>
    %cst_52 = arith.constant dense<0.000000e+00> : vector<1x128xf32>
    %59 = tpu.matmul %56, %58, %cst_52 {dimension_numbers = #tpu.dot_dimension_numbers<[1], [0], [0], [1], [0, 0, 1, 1], [], []>} : vector<1x80xbf16>, vector<80x128xbf16>, vector<1x128xf32> -> vector<1x128xf32>
    %60 = arith.addf %55, %59 : vector<1x128xf32>
    %61 = vector.extract_strided_slice %44 {offsets = [3, 0], sizes = [1, 80], strides = [1, 1]} : vector<5x80xbf16> to vector<1x80xbf16>
    %c3 = arith.constant 3 : index
    %c0_53 = arith.constant 0 : index
    %c0_54 = arith.constant 0 : index
    %62 = vector.load %arg7[%c3, %c0_53, %c0_54] : memref<5x80x128xbf16, #tpu.memory_space<vmem>>, vector<1x80x128xbf16>
    %63 = vector.shape_cast %62 : vector<1x80x128xbf16> to vector<80x128xbf16>
    %cst_55 = arith.constant dense<0.000000e+00> : vector<1x128xf32>
    %64 = tpu.matmul %61, %63, %cst_55 {dimension_numbers = #tpu.dot_dimension_numbers<[1], [0], [0], [1], [0, 0, 1, 1], [], []>} : vector<1x80xbf16>, vector<80x128xbf16>, vector<1x128xf32> -> vector<1x128xf32>
    %65 = arith.addf %60, %64 : vector<1x128xf32>
    %66 = vector.extract_strided_slice %44 {offsets = [4, 0], sizes = [1, 80], strides = [1, 1]} : vector<5x80xbf16> to vector<1x80xbf16>
    %c4 = arith.constant 4 : index
    %c0_56 = arith.constant 0 : index
    %c0_57 = arith.constant 0 : index
    %67 = vector.load %arg7[%c4, %c0_56, %c0_57] : memref<5x80x128xbf16, #tpu.memory_space<vmem>>, vector<1x80x128xbf16>
    %68 = vector.shape_cast %67 : vector<1x80x128xbf16> to vector<80x128xbf16>
    %cst_58 = arith.constant dense<0.000000e+00> : vector<1x128xf32>
    %69 = tpu.matmul %66, %68, %cst_58 {dimension_numbers = #tpu.dot_dimension_numbers<[1], [0], [0], [1], [0, 0, 1, 1], [], []>} : vector<1x80xbf16>, vector<80x128xbf16>, vector<1x128xf32> -> vector<1x128xf32>
    %70 = arith.addf %65, %69 : vector<1x128xf32>
    %cst_59 = arith.constant 0.000000e+00 : f32
    %71 = vector.broadcast %cst_59 : f32 to vector<1x128xf32>
    %72 = arith.maximumf %70, %71 : vector<1x128xf32>
    %73 = arith.truncf %72 : vector<1x128xf32> to vector<1x128xbf16>
    %c0_60 = arith.constant 0 : index
    %c0_61 = arith.constant 0 : index
    %74 = vector.load %arg9[%c0_60, %c0_61] : memref<128x128xbf16, #tpu.memory_space<vmem>>, vector<128x128xbf16>
    %cst_62 = arith.constant dense<0.000000e+00> : vector<1x128xf32>
    %75 = tpu.matmul %73, %74, %cst_62 {dimension_numbers = #tpu.dot_dimension_numbers<[1], [0], [0], [1], [0, 0, 1, 1], [], []>} : vector<1x128xbf16>, vector<128x128xbf16>, vector<1x128xf32> -> vector<1x128xf32>
    %c0_63 = arith.constant 0 : index
    %c0_64 = arith.constant 0 : index
    %76 = vector.load %arg10[%c0_63, %c0_64] : memref<1x128xf32, #tpu.memory_space<vmem>>, vector<1x128xf32>
    %77 = arith.addf %75, %76 : vector<1x128xf32>
    %cst_65 = arith.constant 0.000000e+00 : f32
    %78 = vector.broadcast %cst_65 : f32 to vector<1x128xf32>
    %79 = arith.maximumf %77, %78 : vector<1x128xf32>
    %80 = arith.truncf %79 : vector<1x128xf32> to vector<1x128xbf16>
    %c0_66 = arith.constant 0 : index
    %c0_67 = arith.constant 0 : index
    %81 = vector.load %arg11[%c0_66, %c0_67] : memref<128x128xbf16, #tpu.memory_space<vmem>>, vector<128x128xbf16>
    %cst_68 = arith.constant dense<0.000000e+00> : vector<1x128xf32>
    %82 = tpu.matmul %80, %81, %cst_68 {dimension_numbers = #tpu.dot_dimension_numbers<[1], [0], [0], [1], [0, 0, 1, 1], [], []>} : vector<1x128xbf16>, vector<128x128xbf16>, vector<1x128xf32> -> vector<1x128xf32>
    %c0_69 = arith.constant 0 : index
    %c0_70 = arith.constant 0 : index
    %83 = vector.load %arg12[%c0_69, %c0_70] : memref<1x128xf32, #tpu.memory_space<vmem>>, vector<1x128xf32>
    %84 = arith.addf %82, %83 : vector<1x128xf32>
    %c0_71 = arith.constant 0 : index
    %c0_72 = arith.constant 0 : index
    %c0_73 = arith.constant 0 : index
    %85 = vector.load %arg13[%c0_71, %c0_72, %c0_73] : memref<1x1x128xf32, #tpu.memory_space<vmem>>, vector<1x1x128xf32>
    %86 = vector.shape_cast %85 : vector<1x1x128xf32> to vector<1x128xf32>
    %87 = vector.shape_cast %84 : vector<1x128xf32> to vector<1x1x128xf32>
    tpu.vector_store %arg13[%c0_71, %c0_72, %c0_73], %87 {strides = array<i32>} : memref<1x1x128xf32, #tpu.memory_space<vmem>>, vector<1x1x128xf32>,
    return
  }
  func.func @transform_0(%arg0: i32) -> (i32, i32, i32) {
    %c0_i32 = arith.constant 0 : i32
    %c0_i32_0 = arith.constant 0 : i32
    %c0_i32_1 = arith.constant 0 : i32
    return %arg0, %c0_i32, %c0_i32_0 : i32, i32, i32
  }
  func.func @transform_1(%arg0: i32) -> (i32, i32, i32) {
    %c0_i32 = arith.constant 0 : i32
    %c0_i32_0 = arith.constant 0 : i32
    %c0_i32_1 = arith.constant 0 : i32
    %c0_i32_2 = arith.constant 0 : i32
    return %c0_i32, %c0_i32_0, %c0_i32_1 : i32, i32, i32
  }
  func.func @transform_2(%arg0: i32) -> (i32, i32, i32) {
    %c0_i32 = arith.constant 0 : i32
    %c0_i32_0 = arith.constant 0 : i32
    %c0_i32_1 = arith.constant 0 : i32
    %c0_i32_2 = arith.constant 0 : i32
    return %c0_i32, %c0_i32_0, %c0_i32_1 : i32, i32, i32
  }
  func.func @transform_3(%arg0: i32) -> (i32, i32) {
    %c0_i32 = arith.constant 0 : i32
    %c0_i32_0 = arith.constant 0 : i32
    %c0_i32_1 = arith.constant 0 : i32
    return %c0_i32, %c0_i32_0 : i32, i32
  }
  func.func @transform_4(%arg0: i32) -> (i32, i32) {
    %c0_i32 = arith.constant 0 : i32
    %c0_i32_0 = arith.constant 0 : i32
    %c0_i32_1 = arith.constant 0 : i32
    return %c0_i32, %c0_i32_0 : i32, i32
  }
  func.func @transform_5(%arg0: i32) -> (i32, i32) {
    %c0_i32 = arith.constant 0 : i32
    %c0_i32_0 = arith.constant 0 : i32
    %c0_i32_1 = arith.constant 0 : i32
    return %c0_i32, %c0_i32_0 : i32, i32
  }
  func.func @transform_6(%arg0: i32) -> (i32, i32, i32) {
    %c0_i32 = arith.constant 0 : i32
    %c0_i32_0 = arith.constant 0 : i32
    %c0_i32_1 = arith.constant 0 : i32
    %c0_i32_2 = arith.constant 0 : i32
    return %c0_i32, %c0_i32_0, %c0_i32_1 : i32, i32, i32
  }
  func.func @transform_7(%arg0: i32) -> (i32, i32) {
    %c0_i32 = arith.constant 0 : i32
    %c0_i32_0 = arith.constant 0 : i32
    %c0_i32_1 = arith.constant 0 : i32
    return %c0_i32, %c0_i32_0 : i32, i32
  }
  func.func @transform_8(%arg0: i32) -> (i32, i32) {
    %c0_i32 = arith.constant 0 : i32
    %c0_i32_0 = arith.constant 0 : i32
    %c0_i32_1 = arith.constant 0 : i32
    return %c0_i32, %c0_i32_0 : i32, i32
  }
  func.func @transform_9(%arg0: i32) -> (i32, i32) {
    %c0_i32 = arith.constant 0 : i32
    %c0_i32_0 = arith.constant 0 : i32
    %c0_i32_1 = arith.constant 0 : i32
    return %c0_i32, %c0_i32_0 : i32, i32
  }
  func.func @transform_10(%arg0: i32) -> (i32, i32) {
    %c0_i32 = arith.constant 0 : i32
    %c0_i32_0 = arith.constant 0 : i32
    %c0_i32_1 = arith.constant 0 : i32
    return %c0_i32, %c0_i32_0 : i32, i32
  }
  func.func @transform_11(%arg0: i32) -> (i32, i32) {
    %c0_i32 = arith.constant 0 : i32
    %c0_i32_0 = arith.constant 0 : i32
    %c0_i32_1 = arith.constant 0 : i32
    return %c0_i32, %c0_i32_0 : i32, i32
  }
  func.func @transform_12(%arg0: i32) -> (i32, i32, i32) {
    %c0_i32 = arith.constant 0 : i32
    %c0_i32_0 = arith.constant 0 : i32
    %c0_i32_1 = arith.constant 0 : i32
    return %arg0, %c0_i32, %c0_i32_0 : i32, i32, i32
  }
}

</mosaic_0001>

<llo_original>
// kernel: forward.2
$region0: #{forward.2}
  #allocation0 [shape = 'u32[]', space=smem, size = 0x4, offset = 0x4, fixed_abs, tag = 'smem constant byte address 0x4 - core index']
  #allocation1 [shape = 'u32[144,128]{1,0:T(1,128)}', space=vmem, size = 0x12000, scoped, tag = 'internal scratch']
  %s0 = inlined_call_operand.vmem [shape: bf16[2,16,192], index: 0, kind: input, shape index: {}]
  %s1 = inlined_call_operand.vmem [shape: bf16[3,192,448], index: 1, kind: input, shape index: {}]
  %s2 = inlined_call_operand.vmem [shape: bf16[3,192,448], index: 2, kind: input, shape index: {}]
  %s3 = inlined_call_operand.vmem [shape: f32[1,448], index: 3, kind: input, shape index: {}]
  %s4 = inlined_call_operand.hbm [shape: bf16[448,224], index: 4, kind: input, shape index: {}]
  %s5 = inlined_call_operand.hbm [shape: bf16[448,224], index: 5, kind: input, shape index: {}]
  %s6 = inlined_call_operand.vmem [shape: bf16[2,14,224], index: 6, kind: output, shape index: {}]
  %s7 = sld [smem:[#allocation0]]
  $region65: #{forward.2} parent=0
    _
  %s9 = ssub.s32 1, %s7
  %s10 = scalar_select 0, %s9, %s7
  $region1: #{forward.2} parent=0
    #allocation2 [shape = 'u8[229376]{0}', space=vmem, size = 0x38000, scoped, tag = 'input window, operand 4, single buffered']
    #allocation3 [shape = 's32[2]{0}', space=sflag, size = 0x8, scoped, tag = 'scoped memory for forward.2']
    #allocation4 [shape = 'u8[229376]{0}', space=vmem, size = 0x38000, scoped, tag = 'input window, operand 5, single buffered']
    #allocation5 [shape = 's32[1]{0}', space=sflag, size = 0x4, scoped, tag = 'scoped memory for forward.2']
    %11 = vsyncpa [#allocation3], 0
    %12 = vsyncpa [#allocation5], 0
    loop: start=0, step=1, limit=4
    $region2: #{forward.2} parent=1 // loop_pre_header
      _
    $region3: #{forward.2} parent=1 // loop_header
      %s14 = sphi 0, %s18
      %p15 = scmp.ge.s32.totalorder %s14, 4
      %s24 = sphi 0, %s26
      %s27 = sphi 0, %s24
      %s28 = sphi 0, %s27
      %s44 = sphi 0, %s28
      %s48 = sphi 0, %s48
      %s50 = sphi 0, %s48
      %s51 = sphi 0, %s50
      %s65 = sphi 0, %s51
      %s69 = sphi 0, %s69
      %s71 = sphi 0, %s69
      %s72 = sphi 0, %s71
      %s86 = sphi 0, %s72
      %s90 = sphi 0, %s90
      %s92 = sphi 0, %s90
      %s93 = sphi 0, %s92
      %s107 = sphi 0, %s93
      %s111 = sphi 0, %s111
      %s113 = sphi 0, %s111
      %s114 = sphi 0, %s113
      %s128 = sphi 0, %s114
      %s132 = sphi 0, %s132
      %s134 = sphi 0, %s132
      %s135 = sphi 0, %s134
      %s149 = sphi 0, %s135
      %s155 = sphi 0, %s157
      %s158 = sphi 0, %s155
      %s159 = sphi 0, %s158
      %s175 = sphi 0, %s159
    $region4: #{forward.2} parent=1 // loop_header_branch
      %17 = sbr.rel (%p15) target = $region8
    $region5: #{forward.2} parent=1 // loop_body
      %s19 = ssub.s32 %s14, 1
      %s20 = ssub.s32 %s14, 2
      %s21 = sadd.s32 %s14, 1
      %s22 = ssub.s32 %s14, %s21
      %p23 = scmp.eq.s32.totalorder %s22, 0
      %s25 = sadd.s32 %s24, 1
      %s26 = scalar_select %p23, %s24, %s25
      %p29 = pneg %p23
      %p30 = scmp.eq.s32.totalorder %s14, 1
      %p31 = por %p29, %p30
      %p32 = scmp.ne.s32.totalorder %s24, %s27
      %p33 = scmp.eq.s32.totalorder %s14, 0
      %p34 = por %p32, %p33
      %p35 = scmp.ne.s32.totalorder %s24, %s27
      %p36 = scmp.eq.s32.totalorder %s19, 1
      %p37 = por %p35, %p36
      %p38 = scmp.ne.s32.totalorder %s27, %s28
      %p39 = scmp.eq.s32.totalorder %s19, 0
      %p40 = por %p38, %p39
      %p41 = scmp.ne.s32.totalorder %s27, %s28
      %p42 = scmp.eq.s32.totalorder %s20, 1
      %p43 = por %p41, %p42
      %p45 = scmp.ne.s32.totalorder %s28, %s44
      %p46 = scmp.eq.s32.totalorder %s20, 0
      %p47 = por %p45, %p46
      %s49 = sadd.s32 %s48, 1
      %p52 = scmp.eq.s32.totalorder %s14, 1
      %p53 = scmp.ne.s32.totalorder %s48, %s50
      %p54 = scmp.eq.s32.totalorder %s14, 0
      %p55 = por %p53, %p54
      %p56 = scmp.ne.s32.totalorder %s48, %s50
      %p57 = scmp.eq.s32.totalorder %s19, 1
      %p58 = por %p56, %p57
      %p59 = scmp.ne.s32.totalorder %s50, %s51
      %p60 = scmp.eq.s32.totalorder %s19, 0
      %p61 = por %p59, %p60
      %p62 = scmp.ne.s32.totalorder %s50, %s51
      %p63 = scmp.eq.s32.totalorder %s20, 1
      %p64 = por %p62, %p63
      %p66 = scmp.ne.s32.totalorder %s51, %s65
      %p67 = scmp.eq.s32.totalorder %s20, 0
      %p68 = por %p66, %p67
      %s70 = sadd.s32 %s69, 1
      %p73 = scmp.eq.s32.totalorder %s14, 1
      %p74 = scmp.ne.s32.totalorder %s69, %s71
      %p75 = scmp.eq.s32.totalorder %s14, 0
      %p76 = por %p74, %p75
      %p77 = scmp.ne.s32.totalorder %s69, %s71
      %p78 = scmp.eq.s32.totalorder %s19, 1
      %p79 = por %p77, %p78
      %p80 = scmp.ne.s32.totalorder %s71, %s72
      %p81 = scmp.eq.s32.totalorder %s19, 0
      %p82 = por %p80, %p81
      %p83 = scmp.ne.s32.totalorder %s71, %s72
      %p84 = scmp.eq.s32.totalorder %s20, 1
      %p85 = por %p83, %p84
      %p87 = scmp.ne.s32.totalorder %s72, %s86
      %p88 = scmp.eq.s32.totalorder %s20, 0
      %p89 = por %p87, %p88
      %s91 = sadd.s32 %s90, 1
      %p94 = scmp.eq.s32.totalorder %s14, 1
      %p95 = scmp.ne.s32.totalorder %s90, %s92
      %p96 = scmp.eq.s32.totalorder %s14, 0
      %p97 = por %p95, %p96
      %p98 = scmp.ne.s32.totalorder %s90, %s92
      %p99 = scmp.eq.s32.totalorder %s19, 1
      %p100 = por %p98, %p99
      %p101 = scmp.ne.s32.totalorder %s92, %s93
      %p102 = scmp.eq.s32.totalorder %s19, 0
      %p103 = por %p101, %p102
      %p104 = scmp.ne.s32.totalorder %s92, %s93
      %p105 = scmp.eq.s32.totalorder %s20, 1
      %p106 = por %p104, %p105
      %p108 = scmp.ne.s32.totalorder %s93, %s107
      %p109 = scmp.eq.s32.totalorder %s20, 0
      %p110 = por %p108, %p109
      %s112 = sadd.s32 %s111, 1
      %p115 = scmp.eq.s32.totalorder %s14, 1
      %p116 = scmp.ne.s32.totalorder %s111, %s113
      %p117 = scmp.eq.s32.totalorder %s14, 0
      %p118 = por %p116, %p117
      %p119 = scmp.ne.s32.totalorder %s111, %s113
      %p120 = scmp.eq.s32.totalorder %s19, 1
      %p121 = por %p119, %p120
      %p122 = scmp.ne.s32.totalorder %s113, %s114
      %p123 = scmp.eq.s32.totalorder %s19, 0
      %p124 = por %p122, %p123
      %p125 = scmp.ne.s32.totalorder %s113, %s114
      %p126 = scmp.eq.s32.totalorder %s20, 1
      %p127 = por %p125, %p126
      %p129 = scmp.ne.s32.totalorder %s114, %s128
      %p130 = scmp.eq.s32.totalorder %s20, 0
      %p131 = por %p129, %p130
      %s133 = sadd.s32 %s132, 1
      %p136 = scmp.eq.s32.totalorder %s14, 1
      %p137 = scmp.ne.s32.totalorder %s132, %s134
      %p138 = scmp.eq.s32.totalorder %s14, 0
      %p139 = por %p137, %p138
      %p140 = scmp.ne.s32.totalorder %s132, %s134
      %p141 = scmp.eq.s32.totalorder %s19, 1
      %p142 = por %p140, %p141
      %p143 = scmp.ne.s32.totalorder %s134, %s135
      %p144 = scmp.eq.s32.totalorder %s19, 0
      %p145 = por %p143, %p144
      %p146 = scmp.ne.s32.totalorder %s134, %s135
      %p147 = scmp.eq.s32.totalorder %s20, 1
      %p148 = por %p146, %p147
      %p150 = scmp.ne.s32.totalorder %s135, %s149
      %p151 = scmp.eq.s32.totalorder %s20, 0
      %p152 = por %p150, %p151
      %s153 = ssub.s32 %s14, %s21
      %p154 = scmp.eq.s32.totalorder %s153, 0
      %s156 = sadd.s32 %s155, 1
      %s157 = scalar_select %p154, %s155, %s156
      %p160 = pneg %p154
      %p161 = scmp.eq.s32.totalorder %s14, 1
      %p162 = por %p160, %p161
      %p163 = scmp.ne.s32.totalorder %s155, %s158
      %p164 = scmp.eq.s32.totalorder %s14, 0
      %p165 = por %p163, %p164
      %p166 = scmp.ne.s32.totalorder %s155, %s158
      %p167 = scmp.eq.s32.totalorder %s19, 1
      %p168 = por %p166, %p167
      %p169 = scmp.ne.s32.totalorder %s158, %s159
      %p170 = scmp.eq.s32.totalorder %s19, 0
      %p171 = por %p169, %p170
      %p172 = scmp.ne.s32.totalorder %s158, %s159
      %p173 = scmp.eq.s32.totalorder %s20, 1
      %p174 = por %p172, %p173
      %p176 = scmp.ne.s32.totalorder %s159, %s175
      %p177 = scmp.eq.s32.totalorder %s20, 0
      %p178 = por %p176, %p177
      %p179 = scmp.le.s32.totalorder 1, %s14
      %p180 = scmp.lt.s32.totalorder %s14, 3
      %p181 = pnand %p179, %p180
      %p182 = pneg %p181
      // Predicated region
      $region9: #{forward.2} parent=5 // pred_check
        _
      $region10: #{forward.2} parent=5 // pred_check_branch
        %184 = sbr.rel (%p181) target = $region12
      $region11: #{forward.2} parent=5 // pred_region
        %s185 = ssub.s32 %s14, 1
        // Predicated region
        $region13: #{forward.2} parent=11 // pred_check
          %p186 = pneg %p61
        $region14: #{forward.2} parent=11 // pred_check_branch
          %188 = sbr.rel (%p186) target = $region16
        $region15: #{forward.2} parent=11 // pred_region
          _
        $region16: #{forward.2} parent=11 // pred_fallthru
          _
        // Predicated region
        $region17: #{forward.2} parent=11 // pred_check
          %p189 = pneg %p82
        $region18: #{forward.2} parent=11 // pred_check_branch
          %191 = sbr.rel (%p189) target = $region20
        $region19: #{forward.2} parent=11 // pred_region
          _
        $region20: #{forward.2} parent=11 // pred_fallthru
          _
        // Predicated region
        $region21: #{forward.2} parent=11 // pred_check
          %p192 = pneg %p103
        $region22: #{forward.2} parent=11 // pred_check_branch
          %194 = sbr.rel (%p192) target = $region24
        $region23: #{forward.2} parent=11 // pred_region
          _
        $region24: #{forward.2} parent=11 // pred_fallthru
          _
        // Predicated region
        $region25: #{forward.2} parent=11 // pred_check
          %p195 = pneg %p124
        $region26: #{forward.2} parent=11 // pred_check_branch
          %197 = sbr.rel (%p195) target = $region28
        $region27: #{forward.2} parent=11 // pred_region
          %s199 = ssub.s32 7168, 7168
          %200 = vsyncadd [#allocation3], %s199
          %s201 = sshll.u32 [#allocation2], 4
          %s202 = int_to_ptr.vmem [resolvable:$true] %s201
          %207 = dma.hbm_to_vmem [thread:$0]  %s4, 7168, %s202, [#allocation3], 128, 128, 8
        $region28: #{forward.2} parent=11 // pred_fallthru
          _
        // Predicated region
        $region29: #{forward.2} parent=11 // pred_check
          %p208 = pneg %p145
        $region30: #{forward.2} parent=11 // pred_check_branch
          %210 = sbr.rel (%p208) target = $region32
        $region31: #{forward.2} parent=11 // pred_region
          %s212 = ssub.s32 7168, 7168
          %213 = vsyncadd [#allocation5], %s212
          %s214 = sshll.u32 [#allocation4], 4
          %s215 = int_to_ptr.vmem [resolvable:$true] %s214
          %220 = dma.hbm_to_vmem [thread:$0]  %s5, 7168, %s215, [#allocation5], 128, 128, 8
        $region32: #{forward.2} parent=11 // pred_fallthru
          _
      $region12: #{forward.2} parent=5 // pred_fallthru
        _
      %p221 = scmp.lt.s32.totalorder %s14, 2
      // Predicated region
      $region33: #{forward.2} parent=5 // pred_check
        %p222 = pneg %p221
      $region34: #{forward.2} parent=5 // pred_check_branch
        %224 = sbr.rel (%p222) target = $region36
      $region35: #{forward.2} parent=5 // pred_region
        // Predicated region
        $region37: #{forward.2} parent=35 // pred_check
          %p225 = pneg %p34
        $region38: #{forward.2} parent=35 // pred_check_branch
          %227 = sbr.rel (%p225) target = $region40
        $region39: #{forward.2} parent=35 // pred_region
          %p228 = scmp.lt.s32.totalorder %s14, 1
          %s229 = scalar_select %p228, %s14, 1
          %s230 = smul.addr %s229, 4
          %s231 = smul.addr %s230, 4
          %s232 = scalar_lea.vmem %s0, %s231
        $region40: #{forward.2} parent=35 // pred_fallthru
          _
      $region36: #{forward.2} parent=5 // pred_fallthru
        _
      %p233 = scmp.le.s32.totalorder 1, %s14
      %p234 = scmp.lt.s32.totalorder %s14, 3
      %p235 = pnand %p233, %p234
      %p236 = pneg %p235
      // Predicated region
      $region41: #{forward.2} parent=5 // pred_check
        _
      $region42: #{forward.2} parent=5 // pred_check_branch
        %238 = sbr.rel (%p235) target = $region44
      $region43: #{forward.2} parent=5 // pred_region
        %s239 = ssub.s32 %s14, 1
        // Predicated region
        $region45: #{forward.2} parent=43 // pred_check
          %p240 = pneg %p124
        $region46: #{forward.2} parent=43 // pred_check_branch
          %242 = sbr.rel (%p240) target = $region48
        $region47: #{forward.2} parent=43 // pred_region
          %243 = dma.done [#allocation3], 7168
        $region48: #{forward.2} parent=43 // pred_fallthru
          _
        // Predicated region
        $region49: #{forward.2} parent=43 // pred_check
          %p244 = pneg %p145
        $region50: #{forward.2} parent=43 // pred_check_branch
          %246 = sbr.rel (%p244) target = $region52
        $region51: #{forward.2} parent=43 // pred_region
          %247 = dma.done [#allocation5], 7168
        $region52: #{forward.2} parent=43 // pred_fallthru
          _
        %p248 = scmp.lt.s32.totalorder %s19, 1
        %s249 = scalar_select %p248, %s19, 1
        %s250 = smul.addr %s249, 4
        %s251 = smul.addr %s250, 4
        %s252 = scalar_lea.vmem %s0, %s251
        %p253 = pneg %p40
        %p254 = pneg %p37
        %p255 = pneg %p61
        %p256 = pneg %p58
        %p257 = pneg %p82
        %p258 = pneg %p79
        %p259 = pneg %p103
        %p260 = pneg %p100
        %p261 = pneg %p124
        %p262 = pneg %p121
        %p263 = pneg %p145
        %p264 = pneg %p142
        %p265 = pneg %p171
        %p266 = pneg %p168
        %p267 = scmp.lt.s32.totalorder %s19, 1
        %s268 = scalar_select %p267, %s19, 1
        %s269 = smul.addr %s268, 4
        %s270 = smul.addr %s269, 4
        %s271 = scalar_lea.vmem %s6, %s270
        %p272 = scmp.lt.s32.totalorder %s19, 1
        %s273 = scalar_select %p272, %s19, 1
        %s274 = smul.addr %s273, 4
        %s275 = smul.addr %s274, 4
        %s276 = scalar_lea.vmem %s0, %s275
        %p277 = scmp.lt.s32.totalorder %s19, 1
        %s278 = scalar_select %p277, %s19, 1
        %s279 = smul.addr %s278, 4
        %s280 = smul.addr %s279, 4
        %s281 = scalar_lea.vmem %s6, %s280
        %v283 = vld [vmem:[%s276] sm:$0xff]
        %v284 = vld [vmem:[%s276 + $0x8] sm:$0x77]
        %v285 = vld [vmem:[%s1] sm:$0xff]
        %v286 = vld [vmem:[%s1 + $0x8] sm:$0xff]
        %v287 = vld [vmem:[%s1 + $0x10] sm:$0xff]
        %v288 = vld [vmem:[%s1 + $0x18] sm:$0xff]
        %v289 = vld [vmem:[%s1 + $0x20] sm:$0xff]
        %v290 = vld [vmem:[%s1 + $0x28] sm:$0xff]
        %v291 = vld [vmem:[%s1 + $0x30] sm:$0xff]
        %v292 = vld [vmem:[%s1 + $0x38] sm:$0xff]
        %v293 = vld [vmem:[%s1 + $0x40] sm:$0xff]
        %v294 = vld [vmem:[%s1 + $0x48] sm:$0xff]
        %v295 = vld [vmem:[%s1 + $0x50] sm:$0xff]
        %v296 = vld [vmem:[%s1 + $0x58] sm:$0xff]
        %v297 = vld [vmem:[%s1 + $0x60] sm:$0xff]
        %v298 = vld [vmem:[%s1 + $0x68] sm:$0xff]
        %v299 = vld [vmem:[%s1 + $0x70] sm:$0xff]
        %v300 = vld [vmem:[%s1 + $0x78] sm:$0xff]
        %v301 = vld [vmem:[%s1 + $0x80] sm:$0xff]
        %v302 = vld [vmem:[%s1 + $0x88] sm:$0xff]
        %v303 = vld [vmem:[%s1 + $0x90] sm:$0xff]
        %v304 = vld [vmem:[%s1 + $0x98] sm:$0xff]
        %v305 = vld [vmem:[%s1 + $0xa0] sm:$0xff]
        %v306 = vld [vmem:[%s1 + $0xa8] sm:$0xff]
        %v307 = vld [vmem:[%s1 + $0xb0] sm:$0xff]
        %v308 = vld [vmem:[%s1 + $0xb8] sm:$0xff]
        %v309 = vld [vmem:[%s1 + $0xc0] sm:$0xff]
        %v310 = vld [vmem:[%s1 + $0xc8] sm:$0xff]
        %v311 = vld [vmem:[%s1 + $0xd0] sm:$0xff]
        %v312 = vld [vmem:[%s1 + $0xd8] sm:$0xff]
        %v313 = vld [vmem:[%s1 + $0xe0] sm:$0xff]
        %v314 = vld [vmem:[%s1 + $0xe8] sm:$0xff]
        %v315 = vld [vmem:[%s1 + $0xf0] sm:$0xff]
        %v316 = vld [vmem:[%s1 + $0xf8] sm:$0xff]
        %v317 = vld [vmem:[%s1 + $0x100] sm:$0xff]
        %v318 = vld [vmem:[%s1 + $0x108] sm:$0xff]
        %v319 = vld [vmem:[%s1 + $0x110] sm:$0xff]
        %v320 = vld [vmem:[%s1 + $0x118] sm:$0xff]
        %v321 = vld [vmem:[%s1 + $0x120] sm:$0xff]
        %v322 = vld [vmem:[%s1 + $0x128] sm:$0xff]
        %v323 = vld [vmem:[%s1 + $0x130] sm:$0xff]
        %v324 = vld [vmem:[%s1 + $0x138] sm:$0xff]
        %v325 = vld [vmem:[%s1 + $0x140] sm:$0xff]
        %v326 = vld [vmem:[%s1 + $0x148] sm:$0xff]
        %v327 = vld [vmem:[%s1 + $0x150] sm:$0xff]
        %v328 = vld [vmem:[%s1 + $0x158] sm:$0xff]
        %v329 = vld [vmem:[%s1 + $0x160] sm:$0xff]
        %v330 = vld [vmem:[%s1 + $0x168] sm:$0xff]
        %v331 = vld [vmem:[%s1 + $0x170] sm:$0xff]
        %v332 = vld [vmem:[%s1 + $0x178] sm:$0xff]
        %v333 = vld [vmem:[%s2] sm:$0xff]
        %v334 = vld [vmem:[%s2 + $0x8] sm:$0xff]
        %v335 = vld [vmem:[%s2 + $0x10] sm:$0xff]
        %v336 = vld [vmem:[%s2 + $0x18] sm:$0xff]
        %v337 = vld [vmem:[%s2 + $0x20] sm:$0xff]
        %v338 = vld [vmem:[%s2 + $0x28] sm:$0xff]
        %v339 = vld [vmem:[%s2 + $0x30] sm:$0xff]
        %v340 = vld [vmem:[%s2 + $0x38] sm:$0xff]
        %v341 = vld [vmem:[%s2 + $0x40] sm:$0xff]
        %v342 = vld [vmem:[%s2 + $0x48] sm:$0xff]
        %v343 = vld [vmem:[%s2 + $0x50] sm:$0xff]
        %v344 = vld [vmem:[%s2 + $0x58] sm:$0xff]
        %v345 = vld [vmem:[%s2 + $0x60] sm:$0xff]
        %v346 = vld [vmem:[%s2 + $0x68] sm:$0xff]
        %v347 = vld [vmem:[%s2 + $0x70] sm:$0xff]
        %v348 = vld [vmem:[%s2 + $0x78] sm:$0xff]
        %v349 = vld [vmem:[%s2 + $0x80] sm:$0xff]
        %v350 = vld [vmem:[%s2 + $0x88] sm:$0xff]
        %v351 = vld [vmem:[%s2 + $0x90] sm:$0xff]
        %v352 = vld [vmem:[%s2 + $0x98] sm:$0xff]
        %v353 = vld [vmem:[%s2 + $0xa0] sm:$0xff]
        %v354 = vld [vmem:[%s2 + $0xa8] sm:$0xff]
        %v355 = vld [vmem:[%s2 + $0xb0] sm:$0xff]
        %v356 = vld [vmem:[%s2 + $0xb8] sm:$0xff]
        %v357 = vld [vmem:[%s2 + $0xc0] sm:$0xff]
        %v358 = vld [vmem:[%s2 + $0xc8] sm:$0xff]
        %v359 = vld [vmem:[%s2 + $0xd0] sm:$0xff]
        %v360 = vld [vmem:[%s2 + $0xd8] sm:$0xff]
        %v361 = vld [vmem:[%s2 + $0xe0] sm:$0xff]
        %v362 = vld [vmem:[%s2 + $0xe8] sm:$0xff]
        %v363 = vld [vmem:[%s2 + $0xf0] sm:$0xff]
        %v364 = vld [vmem:[%s2 + $0xf8] sm:$0xff]
        %v365 = vld [vmem:[%s2 + $0x100] sm:$0xff]
        %v366 = vld [vmem:[%s2 + $0x108] sm:$0xff]
        %v367 = vld [vmem:[%s2 + $0x110] sm:$0xff]
        %v368 = vld [vmem:[%s2 + $0x118] sm:$0xff]
        %v369 = vld [vmem:[%s2 + $0x120] sm:$0xff]
        %v370 = vld [vmem:[%s2 + $0x128] sm:$0xff]
        %v371 = vld [vmem:[%s2 + $0x130] sm:$0xff]
        %v372 = vld [vmem:[%s2 + $0x138] sm:$0xff]
        %v373 = vld [vmem:[%s2 + $0x140] sm:$0xff]
        %v374 = vld [vmem:[%s2 + $0x148] sm:$0xff]
        %v375 = vld [vmem:[%s2 + $0x150] sm:$0xff]
        %v376 = vld [vmem:[%s2 + $0x158] sm:$0xff]
        %v377 = vld [vmem:[%s2 + $0x160] sm:$0xff]
        %v378 = vld [vmem:[%s2 + $0x168] sm:$0xff]
        %v379 = vld [vmem:[%s2 + $0x170] sm:$0xff]
        %v380 = vld [vmem:[%s2 + $0x178] sm:$0xff]
        %v381 = vld [vmem:[%s276 + $0x8] sm:$0xff]
        %s382 = scalar_lea.vmem %s1, 384
        %v383 = vld [vmem:[%s382] sm:$0xff]
        %v384 = vld [vmem:[%s382 + $0x8] sm:$0xff]
        %v385 = vld [vmem:[%s382 + $0x10] sm:$0xff]
        %v386 = vld [vmem:[%s382 + $0x18] sm:$0xff]
        %v387 = vld [vmem:[%s382 + $0x20] sm:$0xff]
        %v388 = vld [vmem:[%s382 + $0x28] sm:$0xff]
        %v389 = vld [vmem:[%s382 + $0x30] sm:$0xff]
        %v390 = vld [vmem:[%s382 + $0x38] sm:$0xff]
        %v391 = vld [vmem:[%s382 + $0x40] sm:$0xff]
        %v392 = vld [vmem:[%s382 + $0x48] sm:$0xff]
        %v393 = vld [vmem:[%s382 + $0x50] sm:$0xff]
        %v394 = vld [vmem:[%s382 + $0x58] sm:$0xff]
        %v395 = vld [vmem:[%s382 + $0x60] sm:$0xff]
        %v396 = vld [vmem:[%s382 + $0x68] sm:$0xff]
        %v397 = vld [vmem:[%s382 + $0x70] sm:$0xff]
        %v398 = vld [vmem:[%s382 + $0x78] sm:$0xff]
        %v399 = vld [vmem:[%s382 + $0x80] sm:$0xff]
        %v400 = vld [vmem:[%s382 + $0x88] sm:$0xff]
        %v401 = vld [vmem:[%s382 + $0x90] sm:$0xff]
        %v402 = vld [vmem:[%s382 + $0x98] sm:$0xff]
        %v403 = vld [vmem:[%s382 + $0xa0] sm:$0xff]
        %v404 = vld [vmem:[%s382 + $0xa8] sm:$0xff]
        %v405 = vld [vmem:[%s382 + $0xb0] sm:$0xff]
        %v406 = vld [vmem:[%s382 + $0xb8] sm:$0xff]
        %v407 = vld [vmem:[%s382 + $0xc0] sm:$0xff]
        %v408 = vld [vmem:[%s382 + $0xc8] sm:$0xff]
        %v409 = vld [vmem:[%s382 + $0xd0] sm:$0xff]
        %v410 = vld [vmem:[%s382 + $0xd8] sm:$0xff]
        %v411 = vld [vmem:[%s382 + $0xe0] sm:$0xff]
        %v412 = vld [vmem:[%s382 + $0xe8] sm:$0xff]
        %v413 = vld [vmem:[%s382 + $0xf0] sm:$0xff]
        %v414 = vld [vmem:[%s382 + $0xf8] sm:$0xff]
        %v415 = vld [vmem:[%s382 + $0x100] sm:$0xff]
        %v416 = vld [vmem:[%s382 + $0x108] sm:$0xff]
        %v417 = vld [vmem:[%s382 + $0x110] sm:$0xff]
        %v418 = vld [vmem:[%s382 + $0x118] sm:$0xff]
        %v419 = vld [vmem:[%s382 + $0x120] sm:$0xff]
        %v420 = vld [vmem:[%s382 + $0x128] sm:$0xff]
        %v421 = vld [vmem:[%s382 + $0x130] sm:$0xff]
        %v422 = vld [vmem:[%s382 + $0x138] sm:$0xff]
        %v423 = vld [vmem:[%s382 + $0x140] sm:$0xff]
        %v424 = vld [vmem:[%s382 + $0x148] sm:$0xff]
        %v425 = vld [vmem:[%s382 + $0x150] sm:$0xff]
        %v426 = vld [vmem:[%s382 + $0x158] sm:$0xff]
        %v427 = vld [vmem:[%s382 + $0x160] sm:$0xff]
        %v428 = vld [vmem:[%s382 + $0x168] sm:$0xff]
        %v429 = vld [vmem:[%s382 + $0x170] sm:$0xff]
        %v430 = vld [vmem:[%s382 + $0x178] sm:$0xff]
        %v433 = vunpack.c.l.b16 %v283
        %v434 = vunpack.c.h.b16 %v283
        %v435 = vunpack.c.l.b16 %v381
        %v436 = vunpack.c.h.b16 %v381
        %v437 = vpack.c.b16 %v435, %v433
        %v438 = vpack.c.b16 %v436, %v434
        %v440 = vshrl.u32 %v437, 16
        %v442 = vshll.u32 %v437, 16
        %v444 = vrot.slane %v442, 1
        %v445 = vor.u32 %v440, %v444
        %v447 = vshrl.u32 %v438, 16
        %v449 = vshll.u32 %v438, 16
        %v451 = vrot.slane %v449, 1
        %v452 = vor.u32 %v447, %v451
        %v502 = vunpack.c.l.b16 %v383
        %v503 = vunpack.c.h.b16 %v383
        %v504 = vunpack.c.l.b16 %v384
        %v505 = vunpack.c.h.b16 %v384
        %v506 = vunpack.c.l.b16 %v385
        %v507 = vunpack.c.h.b16 %v385
        %v508 = vunpack.c.l.b16 %v386
        %v509 = vunpack.c.h.b16 %v386
        %v510 = vunpack.c.l.b16 %v387
        %v511 = vunpack.c.h.b16 %v387
        %v512 = vunpack.c.l.b16 %v388
        %v513 = vunpack.c.h.b16 %v388
        %v514 = vunpack.c.l.b16 %v389
        %v515 = vunpack.c.h.b16 %v389
        %v516 = vunpack.c.l.b16 %v390
        %v517 = vunpack.c.h.b16 %v390
        %v518 = vunpack.c.l.b16 %v391
        %v519 = vunpack.c.h.b16 %v391
        %v520 = vunpack.c.l.b16 %v392
        %v521 = vunpack.c.h.b16 %v392
        %v522 = vunpack.c.l.b16 %v393
        %v523 = vunpack.c.h.b16 %v393
        %v524 = vunpack.c.l.b16 %v394
        %v525 = vunpack.c.h.b16 %v394
        %v526 = vunpack.c.l.b16 %v395
        %v527 = vunpack.c.h.b16 %v395
        %v528 = vunpack.c.l.b16 %v396
        %v529 = vunpack.c.h.b16 %v396
        %v530 = vunpack.c.l.b16 %v397
        %v531 = vunpack.c.h.b16 %v397
        %v532 = vunpack.c.l.b16 %v398
        %v533 = vunpack.c.h.b16 %v398
        %v534 = vunpack.c.l.b16 %v399
        %v535 = vunpack.c.h.b16 %v399
        %v536 = vunpack.c.l.b16 %v400
        %v537 = vunpack.c.h.b16 %v400
        %v538 = vunpack.c.l.b16 %v401
        %v539 = vunpack.c.h.b16 %v401
        %v540 = vunpack.c.l.b16 %v402
        %v541 = vunpack.c.h.b16 %v402
        %v542 = vunpack.c.l.b16 %v403
        %v543 = vunpack.c.h.b16 %v403
        %v544 = vunpack.c.l.b16 %v404
        %v545 = vunpack.c.h.b16 %v404
        %v546 = vunpack.c.l.b16 %v405
        %v547 = vunpack.c.h.b16 %v405
        %v548 = vunpack.c.l.b16 %v406
        %v549 = vunpack.c.h.b16 %v406
        %v550 = vunpack.c.l.b16 %v407
        %v551 = vunpack.c.h.b16 %v407
        %v552 = vunpack.c.l.b16 %v408
        %v553 = vunpack.c.h.b16 %v408
        %v554 = vunpack.c.l.b16 %v409
        %v555 = vunpack.c.h.b16 %v409
        %v556 = vunpack.c.l.b16 %v410
        %v557 = vunpack.c.h.b16 %v410
        %v558 = vunpack.c.l.b16 %v411
        %v559 = vunpack.c.h.b16 %v411
        %v560 = vunpack.c.l.b16 %v412
        %v561 = vunpack.c.h.b16 %v412
        %v562 = vunpack.c.l.b16 %v413
        %v563 = vunpack.c.h.b16 %v413
        %v564 = vunpack.c.l.b16 %v414
        %v565 = vunpack.c.h.b16 %v414
        %v566 = vunpack.c.l.b16 %v415
        %v567 = vunpack.c.h.b16 %v415
        %v568 = vunpack.c.l.b16 %v416
        %v569 = vunpack.c.h.b16 %v416
        %v570 = vunpack.c.l.b16 %v417
        %v571 = vunpack.c.h.b16 %v417
        %v572 = vunpack.c.l.b16 %v418
        %v573 = vunpack.c.h.b16 %v418
        %v574 = vunpack.c.l.b16 %v419
        %v575 = vunpack.c.h.b16 %v419
        %v576 = vunpack.c.l.b16 %v420
        %v577 = vunpack.c.h.b16 %v420
        %v578 = vunpack.c.l.b16 %v421
        %v579 = vunpack.c.h.b16 %v421
        %v580 = vunpack.c.l.b16 %v422
        %v581 = vunpack.c.h.b16 %v422
        %v582 = vunpack.c.l.b16 %v423
        %v583 = vunpack.c.h.b16 %v423
        %v584 = vunpack.c.l.b16 %v424
        %v585 = vunpack.c.h.b16 %v424
        %v586 = vunpack.c.l.b16 %v425
        %v587 = vunpack.c.h.b16 %v425
        %v588 = vunpack.c.l.b16 %v426
        %v589 = vunpack.c.h.b16 %v426
        %v590 = vunpack.c.l.b16 %v427
        %v591 = vunpack.c.h.b16 %v427
        %v592 = vunpack.c.l.b16 %v428
        %v593 = vunpack.c.h.b16 %v428
        %v594 = vunpack.c.l.b16 %v429
        %v595 = vunpack.c.h.b16 %v429
        %v596 = vunpack.c.l.b16 %v430
        %v597 = vunpack.c.h.b16 %v430
        %v598 = vpack.c.b16 %v506, %v502
        %v599 = vpack.c.b16 %v507, %v503
        %v600 = vpack.c.b16 %v508, %v504
        %v601 = vpack.c.b16 %v509, %v505
        %v602 = vpack.c.b16 %v514, %v510
        %v603 = vpack.c.b16 %v515, %v511
        %v604 = vpack.c.b16 %v516, %v512
        %v605 = vpack.c.b16 %v517, %v513
        %v606 = vpack.c.b16 %v522, %v518
        %v607 = vpack.c.b16 %v523, %v519
        %v608 = vpack.c.b16 %v524, %v520
        %v609 = vpack.c.b16 %v525, %v521
        %v610 = vpack.c.b16 %v530, %v526
        %v611 = vpack.c.b16 %v531, %v527
        %v612 = vpack.c.b16 %v532, %v528
        %v613 = vpack.c.b16 %v533, %v529
        %v614 = vpack.c.b16 %v538, %v534
        %v615 = vpack.c.b16 %v539, %v535
        %v616 = vpack.c.b16 %v540, %v536
        %v617 = vpack.c.b16 %v541, %v537
        %v618 = vpack.c.b16 %v546, %v542
        %v619 = vpack.c.b16 %v547, %v543
        %v620 = vpack.c.b16 %v548, %v544
        %v621 = vpack.c.b16 %v549, %v545
        %v622 = vpack.c.b16 %v554, %v550
        %v623 = vpack.c.b16 %v555, %v551
        %v624 = vpack.c.b16 %v556, %v552
        %v625 = vpack.c.b16 %v557, %v553
        %v626 = vpack.c.b16 %v562, %v558
        %v627 = vpack.c.b16 %v563, %v559
        %v628 = vpack.c.b16 %v564, %v560
        %v629 = vpack.c.b16 %v565, %v561
        %v630 = vpack.c.b16 %v570, %v566
        %v631 = vpack.c.b16 %v571, %v567
        %v632 = vpack.c.b16 %v572, %v568
        %v633 = vpack.c.b16 %v573, %v569
        %v634 = vpack.c.b16 %v578, %v574
        %v635 = vpack.c.b16 %v579, %v575
        %v636 = vpack.c.b16 %v580, %v576
        %v637 = vpack.c.b16 %v581, %v577
        %v638 = vpack.c.b16 %v586, %v582
        %v639 = vpack.c.b16 %v587, %v583
        %v640 = vpack.c.b16 %v588, %v584
        %v641 = vpack.c.b16 %v589, %v585
        %v642 = vpack.c.b16 %v594, %v590
        %v643 = vpack.c.b16 %v595, %v591
        %v644 = vpack.c.b16 %v596, %v592
        %v645 = vpack.c.b16 %v597, %v593
        %vm694 = vcmask 523264
        %v696 = vsel %vm694, %v452, 0
        %698 = vmatprep.subr.bf16.mxu0 %v599
        %699 = vmatpush1.bf16.msra.mxu0 %v598
        %700 = vmatprep.subr.bf16.mxu0 %v603
        %701 = vmatpush1.bf16.msra.mxu0 %v602
        %702 = vmatprep.subr.bf16.mxu0 %v607
        %703 = vmatpush1.bf16.msra.mxu0 %v606
        %704 = vmatprep.subr.bf16.mxu0 %v611
        %705 = vmatpush1.bf16.msra.mxu0 %v610
        %706 = vmatprep.subr.bf16.mxu0 %v615
        %707 = vmatpush1.bf16.msra.mxu0 %v614
        %708 = vmatprep.subr.bf16.mxu0 %v619
        %709 = vmatpush1.bf16.msra.mxu0 %v618
        %710 = vmatprep.subr.bf16.mxu0 %v623
        %711 = vmatpush1.bf16.msra.mxu0 %v622
        %712 = vmatprep.subr.bf16.mxu0 %v627
        %713 = vmatpush1.bf16.msra.mxu0 %v626
        %714 = vmatprep.subr.bf16.mxu0 %v631
        %715 = vmatpush1.bf16.msra.mxu0 %v630
        %716 = vmatprep.subr.bf16.mxu0 %v635
        %717 = vmatpush1.bf16.msra.mxu0 %v634
        %718 = vmatprep.subr.bf16.mxu0 %v639
        %719 = vmatpush1.bf16.msra.mxu0 %v638
        %720 = vmatprep.subr.bf16.mxu0 %v643
        %721 = vmatpush1.bf16.msra.mxu0 %v642
        %722 = vmatprep.subr.bf16.mxu0 0
        %723 = vmatpush1.bf16.msra.mxu0 0
        %724 = vmatprep.subr.bf16.mxu0 0
        %725 = vmatpush1.bf16.msra.mxu0 0
        %726 = vmatprep.subr.bf16.mxu0 0
        %727 = vmatpush1.bf16.msra.mxu0 0
        %728 = vmatprep.subr.bf16.mxu0 0
        %729 = vmatpush1.bf16.msra.mxu0 0
        %730 = vmatprep.mubr.bf16.mxu0 %v696
        %731 = vmatmul.mubr.bf16.gmra.mrb[0].mxu0 %v445
        %v732 = vpop.f32.mrb[0].mxu0
        %v733 = vadd.f32 0.0, %v732
        %v734 = vpop.f32.mrb[0].mxu0
        %v735 = vadd.f32 0.0, %v734
        %v736 = vpop.f32.mrb[0].mxu0
        %v737 = vadd.f32 0.0, %v736
        %v738 = vpop.f32.mrb[0].mxu0
        %v739 = vadd.f32 0.0, %v738
        %740 = vdwg.mxu0
        %741 = vmatprep.subr.bf16.mxu0 %v601
        %742 = vmatpush1.bf16.msra.mxu0 %v600
        %743 = vmatprep.subr.bf16.mxu0 %v605
        %744 = vmatpush1.bf16.msra.mxu0 %v604
        %745 = vmatprep.subr.bf16.mxu0 %v609
        %746 = vmatpush1.bf16.msra.mxu0 %v608
        %747 = vmatprep.subr.bf16.mxu0 %v613
        %748 = vmatpush1.bf16.msra.mxu0 %v612
        %749 = vmatprep.subr.bf16.mxu0 %v617
        %750 = vmatpush1.bf16.msra.mxu0 %v616
        %751 = vmatprep.subr.bf16.mxu0 %v621
        %752 = vmatpush1.bf16.msra.mxu0 %v620
        %753 = vmatprep.subr.bf16.mxu0 %v625
        %754 = vmatpush1.bf16.msra.mxu0 %v624
        %755 = vmatprep.subr.bf16.mxu0 %v629
        %756 = vmatpush1.bf16.msra.mxu0 %v628
        %757 = vmatprep.subr.bf16.mxu0 %v633
        %758 = vmatpush1.bf16.msra.mxu0 %v632
        %759 = vmatprep.subr.bf16.mxu0 %v637
        %760 = vmatpush1.bf16.msra.mxu0 %v636
        %761 = vmatprep.subr.bf16.mxu0 %v641
        %762 = vmatpush1.bf16.msra.mxu0 %v640
        %763 = vmatprep.subr.bf16.mxu0 %v645
        %764 = vmatpush1.bf16.msra.mxu0 %v644
        %765 = vmatprep.subr.bf16.mxu0 0
        %766 = vmatpush1.bf16.msra.mxu0 0
        %767 = vmatprep.subr.bf16.mxu0 0
        %768 = vmatpush1.bf16.msra.mxu0 0
        %769 = vmatprep.subr.bf16.mxu0 0
        %770 = vmatpush1.bf16.msra.mxu0 0
        %771 = vmatprep.subr.bf16.mxu0 0
        %772 = vmatpush1.bf16.msra.mxu0 0
        %773 = vmatprep.mubr.bf16.mxu0 %v696
        %774 = vmatmul.mubr.bf16.gmra.mrb[0].mxu0 %v445
        %v775 = vpop.f32.mrb[0].mxu0
        %v776 = vadd.f32 0.0, %v775
        %v777 = vpop.f32.mrb[0].mxu0
        %v778 = vadd.f32 0.0, %v777
        %v779 = vpop.f32.mrb[0].mxu0
        %v780 = vadd.f32 0.0, %v779
        %v781 = vpop.f32.mrb[0].mxu0
        %v782 = vadd.f32 0.0, %v781
        %783 = vdwg.mxu0
        %v785 = vunpack.c.l.b16 %v284
        %v786 = vunpack.c.h.b16 %v284
        %v787 = vpack.c.b16 %v785, %v433
        %v788 = vpack.c.b16 %v786, %v434
        %v838 = vunpack.c.l.b16 %v285
        %v839 = vunpack.c.h.b16 %v285
        %v840 = vunpack.c.l.b16 %v286
        %v841 = vunpack.c.h.b16 %v286
        %v842 = vunpack.c.l.b16 %v287
        %v843 = vunpack.c.h.b16 %v287
        %v844 = vunpack.c.l.b16 %v288
        %v845 = vunpack.c.h.b16 %v288
        %v846 = vunpack.c.l.b16 %v289
        %v847 = vunpack.c.h.b16 %v289
        %v848 = vunpack.c.l.b16 %v290
        %v849 = vunpack.c.h.b16 %v290
        %v850 = vunpack.c.l.b16 %v291
        %v851 = vunpack.c.h.b16 %v291
        %v852 = vunpack.c.l.b16 %v292
        %v853 = vunpack.c.h.b16 %v292
        %v854 = vunpack.c.l.b16 %v293
        %v855 = vunpack.c.h.b16 %v293
        %v856 = vunpack.c.l.b16 %v294
        %v857 = vunpack.c.h.b16 %v294
        %v858 = vunpack.c.l.b16 %v295
        %v859 = vunpack.c.h.b16 %v295
        %v860 = vunpack.c.l.b16 %v296
        %v861 = vunpack.c.h.b16 %v296
        %v862 = vunpack.c.l.b16 %v297
        %v863 = vunpack.c.h.b16 %v297
        %v864 = vunpack.c.l.b16 %v298
        %v865 = vunpack.c.h.b16 %v298
        %v866 = vunpack.c.l.b16 %v299
        %v867 = vunpack.c.h.b16 %v299
        %v868 = vunpack.c.l.b16 %v300
        %v869 = vunpack.c.h.b16 %v300
        %v870 = vunpack.c.l.b16 %v301
        %v871 = vunpack.c.h.b16 %v301
        %v872 = vunpack.c.l.b16 %v302
        %v873 = vunpack.c.h.b16 %v302
        %v874 = vunpack.c.l.b16 %v303
        %v875 = vunpack.c.h.b16 %v303
        %v876 = vunpack.c.l.b16 %v304
        %v877 = vunpack.c.h.b16 %v304
        %v878 = vunpack.c.l.b16 %v305
        %v879 = vunpack.c.h.b16 %v305
        %v880 = vunpack.c.l.b16 %v306
        %v881 = vunpack.c.h.b16 %v306
        %v882 = vunpack.c.l.b16 %v307
        %v883 = vunpack.c.h.b16 %v307
        %v884 = vunpack.c.l.b16 %v308
        %v885 = vunpack.c.h.b16 %v308
        %v886 = vunpack.c.l.b16 %v309
        %v887 = vunpack.c.h.b16 %v309
        %v888 = vunpack.c.l.b16 %v310
        %v889 = vunpack.c.h.b16 %v310
        %v890 = vunpack.c.l.b16 %v311
        %v891 = vunpack.c.h.b16 %v311
        %v892 = vunpack.c.l.b16 %v312
        %v893 = vunpack.c.h.b16 %v312
        %v894 = vunpack.c.l.b16 %v313
        %v895 = vunpack.c.h.b16 %v313
        %v896 = vunpack.c.l.b16 %v314
        %v897 = vunpack.c.h.b16 %v314
        %v898 = vunpack.c.l.b16 %v315
        %v899 = vunpack.c.h.b16 %v315
        %v900 = vunpack.c.l.b16 %v316
        %v901 = vunpack.c.h.b16 %v316
        %v902 = vunpack.c.l.b16 %v317
        %v903 = vunpack.c.h.b16 %v317
        %v904 = vunpack.c.l.b16 %v318
        %v905 = vunpack.c.h.b16 %v318
        %v906 = vunpack.c.l.b16 %v319
        %v907 = vunpack.c.h.b16 %v319
        %v908 = vunpack.c.l.b16 %v320
        %v909 = vunpack.c.h.b16 %v320
        %v910 = vunpack.c.l.b16 %v321
        %v911 = vunpack.c.h.b16 %v321
        %v912 = vunpack.c.l.b16 %v322
        %v913 = vunpack.c.h.b16 %v322
        %v914 = vunpack.c.l.b16 %v323
        %v915 = vunpack.c.h.b16 %v323
        %v916 = vunpack.c.l.b16 %v324
        %v917 = vunpack.c.h.b16 %v324
        %v918 = vunpack.c.l.b16 %v325
        %v919 = vunpack.c.h.b16 %v325
        %v920 = vunpack.c.l.b16 %v326
        %v921 = vunpack.c.h.b16 %v326
        %v922 = vunpack.c.l.b16 %v327
        %v923 = vunpack.c.h.b16 %v327
        %v924 = vunpack.c.l.b16 %v328
        %v925 = vunpack.c.h.b16 %v328
        %v926 = vunpack.c.l.b16 %v329
        %v927 = vunpack.c.h.b16 %v329
        %v928 = vunpack.c.l.b16 %v330
        %v929 = vunpack.c.h.b16 %v330
        %v930 = vunpack.c.l.b16 %v331
        %v931 = vunpack.c.h.b16 %v331
        %v932 = vunpack.c.l.b16 %v332
        %v933 = vunpack.c.h.b16 %v332
        %v934 = vpack.c.b16 %v842, %v838
        %v935 = vpack.c.b16 %v843, %v839
        %v936 = vpack.c.b16 %v844, %v840
        %v937 = vpack.c.b16 %v845, %v841
        %v938 = vpack.c.b16 %v850, %v846
        %v939 = vpack.c.b16 %v851, %v847
        %v940 = vpack.c.b16 %v852, %v848
        %v941 = vpack.c.b16 %v853, %v849
        %v942 = vpack.c.b16 %v858, %v854
        %v943 = vpack.c.b16 %v859, %v855
        %v944 = vpack.c.b16 %v860, %v856
        %v945 = vpack.c.b16 %v861, %v857
        %v946 = vpack.c.b16 %v866, %v862
        %v947 = vpack.c.b16 %v867, %v863
        %v948 = vpack.c.b16 %v868, %v864
        %v949 = vpack.c.b16 %v869, %v865
        %v950 = vpack.c.b16 %v874, %v870
        %v951 = vpack.c.b16 %v875, %v871
        %v952 = vpack.c.b16 %v876, %v872
        %v953 = vpack.c.b16 %v877, %v873
        %v954 = vpack.c.b16 %v882, %v878
        %v955 = vpack.c.b16 %v883, %v879
        %v956 = vpack.c.b16 %v884, %v880
        %v957 = vpack.c.b16 %v885, %v881
        %v958 = vpack.c.b16 %v890, %v886
        %v959 = vpack.c.b16 %v891, %v887
        %v960 = vpack.c.b16 %v892, %v888
        %v961 = vpack.c.b16 %v893, %v889
        %v962 = vpack.c.b16 %v898, %v894
        %v963 = vpack.c.b16 %v899, %v895
        %v964 = vpack.c.b16 %v900, %v896
        %v965 = vpack.c.b16 %v901, %v897
        %v966 = vpack.c.b16 %v906, %v902
        %v967 = vpack.c.b16 %v907, %v903
        %v968 = vpack.c.b16 %v908, %v904
        %v969 = vpack.c.b16 %v909, %v905
        %v970 = vpack.c.b16 %v914, %v910
        %v971 = vpack.c.b16 %v915, %v911
        %v972 = vpack.c.b16 %v916, %v912
        %v973 = vpack.c.b16 %v917, %v913
        %v974 = vpack.c.b16 %v922, %v918
        %v975 = vpack.c.b16 %v923, %v919
        %v976 = vpack.c.b16 %v924, %v920
        %v977 = vpack.c.b16 %v925, %v921
        %v978 = vpack.c.b16 %v930, %v926
        %v979 = vpack.c.b16 %v931, %v927
        %v980 = vpack.c.b16 %v932, %v928
        %v981 = vpack.c.b16 %v933, %v929
        %v1031 = vsel %vm694, %v788, 0
        %1033 = vmatprep.subr.bf16.mxu0 %v935
        %1034 = vmatpush1.bf16.msra.mxu0 %v934
        %1035 = vmatprep.subr.bf16.mxu0 %v939
        %1036 = vmatpush1.bf16.msra.mxu0 %v938
        %1037 = vmatprep.subr.bf16.mxu0 %v943
        %1038 = vmatpush1.bf16.msra.mxu0 %v942
        %1039 = vmatprep.subr.bf16.mxu0 %v947
        %1040 = vmatpush1.bf16.msra.mxu0 %v946
        %1041 = vmatprep.subr.bf16.mxu0 %v951
        %1042 = vmatpush1.bf16.msra.mxu0 %v950
        %1043 = vmatprep.subr.bf16.mxu0 %v955
        %1044 = vmatpush1.bf16.msra.mxu0 %v954
        %1045 = vmatprep.subr.bf16.mxu0 %v959
        %1046 = vmatpush1.bf16.msra.mxu0 %v958
        %1047 = vmatprep.subr.bf16.mxu0 %v963
        %1048 = vmatpush1.bf16.msra.mxu0 %v962
        %1049 = vmatprep.subr.bf16.mxu0 %v967
        %1050 = vmatpush1.bf16.msra.mxu0 %v966
        %1051 = vmatprep.subr.bf16.mxu0 %v971
        %1052 = vmatpush1.bf16.msra.mxu0 %v970
        %1053 = vmatprep.subr.bf16.mxu0 %v975
        %1054 = vmatpush1.bf16.msra.mxu0 %v974
        %1055 = vmatprep.subr.bf16.mxu0 %v979
        %1056 = vmatpush1.bf16.msra.mxu0 %v978
        %1057 = vmatprep.subr.bf16.mxu0 0
        %1058 = vmatpush1.bf16.msra.mxu0 0
        %1059 = vmatprep.subr.bf16.mxu0 0
        %1060 = vmatpush1.bf16.msra.mxu0 0
        %1061 = vmatprep.subr.bf16.mxu0 0
        %1062 = vmatpush1.bf16.msra.mxu0 0
        %1063 = vmatprep.subr.bf16.mxu0 0
        %1064 = vmatpush1.bf16.msra.mxu0 0
        %1065 = vmatprep.mubr.bf16.mxu0 %v1031
        %1066 = vmatmul.mubr.bf16.gmra.mrb[0].mxu0 %v787
        %v1067 = vpop.f32.mrb[0].mxu0
        %v1068 = vadd.f32 %v733, %v1067
        %v1069 = vpop.f32.mrb[0].mxu0
        %v1070 = vadd.f32 %v735, %v1069
        %v1071 = vpop.f32.mrb[0].mxu0
        %v1072 = vadd.f32 %v737, %v1071
        %v1073 = vpop.f32.mrb[0].mxu0
        %v1074 = vadd.f32 %v739, %v1073
        %1075 = vdwg.mxu0
        %1076 = vmatprep.subr.bf16.mxu0 %v937
        %1077 = vmatpush1.bf16.msra.mxu0 %v936
        %1078 = vmatprep.subr.bf16.mxu0 %v941
        %1079 = vmatpush1.bf16.msra.mxu0 %v940
        %1080 = vmatprep.subr.bf16.mxu0 %v945
        %1081 = vmatpush1.bf16.msra.mxu0 %v944
        %1082 = vmatprep.subr.bf16.mxu0 %v949
        %1083 = vmatpush1.bf16.msra.mxu0 %v948
        %1084 = vmatprep.subr.bf16.mxu0 %v953
        %1085 = vmatpush1.bf16.msra.mxu0 %v952
        %1086 = vmatprep.subr.bf16.mxu0 %v957
        %1087 = vmatpush1.bf16.msra.mxu0 %v956
        %1088 = vmatprep.subr.bf16.mxu0 %v961
        %1089 = vmatpush1.bf16.msra.mxu0 %v960
        %1090 = vmatprep.subr.bf16.mxu0 %v965
        %1091 = vmatpush1.bf16.msra.mxu0 %v964
        %1092 = vmatprep.subr.bf16.mxu0 %v969
        %1093 = vmatpush1.bf16.msra.mxu0 %v968
        %1094 = vmatprep.subr.bf16.mxu0 %v973
        %1095 = vmatpush1.bf16.msra.mxu0 %v972
        %1096 = vmatprep.subr.bf16.mxu0 %v977
        %1097 = vmatpush1.bf16.msra.mxu0 %v976
        %1098 = vmatprep.subr.bf16.mxu0 %v981
        %1099 = vmatpush1.bf16.msra.mxu0 %v980
        %1100 = vmatprep.subr.bf16.mxu0 0
        %1101 = vmatpush1.bf16.msra.mxu0 0
        %1102 = vmatprep.subr.bf16.mxu0 0
        %1103 = vmatpush1.bf16.msra.mxu0 0
        %1104 = vmatprep.subr.bf16.mxu0 0
        %1105 = vmatpush1.bf16.msra.mxu0 0
        %1106 = vmatprep.subr.bf16.mxu0 0
        %1107 = vmatpush1.bf16.msra.mxu0 0
        %1108 = vmatprep.mubr.bf16.mxu0 %v1031
        %1109 = vmatmul.mubr.bf16.gmra.mrb[0].mxu0 %v787
        %v1110 = vpop.f32.mrb[0].mxu0
        %v1111 = vadd.f32 %v776, %v1110
        %v1112 = vpop.f32.mrb[0].mxu0
        %v1113 = vadd.f32 %v778, %v1112
        %v1114 = vpop.f32.mrb[0].mxu0
        %v1115 = vadd.f32 %v780, %v1114
        %v1116 = vpop.f32.mrb[0].mxu0
        %v1117 = vadd.f32 %v782, %v1116
        %1118 = vdwg.mxu0
        %s1119 = scalar_lea.vmem %s2, 384
        %v1120 = vld [vmem:[%s1119] sm:$0xff]
        %v1121 = vld [vmem:[%s1119 + $0x8] sm:$0xff]
        %v1122 = vld [vmem:[%s1119 + $0x10] sm:$0xff]
        %v1123 = vld [vmem:[%s1119 + $0x18] sm:$0xff]
        %v1124 = vld [vmem:[%s1119 + $0x20] sm:$0xff]
        %v1125 = vld [vmem:[%s1119 + $0x28] sm:$0xff]
        %v1126 = vld [vmem:[%s1119 + $0x30] sm:$0xff]
        %v1127 = vld [vmem:[%s1119 + $0x38] sm:$0xff]
        %v1128 = vld [vmem:[%s1119 + $0x40] sm:$0xff]
        %v1129 = vld [vmem:[%s1119 + $0x48] sm:$0xff]
        %v1130 = vld [vmem:[%s1119 + $0x50] sm:$0xff]
        %v1131 = vld [vmem:[%s1119 + $0x58] sm:$0xff]
        %v1132 = vld [vmem:[%s1119 + $0x60] sm:$0xff]
        %v1133 = vld [vmem:[%s1119 + $0x68] sm:$0xff]
        %v1134 = vld [vmem:[%s1119 + $0x70] sm:$0xff]
        %v1135 = vld [vmem:[%s1119 + $0x78] sm:$0xff]
        %v1136 = vld [vmem:[%s1119 + $0x80] sm:$0xff]
        %v1137 = vld [vmem:[%s1119 + $0x88] sm:$0xff]
        %v1138 = vld [vmem:[%s1119 + $0x90] sm:$0xff]
        %v1139 = vld [vmem:[%s1119 + $0x98] sm:$0xff]
        %v1140 = vld [vmem:[%s1119 + $0xa0] sm:$0xff]
        %v1141 = vld [vmem:[%s1119 + $0xa8] sm:$0xff]
        %v1142 = vld [vmem:[%s1119 + $0xb0] sm:$0xff]
        %v1143 = vld [vmem:[%s1119 + $0xb8] sm:$0xff]
        %v1144 = vld [vmem:[%s1119 + $0xc0] sm:$0xff]
        %v1145 = vld [vmem:[%s1119 + $0xc8] sm:$0xff]
        %v1146 = vld [vmem:[%s1119 + $0xd0] sm:$0xff]
        %v1147 = vld [vmem:[%s1119 + $0xd8] sm:$0xff]
        %v1148 = vld [vmem:[%s1119 + $0xe0] sm:$0xff]
        %v1149 = vld [vmem:[%s1119 + $0xe8] sm:$0xff]
        %v1150 = vld [vmem:[%s1119 + $0xf0] sm:$0xff]
        %v1151 = vld [vmem:[%s1119 + $0xf8] sm:$0xff]
        %v1152 = vld [vmem:[%s1119 + $0x100] sm:$0xff]
        %v1153 = vld [vmem:[%s1119 + $0x108] sm:$0xff]
        %v1154 = vld [vmem:[%s1119 + $0x110] sm:$0xff]
        %v1155 = vld [vmem:[%s1119 + $0x118] sm:$0xff]
        %v1156 = vld [vmem:[%s1119 + $0x120] sm:$0xff]
        %v1157 = vld [vmem:[%s1119 + $0x128] sm:$0xff]
        %v1158 = vld [vmem:[%s1119 + $0x130] sm:$0xff]
        %v1159 = vld [vmem:[%s1119 + $0x138] sm:$0xff]
        %v1160 = vld [vmem:[%s1119 + $0x140] sm:$0xff]
        %v1161 = vld [vmem:[%s1119 + $0x148] sm:$0xff]
        %v1162 = vld [vmem:[%s1119 + $0x150] sm:$0xff]
        %v1163 = vld [vmem:[%s1119 + $0x158] sm:$0xff]
        %v1164 = vld [vmem:[%s1119 + $0x160] sm:$0xff]
        %v1165 = vld [vmem:[%s1119 + $0x168] sm:$0xff]
        %v1166 = vld [vmem:[%s1119 + $0x170] sm:$0xff]
        %v1167 = vld [vmem:[%s1119 + $0x178] sm:$0xff]
        %v1216 = vunpack.c.l.b16 %v1120
        %v1217 = vunpack.c.h.b16 %v1120
        %v1218 = vunpack.c.l.b16 %v1121
        %v1219 = vunpack.c.h.b16 %v1121
        %v1220 = vunpack.c.l.b16 %v1122
        %v1221 = vunpack.c.h.b16 %v1122
        %v1222 = vunpack.c.l.b16 %v1123
        %v1223 = vunpack.c.h.b16 %v1123
        %v1224 = vunpack.c.l.b16 %v1124
        %v1225 = vunpack.c.h.b16 %v1124
        %v1226 = vunpack.c.l.b16 %v1125
        %v1227 = vunpack.c.h.b16 %v1125
        %v1228 = vunpack.c.l.b16 %v1126
        %v1229 = vunpack.c.h.b16 %v1126
        %v1230 = vunpack.c.l.b16 %v1127
        %v1231 = vunpack.c.h.b16 %v1127
        %v1232 = vunpack.c.l.b16 %v1128
        %v1233 = vunpack.c.h.b16 %v1128
        %v1234 = vunpack.c.l.b16 %v1129
        %v1235 = vunpack.c.h.b16 %v1129
        %v1236 = vunpack.c.l.b16 %v1130
        %v1237 = vunpack.c.h.b16 %v1130
        %v1238 = vunpack.c.l.b16 %v1131
        %v1239 = vunpack.c.h.b16 %v1131
        %v1240 = vunpack.c.l.b16 %v1132
        %v1241 = vunpack.c.h.b16 %v1132
        %v1242 = vunpack.c.l.b16 %v1133
        %v1243 = vunpack.c.h.b16 %v1133
        %v1244 = vunpack.c.l.b16 %v1134
        %v1245 = vunpack.c.h.b16 %v1134
        %v1246 = vunpack.c.l.b16 %v1135
        %v1247 = vunpack.c.h.b16 %v1135
        %v1248 = vunpack.c.l.b16 %v1136
        %v1249 = vunpack.c.h.b16 %v1136
        %v1250 = vunpack.c.l.b16 %v1137
        %v1251 = vunpack.c.h.b16 %v1137
        %v1252 = vunpack.c.l.b16 %v1138
        %v1253 = vunpack.c.h.b16 %v1138
        %v1254 = vunpack.c.l.b16 %v1139
        %v1255 = vunpack.c.h.b16 %v1139
        %v1256 = vunpack.c.l.b16 %v1140
        %v1257 = vunpack.c.h.b16 %v1140
        %v1258 = vunpack.c.l.b16 %v1141
        %v1259 = vunpack.c.h.b16 %v1141
        %v1260 = vunpack.c.l.b16 %v1142
        %v1261 = vunpack.c.h.b16 %v1142
        %v1262 = vunpack.c.l.b16 %v1143
        %v1263 = vunpack.c.h.b16 %v1143
        %v1264 = vunpack.c.l.b16 %v1144
        %v1265 = vunpack.c.h.b16 %v1144
        %v1266 = vunpack.c.l.b16 %v1145
        %v1267 = vunpack.c.h.b16 %v1145
        %v1268 = vunpack.c.l.b16 %v1146
        %v1269 = vunpack.c.h.b16 %v1146
        %v1270 = vunpack.c.l.b16 %v1147
        %v1271 = vunpack.c.h.b16 %v1147
        %v1272 = vunpack.c.l.b16 %v1148
        %v1273 = vunpack.c.h.b16 %v1148
        %v1274 = vunpack.c.l.b16 %v1149
        %v1275 = vunpack.c.h.b16 %v1149
        %v1276 = vunpack.c.l.b16 %v1150
        %v1277 = vunpack.c.h.b16 %v1150
        %v1278 = vunpack.c.l.b16 %v1151
        %v1279 = vunpack.c.h.b16 %v1151
        %v1280 = vunpack.c.l.b16 %v1152
        %v1281 = vunpack.c.h.b16 %v1152
        %v1282 = vunpack.c.l.b16 %v1153
        %v1283 = vunpack.c.h.b16 %v1153
        %v1284 = vunpack.c.l.b16 %v1154
        %v1285 = vunpack.c.h.b16 %v1154
        %v1286 = vunpack.c.l.b16 %v1155
        %v1287 = vunpack.c.h.b16 %v1155
        %v1288 = vunpack.c.l.b16 %v1156
        %v1289 = vunpack.c.h.b16 %v1156
        %v1290 = vunpack.c.l.b16 %v1157
        %v1291 = vunpack.c.h.b16 %v1157
        %v1292 = vunpack.c.l.b16 %v1158
        %v1293 = vunpack.c.h.b16 %v1158
        %v1294 = vunpack.c.l.b16 %v1159
        %v1295 = vunpack.c.h.b16 %v1159
        %v1296 = vunpack.c.l.b16 %v1160
        %v1297 = vunpack.c.h.b16 %v1160
        %v1298 = vunpack.c.l.b16 %v1161
        %v1299 = vunpack.c.h.b16 %v1161
        %v1300 = vunpack.c.l.b16 %v1162
        %v1301 = vunpack.c.h.b16 %v1162
        %v1302 = vunpack.c.l.b16 %v1163
        %v1303 = vunpack.c.h.b16 %v1163
        %v1304 = vunpack.c.l.b16 %v1164
        %v1305 = vunpack.c.h.b16 %v1164
        %v1306 = vunpack.c.l.b16 %v1165
        %v1307 = vunpack.c.h.b16 %v1165
        %v1308 = vunpack.c.l.b16 %v1166
        %v1309 = vunpack.c.h.b16 %v1166
        %v1310 = vunpack.c.l.b16 %v1167
        %v1311 = vunpack.c.h.b16 %v1167
        %v1312 = vpack.c.b16 %v1220, %v1216
        %v1313 = vpack.c.b16 %v1221, %v1217
        %v1314 = vpack.c.b16 %v1222, %v1218
        %v1315 = vpack.c.b16 %v1223, %v1219
        %v1316 = vpack.c.b16 %v1228, %v1224
        %v1317 = vpack.c.b16 %v1229, %v1225
        %v1318 = vpack.c.b16 %v1230, %v1226
        %v1319 = vpack.c.b16 %v1231, %v1227
        %v1320 = vpack.c.b16 %v1236, %v1232
        %v1321 = vpack.c.b16 %v1237, %v1233
        %v1322 = vpack.c.b16 %v1238, %v1234
        %v1323 = vpack.c.b16 %v1239, %v1235
        %v1324 = vpack.c.b16 %v1244, %v1240
        %v1325 = vpack.c.b16 %v1245, %v1241
        %v1326 = vpack.c.b16 %v1246, %v1242
        %v1327 = vpack.c.b16 %v1247, %v1243
        %v1328 = vpack.c.b16 %v1252, %v1248
        %v1329 = vpack.c.b16 %v1253, %v1249
        %v1330 = vpack.c.b16 %v1254, %v1250
        %v1331 = vpack.c.b16 %v1255, %v1251
        %v1332 = vpack.c.b16 %v1260, %v1256
        %v1333 = vpack.c.b16 %v1261, %v1257
        %v1334 = vpack.c.b16 %v1262, %v1258
        %v1335 = vpack.c.b16 %v1263, %v1259
        %v1336 = vpack.c.b16 %v1268, %v1264
        %v1337 = vpack.c.b16 %v1269, %v1265
        %v1338 = vpack.c.b16 %v1270, %v1266
        %v1339 = vpack.c.b16 %v1271, %v1267
        %v1340 = vpack.c.b16 %v1276, %v1272
        %v1341 = vpack.c.b16 %v1277, %v1273
        %v1342 = vpack.c.b16 %v1278, %v1274
        %v1343 = vpack.c.b16 %v1279, %v1275
        %v1344 = vpack.c.b16 %v1284, %v1280
        %v1345 = vpack.c.b16 %v1285, %v1281
        %v1346 = vpack.c.b16 %v1286, %v1282
        %v1347 = vpack.c.b16 %v1287, %v1283
        %v1348 = vpack.c.b16 %v1292, %v1288
        %v1349 = vpack.c.b16 %v1293, %v1289
        %v1350 = vpack.c.b16 %v1294, %v1290
        %v1351 = vpack.c.b16 %v1295, %v1291
        %v1352 = vpack.c.b16 %v1300, %v1296
        %v1353 = vpack.c.b16 %v1301, %v1297
        %v1354 = vpack.c.b16 %v1302, %v1298
        %v1355 = vpack.c.b16 %v1303, %v1299
        %v1356 = vpack.c.b16 %v1308, %v1304
        %v1357 = vpack.c.b16 %v1309, %v1305
        %v1358 = vpack.c.b16 %v1310, %v1306
        %v1359 = vpack.c.b16 %v1311, %v1307
        %1408 = vmatprep.subr.bf16.mxu0 %v1313
        %1409 = vmatpush1.bf16.msra.mxu0 %v1312
        %1410 = vmatprep.subr.bf16.mxu0 %v1317
        %1411 = vmatpush1.bf16.msra.mxu0 %v1316
        %1412 = vmatprep.subr.bf16.mxu0 %v1321
        %1413 = vmatpush1.bf16.msra.mxu0 %v1320
        %1414 = vmatprep.subr.bf16.mxu0 %v1325
        %1415 = vmatpush1.bf16.msra.mxu0 %v1324
        %1416 = vmatprep.subr.bf16.mxu0 %v1329
        %1417 = vmatpush1.bf16.msra.mxu0 %v1328
        %1418 = vmatprep.subr.bf16.mxu0 %v1333
        %1419 = vmatpush1.bf16.msra.mxu0 %v1332
        %1420 = vmatprep.subr.bf16.mxu0 %v1337
        %1421 = vmatpush1.bf16.msra.mxu0 %v1336
        %1422 = vmatprep.subr.bf16.mxu0 %v1341
        %1423 = vmatpush1.bf16.msra.mxu0 %v1340
        %1424 = vmatprep.subr.bf16.mxu0 %v1345
        %1425 = vmatpush1.bf16.msra.mxu0 %v1344
        %1426 = vmatprep.subr.bf16.mxu0 %v1349
        %1427 = vmatpush1.bf16.msra.mxu0 %v1348
        %1428 = vmatprep.subr.bf16.mxu0 %v1353
        %1429 = vmatpush1.bf16.msra.mxu0 %v1352
        %1430 = vmatprep.subr.bf16.mxu0 %v1357
        %1431 = vmatpush1.bf16.msra.mxu0 %v1356
        %1432 = vmatprep.subr.bf16.mxu0 0
        %1433 = vmatpush1.bf16.msra.mxu0 0
        %1434 = vmatprep.subr.bf16.mxu0 0
        %1435 = vmatpush1.bf16.msra.mxu0 0
        %1436 = vmatprep.subr.bf16.mxu0 0
        %1437 = vmatpush1.bf16.msra.mxu0 0
        %1438 = vmatprep.subr.bf16.mxu0 0
        %1439 = vmatpush1.bf16.msra.mxu0 0
        %1440 = vmatprep.mubr.bf16.mxu0 %v696
        %1441 = vmatmul.mubr.bf16.gmra.mrb[0].mxu0 %v445
        %v1442 = vpop.f32.mrb[0].mxu0
        %v1443 = vadd.f32 0.0, %v1442
        %v1444 = vpop.f32.mrb[0].mxu0
        %v1445 = vadd.f32 0.0, %v1444
        %v1446 = vpop.f32.mrb[0].mxu0
        %v1447 = vadd.f32 0.0, %v1446
        %v1448 = vpop.f32.mrb[0].mxu0
        %v1449 = vadd.f32 0.0, %v1448
        %1450 = vdwg.mxu0
        %1451 = vmatprep.subr.bf16.mxu0 %v1315
        %1452 = vmatpush1.bf16.msra.mxu0 %v1314
        %1453 = vmatprep.subr.bf16.mxu0 %v1319
        %1454 = vmatpush1.bf16.msra.mxu0 %v1318
        %1455 = vmatprep.subr.bf16.mxu0 %v1323
        %1456 = vmatpush1.bf16.msra.mxu0 %v1322
        %1457 = vmatprep.subr.bf16.mxu0 %v1327
        %1458 = vmatpush1.bf16.msra.mxu0 %v1326
        %1459 = vmatprep.subr.bf16.mxu0 %v1331
        %1460 = vmatpush1.bf16.msra.mxu0 %v1330
        %1461 = vmatprep.subr.bf16.mxu0 %v1335
        %1462 = vmatpush1.bf16.msra.mxu0 %v1334
        %1463 = vmatprep.subr.bf16.mxu0 %v1339
        %1464 = vmatpush1.bf16.msra.mxu0 %v1338
        %1465 = vmatprep.subr.bf16.mxu0 %v1343
        %1466 = vmatpush1.bf16.msra.mxu0 %v1342
        %1467 = vmatprep.subr.bf16.mxu0 %v1347
        %1468 = vmatpush1.bf16.msra.mxu0 %v1346
        %1469 = vmatprep.subr.bf16.mxu0 %v1351
        %1470 = vmatpush1.bf16.msra.mxu0 %v1350
        %1471 = vmatprep.subr.bf16.mxu0 %v1355
        %1472 = vmatpush1.bf16.msra.mxu0 %v1354
        %1473 = vmatprep.subr.bf16.mxu0 %v1359
        %1474 = vmatpush1.bf16.msra.mxu0 %v1358
        %1475 = vmatprep.subr.bf16.mxu0 0
        %1476 = vmatpush1.bf16.msra.mxu0 0
        %1477 = vmatprep.subr.bf16.mxu0 0
        %1478 = vmatpush1.bf16.msra.mxu0 0
        %1479 = vmatprep.subr.bf16.mxu0 0
        %1480 = vmatpush1.bf16.msra.mxu0 0
        %1481 = vmatprep.subr.bf16.mxu0 0
        %1482 = vmatpush1.bf16.msra.mxu0 0
        %1483 = vmatprep.mubr.bf16.mxu0 %v696
        %1484 = vmatmul.mubr.bf16.gmra.mrb[0].mxu0 %v445
        %v1485 = vpop.f32.mrb[0].mxu0
        %v1486 = vadd.f32 0.0, %v1485
        %v1487 = vpop.f32.mrb[0].mxu0
        %v1488 = vadd.f32 0.0, %v1487
        %v1489 = vpop.f32.mrb[0].mxu0
        %v1490 = vadd.f32 0.0, %v1489
        %v1491 = vpop.f32.mrb[0].mxu0
        %v1492 = vadd.f32 0.0, %v1491
        %1493 = vdwg.mxu0
        %v1542 = vunpack.c.l.b16 %v333
        %v1543 = vunpack.c.h.b16 %v333
        %v1544 = vunpack.c.l.b16 %v334
        %v1545 = vunpack.c.h.b16 %v334
        %v1546 = vunpack.c.l.b16 %v335
        %v1547 = vunpack.c.h.b16 %v335
        %v1548 = vunpack.c.l.b16 %v336
        %v1549 = vunpack.c.h.b16 %v336
        %v1550 = vunpack.c.l.b16 %v337
        %v1551 = vunpack.c.h.b16 %v337
        %v1552 = vunpack.c.l.b16 %v338
        %v1553 = vunpack.c.h.b16 %v338
        %v1554 = vunpack.c.l.b16 %v339
        %v1555 = vunpack.c.h.b16 %v339
        %v1556 = vunpack.c.l.b16 %v340
        %v1557 = vunpack.c.h.b16 %v340
        %v1558 = vunpack.c.l.b16 %v341
        %v1559 = vunpack.c.h.b16 %v341
        %v1560 = vunpack.c.l.b16 %v342
        %v1561 = vunpack.c.h.b16 %v342
        %v1562 = vunpack.c.l.b16 %v343
        %v1563 = vunpack.c.h.b16 %v343
        %v1564 = vunpack.c.l.b16 %v344
        %v1565 = vunpack.c.h.b16 %v344
        %v1566 = vunpack.c.l.b16 %v345
        %v1567 = vunpack.c.h.b16 %v345
        %v1568 = vunpack.c.l.b16 %v346
        %v1569 = vunpack.c.h.b16 %v346
        %v1570 = vunpack.c.l.b16 %v347
        %v1571 = vunpack.c.h.b16 %v347
        %v1572 = vunpack.c.l.b16 %v348
        %v1573 = vunpack.c.h.b16 %v348
        %v1574 = vunpack.c.l.b16 %v349
        %v1575 = vunpack.c.h.b16 %v349
        %v1576 = vunpack.c.l.b16 %v350
        %v1577 = vunpack.c.h.b16 %v350
        %v1578 = vunpack.c.l.b16 %v351
        %v1579 = vunpack.c.h.b16 %v351
        %v1580 = vunpack.c.l.b16 %v352
        %v1581 = vunpack.c.h.b16 %v352
        %v1582 = vunpack.c.l.b16 %v353
        %v1583 = vunpack.c.h.b16 %v353
        %v1584 = vunpack.c.l.b16 %v354
        %v1585 = vunpack.c.h.b16 %v354
        %v1586 = vunpack.c.l.b16 %v355
        %v1587 = vunpack.c.h.b16 %v355
        %v1588 = vunpack.c.l.b16 %v356
        %v1589 = vunpack.c.h.b16 %v356
        %v1590 = vunpack.c.l.b16 %v357
        %v1591 = vunpack.c.h.b16 %v357
        %v1592 = vunpack.c.l.b16 %v358
        %v1593 = vunpack.c.h.b16 %v358
        %v1594 = vunpack.c.l.b16 %v359
        %v1595 = vunpack.c.h.b16 %v359
        %v1596 = vunpack.c.l.b16 %v360
        %v1597 = vunpack.c.h.b16 %v360
        %v1598 = vunpack.c.l.b16 %v361
        %v1599 = vunpack.c.h.b16 %v361
        %v1600 = vunpack.c.l.b16 %v362
        %v1601 = vunpack.c.h.b16 %v362
        %v1602 = vunpack.c.l.b16 %v363
        %v1603 = vunpack.c.h.b16 %v363
        %v1604 = vunpack.c.l.b16 %v364
        %v1605 = vunpack.c.h.b16 %v364
        %v1606 = vunpack.c.l.b16 %v365
        %v1607 = vunpack.c.h.b16 %v365
        %v1608 = vunpack.c.l.b16 %v366
        %v1609 = vunpack.c.h.b16 %v366
        %v1610 = vunpack.c.l.b16 %v367
        %v1611 = vunpack.c.h.b16 %v367
        %v1612 = vunpack.c.l.b16 %v368
        %v1613 = vunpack.c.h.b16 %v368
        %v1614 = vunpack.c.l.b16 %v369
        %v1615 = vunpack.c.h.b16 %v369
        %v1616 = vunpack.c.l.b16 %v370
        %v1617 = vunpack.c.h.b16 %v370
        %v1618 = vunpack.c.l.b16 %v371
        %v1619 = vunpack.c.h.b16 %v371
        %v1620 = vunpack.c.l.b16 %v372
        %v1621 = vunpack.c.h.b16 %v372
        %v1622 = vunpack.c.l.b16 %v373
        %v1623 = vunpack.c.h.b16 %v373
        %v1624 = vunpack.c.l.b16 %v374
        %v1625 = vunpack.c.h.b16 %v374
        %v1626 = vunpack.c.l.b16 %v375
        %v1627 = vunpack.c.h.b16 %v375
        %v1628 = vunpack.c.l.b16 %v376
        %v1629 = vunpack.c.h.b16 %v376
        %v1630 = vunpack.c.l.b16 %v377
        %v1631 = vunpack.c.h.b16 %v377
        %v1632 = vunpack.c.l.b16 %v378
        %v1633 = vunpack.c.h.b16 %v378
        %v1634 = vunpack.c.l.b16 %v379
        %v1635 = vunpack.c.h.b16 %v379
        %v1636 = vunpack.c.l.b16 %v380
        %v1637 = vunpack.c.h.b16 %v380
        %v1638 = vpack.c.b16 %v1546, %v1542
        %v1639 = vpack.c.b16 %v1547, %v1543
        %v1640 = vpack.c.b16 %v1548, %v1544
        %v1641 = vpack.c.b16 %v1549, %v1545
        %v1642 = vpack.c.b16 %v1554, %v1550
        %v1643 = vpack.c.b16 %v1555, %v1551
        %v1644 = vpack.c.b16 %v1556, %v1552
        %v1645 = vpack.c.b16 %v1557, %v1553
        %v1646 = vpack.c.b16 %v1562, %v1558
        %v1647 = vpack.c.b16 %v1563, %v1559
        %v1648 = vpack.c.b16 %v1564, %v1560
        %v1649 = vpack.c.b16 %v1565, %v1561
        %v1650 = vpack.c.b16 %v1570, %v1566
        %v1651 = vpack.c.b16 %v1571, %v1567
        %v1652 = vpack.c.b16 %v1572, %v1568
        %v1653 = vpack.c.b16 %v1573, %v1569
        %v1654 = vpack.c.b16 %v1578, %v1574
        %v1655 = vpack.c.b16 %v1579, %v1575
        %v1656 = vpack.c.b16 %v1580, %v1576
        %v1657 = vpack.c.b16 %v1581, %v1577
        %v1658 = vpack.c.b16 %v1586, %v1582
        %v1659 = vpack.c.b16 %v1587, %v1583
        %v1660 = vpack.c.b16 %v1588, %v1584
        %v1661 = vpack.c.b16 %v1589, %v1585
        %v1662 = vpack.c.b16 %v1594, %v1590
        %v1663 = vpack.c.b16 %v1595, %v1591
        %v1664 = vpack.c.b16 %v1596, %v1592
        %v1665 = vpack.c.b16 %v1597, %v1593
        %v1666 = vpack.c.b16 %v1602, %v1598
        %v1667 = vpack.c.b16 %v1603, %v1599
        %v1668 = vpack.c.b16 %v1604, %v1600
        %v1669 = vpack.c.b16 %v1605, %v1601
        %v1670 = vpack.c.b16 %v1610, %v1606
        %v1671 = vpack.c.b16 %v1611, %v1607
        %v1672 = vpack.c.b16 %v1612, %v1608
        %v1673 = vpack.c.b16 %v1613, %v1609
        %v1674 = vpack.c.b16 %v1618, %v1614
        %v1675 = vpack.c.b16 %v1619, %v1615
        %v1676 = vpack.c.b16 %v1620, %v1616
        %v1677 = vpack.c.b16 %v1621, %v1617
        %v1678 = vpack.c.b16 %v1626, %v1622
        %v1679 = vpack.c.b16 %v1627, %v1623
        %v1680 = vpack.c.b16 %v1628, %v1624
        %v1681 = vpack.c.b16 %v1629, %v1625
        %v1682 = vpack.c.b16 %v1634, %v1630
        %v1683 = vpack.c.b16 %v1635, %v1631
        %v1684 = vpack.c.b16 %v1636, %v1632
        %v1685 = vpack.c.b16 %v1637, %v1633
        %1734 = vmatprep.subr.bf16.mxu0 %v1639
        %1735 = vmatpush1.bf16.msra.mxu0 %v1638
        %1736 = vmatprep.subr.bf16.mxu0 %v1643
        %1737 = vmatpush1.bf16.msra.mxu0 %v1642
        %1738 = vmatprep.subr.bf16.mxu0 %v1647
        %1739 = vmatpush1.bf16.msra.mxu0 %v1646
        %1740 = vmatprep.subr.bf16.mxu0 %v1651
        %1741 = vmatpush1.bf16.msra.mxu0 %v1650
        %1742 = vmatprep.subr.bf16.mxu0 %v1655
        %1743 = vmatpush1.bf16.msra.mxu0 %v1654
        %1744 = vmatprep.subr.bf16.mxu0 %v1659
        %1745 = vmatpush1.bf16.msra.mxu0 %v1658
        %1746 = vmatprep.subr.bf16.mxu0 %v1663
        %1747 = vmatpush1.bf16.msra.mxu0 %v1662
        %1748 = vmatprep.subr.bf16.mxu0 %v1667
        %1749 = vmatpush1.bf16.msra.mxu0 %v1666
        %1750 = vmatprep.subr.bf16.mxu0 %v1671
        %1751 = vmatpush1.bf16.msra.mxu0 %v1670
        %1752 = vmatprep.subr.bf16.mxu0 %v1675
        %1753 = vmatpush1.bf16.msra.mxu0 %v1674
        %1754 = vmatprep.subr.bf16.mxu0 %v1679
        %1755 = vmatpush1.bf16.msra.mxu0 %v1678
        %1756 = vmatprep.subr.bf16.mxu0 %v1683
        %1757 = vmatpush1.bf16.msra.mxu0 %v1682
        %1758 = vmatprep.subr.bf16.mxu0 0
        %1759 = vmatpush1.bf16.msra.mxu0 0
        %1760 = vmatprep.subr.bf16.mxu0 0
        %1761 = vmatpush1.bf16.msra.mxu0 0
        %1762 = vmatprep.subr.bf16.mxu0 0
        %1763 = vmatpush1.bf16.msra.mxu0 0
        %1764 = vmatprep.subr.bf16.mxu0 0
        %1765 = vmatpush1.bf16.msra.mxu0 0
        %1766 = vmatprep.mubr.bf16.mxu0 %v1031
        %1767 = vmatmul.mubr.bf16.gmra.mrb[0].mxu0 %v787
        %v1768 = vpop.f32.mrb[0].mxu0
        %v1769 = vadd.f32 %v1443, %v1768
        %v1770 = vpop.f32.mrb[0].mxu0
        %v1771 = vadd.f32 %v1445, %v1770
        %v1772 = vpop.f32.mrb[0].mxu0
        %v1773 = vadd.f32 %v1447, %v1772
        %v1774 = vpop.f32.mrb[0].mxu0
        %v1775 = vadd.f32 %v1449, %v1774
        %1776 = vdwg.mxu0
        %1777 = vmatprep.subr.bf16.mxu0 %v1641
        %1778 = vmatpush1.bf16.msra.mxu0 %v1640
        %1779 = vmatprep.subr.bf16.mxu0 %v1645
        %1780 = vmatpush1.bf16.msra.mxu0 %v1644
        %1781 = vmatprep.subr.bf16.mxu0 %v1649
        %1782 = vmatpush1.bf16.msra.mxu0 %v1648
        %1783 = vmatprep.subr.bf16.mxu0 %v1653
        %1784 = vmatpush1.bf16.msra.mxu0 %v1652
        %1785 = vmatprep.subr.bf16.mxu0 %v1657
        %1786 = vmatpush1.bf16.msra.mxu0 %v1656
        %1787 = vmatprep.subr.bf16.mxu0 %v1661
        %1788 = vmatpush1.bf16.msra.mxu0 %v1660
        %1789 = vmatprep.subr.bf16.mxu0 %v1665
        %1790 = vmatpush1.bf16.msra.mxu0 %v1664
        %1791 = vmatprep.subr.bf16.mxu0 %v1669
        %1792 = vmatpush1.bf16.msra.mxu0 %v1668
        %1793 = vmatprep.subr.bf16.mxu0 %v1673
        %1794 = vmatpush1.bf16.msra.mxu0 %v1672
        %1795 = vmatprep.subr.bf16.mxu0 %v1677
        %1796 = vmatpush1.bf16.msra.mxu0 %v1676
        %1797 = vmatprep.subr.bf16.mxu0 %v1681
        %1798 = vmatpush1.bf16.msra.mxu0 %v1680
        %1799 = vmatprep.subr.bf16.mxu0 %v1685
        %1800 = vmatpush1.bf16.msra.mxu0 %v1684
        %1801 = vmatprep.subr.bf16.mxu0 0
        %1802 = vmatpush1.bf16.msra.mxu0 0
        %1803 = vmatprep.subr.bf16.mxu0 0
        %1804 = vmatpush1.bf16.msra.mxu0 0
        %1805 = vmatprep.subr.bf16.mxu0 0
        %1806 = vmatpush1.bf16.msra.mxu0 0
        %1807 = vmatprep.subr.bf16.mxu0 0
        %1808 = vmatpush1.bf16.msra.mxu0 0
        %1809 = vmatprep.mubr.bf16.mxu0 %v1031
        %1810 = vmatmul.mubr.bf16.gmra.mrb[0].mxu0 %v787
        %v1811 = vpop.f32.mrb[0].mxu0
        %v1812 = vadd.f32 %v1486, %v1811
        %v1813 = vpop.f32.mrb[0].mxu0
        %v1814 = vadd.f32 %v1488, %v1813
        %v1815 = vpop.f32.mrb[0].mxu0
        %v1816 = vadd.f32 %v1490, %v1815
        %v1817 = vpop.f32.mrb[0].mxu0
        %v1818 = vadd.f32 %v1492, %v1817
        %1819 = vdwg.mxu0
        %v1820 = vld [vmem:[%s276] sm:$0xee]
        %s1821 = scalar_lea.vmem %s1, 768
        %v1822 = vld [vmem:[%s1821] sm:$0xff]
        %v1823 = vld [vmem:[%s1821 + $0x8] sm:$0xff]
        %v1824 = vld [vmem:[%s1821 + $0x10] sm:$0xff]
        %v1825 = vld [vmem:[%s1821 + $0x18] sm:$0xff]
        %v1826 = vld [vmem:[%s1821 + $0x20] sm:$0xff]
        %v1827 = vld [vmem:[%s1821 + $0x28] sm:$0xff]
        %v1828 = vld [vmem:[%s1821 + $0x30] sm:$0xff]
        %v1829 = vld [vmem:[%s1821 + $0x38] sm:$0xff]
        %v1830 = vld [vmem:[%s1821 + $0x40] sm:$0xff]
        %v1831 = vld [vmem:[%s1821 + $0x48] sm:$0xff]
        %v1832 = vld [vmem:[%s1821 + $0x50] sm:$0xff]
        %v1833 = vld [vmem:[%s1821 + $0x58] sm:$0xff]
        %v1834 = vld [vmem:[%s1821 + $0x60] sm:$0xff]
        %v1835 = vld [vmem:[%s1821 + $0x68] sm:$0xff]
        %v1836 = vld [vmem:[%s1821 + $0x70] sm:$0xff]
        %v1837 = vld [vmem:[%s1821 + $0x78] sm:$0xff]
        %v1838 = vld [vmem:[%s1821 + $0x80] sm:$0xff]
        %v1839 = vld [vmem:[%s1821 + $0x88] sm:$0xff]
        %v1840 = vld [vmem:[%s1821 + $0x90] sm:$0xff]
        %v1841 = vld [vmem:[%s1821 + $0x98] sm:$0xff]
        %v1842 = vld [vmem:[%s1821 + $0xa0] sm:$0xff]
        %v1843 = vld [vmem:[%s1821 + $0xa8] sm:$0xff]
        %v1844 = vld [vmem:[%s1821 + $0xb0] sm:$0xff]
        %v1845 = vld [vmem:[%s1821 + $0xb8] sm:$0xff]
        %v1846 = vld [vmem:[%s1821 + $0xc0] sm:$0xff]
        %v1847 = vld [vmem:[%s1821 + $0xc8] sm:$0xff]
        %v1848 = vld [vmem:[%s1821 + $0xd0] sm:$0xff]
        %v1849 = vld [vmem:[%s1821 + $0xd8] sm:$0xff]
        %v1850 = vld [vmem:[%s1821 + $0xe0] sm:$0xff]
        %v1851 = vld [vmem:[%s1821 + $0xe8] sm:$0xff]
        %v1852 = vld [vmem:[%s1821 + $0xf0] sm:$0xff]
        %v1853 = vld [vmem:[%s1821 + $0xf8] sm:$0xff]
        %v1854 = vld [vmem:[%s1821 + $0x100] sm:$0xff]
        %v1855 = vld [vmem:[%s1821 + $0x108] sm:$0xff]
        %v1856 = vld [vmem:[%s1821 + $0x110] sm:$0xff]
        %v1857 = vld [vmem:[%s1821 + $0x118] sm:$0xff]
        %v1858 = vld [vmem:[%s1821 + $0x120] sm:$0xff]
        %v1859 = vld [vmem:[%s1821 + $0x128] sm:$0xff]
        %v1860 = vld [vmem:[%s1821 + $0x130] sm:$0xff]
        %v1861 = vld [vmem:[%s1821 + $0x138] sm:$0xff]
        %v1862 = vld [vmem:[%s1821 + $0x140] sm:$0xff]
        %v1863 = vld [vmem:[%s1821 + $0x148] sm:$0xff]
        %v1864 = vld [vmem:[%s1821 + $0x150] sm:$0xff]
        %v1865 = vld [vmem:[%s1821 + $0x158] sm:$0xff]
        %v1866 = vld [vmem:[%s1821 + $0x160] sm:$0xff]
        %v1867 = vld [vmem:[%s1821 + $0x168] sm:$0xff]
        %v1868 = vld [vmem:[%s1821 + $0x170] sm:$0xff]
        %v1869 = vld [vmem:[%s1821 + $0x178] sm:$0xff]
        %v1871 = vunpack.c.l.b16 %v1820
        %v1872 = vunpack.c.h.b16 %v1820
        %v1873 = vpack.c.b16 %v435, %v1871
        %v1874 = vpack.c.b16 %v436, %v1872
        %v1875 = vrot.slane %v1873, 1
        %v1876 = vrot.slane %v1874, 1
        %v1926 = vunpack.c.l.b16 %v1822
        %v1927 = vunpack.c.h.b16 %v1822
        %v1928 = vunpack.c.l.b16 %v1823
        %v1929 = vunpack.c.h.b16 %v1823
        %v1930 = vunpack.c.l.b16 %v1824
        %v1931 = vunpack.c.h.b16 %v1824
        %v1932 = vunpack.c.l.b16 %v1825
        %v1933 = vunpack.c.h.b16 %v1825
        %v1934 = vunpack.c.l.b16 %v1826
        %v1935 = vunpack.c.h.b16 %v1826
        %v1936 = vunpack.c.l.b16 %v1827
        %v1937 = vunpack.c.h.b16 %v1827
        %v1938 = vunpack.c.l.b16 %v1828
        %v1939 = vunpack.c.h.b16 %v1828
        %v1940 = vunpack.c.l.b16 %v1829
        %v1941 = vunpack.c.h.b16 %v1829
        %v1942 = vunpack.c.l.b16 %v1830
        %v1943 = vunpack.c.h.b16 %v1830
        %v1944 = vunpack.c.l.b16 %v1831
        %v1945 = vunpack.c.h.b16 %v1831
        %v1946 = vunpack.c.l.b16 %v1832
        %v1947 = vunpack.c.h.b16 %v1832
        %v1948 = vunpack.c.l.b16 %v1833
        %v1949 = vunpack.c.h.b16 %v1833
        %v1950 = vunpack.c.l.b16 %v1834
        %v1951 = vunpack.c.h.b16 %v1834
        %v1952 = vunpack.c.l.b16 %v1835
        %v1953 = vunpack.c.h.b16 %v1835
        %v1954 = vunpack.c.l.b16 %v1836
        %v1955 = vunpack.c.h.b16 %v1836
        %v1956 = vunpack.c.l.b16 %v1837
        %v1957 = vunpack.c.h.b16 %v1837
        %v1958 = vunpack.c.l.b16 %v1838
        %v1959 = vunpack.c.h.b16 %v1838
        %v1960 = vunpack.c.l.b16 %v1839
        %v1961 = vunpack.c.h.b16 %v1839
        %v1962 = vunpack.c.l.b16 %v1840
        %v1963 = vunpack.c.h.b16 %v1840
        %v1964 = vunpack.c.l.b16 %v1841
        %v1965 = vunpack.c.h.b16 %v1841
        %v1966 = vunpack.c.l.b16 %v1842
        %v1967 = vunpack.c.h.b16 %v1842
        %v1968 = vunpack.c.l.b16 %v1843
        %v1969 = vunpack.c.h.b16 %v1843
        %v1970 = vunpack.c.l.b16 %v1844
        %v1971 = vunpack.c.h.b16 %v1844
        %v1972 = vunpack.c.l.b16 %v1845
        %v1973 = vunpack.c.h.b16 %v1845
        %v1974 = vunpack.c.l.b16 %v1846
        %v1975 = vunpack.c.h.b16 %v1846
        %v1976 = vunpack.c.l.b16 %v1847
        %v1977 = vunpack.c.h.b16 %v1847
        %v1978 = vunpack.c.l.b16 %v1848
        %v1979 = vunpack.c.h.b16 %v1848
        %v1980 = vunpack.c.l.b16 %v1849
        %v1981 = vunpack.c.h.b16 %v1849
        %v1982 = vunpack.c.l.b16 %v1850
        %v1983 = vunpack.c.h.b16 %v1850
        %v1984 = vunpack.c.l.b16 %v1851
        %v1985 = vunpack.c.h.b16 %v1851
        %v1986 = vunpack.c.l.b16 %v1852
        %v1987 = vunpack.c.h.b16 %v1852
        %v1988 = vunpack.c.l.b16 %v1853
        %v1989 = vunpack.c.h.b16 %v1853
        %v1990 = vunpack.c.l.b16 %v1854
        %v1991 = vunpack.c.h.b16 %v1854
        %v1992 = vunpack.c.l.b16 %v1855
        %v1993 = vunpack.c.h.b16 %v1855
        %v1994 = vunpack.c.l.b16 %v1856
        %v1995 = vunpack.c.h.b16 %v1856
        %v1996 = vunpack.c.l.b16 %v1857
        %v1997 = vunpack.c.h.b16 %v1857
        %v1998 = vunpack.c.l.b16 %v1858
        %v1999 = vunpack.c.h.b16 %v1858
        %v2000 = vunpack.c.l.b16 %v1859
        %v2001 = vunpack.c.h.b16 %v1859
        %v2002 = vunpack.c.l.b16 %v1860
        %v2003 = vunpack.c.h.b16 %v1860
        %v2004 = vunpack.c.l.b16 %v1861
        %v2005 = vunpack.c.h.b16 %v1861
        %v2006 = vunpack.c.l.b16 %v1862
        %v2007 = vunpack.c.h.b16 %v1862
        %v2008 = vunpack.c.l.b16 %v1863
        %v2009 = vunpack.c.h.b16 %v1863
        %v2010 = vunpack.c.l.b16 %v1864
        %v2011 = vunpack.c.h.b16 %v1864
        %v2012 = vunpack.c.l.b16 %v1865
        %v2013 = vunpack.c.h.b16 %v1865
        %v2014 = vunpack.c.l.b16 %v1866
        %v2015 = vunpack.c.h.b16 %v1866
        %v2016 = vunpack.c.l.b16 %v1867
        %v2017 = vunpack.c.h.b16 %v1867
        %v2018 = vunpack.c.l.b16 %v1868
        %v2019 = vunpack.c.h.b16 %v1868
        %v2020 = vunpack.c.l.b16 %v1869
        %v2021 = vunpack.c.h.b16 %v1869
        %v2022 = vpack.c.b16 %v1930, %v1926
        %v2023 = vpack.c.b16 %v1931, %v1927
        %v2024 = vpack.c.b16 %v1932, %v1928
        %v2025 = vpack.c.b16 %v1933, %v1929
        %v2026 = vpack.c.b16 %v1938, %v1934
        %v2027 = vpack.c.b16 %v1939, %v1935
        %v2028 = vpack.c.b16 %v1940, %v1936
        %v2029 = vpack.c.b16 %v1941, %v1937
        %v2030 = vpack.c.b16 %v1946, %v1942
        %v2031 = vpack.c.b16 %v1947, %v1943
        %v2032 = vpack.c.b16 %v1948, %v1944
        %v2033 = vpack.c.b16 %v1949, %v1945
        %v2034 = vpack.c.b16 %v1954, %v1950
        %v2035 = vpack.c.b16 %v1955, %v1951
        %v2036 = vpack.c.b16 %v1956, %v1952
        %v2037 = vpack.c.b16 %v1957, %v1953
        %v2038 = vpack.c.b16 %v1962, %v1958
        %v2039 = vpack.c.b16 %v1963, %v1959
        %v2040 = vpack.c.b16 %v1964, %v1960
        %v2041 = vpack.c.b16 %v1965, %v1961
        %v2042 = vpack.c.b16 %v1970, %v1966
        %v2043 = vpack.c.b16 %v1971, %v1967
        %v2044 = vpack.c.b16 %v1972, %v1968
        %v2045 = vpack.c.b16 %v1973, %v1969
        %v2046 = vpack.c.b16 %v1978, %v1974
        %v2047 = vpack.c.b16 %v1979, %v1975
        %v2048 = vpack.c.b16 %v1980, %v1976
        %v2049 = vpack.c.b16 %v1981, %v1977
        %v2050 = vpack.c.b16 %v1986, %v1982
        %v2051 = vpack.c.b16 %v1987, %v1983
        %v2052 = vpack.c.b16 %v1988, %v1984
        %v2053 = vpack.c.b16 %v1989, %v1985
        %v2054 = vpack.c.b16 %v1994, %v1990
        %v2055 = vpack.c.b16 %v1995, %v1991
        %v2056 = vpack.c.b16 %v1996, %v1992
        %v2057 = vpack.c.b16 %v1997, %v1993
        %v2058 = vpack.c.b16 %v2002, %v1998
        %v2059 = vpack.c.b16 %v2003, %v1999
        %v2060 = vpack.c.b16 %v2004, %v2000
        %v2061 = vpack.c.b16 %v2005, %v2001
        %v2062 = vpack.c.b16 %v2010, %v2006
        %v2063 = vpack.c.b16 %v2011, %v2007
        %v2064 = vpack.c.b16 %v2012, %v2008
        %v2065 = vpack.c.b16 %v2013, %v2009
        %v2066 = vpack.c.b16 %v2018, %v2014
        %v2067 = vpack.c.b16 %v2019, %v2015
        %v2068 = vpack.c.b16 %v2020, %v2016
        %v2069 = vpack.c.b16 %v2021, %v2017
        %v2119 = vsel %vm694, %v1876, 0
        %2121 = vmatprep.subr.bf16.mxu0 %v2023
        %2122 = vmatpush1.bf16.msra.mxu0 %v2022
        %2123 = vmatprep.subr.bf16.mxu0 %v2027
        %2124 = vmatpush1.bf16.msra.mxu0 %v2026
        %2125 = vmatprep.subr.bf16.mxu0 %v2031
        %2126 = vmatpush1.bf16.msra.mxu0 %v2030
        %2127 = vmatprep.subr.bf16.mxu0 %v2035
        %2128 = vmatpush1.bf16.msra.mxu0 %v2034
        %2129 = vmatprep.subr.bf16.mxu0 %v2039
        %2130 = vmatpush1.bf16.msra.mxu0 %v2038
        %2131 = vmatprep.subr.bf16.mxu0 %v2043
        %2132 = vmatpush1.bf16.msra.mxu0 %v2042
        %2133 = vmatprep.subr.bf16.mxu0 %v2047
        %2134 = vmatpush1.bf16.msra.mxu0 %v2046
        %2135 = vmatprep.subr.bf16.mxu0 %v2051
        %2136 = vmatpush1.bf16.msra.mxu0 %v2050
        %2137 = vmatprep.subr.bf16.mxu0 %v2055
        %2138 = vmatpush1.bf16.msra.mxu0 %v2054
        %2139 = vmatprep.subr.bf16.mxu0 %v2059
        %2140 = vmatpush1.bf16.msra.mxu0 %v2058
        %2141 = vmatprep.subr.bf16.mxu0 %v2063
        %2142 = vmatpush1.bf16.msra.mxu0 %v2062
        %2143 = vmatprep.subr.bf16.mxu0 %v2067
        %2144 = vmatpush1.bf16.msra.mxu0 %v2066
        %2145 = vmatprep.subr.bf16.mxu0 0
        %2146 = vmatpush1.bf16.msra.mxu0 0
        %2147 = vmatprep.subr.bf16.mxu0 0
        %2148 = vmatpush1.bf16.msra.mxu0 0
        %2149 = vmatprep.subr.bf16.mxu0 0
        %2150 = vmatpush1.bf16.msra.mxu0 0
        %2151 = vmatprep.subr.bf16.mxu0 0
        %2152 = vmatpush1.bf16.msra.mxu0 0
        %2153 = vmatprep.mubr.bf16.mxu0 %v2119
        %2154 = vmatmul.mubr.bf16.gmra.mrb[0].mxu0 %v1875
        %v2155 = vpop.f32.mrb[0].mxu0
        %v2156 = vadd.f32 0.0, %v2155
        %v2157 = vpop.f32.mrb[0].mxu0
        %v2158 = vadd.f32 0.0, %v2157
        %v2159 = vpop.f32.mrb[0].mxu0
        %v2160 = vadd.f32 0.0, %v2159
        %v2161 = vpop.f32.mrb[0].mxu0
        %v2162 = vadd.f32 0.0, %v2161
        %2163 = vdwg.mxu0
        %2164 = vmatprep.subr.bf16.mxu0 %v2025
        %2165 = vmatpush1.bf16.msra.mxu0 %v2024
        %2166 = vmatprep.subr.bf16.mxu0 %v2029
        %2167 = vmatpush1.bf16.msra.mxu0 %v2028
        %2168 = vmatprep.subr.bf16.mxu0 %v2033
        %2169 = vmatpush1.bf16.msra.mxu0 %v2032
        %2170 = vmatprep.subr.bf16.mxu0 %v2037
        %2171 = vmatpush1.bf16.msra.mxu0 %v2036
        %2172 = vmatprep.subr.bf16.mxu0 %v2041
        %2173 = vmatpush1.bf16.msra.mxu0 %v2040
        %2174 = vmatprep.subr.bf16.mxu0 %v2045
        %2175 = vmatpush1.bf16.msra.mxu0 %v2044
        %2176 = vmatprep.subr.bf16.mxu0 %v2049
        %2177 = vmatpush1.bf16.msra.mxu0 %v2048
        %2178 = vmatprep.subr.bf16.mxu0 %v2053
        %2179 = vmatpush1.bf16.msra.mxu0 %v2052
        %2180 = vmatprep.subr.bf16.mxu0 %v2057
        %2181 = vmatpush1.bf16.msra.mxu0 %v2056
        %2182 = vmatprep.subr.bf16.mxu0 %v2061
        %2183 = vmatpush1.bf16.msra.mxu0 %v2060
        %2184 = vmatprep.subr.bf16.mxu0 %v2065
        %2185 = vmatpush1.bf16.msra.mxu0 %v2064
        %2186 = vmatprep.subr.bf16.mxu0 %v2069
        %2187 = vmatpush1.bf16.msra.mxu0 %v2068
        %2188 = vmatprep.subr.bf16.mxu0 0
        %2189 = vmatpush1.bf16.msra.mxu0 0
        %2190 = vmatprep.subr.bf16.mxu0 0
        %2191 = vmatpush1.bf16.msra.mxu0 0
        %2192 = vmatprep.subr.bf16.mxu0 0
        %2193 = vmatpush1.bf16.msra.mxu0 0
        %2194 = vmatprep.subr.bf16.mxu0 0
        %2195 = vmatpush1.bf16.msra.mxu0 0
        %2196 = vmatprep.mubr.bf16.mxu0 %v2119
        %2197 = vmatmul.mubr.bf16.gmra.mrb[0].mxu0 %v1875
        %v2198 = vpop.f32.mrb[0].mxu0
        %v2199 = vadd.f32 0.0, %v2198
        %v2200 = vpop.f32.mrb[0].mxu0
        %v2201 = vadd.f32 0.0, %v2200
        %v2202 = vpop.f32.mrb[0].mxu0
        %v2203 = vadd.f32 0.0, %v2202
        %v2204 = vpop.f32.mrb[0].mxu0
        %v2205 = vadd.f32 0.0, %v2204
        %2206 = vdwg.mxu0
        %v2207 = vadd.f32 %v1068, %v2156
        %v2208 = vadd.f32 %v1070, %v2158
        %v2209 = vadd.f32 %v1111, %v2199
        %v2210 = vadd.f32 %v1113, %v2201
        %v2211 = vadd.f32 %v1072, %v2160
        %v2212 = vadd.f32 %v1074, %v2162
        %v2213 = vadd.f32 %v1115, %v2203
        %v2214 = vadd.f32 %v1117, %v2205
        %s2215 = scalar_lea.vmem %s2, 768
        %v2216 = vld [vmem:[%s2215] sm:$0xff]
        %v2217 = vld [vmem:[%s2215 + $0x8] sm:$0xff]
        %v2218 = vld [vmem:[%s2215 + $0x10] sm:$0xff]
        %v2219 = vld [vmem:[%s2215 + $0x18] sm:$0xff]
        %v2220 = vld [vmem:[%s2215 + $0x20] sm:$0xff]
        %v2221 = vld [vmem:[%s2215 + $0x28] sm:$0xff]
        %v2222 = vld [vmem:[%s2215 + $0x30] sm:$0xff]
        %v2223 = vld [vmem:[%s2215 + $0x38] sm:$0xff]
        %v2224 = vld [vmem:[%s2215 + $0x40] sm:$0xff]
        %v2225 = vld [vmem:[%s2215 + $0x48] sm:$0xff]
        %v2226 = vld [vmem:[%s2215 + $0x50] sm:$0xff]
        %v2227 = vld [vmem:[%s2215 + $0x58] sm:$0xff]
        %v2228 = vld [vmem:[%s2215 + $0x60] sm:$0xff]
        %v2229 = vld [vmem:[%s2215 + $0x68] sm:$0xff]
        %v2230 = vld [vmem:[%s2215 + $0x70] sm:$0xff]
        %v2231 = vld [vmem:[%s2215 + $0x78] sm:$0xff]
        %v2232 = vld [vmem:[%s2215 + $0x80] sm:$0xff]
        %v2233 = vld [vmem:[%s2215 + $0x88] sm:$0xff]
        %v2234 = vld [vmem:[%s2215 + $0x90] sm:$0xff]
        %v2235 = vld [vmem:[%s2215 + $0x98] sm:$0xff]
        %v2236 = vld [vmem:[%s2215 + $0xa0] sm:$0xff]
        %v2237 = vld [vmem:[%s2215 + $0xa8] sm:$0xff]
        %v2238 = vld [vmem:[%s2215 + $0xb0] sm:$0xff]
        %v2239 = vld [vmem:[%s2215 + $0xb8] sm:$0xff]
        %v2240 = vld [vmem:[%s2215 + $0xc0] sm:$0xff]
        %v2241 = vld [vmem:[%s2215 + $0xc8] sm:$0xff]
        %v2242 = vld [vmem:[%s2215 + $0xd0] sm:$0xff]
        %v2243 = vld [vmem:[%s2215 + $0xd8] sm:$0xff]
        %v2244 = vld [vmem:[%s2215 + $0xe0] sm:$0xff]
        %v2245 = vld [vmem:[%s2215 + $0xe8] sm:$0xff]
        %v2246 = vld [vmem:[%s2215 + $0xf0] sm:$0xff]
        %v2247 = vld [vmem:[%s2215 + $0xf8] sm:$0xff]
        %v2248 = vld [vmem:[%s2215 + $0x100] sm:$0xff]
        %v2249 = vld [vmem:[%s2215 + $0x108] sm:$0xff]
        %v2250 = vld [vmem:[%s2215 + $0x110] sm:$0xff]
        %v2251 = vld [vmem:[%s2215 + $0x118] sm:$0xff]
        %v2252 = vld [vmem:[%s2215 + $0x120] sm:$0xff]
        %v2253 = vld [vmem:[%s2215 + $0x128] sm:$0xff]
        %v2254 = vld [vmem:[%s2215 + $0x130] sm:$0xff]
        %v2255 = vld [vmem:[%s2215 + $0x138] sm:$0xff]
        %v2256 = vld [vmem:[%s2215 + $0x140] sm:$0xff]
        %v2257 = vld [vmem:[%s2215 + $0x148] sm:$0xff]
        %v2258 = vld [vmem:[%s2215 + $0x150] sm:$0xff]
        %v2259 = vld [vmem:[%s2215 + $0x158] sm:$0xff]
        %v2260 = vld [vmem:[%s2215 + $0x160] sm:$0xff]
        %v2261 = vld [vmem:[%s2215 + $0x168] sm:$0xff]
        %v2262 = vld [vmem:[%s2215 + $0x170] sm:$0xff]
        %v2263 = vld [vmem:[%s2215 + $0x178] sm:$0xff]
        %v2312 = vunpack.c.l.b16 %v2216
        %v2313 = vunpack.c.h.b16 %v2216
        %v2314 = vunpack.c.l.b16 %v2217
        %v2315 = vunpack.c.h.b16 %v2217
        %v2316 = vunpack.c.l.b16 %v2218
        %v2317 = vunpack.c.h.b16 %v2218
        %v2318 = vunpack.c.l.b16 %v2219
        %v2319 = vunpack.c.h.b16 %v2219
        %v2320 = vunpack.c.l.b16 %v2220
        %v2321 = vunpack.c.h.b16 %v2220
        %v2322 = vunpack.c.l.b16 %v2221
        %v2323 = vunpack.c.h.b16 %v2221
        %v2324 = vunpack.c.l.b16 %v2222
        %v2325 = vunpack.c.h.b16 %v2222
        %v2326 = vunpack.c.l.b16 %v2223
        %v2327 = vunpack.c.h.b16 %v2223
        %v2328 = vunpack.c.l.b16 %v2224
        %v2329 = vunpack.c.h.b16 %v2224
        %v2330 = vunpack.c.l.b16 %v2225
        %v2331 = vunpack.c.h.b16 %v2225
        %v2332 = vunpack.c.l.b16 %v2226
        %v2333 = vunpack.c.h.b16 %v2226
        %v2334 = vunpack.c.l.b16 %v2227
        %v2335 = vunpack.c.h.b16 %v2227
        %v2336 = vunpack.c.l.b16 %v2228
        %v2337 = vunpack.c.h.b16 %v2228
        %v2338 = vunpack.c.l.b16 %v2229
        %v2339 = vunpack.c.h.b16 %v2229
        %v2340 = vunpack.c.l.b16 %v2230
        %v2341 = vunpack.c.h.b16 %v2230
        %v2342 = vunpack.c.l.b16 %v2231
        %v2343 = vunpack.c.h.b16 %v2231
        %v2344 = vunpack.c.l.b16 %v2232
        %v2345 = vunpack.c.h.b16 %v2232
        %v2346 = vunpack.c.l.b16 %v2233
        %v2347 = vunpack.c.h.b16 %v2233
        %v2348 = vunpack.c.l.b16 %v2234
        %v2349 = vunpack.c.h.b16 %v2234
        %v2350 = vunpack.c.l.b16 %v2235
        %v2351 = vunpack.c.h.b16 %v2235
        %v2352 = vunpack.c.l.b16 %v2236
        %v2353 = vunpack.c.h.b16 %v2236
        %v2354 = vunpack.c.l.b16 %v2237
        %v2355 = vunpack.c.h.b16 %v2237
        %v2356 = vunpack.c.l.b16 %v2238
        %v2357 = vunpack.c.h.b16 %v2238
        %v2358 = vunpack.c.l.b16 %v2239
        %v2359 = vunpack.c.h.b16 %v2239
        %v2360 = vunpack.c.l.b16 %v2240
        %v2361 = vunpack.c.h.b16 %v2240
        %v2362 = vunpack.c.l.b16 %v2241
        %v2363 = vunpack.c.h.b16 %v2241
        %v2364 = vunpack.c.l.b16 %v2242
        %v2365 = vunpack.c.h.b16 %v2242
        %v2366 = vunpack.c.l.b16 %v2243
        %v2367 = vunpack.c.h.b16 %v2243
        %v2368 = vunpack.c.l.b16 %v2244
        %v2369 = vunpack.c.h.b16 %v2244
        %v2370 = vunpack.c.l.b16 %v2245
        %v2371 = vunpack.c.h.b16 %v2245
        %v2372 = vunpack.c.l.b16 %v2246
        %v2373 = vunpack.c.h.b16 %v2246
        %v2374 = vunpack.c.l.b16 %v2247
        %v2375 = vunpack.c.h.b16 %v2247
        %v2376 = vunpack.c.l.b16 %v2248
        %v2377 = vunpack.c.h.b16 %v2248
        %v2378 = vunpack.c.l.b16 %v2249
        %v2379 = vunpack.c.h.b16 %v2249
        %v2380 = vunpack.c.l.b16 %v2250
        %v2381 = vunpack.c.h.b16 %v2250
        %v2382 = vunpack.c.l.b16 %v2251
        %v2383 = vunpack.c.h.b16 %v2251
        %v2384 = vunpack.c.l.b16 %v2252
        %v2385 = vunpack.c.h.b16 %v2252
        %v2386 = vunpack.c.l.b16 %v2253
        %v2387 = vunpack.c.h.b16 %v2253
        %v2388 = vunpack.c.l.b16 %v2254
        %v2389 = vunpack.c.h.b16 %v2254
        %v2390 = vunpack.c.l.b16 %v2255
        %v2391 = vunpack.c.h.b16 %v2255
        %v2392 = vunpack.c.l.b16 %v2256
        %v2393 = vunpack.c.h.b16 %v2256
        %v2394 = vunpack.c.l.b16 %v2257
        %v2395 = vunpack.c.h.b16 %v2257
        %v2396 = vunpack.c.l.b16 %v2258
        %v2397 = vunpack.c.h.b16 %v2258
        %v2398 = vunpack.c.l.b16 %v2259
        %v2399 = vunpack.c.h.b16 %v2259
        %v2400 = vunpack.c.l.b16 %v2260
        %v2401 = vunpack.c.h.b16 %v2260
        %v2402 = vunpack.c.l.b16 %v2261
        %v2403 = vunpack.c.h.b16 %v2261
        %v2404 = vunpack.c.l.b16 %v2262
        %v2405 = vunpack.c.h.b16 %v2262
        %v2406 = vunpack.c.l.b16 %v2263
        %v2407 = vunpack.c.h.b16 %v2263
        %v2408 = vpack.c.b16 %v2316, %v2312
        %v2409 = vpack.c.b16 %v2317, %v2313
        %v2410 = vpack.c.b16 %v2318, %v2314
        %v2411 = vpack.c.b16 %v2319, %v2315
        %v2412 = vpack.c.b16 %v2324, %v2320
        %v2413 = vpack.c.b16 %v2325, %v2321
        %v2414 = vpack.c.b16 %v2326, %v2322
        %v2415 = vpack.c.b16 %v2327, %v2323
        %v2416 = vpack.c.b16 %v2332, %v2328
        %v2417 = vpack.c.b16 %v2333, %v2329
        %v2418 = vpack.c.b16 %v2334, %v2330
        %v2419 = vpack.c.b16 %v2335, %v2331
        %v2420 = vpack.c.b16 %v2340, %v2336
        %v2421 = vpack.c.b16 %v2341, %v2337
        %v2422 = vpack.c.b16 %v2342, %v2338
        %v2423 = vpack.c.b16 %v2343, %v2339
        %v2424 = vpack.c.b16 %v2348, %v2344
        %v2425 = vpack.c.b16 %v2349, %v2345
        %v2426 = vpack.c.b16 %v2350, %v2346
        %v2427 = vpack.c.b16 %v2351, %v2347
        %v2428 = vpack.c.b16 %v2356, %v2352
        %v2429 = vpack.c.b16 %v2357, %v2353
        %v2430 = vpack.c.b16 %v2358, %v2354
        %v2431 = vpack.c.b16 %v2359, %v2355
        %v2432 = vpack.c.b16 %v2364, %v2360
        %v2433 = vpack.c.b16 %v2365, %v2361
        %v2434 = vpack.c.b16 %v2366, %v2362
        %v2435 = vpack.c.b16 %v2367, %v2363
        %v2436 = vpack.c.b16 %v2372, %v2368
        %v2437 = vpack.c.b16 %v2373, %v2369
        %v2438 = vpack.c.b16 %v2374, %v2370
        %v2439 = vpack.c.b16 %v2375, %v2371
        %v2440 = vpack.c.b16 %v2380, %v2376
        %v2441 = vpack.c.b16 %v2381, %v2377
        %v2442 = vpack.c.b16 %v2382, %v2378
        %v2443 = vpack.c.b16 %v2383, %v2379
        %v2444 = vpack.c.b16 %v2388, %v2384
        %v2445 = vpack.c.b16 %v2389, %v2385
        %v2446 = vpack.c.b16 %v2390, %v2386
        %v2447 = vpack.c.b16 %v2391, %v2387
        %v2448 = vpack.c.b16 %v2396, %v2392
        %v2449 = vpack.c.b16 %v2397, %v2393
        %v2450 = vpack.c.b16 %v2398, %v2394
        %v2451 = vpack.c.b16 %v2399, %v2395
        %v2452 = vpack.c.b16 %v2404, %v2400
        %v2453 = vpack.c.b16 %v2405, %v2401
        %v2454 = vpack.c.b16 %v2406, %v2402
        %v2455 = vpack.c.b16 %v2407, %v2403
        %2504 = vmatprep.subr.bf16.mxu0 %v2409
        %2505 = vmatpush1.bf16.msra.mxu0 %v2408
        %2506 = vmatprep.subr.bf16.mxu0 %v2413
        %2507 = vmatpush1.bf16.msra.mxu0 %v2412
        %2508 = vmatprep.subr.bf16.mxu0 %v2417
        %2509 = vmatpush1.bf16.msra.mxu0 %v2416
        %2510 = vmatprep.subr.bf16.mxu0 %v2421
        %2511 = vmatpush1.bf16.msra.mxu0 %v2420
        %2512 = vmatprep.subr.bf16.mxu0 %v2425
        %2513 = vmatpush1.bf16.msra.mxu0 %v2424
        %2514 = vmatprep.subr.bf16.mxu0 %v2429
        %2515 = vmatpush1.bf16.msra.mxu0 %v2428
        %2516 = vmatprep.subr.bf16.mxu0 %v2433
        %2517 = vmatpush1.bf16.msra.mxu0 %v2432
        %2518 = vmatprep.subr.bf16.mxu0 %v2437
        %2519 = vmatpush1.bf16.msra.mxu0 %v2436
        %2520 = vmatprep.subr.bf16.mxu0 %v2441
        %2521 = vmatpush1.bf16.msra.mxu0 %v2440
        %2522 = vmatprep.subr.bf16.mxu0 %v2445
        %2523 = vmatpush1.bf16.msra.mxu0 %v2444
        %2524 = vmatprep.subr.bf16.mxu0 %v2449
        %2525 = vmatpush1.bf16.msra.mxu0 %v2448
        %2526 = vmatprep.subr.bf16.mxu0 %v2453
        %2527 = vmatpush1.bf16.msra.mxu0 %v2452
        %2528 = vmatprep.subr.bf16.mxu0 0
        %2529 = vmatpush1.bf16.msra.mxu0 0
        %2530 = vmatprep.subr.bf16.mxu0 0
        %2531 = vmatpush1.bf16.msra.mxu0 0
        %2532 = vmatprep.subr.bf16.mxu0 0
        %2533 = vmatpush1.bf16.msra.mxu0 0
        %2534 = vmatprep.subr.bf16.mxu0 0
        %2535 = vmatpush1.bf16.msra.mxu0 0
        %2536 = vmatprep.mubr.bf16.mxu0 %v2119
        %2537 = vmatmul.mubr.bf16.gmra.mrb[0].mxu0 %v1875
        %v2538 = vpop.f32.mrb[0].mxu0
        %v2539 = vadd.f32 0.0, %v2538
        %v2540 = vpop.f32.mrb[0].mxu0
        %v2541 = vadd.f32 0.0, %v2540
        %v2542 = vpop.f32.mrb[0].mxu0
        %v2543 = vadd.f32 0.0, %v2542
        %v2544 = vpop.f32.mrb[0].mxu0
        %v2545 = vadd.f32 0.0, %v2544
        %2546 = vdwg.mxu0
        %2547 = vmatprep.subr.bf16.mxu0 %v2411
        %2548 = vmatpush1.bf16.msra.mxu0 %v2410
        %2549 = vmatprep.subr.bf16.mxu0 %v2415
        %2550 = vmatpush1.bf16.msra.mxu0 %v2414
        %2551 = vmatprep.subr.bf16.mxu0 %v2419
        %2552 = vmatpush1.bf16.msra.mxu0 %v2418
        %2553 = vmatprep.subr.bf16.mxu0 %v2423
        %2554 = vmatpush1.bf16.msra.mxu0 %v2422
        %2555 = vmatprep.subr.bf16.mxu0 %v2427
        %2556 = vmatpush1.bf16.msra.mxu0 %v2426
        %2557 = vmatprep.subr.bf16.mxu0 %v2431
        %2558 = vmatpush1.bf16.msra.mxu0 %v2430
        %2559 = vmatprep.subr.bf16.mxu0 %v2435
        %2560 = vmatpush1.bf16.msra.mxu0 %v2434
        %2561 = vmatprep.subr.bf16.mxu0 %v2439
        %2562 = vmatpush1.bf16.msra.mxu0 %v2438
        %2563 = vmatprep.subr.bf16.mxu0 %v2443
        %2564 = vmatpush1.bf16.msra.mxu0 %v2442
        %2565 = vmatprep.subr.bf16.mxu0 %v2447
        %2566 = vmatpush1.bf16.msra.mxu0 %v2446
        %2567 = vmatprep.subr.bf16.mxu0 %v2451
        %2568 = vmatpush1.bf16.msra.mxu0 %v2450
        %2569 = vmatprep.subr.bf16.mxu0 %v2455
        %2570 = vmatpush1.bf16.msra.mxu0 %v2454
        %2571 = vmatprep.subr.bf16.mxu0 0
        %2572 = vmatpush1.bf16.msra.mxu0 0
        %2573 = vmatprep.subr.bf16.mxu0 0
        %2574 = vmatpush1.bf16.msra.mxu0 0
        %2575 = vmatprep.subr.bf16.mxu0 0
        %2576 = vmatpush1.bf16.msra.mxu0 0
        %2577 = vmatprep.subr.bf16.mxu0 0
        %2578 = vmatpush1.bf16.msra.mxu0 0
        %2579 = vmatprep.mubr.bf16.mxu0 %v2119
        %2580 = vmatmul.mubr.bf16.gmra.mrb[0].mxu0 %v1875
        %v2581 = vpop.f32.mrb[0].mxu0
        %v2582 = vadd.f32 0.0, %v2581
        %v2583 = vpop.f32.mrb[0].mxu0
        %v2584 = vadd.f32 0.0, %v2583
        %v2585 = vpop.f32.mrb[0].mxu0
        %v2586 = vadd.f32 0.0, %v2585
        %v2587 = vpop.f32.mrb[0].mxu0
        %v2588 = vadd.f32 0.0, %v2587
        %2589 = vdwg.mxu0
        %v2590 = vadd.f32 %v1769, %v2539
        %v2591 = vadd.f32 %v1771, %v2541
        %v2592 = vadd.f32 %v1812, %v2582
        %v2593 = vadd.f32 %v1814, %v2584
        %v2594 = vadd.f32 %v1773, %v2543
        %v2595 = vadd.f32 %v1775, %v2545
        %v2596 = vadd.f32 %v1816, %v2586
        %v2597 = vadd.f32 %v1818, %v2588
        %v2598 = vld [vmem:[%s3] sm:$0xf]
        %v2600 = vlaneseq
        %v2601 = vshrl.u32 %v2600, 7
        %v2602 = vsub.s32 0, %v2601
        %v2603 = vrot.slane %v2598, %v2602
        %v2604 = vlaneseq
        %v2605 = vshrl.u32 %v2604, 7
        %v2606 = vsub.s32 1, %v2605
        %v2607 = vrot.slane %v2598, %v2606
        %v2608 = vlaneseq
        %v2609 = vshrl.u32 %v2608, 7
        %v2610 = vsub.s32 2, %v2609
        %v2611 = vrot.slane %v2598, %v2610
        %v2612 = vlaneseq
        %v2613 = vshrl.u32 %v2612, 7
        %v2614 = vsub.s32 3, %v2613
        %v2615 = vrot.slane %v2598, %v2614
        %v2620 = vadd.f32 %v2207, %v2603
        %v2621 = vadd.f32 %v2208, %v2607
        %v2622 = vadd.f32 %v2209, %v2611
        %v2623 = vadd.f32 %v2210, %v2615
        %v2624 = vadd.f32 %v2211, %v2603
        %v2625 = vadd.f32 %v2212, %v2607
        %v2626 = vadd.f32 %v2213, %v2611
        %v2627 = vadd.f32 %v2214, %v2615
        %v2628 = vmax.f32 %v2620, 0.0
        %v2629 = vmax.f32 %v2621, 0.0
        %v2630 = vmax.f32 %v2622, 0.0
        %v2631 = vmax.f32 %v2623, 0.0
        %v2632 = vmax.f32 %v2624, 0.0
        %v2633 = vmax.f32 %v2625, 0.0
        %v2634 = vmax.f32 %v2626, 0.0
        %v2635 = vmax.f32 %v2627, 0.0
        %v2636 = vadd.f32 %v2590, %v2603
        %v2637 = vadd.f32 %v2591, %v2607
        %v2638 = vadd.f32 %v2592, %v2611
        %v2639 = vadd.f32 %v2593, %v2615
        %v2640 = vadd.f32 %v2594, %v2603
        %v2641 = vadd.f32 %v2595, %v2607
        %v2642 = vadd.f32 %v2596, %v2611
        %v2643 = vadd.f32 %v2597, %v2615
        %v2644 = vmax.f32 %v2636, 0.0
        %v2645 = vmax.f32 %v2637, 0.0
        %v2646 = vmax.f32 %v2638, 0.0
        %v2647 = vmax.f32 %v2639, 0.0
        %v2648 = vmax.f32 %v2640, 0.0
        %v2649 = vmax.f32 %v2641, 0.0
        %v2650 = vmax.f32 %v2642, 0.0
        %v2651 = vmax.f32 %v2643, 0.0
        %v2652 = vmax.f32 %v2628, %v2644
        %v2653 = vmax.f32 %v2629, %v2645
        %v2654 = vmax.f32 %v2630, %v2646
        %v2655 = vmax.f32 %v2631, %v2647
        %v2656 = vmax.f32 %v2632, %v2648
        %v2657 = vmax.f32 %v2633, %v2649
        %v2658 = vmax.f32 %v2634, %v2650
        %v2659 = vmax.f32 %v2635, %v2651
        %v2660 = vpack.c.bf16 %v2656, %v2652
        %v2661 = vpack.c.bf16 %v2657, %v2653
        %v2662 = vpack.c.bf16 %v2658, %v2654
        %v2663 = vpack.c.bf16 %v2659, %v2655
        %v2664 = vld [vmem:[#allocation2] sm:$0xff]
        %v2665 = vld [vmem:[#allocation2 + $0x8] sm:$0xff]
        %v2666 = vld [vmem:[#allocation2 + $0x10] sm:$0xff]
        %v2667 = vld [vmem:[#allocation2 + $0x18] sm:$0xff]
        %v2668 = vld [vmem:[#allocation2 + $0x20] sm:$0xff]
        %v2669 = vld [vmem:[#allocation2 + $0x28] sm:$0xff]
        %v2670 = vld [vmem:[#allocation2 + $0x30] sm:$0xff]
        %v2671 = vld [vmem:[#allocation2 + $0x38] sm:$0xff]
        %v2672 = vld [vmem:[#allocation2 + $0x40] sm:$0xff]
        %v2673 = vld [vmem:[#allocation2 + $0x48] sm:$0xff]
        %v2674 = vld [vmem:[#allocation2 + $0x50] sm:$0xff]
        %v2675 = vld [vmem:[#allocation2 + $0x58] sm:$0xff]
        %v2676 = vld [vmem:[#allocation2 + $0x60] sm:$0xff]
        %v2677 = vld [vmem:[#allocation2 + $0x68] sm:$0xff]
        %v2678 = vld [vmem:[#allocation2 + $0x70] sm:$0xff]
        %v2679 = vld [vmem:[#allocation2 + $0x78] sm:$0xff]
        %v2680 = vld [vmem:[#allocation2 + $0x80] sm:$0xff]
        %v2681 = vld [vmem:[#allocation2 + $0x88] sm:$0xff]
        %v2682 = vld [vmem:[#allocation2 + $0x90] sm:$0xff]
        %v2683 = vld [vmem:[#allocation2 + $0x98] sm:$0xff]
        %v2684 = vld [vmem:[#allocation2 + $0xa0] sm:$0xff]
        %v2685 = vld [vmem:[#allocation2 + $0xa8] sm:$0xff]
        %v2686 = vld [vmem:[#allocation2 + $0xb0] sm:$0xff]
        %v2687 = vld [vmem:[#allocation2 + $0xb8] sm:$0xff]
        %v2688 = vld [vmem:[#allocation2 + $0xc0] sm:$0xff]
        %v2689 = vld [vmem:[#allocation2 + $0xc8] sm:$0xff]
        %v2690 = vld [vmem:[#allocation2 + $0xd0] sm:$0xff]
        %v2691 = vld [vmem:[#allocation2 + $0xd8] sm:$0xff]
        %v2692 = vld [vmem:[#allocation2 + $0xe0] sm:$0xff]
        %v2693 = vld [vmem:[#allocation2 + $0xe8] sm:$0xff]
        %v2694 = vld [vmem:[#allocation2 + $0xf0] sm:$0xff]
        %v2695 = vld [vmem:[#allocation2 + $0xf8] sm:$0xff]
        %v2696 = vld [vmem:[#allocation2 + $0x100] sm:$0xff]
        %v2697 = vld [vmem:[#allocation2 + $0x108] sm:$0xff]
        %v2698 = vld [vmem:[#allocation2 + $0x110] sm:$0xff]
        %v2699 = vld [vmem:[#allocation2 + $0x118] sm:$0xff]
        %v2700 = vld [vmem:[#allocation2 + $0x120] sm:$0xff]
        %v2701 = vld [vmem:[#allocation2 + $0x128] sm:$0xff]
        %v2702 = vld [vmem:[#allocation2 + $0x130] sm:$0xff]
        %v2703 = vld [vmem:[#allocation2 + $0x138] sm:$0xff]
        %v2704 = vld [vmem:[#allocation2 + $0x140] sm:$0xff]
        %v2705 = vld [vmem:[#allocation2 + $0x148] sm:$0xff]
        %v2706 = vld [vmem:[#allocation2 + $0x150] sm:$0xff]
        %v2707 = vld [vmem:[#allocation2 + $0x158] sm:$0xff]
        %v2708 = vld [vmem:[#allocation2 + $0x160] sm:$0xff]
        %v2709 = vld [vmem:[#allocation2 + $0x168] sm:$0xff]
        %v2710 = vld [vmem:[#allocation2 + $0x170] sm:$0xff]
        %v2711 = vld [vmem:[#allocation2 + $0x178] sm:$0xff]
        %v2712 = vld [vmem:[#allocation2 + $0x180] sm:$0xff]
        %v2713 = vld [vmem:[#allocation2 + $0x188] sm:$0xff]
        %v2714 = vld [vmem:[#allocation2 + $0x190] sm:$0xff]
        %v2715 = vld [vmem:[#allocation2 + $0x198] sm:$0xff]
        %v2716 = vld [vmem:[#allocation2 + $0x1a0] sm:$0xff]
        %v2717 = vld [vmem:[#allocation2 + $0x1a8] sm:$0xff]
        %v2718 = vld [vmem:[#allocation2 + $0x1b0] sm:$0xff]
        %v2719 = vld [vmem:[#allocation2 + $0x1b8] sm:$0xff]
        %v2776 = vunpack.c.l.b16 %v2664
        %v2777 = vunpack.c.h.b16 %v2664
        %v2778 = vunpack.c.l.b16 %v2665
        %v2779 = vunpack.c.h.b16 %v2665
        %v2780 = vunpack.c.l.b16 %v2666
        %v2781 = vunpack.c.h.b16 %v2666
        %v2782 = vunpack.c.l.b16 %v2667
        %v2783 = vunpack.c.h.b16 %v2667
        %v2784 = vunpack.c.l.b16 %v2668
        %v2785 = vunpack.c.h.b16 %v2668
        %v2786 = vunpack.c.l.b16 %v2669
        %v2787 = vunpack.c.h.b16 %v2669
        %v2788 = vunpack.c.l.b16 %v2670
        %v2789 = vunpack.c.h.b16 %v2670
        %v2790 = vunpack.c.l.b16 %v2671
        %v2791 = vunpack.c.h.b16 %v2671
        %v2792 = vunpack.c.l.b16 %v2672
        %v2793 = vunpack.c.h.b16 %v2672
        %v2794 = vunpack.c.l.b16 %v2673
        %v2795 = vunpack.c.h.b16 %v2673
        %v2796 = vunpack.c.l.b16 %v2674
        %v2797 = vunpack.c.h.b16 %v2674
        %v2798 = vunpack.c.l.b16 %v2675
        %v2799 = vunpack.c.h.b16 %v2675
        %v2800 = vunpack.c.l.b16 %v2676
        %v2801 = vunpack.c.h.b16 %v2676
        %v2802 = vunpack.c.l.b16 %v2677
        %v2803 = vunpack.c.h.b16 %v2677
        %v2804 = vunpack.c.l.b16 %v2678
        %v2805 = vunpack.c.h.b16 %v2678
        %v2806 = vunpack.c.l.b16 %v2679
        %v2807 = vunpack.c.h.b16 %v2679
        %v2808 = vunpack.c.l.b16 %v2680
        %v2809 = vunpack.c.h.b16 %v2680
        %v2810 = vunpack.c.l.b16 %v2681
        %v2811 = vunpack.c.h.b16 %v2681
        %v2812 = vunpack.c.l.b16 %v2682
        %v2813 = vunpack.c.h.b16 %v2682
        %v2814 = vunpack.c.l.b16 %v2683
        %v2815 = vunpack.c.h.b16 %v2683
        %v2816 = vunpack.c.l.b16 %v2684
        %v2817 = vunpack.c.h.b16 %v2684
        %v2818 = vunpack.c.l.b16 %v2685
        %v2819 = vunpack.c.h.b16 %v2685
        %v2820 = vunpack.c.l.b16 %v2686
        %v2821 = vunpack.c.h.b16 %v2686
        %v2822 = vunpack.c.l.b16 %v2687
        %v2823 = vunpack.c.h.b16 %v2687
        %v2824 = vunpack.c.l.b16 %v2688
        %v2825 = vunpack.c.h.b16 %v2688
        %v2826 = vunpack.c.l.b16 %v2689
        %v2827 = vunpack.c.h.b16 %v2689
        %v2828 = vunpack.c.l.b16 %v2690
        %v2829 = vunpack.c.h.b16 %v2690
        %v2830 = vunpack.c.l.b16 %v2691
        %v2831 = vunpack.c.h.b16 %v2691
        %v2832 = vunpack.c.l.b16 %v2692
        %v2833 = vunpack.c.h.b16 %v2692
        %v2834 = vunpack.c.l.b16 %v2693
        %v2835 = vunpack.c.h.b16 %v2693
        %v2836 = vunpack.c.l.b16 %v2694
        %v2837 = vunpack.c.h.b16 %v2694
        %v2838 = vunpack.c.l.b16 %v2695
        %v2839 = vunpack.c.h.b16 %v2695
        %v2840 = vunpack.c.l.b16 %v2696
        %v2841 = vunpack.c.h.b16 %v2696
        %v2842 = vunpack.c.l.b16 %v2697
        %v2843 = vunpack.c.h.b16 %v2697
        %v2844 = vunpack.c.l.b16 %v2698
        %v2845 = vunpack.c.h.b16 %v2698
        %v2846 = vunpack.c.l.b16 %v2699
        %v2847 = vunpack.c.h.b16 %v2699
        %v2848 = vunpack.c.l.b16 %v2700
        %v2849 = vunpack.c.h.b16 %v2700
        %v2850 = vunpack.c.l.b16 %v2701
        %v2851 = vunpack.c.h.b16 %v2701
        %v2852 = vunpack.c.l.b16 %v2702
        %v2853 = vunpack.c.h.b16 %v2702
        %v2854 = vunpack.c.l.b16 %v2703
        %v2855 = vunpack.c.h.b16 %v2703
        %v2856 = vunpack.c.l.b16 %v2704
        %v2857 = vunpack.c.h.b16 %v2704
        %v2858 = vunpack.c.l.b16 %v2705
        %v2859 = vunpack.c.h.b16 %v2705
        %v2860 = vunpack.c.l.b16 %v2706
        %v2861 = vunpack.c.h.b16 %v2706
        %v2862 = vunpack.c.l.b16 %v2707
        %v2863 = vunpack.c.h.b16 %v2707
        %v2864 = vunpack.c.l.b16 %v2708
        %v2865 = vunpack.c.h.b16 %v2708
        %v2866 = vunpack.c.l.b16 %v2709
        %v2867 = vunpack.c.h.b16 %v2709
        %v2868 = vunpack.c.l.b16 %v2710
        %v2869 = vunpack.c.h.b16 %v2710
        %v2870 = vunpack.c.l.b16 %v2711
        %v2871 = vunpack.c.h.b16 %v2711
        %v2872 = vunpack.c.l.b16 %v2712
        %v2873 = vunpack.c.h.b16 %v2712
        %v2874 = vunpack.c.l.b16 %v2713
        %v2875 = vunpack.c.h.b16 %v2713
        %v2876 = vunpack.c.l.b16 %v2714
        %v2877 = vunpack.c.h.b16 %v2714
        %v2878 = vunpack.c.l.b16 %v2715
        %v2879 = vunpack.c.h.b16 %v2715
        %v2880 = vunpack.c.l.b16 %v2716
        %v2881 = vunpack.c.h.b16 %v2716
        %v2882 = vunpack.c.l.b16 %v2717
        %v2883 = vunpack.c.h.b16 %v2717
        %v2884 = vunpack.c.l.b16 %v2718
        %v2885 = vunpack.c.h.b16 %v2718
        %v2886 = vunpack.c.l.b16 %v2719
        %v2887 = vunpack.c.h.b16 %v2719
        %v2888 = vpack.c.b16 %v2778, %v2776
        %v2889 = vpack.c.b16 %v2779, %v2777
        %v2890 = vpack.c.b16 %v2782, %v2780
        %v2891 = vpack.c.b16 %v2783, %v2781
        %v2892 = vpack.c.b16 %v2786, %v2784
        %v2893 = vpack.c.b16 %v2787, %v2785
        %v2894 = vpack.c.b16 %v2790, %v2788
        %v2895 = vpack.c.b16 %v2791, %v2789
        %v2896 = vpack.c.b16 %v2794, %v2792
        %v2897 = vpack.c.b16 %v2795, %v2793
        %v2898 = vpack.c.b16 %v2798, %v2796
        %v2899 = vpack.c.b16 %v2799, %v2797
        %v2900 = vpack.c.b16 %v2802, %v2800
        %v2901 = vpack.c.b16 %v2803, %v2801
        %v2902 = vpack.c.b16 %v2806, %v2804
        %v2903 = vpack.c.b16 %v2807, %v2805
        %v2904 = vpack.c.b16 %v2810, %v2808
        %v2905 = vpack.c.b16 %v2811, %v2809
        %v2906 = vpack.c.b16 %v2814, %v2812
        %v2907 = vpack.c.b16 %v2815, %v2813
        %v2908 = vpack.c.b16 %v2818, %v2816
        %v2909 = vpack.c.b16 %v2819, %v2817
        %v2910 = vpack.c.b16 %v2822, %v2820
        %v2911 = vpack.c.b16 %v2823, %v2821
        %v2912 = vpack.c.b16 %v2826, %v2824
        %v2913 = vpack.c.b16 %v2827, %v2825
        %v2914 = vpack.c.b16 %v2830, %v2828
        %v2915 = vpack.c.b16 %v2831, %v2829
        %v2916 = vpack.c.b16 %v2834, %v2832
        %v2917 = vpack.c.b16 %v2835, %v2833
        %v2918 = vpack.c.b16 %v2838, %v2836
        %v2919 = vpack.c.b16 %v2839, %v2837
        %v2920 = vpack.c.b16 %v2842, %v2840
        %v2921 = vpack.c.b16 %v2843, %v2841
        %v2922 = vpack.c.b16 %v2846, %v2844
        %v2923 = vpack.c.b16 %v2847, %v2845
        %v2924 = vpack.c.b16 %v2850, %v2848
        %v2925 = vpack.c.b16 %v2851, %v2849
        %v2926 = vpack.c.b16 %v2854, %v2852
        %v2927 = vpack.c.b16 %v2855, %v2853
        %v2928 = vpack.c.b16 %v2858, %v2856
        %v2929 = vpack.c.b16 %v2859, %v2857
        %v2930 = vpack.c.b16 %v2862, %v2860
        %v2931 = vpack.c.b16 %v2863, %v2861
        %v2932 = vpack.c.b16 %v2866, %v2864
        %v2933 = vpack.c.b16 %v2867, %v2865
        %v2934 = vpack.c.b16 %v2870, %v2868
        %v2935 = vpack.c.b16 %v2871, %v2869
        %v2936 = vpack.c.b16 %v2874, %v2872
        %v2937 = vpack.c.b16 %v2875, %v2873
        %v2938 = vpack.c.b16 %v2878, %v2876
        %v2939 = vpack.c.b16 %v2879, %v2877
        %v2940 = vpack.c.b16 %v2882, %v2880
        %v2941 = vpack.c.b16 %v2883, %v2881
        %v2942 = vpack.c.b16 %v2886, %v2884
        %v2943 = vpack.c.b16 %v2887, %v2885
        %v3001 = vsel %vm694, %v2663, 0
        %3003 = vmatprep.subr.bf16.mxu0 %v2889
        %3004 = vmatpush1.bf16.msra.mxu0 %v2888
        %3005 = vmatprep.subr.bf16.mxu0 %v2891
        %3006 = vmatpush1.bf16.msra.mxu0 %v2890
        %3007 = vmatprep.subr.bf16.mxu0 %v2893
        %3008 = vmatpush1.bf16.msra.mxu0 %v2892
        %3009 = vmatprep.subr.bf16.mxu0 %v2895
        %3010 = vmatpush1.bf16.msra.mxu0 %v2894
        %3011 = vmatprep.subr.bf16.mxu0 %v2897
        %3012 = vmatpush1.bf16.msra.mxu0 %v2896
        %3013 = vmatprep.subr.bf16.mxu0 %v2899
        %3014 = vmatpush1.bf16.msra.mxu0 %v2898
        %3015 = vmatprep.subr.bf16.mxu0 %v2901
        %3016 = vmatpush1.bf16.msra.mxu0 %v2900
        %3017 = vmatprep.subr.bf16.mxu0 %v2903
        %3018 = vmatpush1.bf16.msra.mxu0 %v2902
        %3019 = vmatprep.subr.bf16.mxu0 %v2905
        %3020 = vmatpush1.bf16.msra.mxu0 %v2904
        %3021 = vmatprep.subr.bf16.mxu0 %v2907
        %3022 = vmatpush1.bf16.msra.mxu0 %v2906
        %3023 = vmatprep.subr.bf16.mxu0 %v2909
        %3024 = vmatpush1.bf16.msra.mxu0 %v2908
        %3025 = vmatprep.subr.bf16.mxu0 %v2911
        %3026 = vmatpush1.bf16.msra.mxu0 %v2910
        %3027 = vmatprep.subr.bf16.mxu0 %v2913
        %3028 = vmatpush1.bf16.msra.mxu0 %v2912
        %3029 = vmatprep.subr.bf16.mxu0 %v2915
        %3030 = vmatpush1.bf16.msra.mxu0 %v2914
        %3031 = vmatprep.subr.bf16.mxu0 %v2917
        %3032 = vmatpush1.bf16.msra.mxu0 %v2916
        %3033 = vmatprep.subr.bf16.mxu0 %v2919
        %3034 = vmatpush1.bf16.msra.mxu0 %v2918
        %3035 = vmatprep.mubr.bf16.mxu0 %v2661
        %3036 = vmatmul.mubr.bf16.gmra.mrb[0].mxu0 %v2660
        %v3037 = vpop.f32.mrb[0].mxu0
        %v3038 = vadd.f32 0.0, %v3037
        %v3039 = vpop.f32.mrb[0].mxu0
        %v3040 = vadd.f32 0.0, %v3039
        %v3041 = vpop.f32.mrb[0].mxu0
        %v3042 = vadd.f32 0.0, %v3041
        %v3043 = vpop.f32.mrb[0].mxu0
        %v3044 = vadd.f32 0.0, %v3043
        %3045 = vdwg.mxu0
        %3046 = vmatprep.subr.bf16.mxu0 %v2921
        %3047 = vmatpush1.bf16.msra.mxu0 %v2920
        %3048 = vmatprep.subr.bf16.mxu0 %v2923
        %3049 = vmatpush1.bf16.msra.mxu0 %v2922
        %3050 = vmatprep.subr.bf16.mxu0 %v2925
        %3051 = vmatpush1.bf16.msra.mxu0 %v2924
        %3052 = vmatprep.subr.bf16.mxu0 %v2927
        %3053 = vmatpush1.bf16.msra.mxu0 %v2926
        %3054 = vmatprep.subr.bf16.mxu0 %v2929
        %3055 = vmatpush1.bf16.msra.mxu0 %v2928
        %3056 = vmatprep.subr.bf16.mxu0 %v2931
        %3057 = vmatpush1.bf16.msra.mxu0 %v2930
        %3058 = vmatprep.subr.bf16.mxu0 %v2933
        %3059 = vmatpush1.bf16.msra.mxu0 %v2932
        %3060 = vmatprep.subr.bf16.mxu0 %v2935
        %3061 = vmatpush1.bf16.msra.mxu0 %v2934
        %3062 = vmatprep.subr.bf16.mxu0 %v2937
        %3063 = vmatpush1.bf16.msra.mxu0 %v2936
        %3064 = vmatprep.subr.bf16.mxu0 %v2939
        %3065 = vmatpush1.bf16.msra.mxu0 %v2938
        %3066 = vmatprep.subr.bf16.mxu0 %v2941
        %3067 = vmatpush1.bf16.msra.mxu0 %v2940
        %3068 = vmatprep.subr.bf16.mxu0 %v2943
        %3069 = vmatpush1.bf16.msra.mxu0 %v2942
        %3070 = vmatprep.subr.bf16.mxu0 0
        %3071 = vmatpush1.bf16.msra.mxu0 0
        %3072 = vmatprep.subr.bf16.mxu0 0
        %3073 = vmatpush1.bf16.msra.mxu0 0
        %3074 = vmatprep.subr.bf16.mxu0 0
        %3075 = vmatpush1.bf16.msra.mxu0 0
        %3076 = vmatprep.subr.bf16.mxu0 0
        %3077 = vmatpush1.bf16.msra.mxu0 0
        %3078 = vmatprep.mubr.bf16.mxu0 %v3001
        %3079 = vmatmul.mubr.bf16.gmra.mrb[0].mxu0 %v2662
        %v3080 = vpop.f32.mrb[0].mxu0
        %v3081 = vadd.f32 %v3038, %v3080
        %v3082 = vpop.f32.mrb[0].mxu0
        %v3083 = vadd.f32 %v3040, %v3082
        %v3084 = vpop.f32.mrb[0].mxu0
        %v3085 = vadd.f32 %v3042, %v3084
        %v3086 = vpop.f32.mrb[0].mxu0
        %v3087 = vadd.f32 %v3044, %v3086
        %3088 = vdwg.mxu0
        %v3089 = vld [vmem:[#allocation4] sm:$0xff]
        %v3090 = vld [vmem:[#allocation4 + $0x8] sm:$0xff]
        %v3091 = vld [vmem:[#allocation4 + $0x10] sm:$0xff]
        %v3092 = vld [vmem:[#allocation4 + $0x18] sm:$0xff]
        %v3093 = vld [vmem:[#allocation4 + $0x20] sm:$0xff]
        %v3094 = vld [vmem:[#allocation4 + $0x28] sm:$0xff]
        %v3095 = vld [vmem:[#allocation4 + $0x30] sm:$0xff]
        %v3096 = vld [vmem:[#allocation4 + $0x38] sm:$0xff]
        %v3097 = vld [vmem:[#allocation4 + $0x40] sm:$0xff]
        %v3098 = vld [vmem:[#allocation4 + $0x48] sm:$0xff]
        %v3099 = vld [vmem:[#allocation4 + $0x50] sm:$0xff]
        %v3100 = vld [vmem:[#allocation4 + $0x58] sm:$0xff]
        %v3101 = vld [vmem:[#allocation4 + $0x60] sm:$0xff]
        %v3102 = vld [vmem:[#allocation4 + $0x68] sm:$0xff]
        %v3103 = vld [vmem:[#allocation4 + $0x70] sm:$0xff]
        %v3104 = vld [vmem:[#allocation4 + $0x78] sm:$0xff]
        %v3105 = vld [vmem:[#allocation4 + $0x80] sm:$0xff]
        %v3106 = vld [vmem:[#allocation4 + $0x88] sm:$0xff]
        %v3107 = vld [vmem:[#allocation4 + $0x90] sm:$0xff]
        %v3108 = vld [vmem:[#allocation4 + $0x98] sm:$0xff]
        %v3109 = vld [vmem:[#allocation4 + $0xa0] sm:$0xff]
        %v3110 = vld [vmem:[#allocation4 + $0xa8] sm:$0xff]
        %v3111 = vld [vmem:[#allocation4 + $0xb0] sm:$0xff]
        %v3112 = vld [vmem:[#allocation4 + $0xb8] sm:$0xff]
        %v3113 = vld [vmem:[#allocation4 + $0xc0] sm:$0xff]
        %v3114 = vld [vmem:[#allocation4 + $0xc8] sm:$0xff]
        %v3115 = vld [vmem:[#allocation4 + $0xd0] sm:$0xff]
        %v3116 = vld [vmem:[#allocation4 + $0xd8] sm:$0xff]
        %v3117 = vld [vmem:[#allocation4 + $0xe0] sm:$0xff]
        %v3118 = vld [vmem:[#allocation4 + $0xe8] sm:$0xff]
        %v3119 = vld [vmem:[#allocation4 + $0xf0] sm:$0xff]
        %v3120 = vld [vmem:[#allocation4 + $0xf8] sm:$0xff]
        %v3121 = vld [vmem:[#allocation4 + $0x100] sm:$0xff]
        %v3122 = vld [vmem:[#allocation4 + $0x108] sm:$0xff]
        %v3123 = vld [vmem:[#allocation4 + $0x110] sm:$0xff]
        %v3124 = vld [vmem:[#allocation4 + $0x118] sm:$0xff]
        %v3125 = vld [vmem:[#allocation4 + $0x120] sm:$0xff]
        %v3126 = vld [vmem:[#allocation4 + $0x128] sm:$0xff]
        %v3127 = vld [vmem:[#allocation4 + $0x130] sm:$0xff]
        %v3128 = vld [vmem:[#allocation4 + $0x138] sm:$0xff]
        %v3129 = vld [vmem:[#allocation4 + $0x140] sm:$0xff]
        %v3130 = vld [vmem:[#allocation4 + $0x148] sm:$0xff]
        %v3131 = vld [vmem:[#allocation4 + $0x150] sm:$0xff]
        %v3132 = vld [vmem:[#allocation4 + $0x158] sm:$0xff]
        %v3133 = vld [vmem:[#allocation4 + $0x160] sm:$0xff]
        %v3134 = vld [vmem:[#allocation4 + $0x168] sm:$0xff]
        %v3135 = vld [vmem:[#allocation4 + $0x170] sm:$0xff]
        %v3136 = vld [vmem:[#allocation4 + $0x178] sm:$0xff]
        %v3137 = vld [vmem:[#allocation4 + $0x180] sm:$0xff]
        %v3138 = vld [vmem:[#allocation4 + $0x188] sm:$0xff]
        %v3139 = vld [vmem:[#allocation4 + $0x190] sm:$0xff]
        %v3140 = vld [vmem:[#allocation4 + $0x198] sm:$0xff]
        %v3141 = vld [vmem:[#allocation4 + $0x1a0] sm:$0xff]
        %v3142 = vld [vmem:[#allocation4 + $0x1a8] sm:$0xff]
        %v3143 = vld [vmem:[#allocation4 + $0x1b0] sm:$0xff]
        %v3144 = vld [vmem:[#allocation4 + $0x1b8] sm:$0xff]
        %v3201 = vunpack.c.l.b16 %v3089
        %v3202 = vunpack.c.h.b16 %v3089
        %v3203 = vunpack.c.l.b16 %v3090
        %v3204 = vunpack.c.h.b16 %v3090
        %v3205 = vunpack.c.l.b16 %v3091
        %v3206 = vunpack.c.h.b16 %v3091
        %v3207 = vunpack.c.l.b16 %v3092
        %v3208 = vunpack.c.h.b16 %v3092
        %v3209 = vunpack.c.l.b16 %v3093
        %v3210 = vunpack.c.h.b16 %v3093
        %v3211 = vunpack.c.l.b16 %v3094
        %v3212 = vunpack.c.h.b16 %v3094
        %v3213 = vunpack.c.l.b16 %v3095
        %v3214 = vunpack.c.h.b16 %v3095
        %v3215 = vunpack.c.l.b16 %v3096
        %v3216 = vunpack.c.h.b16 %v3096
        %v3217 = vunpack.c.l.b16 %v3097
        %v3218 = vunpack.c.h.b16 %v3097
        %v3219 = vunpack.c.l.b16 %v3098
        %v3220 = vunpack.c.h.b16 %v3098
        %v3221 = vunpack.c.l.b16 %v3099
        %v3222 = vunpack.c.h.b16 %v3099
        %v3223 = vunpack.c.l.b16 %v3100
        %v3224 = vunpack.c.h.b16 %v3100
        %v3225 = vunpack.c.l.b16 %v3101
        %v3226 = vunpack.c.h.b16 %v3101
        %v3227 = vunpack.c.l.b16 %v3102
        %v3228 = vunpack.c.h.b16 %v3102
        %v3229 = vunpack.c.l.b16 %v3103
        %v3230 = vunpack.c.h.b16 %v3103
        %v3231 = vunpack.c.l.b16 %v3104
        %v3232 = vunpack.c.h.b16 %v3104
        %v3233 = vunpack.c.l.b16 %v3105
        %v3234 = vunpack.c.h.b16 %v3105
        %v3235 = vunpack.c.l.b16 %v3106
        %v3236 = vunpack.c.h.b16 %v3106
        %v3237 = vunpack.c.l.b16 %v3107
        %v3238 = vunpack.c.h.b16 %v3107
        %v3239 = vunpack.c.l.b16 %v3108
        %v3240 = vunpack.c.h.b16 %v3108
        %v3241 = vunpack.c.l.b16 %v3109
        %v3242 = vunpack.c.h.b16 %v3109
        %v3243 = vunpack.c.l.b16 %v3110
        %v3244 = vunpack.c.h.b16 %v3110
        %v3245 = vunpack.c.l.b16 %v3111
        %v3246 = vunpack.c.h.b16 %v3111
        %v3247 = vunpack.c.l.b16 %v3112
        %v3248 = vunpack.c.h.b16 %v3112
        %v3249 = vunpack.c.l.b16 %v3113
        %v3250 = vunpack.c.h.b16 %v3113
        %v3251 = vunpack.c.l.b16 %v3114
        %v3252 = vunpack.c.h.b16 %v3114
        %v3253 = vunpack.c.l.b16 %v3115
        %v3254 = vunpack.c.h.b16 %v3115
        %v3255 = vunpack.c.l.b16 %v3116
        %v3256 = vunpack.c.h.b16 %v3116
        %v3257 = vunpack.c.l.b16 %v3117
        %v3258 = vunpack.c.h.b16 %v3117
        %v3259 = vunpack.c.l.b16 %v3118
        %v3260 = vunpack.c.h.b16 %v3118
        %v3261 = vunpack.c.l.b16 %v3119
        %v3262 = vunpack.c.h.b16 %v3119
        %v3263 = vunpack.c.l.b16 %v3120
        %v3264 = vunpack.c.h.b16 %v3120
        %v3265 = vunpack.c.l.b16 %v3121
        %v3266 = vunpack.c.h.b16 %v3121
        %v3267 = vunpack.c.l.b16 %v3122
        %v3268 = vunpack.c.h.b16 %v3122
        %v3269 = vunpack.c.l.b16 %v3123
        %v3270 = vunpack.c.h.b16 %v3123
        %v3271 = vunpack.c.l.b16 %v3124
        %v3272 = vunpack.c.h.b16 %v3124
        %v3273 = vunpack.c.l.b16 %v3125
        %v3274 = vunpack.c.h.b16 %v3125
        %v3275 = vunpack.c.l.b16 %v3126
        %v3276 = vunpack.c.h.b16 %v3126
        %v3277 = vunpack.c.l.b16 %v3127
        %v3278 = vunpack.c.h.b16 %v3127
        %v3279 = vunpack.c.l.b16 %v3128
        %v3280 = vunpack.c.h.b16 %v3128
        %v3281 = vunpack.c.l.b16 %v3129
        %v3282 = vunpack.c.h.b16 %v3129
        %v3283 = vunpack.c.l.b16 %v3130
        %v3284 = vunpack.c.h.b16 %v3130
        %v3285 = vunpack.c.l.b16 %v3131
        %v3286 = vunpack.c.h.b16 %v3131
        %v3287 = vunpack.c.l.b16 %v3132
        %v3288 = vunpack.c.h.b16 %v3132
        %v3289 = vunpack.c.l.b16 %v3133
        %v3290 = vunpack.c.h.b16 %v3133
        %v3291 = vunpack.c.l.b16 %v3134
        %v3292 = vunpack.c.h.b16 %v3134
        %v3293 = vunpack.c.l.b16 %v3135
        %v3294 = vunpack.c.h.b16 %v3135
        %v3295 = vunpack.c.l.b16 %v3136
        %v3296 = vunpack.c.h.b16 %v3136
        %v3297 = vunpack.c.l.b16 %v3137
        %v3298 = vunpack.c.h.b16 %v3137
        %v3299 = vunpack.c.l.b16 %v3138
        %v3300 = vunpack.c.h.b16 %v3138
        %v3301 = vunpack.c.l.b16 %v3139
        %v3302 = vunpack.c.h.b16 %v3139
        %v3303 = vunpack.c.l.b16 %v3140
        %v3304 = vunpack.c.h.b16 %v3140
        %v3305 = vunpack.c.l.b16 %v3141
        %v3306 = vunpack.c.h.b16 %v3141
        %v3307 = vunpack.c.l.b16 %v3142
        %v3308 = vunpack.c.h.b16 %v3142
        %v3309 = vunpack.c.l.b16 %v3143
        %v3310 = vunpack.c.h.b16 %v3143
        %v3311 = vunpack.c.l.b16 %v3144
        %v3312 = vunpack.c.h.b16 %v3144
        %v3313 = vpack.c.b16 %v3203, %v3201
        %v3314 = vpack.c.b16 %v3204, %v3202
        %v3315 = vpack.c.b16 %v3207, %v3205
        %v3316 = vpack.c.b16 %v3208, %v3206
        %v3317 = vpack.c.b16 %v3211, %v3209
        %v3318 = vpack.c.b16 %v3212, %v3210
        %v3319 = vpack.c.b16 %v3215, %v3213
        %v3320 = vpack.c.b16 %v3216, %v3214
        %v3321 = vpack.c.b16 %v3219, %v3217
        %v3322 = vpack.c.b16 %v3220, %v3218
        %v3323 = vpack.c.b16 %v3223, %v3221
        %v3324 = vpack.c.b16 %v3224, %v3222
        %v3325 = vpack.c.b16 %v3227, %v3225
        %v3326 = vpack.c.b16 %v3228, %v3226
        %v3327 = vpack.c.b16 %v3231, %v3229
        %v3328 = vpack.c.b16 %v3232, %v3230
        %v3329 = vpack.c.b16 %v3235, %v3233
        %v3330 = vpack.c.b16 %v3236, %v3234
        %v3331 = vpack.c.b16 %v3239, %v3237
        %v3332 = vpack.c.b16 %v3240, %v3238
        %v3333 = vpack.c.b16 %v3243, %v3241
        %v3334 = vpack.c.b16 %v3244, %v3242
        %v3335 = vpack.c.b16 %v3247, %v3245
        %v3336 = vpack.c.b16 %v3248, %v3246
        %v3337 = vpack.c.b16 %v3251, %v3249
        %v3338 = vpack.c.b16 %v3252, %v3250
        %v3339 = vpack.c.b16 %v3255, %v3253
        %v3340 = vpack.c.b16 %v3256, %v3254
        %v3341 = vpack.c.b16 %v3259, %v3257
        %v3342 = vpack.c.b16 %v3260, %v3258
        %v3343 = vpack.c.b16 %v3263, %v3261
        %v3344 = vpack.c.b16 %v3264, %v3262
        %v3345 = vpack.c.b16 %v3267, %v3265
        %v3346 = vpack.c.b16 %v3268, %v3266
        %v3347 = vpack.c.b16 %v3271, %v3269
        %v3348 = vpack.c.b16 %v3272, %v3270
        %v3349 = vpack.c.b16 %v3275, %v3273
        %v3350 = vpack.c.b16 %v3276, %v3274
        %v3351 = vpack.c.b16 %v3279, %v3277
        %v3352 = vpack.c.b16 %v3280, %v3278
        %v3353 = vpack.c.b16 %v3283, %v3281
        %v3354 = vpack.c.b16 %v3284, %v3282
        %v3355 = vpack.c.b16 %v3287, %v3285
        %v3356 = vpack.c.b16 %v3288, %v3286
        %v3357 = vpack.c.b16 %v3291, %v3289
        %v3358 = vpack.c.b16 %v3292, %v3290
        %v3359 = vpack.c.b16 %v3295, %v3293
        %v3360 = vpack.c.b16 %v3296, %v3294
        %v3361 = vpack.c.b16 %v3299, %v3297
        %v3362 = vpack.c.b16 %v3300, %v3298
        %v3363 = vpack.c.b16 %v3303, %v3301
        %v3364 = vpack.c.b16 %v3304, %v3302
        %v3365 = vpack.c.b16 %v3307, %v3305
        %v3366 = vpack.c.b16 %v3308, %v3306
        %v3367 = vpack.c.b16 %v3311, %v3309
        %v3368 = vpack.c.b16 %v3312, %v3310
        %3425 = vmatprep.subr.bf16.mxu0 %v3314
        %3426 = vmatpush1.bf16.msra.mxu0 %v3313
        %3427 = vmatprep.subr.bf16.mxu0 %v3316
        %3428 = vmatpush1.bf16.msra.mxu0 %v3315
        %3429 = vmatprep.subr.bf16.mxu0 %v3318
        %3430 = vmatpush1.bf16.msra.mxu0 %v3317
        %3431 = vmatprep.subr.bf16.mxu0 %v3320
        %3432 = vmatpush1.bf16.msra.mxu0 %v3319
        %3433 = vmatprep.subr.bf16.mxu0 %v3322
        %3434 = vmatpush1.bf16.msra.mxu0 %v3321
        %3435 = vmatprep.subr.bf16.mxu0 %v3324
        %3436 = vmatpush1.bf16.msra.mxu0 %v3323
        %3437 = vmatprep.subr.bf16.mxu0 %v3326
        %3438 = vmatpush1.bf16.msra.mxu0 %v3325
        %3439 = vmatprep.subr.bf16.mxu0 %v3328
        %3440 = vmatpush1.bf16.msra.mxu0 %v3327
        %3441 = vmatprep.subr.bf16.mxu0 %v3330
        %3442 = vmatpush1.bf16.msra.mxu0 %v3329
        %3443 = vmatprep.subr.bf16.mxu0 %v3332
        %3444 = vmatpush1.bf16.msra.mxu0 %v3331
        %3445 = vmatprep.subr.bf16.mxu0 %v3334
        %3446 = vmatpush1.bf16.msra.mxu0 %v3333
        %3447 = vmatprep.subr.bf16.mxu0 %v3336
        %3448 = vmatpush1.bf16.msra.mxu0 %v3335
        %3449 = vmatprep.subr.bf16.mxu0 %v3338
        %3450 = vmatpush1.bf16.msra.mxu0 %v3337
        %3451 = vmatprep.subr.bf16.mxu0 %v3340
        %3452 = vmatpush1.bf16.msra.mxu0 %v3339
        %3453 = vmatprep.subr.bf16.mxu0 %v3342
        %3454 = vmatpush1.bf16.msra.mxu0 %v3341
        %3455 = vmatprep.subr.bf16.mxu0 %v3344
        %3456 = vmatpush1.bf16.msra.mxu0 %v3343
        %3457 = vmatprep.mubr.bf16.mxu0 %v2661
        %3458 = vmatmul.mubr.bf16.gmra.mrb[0].mxu0 %v2660
        %v3459 = vpop.f32.mrb[0].mxu0
        %v3460 = vadd.f32 0.0, %v3459
        %v3461 = vpop.f32.mrb[0].mxu0
        %v3462 = vadd.f32 0.0, %v3461
        %v3463 = vpop.f32.mrb[0].mxu0
        %v3464 = vadd.f32 0.0, %v3463
        %v3465 = vpop.f32.mrb[0].mxu0
        %v3466 = vadd.f32 0.0, %v3465
        %3467 = vdwg.mxu0
        %3468 = vmatprep.subr.bf16.mxu0 %v3346
        %3469 = vmatpush1.bf16.msra.mxu0 %v3345
        %3470 = vmatprep.subr.bf16.mxu0 %v3348
        %3471 = vmatpush1.bf16.msra.mxu0 %v3347
        %3472 = vmatprep.subr.bf16.mxu0 %v3350
        %3473 = vmatpush1.bf16.msra.mxu0 %v3349
        %3474 = vmatprep.subr.bf16.mxu0 %v3352
        %3475 = vmatpush1.bf16.msra.mxu0 %v3351
        %3476 = vmatprep.subr.bf16.mxu0 %v3354
        %3477 = vmatpush1.bf16.msra.mxu0 %v3353
        %3478 = vmatprep.subr.bf16.mxu0 %v3356
        %3479 = vmatpush1.bf16.msra.mxu0 %v3355
        %3480 = vmatprep.subr.bf16.mxu0 %v3358
        %3481 = vmatpush1.bf16.msra.mxu0 %v3357
        %3482 = vmatprep.subr.bf16.mxu0 %v3360
        %3483 = vmatpush1.bf16.msra.mxu0 %v3359
        %3484 = vmatprep.subr.bf16.mxu0 %v3362
        %3485 = vmatpush1.bf16.msra.mxu0 %v3361
        %3486 = vmatprep.subr.bf16.mxu0 %v3364
        %3487 = vmatpush1.bf16.msra.mxu0 %v3363
        %3488 = vmatprep.subr.bf16.mxu0 %v3366
        %3489 = vmatpush1.bf16.msra.mxu0 %v3365
        %3490 = vmatprep.subr.bf16.mxu0 %v3368
        %3491 = vmatpush1.bf16.msra.mxu0 %v3367
        %3492 = vmatprep.subr.bf16.mxu0 0
        %3493 = vmatpush1.bf16.msra.mxu0 0
        %3494 = vmatprep.subr.bf16.mxu0 0
        %3495 = vmatpush1.bf16.msra.mxu0 0
        %3496 = vmatprep.subr.bf16.mxu0 0
        %3497 = vmatpush1.bf16.msra.mxu0 0
        %3498 = vmatprep.subr.bf16.mxu0 0
        %3499 = vmatpush1.bf16.msra.mxu0 0
        %3500 = vmatprep.mubr.bf16.mxu0 %v3001
        %3501 = vmatmul.mubr.bf16.gmra.mrb[0].mxu0 %v2662
        %v3502 = vpop.f32.mrb[0].mxu0
        %v3503 = vadd.f32 %v3460, %v3502
        %v3504 = vpop.f32.mrb[0].mxu0
        %v3505 = vadd.f32 %v3462, %v3504
        %v3506 = vpop.f32.mrb[0].mxu0
        %v3507 = vadd.f32 %v3464, %v3506
        %v3508 = vpop.f32.mrb[0].mxu0
        %v3509 = vadd.f32 %v3466, %v3508
        %3510 = vdwg.mxu0
        %v3511 = vmax.f32 %v3081, %v3503
        %v3512 = vmax.f32 %v3083, %v3505
        %v3513 = vmax.f32 %v3085, %v3507
        %v3514 = vmax.f32 %v3087, %v3509
        %v3515 = vpack.c.bf16 %v3513, %v3511
        %v3516 = vpack.c.bf16 %v3514, %v3512
        %v3519 = vunpack.c.l.b16 %v3515
        %v3520 = vunpack.c.l.b16 %v3516
        %v3521 = vunpack.c.h.b16 %v3515
        %v3522 = vunpack.c.h.b16 %v3516
        %v3523 = vpack.c.b16 %v3520, %v3519
        %v3524 = vpack.c.b16 %v3522, %v3521
        %vm3527 = vcmask 1043456
        %vm3528 = vcmask 785412
        %vm3529 = vmor %vm3528, %vm3527
        %3530 = vst.msk [vmem:[%s281] sm:$0xff] %vm3529, %v3523
        %vm3531 = vcmask 1042432
        %vm3532 = vcmask 784388
        %vm3533 = vmor %vm3532, %vm3531
        %3534 = vst.msk [vmem:[%s281 + $0x8] sm:$0x77] %vm3533, %v3524
        %p3535 = scmp.lt.s32.totalorder %s19, 1
        %s3536 = scalar_select %p3535, %s19, 1
        %s3537 = smul.addr %s3536, 4
        %s3538 = smul.addr %s3537, 4
        %s3539 = scalar_lea.vmem %s6, %s3538
        // Predicated region
        $region53: #{forward.2} parent=43 // pred_check
          %p3540 = pneg %p168
        $region54: #{forward.2} parent=43 // pred_check_branch
          %3542 = sbr.rel (%p3540) target = $region56
        $region55: #{forward.2} parent=43 // pred_region
          _
        $region56: #{forward.2} parent=43 // pred_fallthru
          _
      $region44: #{forward.2} parent=5 // pred_fallthru
        _
      %p3543 = scmp.le.s32.totalorder 2, %s14
      // Predicated region
      $region57: #{forward.2} parent=5 // pred_check
        %p3544 = pneg %p3543
      $region58: #{forward.2} parent=5 // pred_check_branch
        %3546 = sbr.rel (%p3544) target = $region60
      $region59: #{forward.2} parent=5 // pred_region
        %s3547 = ssub.s32 %s14, 2
        // Predicated region
        $region61: #{forward.2} parent=59 // pred_check
          %p3548 = pneg %p174
        $region62: #{forward.2} parent=59 // pred_check_branch
          %3550 = sbr.rel (%p3548) target = $region64
        $region63: #{forward.2} parent=59 // pred_region
          %p3551 = scmp.lt.s32.totalorder %s20, 1
          %s3552 = scalar_select %p3551, %s20, 1
          %s3553 = smul.addr %s3552, 4
          %s3554 = smul.addr %s3553, 4
          %s3555 = scalar_lea.vmem %s6, %s3554
        $region64: #{forward.2} parent=59 // pred_fallthru
          _
      $region60: #{forward.2} parent=5 // pred_fallthru
        _
    $region6: #{forward.2} parent=1 // loop_footer
      %s18 = sadd.s32 1, %s14
    $region7: #{forward.2} parent=1 // loop_footer_branch
      %13 = sbr.rel target = $region3
    $region8: #{forward.2} parent=1 // loop_exit
      _
    %3556 = vsyncpa [#allocation3], 1
    %s3557 = scalar_lea.sflag [#allocation3], 1
    %3558 = vsyncpa %s3557, 1
    %3559 = vsyncpa [#allocation5], 1

// kernel: forward.3
$region0: #{forward.3}
  #allocation0 [shape = 'u32[]', space=smem, size = 0x4, offset = 0x4, fixed_abs, tag = 'smem constant byte address 0x4 - core index']
  #allocation1 [shape = 'u32[144,128]{1,0:T(1,128)}', space=vmem, size = 0x12000, scoped, tag = 'internal scratch']
  %s0 = inlined_call_operand.vmem [shape: bf16[2,7,448], index: 0, kind: input, shape index: {}]
  %s1 = inlined_call_operand.vmem [shape: bf16[3,448,160], index: 1, kind: input, shape index: {}]
  %s2 = inlined_call_operand.vmem [shape: bf16[3,448,160], index: 2, kind: input, shape index: {}]
  %s3 = inlined_call_operand.vmem [shape: f32[1,160], index: 3, kind: input, shape index: {}]
  %s4 = inlined_call_operand.vmem [shape: bf16[160,80], index: 4, kind: input, shape index: {}]
  %s5 = inlined_call_operand.vmem [shape: bf16[160,80], index: 5, kind: input, shape index: {}]
  %s6 = inlined_call_operand.vmem [shape: bf16[5,80,128], index: 6, kind: input, shape index: {}]
  %s7 = inlined_call_operand.vmem [shape: f32[1,128], index: 7, kind: input, shape index: {}]
  %s8 = inlined_call_operand.vmem [shape: bf16[128,128], index: 8, kind: input, shape index: {}]
  %s9 = inlined_call_operand.vmem [shape: f32[1,128], index: 9, kind: input, shape index: {}]
  %s10 = inlined_call_operand.vmem [shape: bf16[128,128], index: 10, kind: input, shape index: {}]
  %s11 = inlined_call_operand.vmem [shape: f32[1,128], index: 11, kind: input, shape index: {}]
  %s12 = inlined_call_operand.hbm [shape: f32[2,1,128], index: 12, kind: output, shape index: {}]
  %s13 = sld [smem:[#allocation0]]
  $region81: #{forward.3} parent=0
    _
  %s15 = ssub.s32 1, %s13
  %s16 = scalar_select 0, %s15, %s13
  $region1: #{forward.3} parent=0
    #allocation2 [shape = 'u8[1024]{0}', space=vmem, size = 0x400, scoped, tag = 'output window, operand 0']
    #allocation3 [shape = 's32[2]{0}', space=sflag, size = 0x8, scoped, tag = 'scoped memory for forward.3']
    %17 = vsyncpa [#allocation3], 0
    %s18 = scalar_lea.sflag [#allocation3], 1
    %19 = vsyncpa %s18, 0
    loop: start=0, step=1, limit=4
    $region2: #{forward.3} parent=1 // loop_pre_header
      _
    $region3: #{forward.3} parent=1 // loop_header
      %s21 = sphi 0, %s25
      %p22 = scmp.ge.s32.totalorder %s21, 4
      %s31 = sphi 0, %s33
      %s34 = sphi 0, %s31
      %s35 = sphi 0, %s34
      %s51 = sphi 0, %s35
      %s55 = sphi 0, %s55
      %s57 = sphi 0, %s55
      %s58 = sphi 0, %s57
      %s72 = sphi 0, %s58
      %s76 = sphi 0, %s76
      %s78 = sphi 0, %s76
      %s79 = sphi 0, %s78
      %s93 = sphi 0, %s79
      %s97 = sphi 0, %s97
      %s99 = sphi 0, %s97
      %s100 = sphi 0, %s99
      %s114 = sphi 0, %s100
      %s118 = sphi 0, %s118
      %s120 = sphi 0, %s118
      %s121 = sphi 0, %s120
      %s135 = sphi 0, %s121
      %s139 = sphi 0, %s139
      %s141 = sphi 0, %s139
      %s142 = sphi 0, %s141
      %s156 = sphi 0, %s142
      %s160 = sphi 0, %s160
      %s162 = sphi 0, %s160
      %s163 = sphi 0, %s162
      %s177 = sphi 0, %s163
      %s181 = sphi 0, %s181
      %s183 = sphi 0, %s181
      %s184 = sphi 0, %s183
      %s198 = sphi 0, %s184
      %s202 = sphi 0, %s202
      %s204 = sphi 0, %s202
      %s205 = sphi 0, %s204
      %s219 = sphi 0, %s205
      %s223 = sphi 0, %s223
      %s225 = sphi 0, %s223
      %s226 = sphi 0, %s225
      %s240 = sphi 0, %s226
      %s244 = sphi 0, %s244
      %s246 = sphi 0, %s244
      %s247 = sphi 0, %s246
      %s261 = sphi 0, %s247
      %s265 = sphi 0, %s265
      %s267 = sphi 0, %s265
      %s268 = sphi 0, %s267
      %s282 = sphi 0, %s268
      %s288 = sphi 0, %s290
      %s291 = sphi 0, %s288
      %s292 = sphi 0, %s291
      %s308 = sphi 0, %s292
    $region4: #{forward.3} parent=1 // loop_header_branch
      %24 = sbr.rel (%p22) target = $region8
    $region5: #{forward.3} parent=1 // loop_body
      %s26 = ssub.s32 %s21, 1
      %s27 = ssub.s32 %s21, 2
      %s28 = sadd.s32 %s21, 1
      %s29 = ssub.s32 %s21, %s28
      %p30 = scmp.eq.s32.totalorder %s29, 0
      %s32 = sadd.s32 %s31, 1
      %s33 = scalar_select %p30, %s31, %s32
      %p36 = pneg %p30
      %p37 = scmp.eq.s32.totalorder %s21, 1
      %p38 = por %p36, %p37
      %p39 = scmp.ne.s32.totalorder %s31, %s34
      %p40 = scmp.eq.s32.totalorder %s21, 0
      %p41 = por %p39, %p40
      %p42 = scmp.ne.s32.totalorder %s31, %s34
      %p43 = scmp.eq.s32.totalorder %s26, 1
      %p44 = por %p42, %p43
      %p45 = scmp.ne.s32.totalorder %s34, %s35
      %p46 = scmp.eq.s32.totalorder %s26, 0
      %p47 = por %p45, %p46
      %p48 = scmp.ne.s32.totalorder %s34, %s35
      %p49 = scmp.eq.s32.totalorder %s27, 1
      %p50 = por %p48, %p49
      %p52 = scmp.ne.s32.totalorder %s35, %s51
      %p53 = scmp.eq.s32.totalorder %s27, 0
      %p54 = por %p52, %p53
      %s56 = sadd.s32 %s55, 1
      %p59 = scmp.eq.s32.totalorder %s21, 1
      %p60 = scmp.ne.s32.totalorder %s55, %s57
      %p61 = scmp.eq.s32.totalorder %s21, 0
      %p62 = por %p60, %p61
      %p63 = scmp.ne.s32.totalorder %s55, %s57
      %p64 = scmp.eq.s32.totalorder %s26, 1
      %p65 = por %p63, %p64
      %p66 = scmp.ne.s32.totalorder %s57, %s58
      %p67 = scmp.eq.s32.totalorder %s26, 0
      %p68 = por %p66, %p67
      %p69 = scmp.ne.s32.totalorder %s57, %s58
      %p70 = scmp.eq.s32.totalorder %s27, 1
      %p71 = por %p69, %p70
      %p73 = scmp.ne.s32.totalorder %s58, %s72
      %p74 = scmp.eq.s32.totalorder %s27, 0
      %p75 = por %p73, %p74
      %s77 = sadd.s32 %s76, 1
      %p80 = scmp.eq.s32.totalorder %s21, 1
      %p81 = scmp.ne.s32.totalorder %s76, %s78
      %p82 = scmp.eq.s32.totalorder %s21, 0
      %p83 = por %p81, %p82
      %p84 = scmp.ne.s32.totalorder %s76, %s78
      %p85 = scmp.eq.s32.totalorder %s26, 1
      %p86 = por %p84, %p85
      %p87 = scmp.ne.s32.totalorder %s78, %s79
      %p88 = scmp.eq.s32.totalorder %s26, 0
      %p89 = por %p87, %p88
      %p90 = scmp.ne.s32.totalorder %s78, %s79
      %p91 = scmp.eq.s32.totalorder %s27, 1
      %p92 = por %p90, %p91
      %p94 = scmp.ne.s32.totalorder %s79, %s93
      %p95 = scmp.eq.s32.totalorder %s27, 0
      %p96 = por %p94, %p95
      %s98 = sadd.s32 %s97, 1
      %p101 = scmp.eq.s32.totalorder %s21, 1
      %p102 = scmp.ne.s32.totalorder %s97, %s99
      %p103 = scmp.eq.s32.totalorder %s21, 0
      %p104 = por %p102, %p103
      %p105 = scmp.ne.s32.totalorder %s97, %s99
      %p106 = scmp.eq.s32.totalorder %s26, 1
      %p107 = por %p105, %p106
      %p108 = scmp.ne.s32.totalorder %s99, %s100
      %p109 = scmp.eq.s32.totalorder %s26, 0
      %p110 = por %p108, %p109
      %p111 = scmp.ne.s32.totalorder %s99, %s100
      %p112 = scmp.eq.s32.totalorder %s27, 1
      %p113 = por %p111, %p112
      %p115 = scmp.ne.s32.totalorder %s100, %s114
      %p116 = scmp.eq.s32.totalorder %s27, 0
      %p117 = por %p115, %p116
      %s119 = sadd.s32 %s118, 1
      %p122 = scmp.eq.s32.totalorder %s21, 1
      %p123 = scmp.ne.s32.totalorder %s118, %s120
      %p124 = scmp.eq.s32.totalorder %s21, 0
      %p125 = por %p123, %p124
      %p126 = scmp.ne.s32.totalorder %s118, %s120
      %p127 = scmp.eq.s32.totalorder %s26, 1
      %p128 = por %p126, %p127
      %p129 = scmp.ne.s32.totalorder %s120, %s121
      %p130 = scmp.eq.s32.totalorder %s26, 0
      %p131 = por %p129, %p130
      %p132 = scmp.ne.s32.totalorder %s120, %s121
      %p133 = scmp.eq.s32.totalorder %s27, 1
      %p134 = por %p132, %p133
      %p136 = scmp.ne.s32.totalorder %s121, %s135
      %p137 = scmp.eq.s32.totalorder %s27, 0
      %p138 = por %p136, %p137
      %s140 = sadd.s32 %s139, 1
      %p143 = scmp.eq.s32.totalorder %s21, 1
      %p144 = scmp.ne.s32.totalorder %s139, %s141
      %p145 = scmp.eq.s32.totalorder %s21, 0
      %p146 = por %p144, %p145
      %p147 = scmp.ne.s32.totalorder %s139, %s141
      %p148 = scmp.eq.s32.totalorder %s26, 1
      %p149 = por %p147, %p148
      %p150 = scmp.ne.s32.totalorder %s141, %s142
      %p151 = scmp.eq.s32.totalorder %s26, 0
      %p152 = por %p150, %p151
      %p153 = scmp.ne.s32.totalorder %s141, %s142
      %p154 = scmp.eq.s32.totalorder %s27, 1
      %p155 = por %p153, %p154
      %p157 = scmp.ne.s32.totalorder %s142, %s156
      %p158 = scmp.eq.s32.totalorder %s27, 0
      %p159 = por %p157, %p158
      %s161 = sadd.s32 %s160, 1
      %p164 = scmp.eq.s32.totalorder %s21, 1
      %p165 = scmp.ne.s32.totalorder %s160, %s162
      %p166 = scmp.eq.s32.totalorder %s21, 0
      %p167 = por %p165, %p166
      %p168 = scmp.ne.s32.totalorder %s160, %s162
      %p169 = scmp.eq.s32.totalorder %s26, 1
      %p170 = por %p168, %p169
      %p171 = scmp.ne.s32.totalorder %s162, %s163
      %p172 = scmp.eq.s32.totalorder %s26, 0
      %p173 = por %p171, %p172
      %p174 = scmp.ne.s32.totalorder %s162, %s163
      %p175 = scmp.eq.s32.totalorder %s27, 1
      %p176 = por %p174, %p175
      %p178 = scmp.ne.s32.totalorder %s163, %s177
      %p179 = scmp.eq.s32.totalorder %s27, 0
      %p180 = por %p178, %p179
      %s182 = sadd.s32 %s181, 1
      %p185 = scmp.eq.s32.totalorder %s21, 1
      %p186 = scmp.ne.s32.totalorder %s181, %s183
      %p187 = scmp.eq.s32.totalorder %s21, 0
      %p188 = por %p186, %p187
      %p189 = scmp.ne.s32.totalorder %s181, %s183
      %p190 = scmp.eq.s32.totalorder %s26, 1
      %p191 = por %p189, %p190
      %p192 = scmp.ne.s32.totalorder %s183, %s184
      %p193 = scmp.eq.s32.totalorder %s26, 0
      %p194 = por %p192, %p193
      %p195 = scmp.ne.s32.totalorder %s183, %s184
      %p196 = scmp.eq.s32.totalorder %s27, 1
      %p197 = por %p195, %p196
      %p199 = scmp.ne.s32.totalorder %s184, %s198
      %p200 = scmp.eq.s32.totalorder %s27, 0
      %p201 = por %p199, %p200
      %s203 = sadd.s32 %s202, 1
      %p206 = scmp.eq.s32.totalorder %s21, 1
      %p207 = scmp.ne.s32.totalorder %s202, %s204
      %p208 = scmp.eq.s32.totalorder %s21, 0
      %p209 = por %p207, %p208
      %p210 = scmp.ne.s32.totalorder %s202, %s204
      %p211 = scmp.eq.s32.totalorder %s26, 1
      %p212 = por %p210, %p211
      %p213 = scmp.ne.s32.totalorder %s204, %s205
      %p214 = scmp.eq.s32.totalorder %s26, 0
      %p215 = por %p213, %p214
      %p216 = scmp.ne.s32.totalorder %s204, %s205
      %p217 = scmp.eq.s32.totalorder %s27, 1
      %p218 = por %p216, %p217
      %p220 = scmp.ne.s32.totalorder %s205, %s219
      %p221 = scmp.eq.s32.totalorder %s27, 0
      %p222 = por %p220, %p221
      %s224 = sadd.s32 %s223, 1
      %p227 = scmp.eq.s32.totalorder %s21, 1
      %p228 = scmp.ne.s32.totalorder %s223, %s225
      %p229 = scmp.eq.s32.totalorder %s21, 0
      %p230 = por %p228, %p229
      %p231 = scmp.ne.s32.totalorder %s223, %s225
      %p232 = scmp.eq.s32.totalorder %s26, 1
      %p233 = por %p231, %p232
      %p234 = scmp.ne.s32.totalorder %s225, %s226
      %p235 = scmp.eq.s32.totalorder %s26, 0
      %p236 = por %p234, %p235
      %p237 = scmp.ne.s32.totalorder %s225, %s226
      %p238 = scmp.eq.s32.totalorder %s27, 1
      %p239 = por %p237, %p238
      %p241 = scmp.ne.s32.totalorder %s226, %s240
      %p242 = scmp.eq.s32.totalorder %s27, 0
      %p243 = por %p241, %p242
      %s245 = sadd.s32 %s244, 1
      %p248 = scmp.eq.s32.totalorder %s21, 1
      %p249 = scmp.ne.s32.totalorder %s244, %s246
      %p250 = scmp.eq.s32.totalorder %s21, 0
      %p251 = por %p249, %p250
      %p252 = scmp.ne.s32.totalorder %s244, %s246
      %p253 = scmp.eq.s32.totalorder %s26, 1
      %p254 = por %p252, %p253
      %p255 = scmp.ne.s32.totalorder %s246, %s247
      %p256 = scmp.eq.s32.totalorder %s26, 0
      %p257 = por %p255, %p256
      %p258 = scmp.ne.s32.totalorder %s246, %s247
      %p259 = scmp.eq.s32.totalorder %s27, 1
      %p260 = por %p258, %p259
      %p262 = scmp.ne.s32.totalorder %s247, %s261
      %p263 = scmp.eq.s32.totalorder %s27, 0
      %p264 = por %p262, %p263
      %s266 = sadd.s32 %s265, 1
      %p269 = scmp.eq.s32.totalorder %s21, 1
      %p270 = scmp.ne.s32.totalorder %s265, %s267
      %p271 = scmp.eq.s32.totalorder %s21, 0
      %p272 = por %p270, %p271
      %p273 = scmp.ne.s32.totalorder %s265, %s267
      %p274 = scmp.eq.s32.totalorder %s26, 1
      %p275 = por %p273, %p274
      %p276 = scmp.ne.s32.totalorder %s267, %s268
      %p277 = scmp.eq.s32.totalorder %s26, 0
      %p278 = por %p276, %p277
      %p279 = scmp.ne.s32.totalorder %s267, %s268
      %p280 = scmp.eq.s32.totalorder %s27, 1
      %p281 = por %p279, %p280
      %p283 = scmp.ne.s32.totalorder %s268, %s282
      %p284 = scmp.eq.s32.totalorder %s27, 0
      %p285 = por %p283, %p284
      %s286 = ssub.s32 %s21, %s28
      %p287 = scmp.eq.s32.totalorder %s286, 0
      %s289 = sadd.s32 %s288, 1
      %s290 = scalar_select %p287, %s288, %s289
      %p293 = pneg %p287
      %p294 = scmp.eq.s32.totalorder %s21, 1
      %p295 = por %p293, %p294
      %p296 = scmp.ne.s32.totalorder %s288, %s291
      %p297 = scmp.eq.s32.totalorder %s21, 0
      %p298 = por %p296, %p297
      %p299 = scmp.ne.s32.totalorder %s288, %s291
      %p300 = scmp.eq.s32.totalorder %s26, 1
      %p301 = por %p299, %p300
      %p302 = scmp.ne.s32.totalorder %s291, %s292
      %p303 = scmp.eq.s32.totalorder %s26, 0
      %p304 = por %p302, %p303
      %p305 = scmp.ne.s32.totalorder %s291, %s292
      %p306 = scmp.eq.s32.totalorder %s27, 1
      %p307 = por %p305, %p306
      %p309 = scmp.ne.s32.totalorder %s292, %s308
      %p310 = scmp.eq.s32.totalorder %s27, 0
      %p311 = por %p309, %p310
      %p312 = scmp.le.s32.totalorder 1, %s21
      %p313 = scmp.lt.s32.totalorder %s21, 3
      %p314 = pnand %p312, %p313
      %p315 = pneg %p314
      // Predicated region
      $region9: #{forward.3} parent=5 // pred_check
        _
      $region10: #{forward.3} parent=5 // pred_check_branch
        %317 = sbr.rel (%p314) target = $region12
      $region11: #{forward.3} parent=5 // pred_region
        %s318 = ssub.s32 %s21, 1
        // Predicated region
        $region13: #{forward.3} parent=11 // pred_check
          %p319 = pneg %p68
        $region14: #{forward.3} parent=11 // pred_check_branch
          %321 = sbr.rel (%p319) target = $region16
        $region15: #{forward.3} parent=11 // pred_region
          _
        $region16: #{forward.3} parent=11 // pred_fallthru
          _
        // Predicated region
        $region17: #{forward.3} parent=11 // pred_check
          %p322 = pneg %p89
        $region18: #{forward.3} parent=11 // pred_check_branch
          %324 = sbr.rel (%p322) target = $region20
        $region19: #{forward.3} parent=11 // pred_region
          _
        $region20: #{forward.3} parent=11 // pred_fallthru
          _
        // Predicated region
        $region21: #{forward.3} parent=11 // pred_check
          %p325 = pneg %p110
        $region22: #{forward.3} parent=11 // pred_check_branch
          %327 = sbr.rel (%p325) target = $region24
        $region23: #{forward.3} parent=11 // pred_region
          _
        $region24: #{forward.3} parent=11 // pred_fallthru
          _
        // Predicated region
        $region25: #{forward.3} parent=11 // pred_check
          %p328 = pneg %p131
        $region26: #{forward.3} parent=11 // pred_check_branch
          %330 = sbr.rel (%p328) target = $region28
        $region27: #{forward.3} parent=11 // pred_region
          _
        $region28: #{forward.3} parent=11 // pred_fallthru
          _
        // Predicated region
        $region29: #{forward.3} parent=11 // pred_check
          %p331 = pneg %p152
        $region30: #{forward.3} parent=11 // pred_check_branch
          %333 = sbr.rel (%p331) target = $region32
        $region31: #{forward.3} parent=11 // pred_region
          _
        $region32: #{forward.3} parent=11 // pred_fallthru
          _
        // Predicated region
        $region33: #{forward.3} parent=11 // pred_check
          %p334 = pneg %p173
        $region34: #{forward.3} parent=11 // pred_check_branch
          %336 = sbr.rel (%p334) target = $region36
        $region35: #{forward.3} parent=11 // pred_region
          _
        $region36: #{forward.3} parent=11 // pred_fallthru
          _
        // Predicated region
        $region37: #{forward.3} parent=11 // pred_check
          %p337 = pneg %p194
        $region38: #{forward.3} parent=11 // pred_check_branch
          %339 = sbr.rel (%p337) target = $region40
        $region39: #{forward.3} parent=11 // pred_region
          _
        $region40: #{forward.3} parent=11 // pred_fallthru
          _
        // Predicated region
        $region41: #{forward.3} parent=11 // pred_check
          %p340 = pneg %p215
        $region42: #{forward.3} parent=11 // pred_check_branch
          %342 = sbr.rel (%p340) target = $region44
        $region43: #{forward.3} parent=11 // pred_region
          _
        $region44: #{forward.3} parent=11 // pred_fallthru
          _
        // Predicated region
        $region45: #{forward.3} parent=11 // pred_check
          %p343 = pneg %p236
        $region46: #{forward.3} parent=11 // pred_check_branch
          %345 = sbr.rel (%p343) target = $region48
        $region47: #{forward.3} parent=11 // pred_region
          _
        $region48: #{forward.3} parent=11 // pred_fallthru
          _
        // Predicated region
        $region49: #{forward.3} parent=11 // pred_check
          %p346 = pneg %p257
        $region50: #{forward.3} parent=11 // pred_check_branch
          %348 = sbr.rel (%p346) target = $region52
        $region51: #{forward.3} parent=11 // pred_region
          _
        $region52: #{forward.3} parent=11 // pred_fallthru
          _
        // Predicated region
        $region53: #{forward.3} parent=11 // pred_check
          %p349 = pneg %p278
        $region54: #{forward.3} parent=11 // pred_check_branch
          %351 = sbr.rel (%p349) target = $region56
        $region55: #{forward.3} parent=11 // pred_region
          _
        $region56: #{forward.3} parent=11 // pred_fallthru
          _
      $region12: #{forward.3} parent=5 // pred_fallthru
        _
      %p352 = scmp.lt.s32.totalorder %s21, 2
      // Predicated region
      $region57: #{forward.3} parent=5 // pred_check
        %p353 = pneg %p352
      $region58: #{forward.3} parent=5 // pred_check_branch
        %355 = sbr.rel (%p353) target = $region60
      $region59: #{forward.3} parent=5 // pred_region
        // Predicated region
        $region61: #{forward.3} parent=59 // pred_check
          %p356 = pneg %p41
        $region62: #{forward.3} parent=59 // pred_check_branch
          %358 = sbr.rel (%p356) target = $region64
        $region63: #{forward.3} parent=59 // pred_region
          %p359 = scmp.lt.s32.totalorder %s21, 1
          %s360 = scalar_select %p359, %s21, 1
          %s361 = smul.addr %s360, 4
          %s362 = smul.addr %s361, 4
          %s363 = scalar_lea.vmem %s0, %s362
        $region64: #{forward.3} parent=59 // pred_fallthru
          _
      $region60: #{forward.3} parent=5 // pred_fallthru
        _
      %p364 = scmp.le.s32.totalorder 1, %s21
      %p365 = scmp.lt.s32.totalorder %s21, 3
      %p366 = pnand %p364, %p365
      %p367 = pneg %p366
      // Predicated region
      $region65: #{forward.3} parent=5 // pred_check
        _
      $region66: #{forward.3} parent=5 // pred_check_branch
        %369 = sbr.rel (%p366) target = $region68
      $region67: #{forward.3} parent=5 // pred_region
        %s370 = ssub.s32 %s21, 1
        %p371 = scmp.lt.s32.totalorder %s26, 1
        %s372 = scalar_select %p371, %s26, 1
        %s373 = smul.addr %s372, 4
        %s374 = smul.addr %s373, 4
        %s375 = scalar_lea.vmem %s0, %s374
        %p376 = pneg %p47
        %p377 = pneg %p44
        %p378 = pneg %p68
        %p379 = pneg %p65
        %p380 = pneg %p89
        %p381 = pneg %p86
        %p382 = pneg %p110
        %p383 = pneg %p107
        %p384 = pneg %p131
        %p385 = pneg %p128
        %p386 = pneg %p152
        %p387 = pneg %p149
        %p388 = pneg %p173
        %p389 = pneg %p170
        %p390 = pneg %p194
        %p391 = pneg %p191
        %p392 = pneg %p215
        %p393 = pneg %p212
        %p394 = pneg %p236
        %p395 = pneg %p233
        %p396 = pneg %p257
        %p397 = pneg %p254
        %p398 = pneg %p278
        %p399 = pneg %p275
        %p400 = pneg %p304
        %p401 = pneg %p301
        %s402 = sand.u32 %s291, 1
        %s403 = scalar_lea.sflag [#allocation3], %s402
        %s404 = sand.u32 %s291, 1
        %s405 = scalar_lea.vmem [#allocation2], %s404
        %p406 = scmp.lt.s32.totalorder %s26, 1
        %s407 = scalar_select %p406, %s26, 1
        %s408 = smul.addr %s407, 4
        %s409 = smul.addr %s408, 4
        %s410 = scalar_lea.vmem %s0, %s409
        %v412 = vld [vmem:[%s410] sm:$0x77]
        %v413 = vld [vmem:[%s410 + $0x8] sm:$0x77]
        %v414 = vld [vmem:[%s1] sm:$0xff]
        %v415 = vld [vmem:[%s1 + $0x8] sm:$0xff]
        %v416 = vld [vmem:[%s1 + $0x10] sm:$0xff]
        %v417 = vld [vmem:[%s1 + $0x18] sm:$0xff]
        %v418 = vld [vmem:[%s1 + $0x20] sm:$0xff]
        %v419 = vld [vmem:[%s1 + $0x28] sm:$0xff]
        %v420 = vld [vmem:[%s1 + $0x30] sm:$0xff]
        %v421 = vld [vmem:[%s1 + $0x38] sm:$0xff]
        %v422 = vld [vmem:[%s1 + $0x40] sm:$0xff]
        %v423 = vld [vmem:[%s1 + $0x48] sm:$0xff]
        %v424 = vld [vmem:[%s1 + $0x50] sm:$0xff]
        %v425 = vld [vmem:[%s1 + $0x58] sm:$0xff]
        %v426 = vld [vmem:[%s1 + $0x60] sm:$0xff]
        %v427 = vld [vmem:[%s1 + $0x68] sm:$0xff]
        %v428 = vld [vmem:[%s1 + $0x70] sm:$0xff]
        %v429 = vld [vmem:[%s1 + $0x78] sm:$0xff]
        %v430 = vld [vmem:[%s1 + $0x80] sm:$0xff]
        %v431 = vld [vmem:[%s1 + $0x88] sm:$0xff]
        %v432 = vld [vmem:[%s1 + $0x90] sm:$0xff]
        %v433 = vld [vmem:[%s1 + $0x98] sm:$0xff]
        %v434 = vld [vmem:[%s1 + $0xa0] sm:$0xff]
        %v435 = vld [vmem:[%s1 + $0xa8] sm:$0xff]
        %v436 = vld [vmem:[%s1 + $0xb0] sm:$0xff]
        %v437 = vld [vmem:[%s1 + $0xb8] sm:$0xff]
        %v438 = vld [vmem:[%s1 + $0xc0] sm:$0xff]
        %v439 = vld [vmem:[%s1 + $0xc8] sm:$0xff]
        %v440 = vld [vmem:[%s1 + $0xd0] sm:$0xff]
        %v441 = vld [vmem:[%s1 + $0xd8] sm:$0xff]
        %v442 = vld [vmem:[%s1 + $0xe0] sm:$0xff]
        %v443 = vld [vmem:[%s1 + $0xe8] sm:$0xff]
        %v444 = vld [vmem:[%s1 + $0xf0] sm:$0xff]
        %v445 = vld [vmem:[%s1 + $0xf8] sm:$0xff]
        %v446 = vld [vmem:[%s1 + $0x100] sm:$0xff]
        %v447 = vld [vmem:[%s1 + $0x108] sm:$0xff]
        %v448 = vld [vmem:[%s1 + $0x110] sm:$0xff]
        %v449 = vld [vmem:[%s1 + $0x118] sm:$0xff]
        %v450 = vld [vmem:[%s1 + $0x120] sm:$0xff]
        %v451 = vld [vmem:[%s1 + $0x128] sm:$0xff]
        %v452 = vld [vmem:[%s1 + $0x130] sm:$0xff]
        %v453 = vld [vmem:[%s1 + $0x138] sm:$0xff]
        %v454 = vld [vmem:[%s1 + $0x140] sm:$0xff]
        %v455 = vld [vmem:[%s1 + $0x148] sm:$0xff]
        %v456 = vld [vmem:[%s1 + $0x150] sm:$0xff]
        %v457 = vld [vmem:[%s1 + $0x158] sm:$0xff]
        %v458 = vld [vmem:[%s1 + $0x160] sm:$0xff]
        %v459 = vld [vmem:[%s1 + $0x168] sm:$0xff]
        %v460 = vld [vmem:[%s1 + $0x170] sm:$0xff]
        %v461 = vld [vmem:[%s1 + $0x178] sm:$0xff]
        %v462 = vld [vmem:[%s1 + $0x180] sm:$0xff]
        %v463 = vld [vmem:[%s1 + $0x188] sm:$0xff]
        %v464 = vld [vmem:[%s1 + $0x190] sm:$0xff]
        %v465 = vld [vmem:[%s1 + $0x198] sm:$0xff]
        %v466 = vld [vmem:[%s1 + $0x1a0] sm:$0xff]
        %v467 = vld [vmem:[%s1 + $0x1a8] sm:$0xff]
        %v468 = vld [vmem:[%s1 + $0x1b0] sm:$0xff]
        %v469 = vld [vmem:[%s1 + $0x1b8] sm:$0xff]
        %v470 = vld [vmem:[%s2] sm:$0xff]
        %v471 = vld [vmem:[%s2 + $0x8] sm:$0xff]
        %v472 = vld [vmem:[%s2 + $0x10] sm:$0xff]
        %v473 = vld [vmem:[%s2 + $0x18] sm:$0xff]
        %v474 = vld [vmem:[%s2 + $0x20] sm:$0xff]
        %v475 = vld [vmem:[%s2 + $0x28] sm:$0xff]
        %v476 = vld [vmem:[%s2 + $0x30] sm:$0xff]
        %v477 = vld [vmem:[%s2 + $0x38] sm:$0xff]
        %v478 = vld [vmem:[%s2 + $0x40] sm:$0xff]
        %v479 = vld [vmem:[%s2 + $0x48] sm:$0xff]
        %v480 = vld [vmem:[%s2 + $0x50] sm:$0xff]
        %v481 = vld [vmem:[%s2 + $0x58] sm:$0xff]
        %v482 = vld [vmem:[%s2 + $0x60] sm:$0xff]
        %v483 = vld [vmem:[%s2 + $0x68] sm:$0xff]
        %v484 = vld [vmem:[%s2 + $0x70] sm:$0xff]
        %v485 = vld [vmem:[%s2 + $0x78] sm:$0xff]
        %v486 = vld [vmem:[%s2 + $0x80] sm:$0xff]
        %v487 = vld [vmem:[%s2 + $0x88] sm:$0xff]
        %v488 = vld [vmem:[%s2 + $0x90] sm:$0xff]
        %v489 = vld [vmem:[%s2 + $0x98] sm:$0xff]
        %v490 = vld [vmem:[%s2 + $0xa0] sm:$0xff]
        %v491 = vld [vmem:[%s2 + $0xa8] sm:$0xff]
        %v492 = vld [vmem:[%s2 + $0xb0] sm:$0xff]
        %v493 = vld [vmem:[%s2 + $0xb8] sm:$0xff]
        %v494 = vld [vmem:[%s2 + $0xc0] sm:$0xff]
        %v495 = vld [vmem:[%s2 + $0xc8] sm:$0xff]
        %v496 = vld [vmem:[%s2 + $0xd0] sm:$0xff]
        %v497 = vld [vmem:[%s2 + $0xd8] sm:$0xff]
        %v498 = vld [vmem:[%s2 + $0xe0] sm:$0xff]
        %v499 = vld [vmem:[%s2 + $0xe8] sm:$0xff]
        %v500 = vld [vmem:[%s2 + $0xf0] sm:$0xff]
        %v501 = vld [vmem:[%s2 + $0xf8] sm:$0xff]
        %v502 = vld [vmem:[%s2 + $0x100] sm:$0xff]
        %v503 = vld [vmem:[%s2 + $0x108] sm:$0xff]
        %v504 = vld [vmem:[%s2 + $0x110] sm:$0xff]
        %v505 = vld [vmem:[%s2 + $0x118] sm:$0xff]
        %v506 = vld [vmem:[%s2 + $0x120] sm:$0xff]
        %v507 = vld [vmem:[%s2 + $0x128] sm:$0xff]
        %v508 = vld [vmem:[%s2 + $0x130] sm:$0xff]
        %v509 = vld [vmem:[%s2 + $0x138] sm:$0xff]
        %v510 = vld [vmem:[%s2 + $0x140] sm:$0xff]
        %v511 = vld [vmem:[%s2 + $0x148] sm:$0xff]
        %v512 = vld [vmem:[%s2 + $0x150] sm:$0xff]
        %v513 = vld [vmem:[%s2 + $0x158] sm:$0xff]
        %v514 = vld [vmem:[%s2 + $0x160] sm:$0xff]
        %v515 = vld [vmem:[%s2 + $0x168] sm:$0xff]
        %v516 = vld [vmem:[%s2 + $0x170] sm:$0xff]
        %v517 = vld [vmem:[%s2 + $0x178] sm:$0xff]
        %v518 = vld [vmem:[%s2 + $0x180] sm:$0xff]
        %v519 = vld [vmem:[%s2 + $0x188] sm:$0xff]
        %v520 = vld [vmem:[%s2 + $0x190] sm:$0xff]
        %v521 = vld [vmem:[%s2 + $0x198] sm:$0xff]
        %v522 = vld [vmem:[%s2 + $0x1a0] sm:$0xff]
        %v523 = vld [vmem:[%s2 + $0x1a8] sm:$0xff]
        %v524 = vld [vmem:[%s2 + $0x1b0] sm:$0xff]
        %v525 = vld [vmem:[%s2 + $0x1b8] sm:$0xff]
        %s526 = scalar_lea.vmem %s1, 448
        %v527 = vld [vmem:[%s526] sm:$0xff]
        %v528 = vld [vmem:[%s526 + $0x8] sm:$0xff]
        %v529 = vld [vmem:[%s526 + $0x10] sm:$0xff]
        %v530 = vld [vmem:[%s526 + $0x18] sm:$0xff]
        %v531 = vld [vmem:[%s526 + $0x20] sm:$0xff]
        %v532 = vld [vmem:[%s526 + $0x28] sm:$0xff]
        %v533 = vld [vmem:[%s526 + $0x30] sm:$0xff]
        %v534 = vld [vmem:[%s526 + $0x38] sm:$0xff]
        %v535 = vld [vmem:[%s526 + $0x40] sm:$0xff]
        %v536 = vld [vmem:[%s526 + $0x48] sm:$0xff]
        %v537 = vld [vmem:[%s526 + $0x50] sm:$0xff]
        %v538 = vld [vmem:[%s526 + $0x58] sm:$0xff]
        %v539 = vld [vmem:[%s526 + $0x60] sm:$0xff]
        %v540 = vld [vmem:[%s526 + $0x68] sm:$0xff]
        %v541 = vld [vmem:[%s526 + $0x70] sm:$0xff]
        %v542 = vld [vmem:[%s526 + $0x78] sm:$0xff]
        %v543 = vld [vmem:[%s526 + $0x80] sm:$0xff]
        %v544 = vld [vmem:[%s526 + $0x88] sm:$0xff]
        %v545 = vld [vmem:[%s526 + $0x90] sm:$0xff]
        %v546 = vld [vmem:[%s526 + $0x98] sm:$0xff]
        %v547 = vld [vmem:[%s526 + $0xa0] sm:$0xff]
        %v548 = vld [vmem:[%s526 + $0xa8] sm:$0xff]
        %v549 = vld [vmem:[%s526 + $0xb0] sm:$0xff]
        %v550 = vld [vmem:[%s526 + $0xb8] sm:$0xff]
        %v551 = vld [vmem:[%s526 + $0xc0] sm:$0xff]
        %v552 = vld [vmem:[%s526 + $0xc8] sm:$0xff]
        %v553 = vld [vmem:[%s526 + $0xd0] sm:$0xff]
        %v554 = vld [vmem:[%s526 + $0xd8] sm:$0xff]
        %v555 = vld [vmem:[%s526 + $0xe0] sm:$0xff]
        %v556 = vld [vmem:[%s526 + $0xe8] sm:$0xff]
        %v557 = vld [vmem:[%s526 + $0xf0] sm:$0xff]
        %v558 = vld [vmem:[%s526 + $0xf8] sm:$0xff]
        %v559 = vld [vmem:[%s526 + $0x100] sm:$0xff]
        %v560 = vld [vmem:[%s526 + $0x108] sm:$0xff]
        %v561 = vld [vmem:[%s526 + $0x110] sm:$0xff]
        %v562 = vld [vmem:[%s526 + $0x118] sm:$0xff]
        %v563 = vld [vmem:[%s526 + $0x120] sm:$0xff]
        %v564 = vld [vmem:[%s526 + $0x128] sm:$0xff]
        %v565 = vld [vmem:[%s526 + $0x130] sm:$0xff]
        %v566 = vld [vmem:[%s526 + $0x138] sm:$0xff]
        %v567 = vld [vmem:[%s526 + $0x140] sm:$0xff]
        %v568 = vld [vmem:[%s526 + $0x148] sm:$0xff]
        %v569 = vld [vmem:[%s526 + $0x150] sm:$0xff]
        %v570 = vld [vmem:[%s526 + $0x158] sm:$0xff]
        %v571 = vld [vmem:[%s526 + $0x160] sm:$0xff]
        %v572 = vld [vmem:[%s526 + $0x168] sm:$0xff]
        %v573 = vld [vmem:[%s526 + $0x170] sm:$0xff]
        %v574 = vld [vmem:[%s526 + $0x178] sm:$0xff]
        %v575 = vld [vmem:[%s526 + $0x180] sm:$0xff]
        %v576 = vld [vmem:[%s526 + $0x188] sm:$0xff]
        %v577 = vld [vmem:[%s526 + $0x190] sm:$0xff]
        %v578 = vld [vmem:[%s526 + $0x198] sm:$0xff]
        %v579 = vld [vmem:[%s526 + $0x1a0] sm:$0xff]
        %v580 = vld [vmem:[%s526 + $0x1a8] sm:$0xff]
        %v581 = vld [vmem:[%s526 + $0x1b0] sm:$0xff]
        %v582 = vld [vmem:[%s526 + $0x1b8] sm:$0xff]
        %v585 = vunpack.c.l.b16 %v412
        %v586 = vunpack.c.h.b16 %v412
        %v587 = vunpack.c.l.b16 %v413
        %v588 = vunpack.c.h.b16 %v413
        %v589 = vpack.c.b16 %v585, %v585
        %v590 = vpack.c.b16 %v586, %v586
        %v591 = vpack.c.b16 %v587, %v587
        %v592 = vpack.c.b16 %v588, %v588
        %v594 = vshrl.u32 %v589, 16
        %v596 = vshll.u32 %v589, 16
        %v598 = vrot.slane %v596, 1
        %v599 = vor.u32 %v594, %v598
        %v601 = vshrl.u32 %v590, 16
        %v603 = vshll.u32 %v590, 16
        %v605 = vrot.slane %v603, 1
        %v606 = vor.u32 %v601, %v605
        %v608 = vshrl.u32 %v591, 16
        %v610 = vshll.u32 %v591, 16
        %v612 = vrot.slane %v610, 1
        %v613 = vor.u32 %v608, %v612
        %v615 = vshrl.u32 %v592, 16
        %v617 = vshll.u32 %v592, 16
        %v619 = vrot.slane %v617, 1
        %v620 = vor.u32 %v615, %v619
        %v680 = vunpack.c.l.b16 %v527
        %v681 = vunpack.c.h.b16 %v527
        %v682 = vunpack.c.l.b16 %v528
        %v683 = vunpack.c.h.b16 %v528
        %v684 = vunpack.c.l.b16 %v529
        %v685 = vunpack.c.h.b16 %v529
        %v686 = vunpack.c.l.b16 %v530
        %v687 = vunpack.c.h.b16 %v530
        %v688 = vunpack.c.l.b16 %v531
        %v689 = vunpack.c.h.b16 %v531
        %v690 = vunpack.c.l.b16 %v532
        %v691 = vunpack.c.h.b16 %v532
        %v692 = vunpack.c.l.b16 %v533
        %v693 = vunpack.c.h.b16 %v533
        %v694 = vunpack.c.l.b16 %v534
        %v695 = vunpack.c.h.b16 %v534
        %v696 = vunpack.c.l.b16 %v535
        %v697 = vunpack.c.h.b16 %v535
        %v698 = vunpack.c.l.b16 %v536
        %v699 = vunpack.c.h.b16 %v536
        %v700 = vunpack.c.l.b16 %v537
        %v701 = vunpack.c.h.b16 %v537
        %v702 = vunpack.c.l.b16 %v538
        %v703 = vunpack.c.h.b16 %v538
        %v704 = vunpack.c.l.b16 %v539
        %v705 = vunpack.c.h.b16 %v539
        %v706 = vunpack.c.l.b16 %v540
        %v707 = vunpack.c.h.b16 %v540
        %v708 = vunpack.c.l.b16 %v541
        %v709 = vunpack.c.h.b16 %v541
        %v710 = vunpack.c.l.b16 %v542
        %v711 = vunpack.c.h.b16 %v542
        %v712 = vunpack.c.l.b16 %v543
        %v713 = vunpack.c.h.b16 %v543
        %v714 = vunpack.c.l.b16 %v544
        %v715 = vunpack.c.h.b16 %v544
        %v716 = vunpack.c.l.b16 %v545
        %v717 = vunpack.c.h.b16 %v545
        %v718 = vunpack.c.l.b16 %v546
        %v719 = vunpack.c.h.b16 %v546
        %v720 = vunpack.c.l.b16 %v547
        %v721 = vunpack.c.h.b16 %v547
        %v722 = vunpack.c.l.b16 %v548
        %v723 = vunpack.c.h.b16 %v548
        %v724 = vunpack.c.l.b16 %v549
        %v725 = vunpack.c.h.b16 %v549
        %v726 = vunpack.c.l.b16 %v550
        %v727 = vunpack.c.h.b16 %v550
        %v728 = vunpack.c.l.b16 %v551
        %v729 = vunpack.c.h.b16 %v551
        %v730 = vunpack.c.l.b16 %v552
        %v731 = vunpack.c.h.b16 %v552
        %v732 = vunpack.c.l.b16 %v553
        %v733 = vunpack.c.h.b16 %v553
        %v734 = vunpack.c.l.b16 %v554
        %v735 = vunpack.c.h.b16 %v554
        %v736 = vunpack.c.l.b16 %v555
        %v737 = vunpack.c.h.b16 %v555
        %v738 = vunpack.c.l.b16 %v556
        %v739 = vunpack.c.h.b16 %v556
        %v740 = vunpack.c.l.b16 %v557
        %v741 = vunpack.c.h.b16 %v557
        %v742 = vunpack.c.l.b16 %v558
        %v743 = vunpack.c.h.b16 %v558
        %v744 = vunpack.c.l.b16 %v559
        %v745 = vunpack.c.h.b16 %v559
        %v746 = vunpack.c.l.b16 %v560
        %v747 = vunpack.c.h.b16 %v560
        %v748 = vunpack.c.l.b16 %v561
        %v749 = vunpack.c.h.b16 %v561
        %v750 = vunpack.c.l.b16 %v562
        %v751 = vunpack.c.h.b16 %v562
        %v752 = vunpack.c.l.b16 %v563
        %v753 = vunpack.c.h.b16 %v563
        %v754 = vunpack.c.l.b16 %v564
        %v755 = vunpack.c.h.b16 %v564
        %v756 = vunpack.c.l.b16 %v565
        %v757 = vunpack.c.h.b16 %v565
        %v758 = vunpack.c.l.b16 %v566
        %v759 = vunpack.c.h.b16 %v566
        %v760 = vunpack.c.l.b16 %v567
        %v761 = vunpack.c.h.b16 %v567
        %v762 = vunpack.c.l.b16 %v568
        %v763 = vunpack.c.h.b16 %v568
        %v764 = vunpack.c.l.b16 %v569
        %v765 = vunpack.c.h.b16 %v569
        %v766 = vunpack.c.l.b16 %v570
        %v767 = vunpack.c.h.b16 %v570
        %v768 = vunpack.c.l.b16 %v571
        %v769 = vunpack.c.h.b16 %v571
        %v770 = vunpack.c.l.b16 %v572
        %v771 = vunpack.c.h.b16 %v572
        %v772 = vunpack.c.l.b16 %v573
        %v773 = vunpack.c.h.b16 %v573
        %v774 = vunpack.c.l.b16 %v574
        %v775 = vunpack.c.h.b16 %v574
        %v776 = vunpack.c.l.b16 %v575
        %v777 = vunpack.c.h.b16 %v575
        %v778 = vunpack.c.l.b16 %v576
        %v779 = vunpack.c.h.b16 %v576
        %v780 = vunpack.c.l.b16 %v577
        %v781 = vunpack.c.h.b16 %v577
        %v782 = vunpack.c.l.b16 %v578
        %v783 = vunpack.c.h.b16 %v578
        %v784 = vunpack.c.l.b16 %v579
        %v785 = vunpack.c.h.b16 %v579
        %v786 = vunpack.c.l.b16 %v580
        %v787 = vunpack.c.h.b16 %v580
        %v788 = vunpack.c.l.b16 %v581
        %v789 = vunpack.c.h.b16 %v581
        %v790 = vunpack.c.l.b16 %v582
        %v791 = vunpack.c.h.b16 %v582
        %v792 = vpack.c.b16 %v682, %v680
        %v793 = vpack.c.b16 %v683, %v681
        %v794 = vpack.c.b16 %v686, %v684
        %v795 = vpack.c.b16 %v687, %v685
        %v796 = vpack.c.b16 %v690, %v688
        %v797 = vpack.c.b16 %v691, %v689
        %v798 = vpack.c.b16 %v694, %v692
        %v799 = vpack.c.b16 %v695, %v693
        %v800 = vpack.c.b16 %v698, %v696
        %v801 = vpack.c.b16 %v699, %v697
        %v802 = vpack.c.b16 %v702, %v700
        %v803 = vpack.c.b16 %v703, %v701
        %v804 = vpack.c.b16 %v706, %v704
        %v805 = vpack.c.b16 %v707, %v705
        %v806 = vpack.c.b16 %v710, %v708
        %v807 = vpack.c.b16 %v711, %v709
        %v808 = vpack.c.b16 %v714, %v712
        %v809 = vpack.c.b16 %v715, %v713
        %v810 = vpack.c.b16 %v718, %v716
        %v811 = vpack.c.b16 %v719, %v717
        %v812 = vpack.c.b16 %v722, %v720
        %v813 = vpack.c.b16 %v723, %v721
        %v814 = vpack.c.b16 %v726, %v724
        %v815 = vpack.c.b16 %v727, %v725
        %v816 = vpack.c.b16 %v730, %v728
        %v817 = vpack.c.b16 %v731, %v729
        %v818 = vpack.c.b16 %v734, %v732
        %v819 = vpack.c.b16 %v735, %v733
        %v820 = vpack.c.b16 %v738, %v736
        %v821 = vpack.c.b16 %v739, %v737
        %v822 = vpack.c.b16 %v742, %v740
        %v823 = vpack.c.b16 %v743, %v741
        %v824 = vpack.c.b16 %v746, %v744
        %v825 = vpack.c.b16 %v747, %v745
        %v826 = vpack.c.b16 %v750, %v748
        %v827 = vpack.c.b16 %v751, %v749
        %v828 = vpack.c.b16 %v754, %v752
        %v829 = vpack.c.b16 %v755, %v753
        %v830 = vpack.c.b16 %v758, %v756
        %v831 = vpack.c.b16 %v759, %v757
        %v832 = vpack.c.b16 %v762, %v760
        %v833 = vpack.c.b16 %v763, %v761
        %v834 = vpack.c.b16 %v766, %v764
        %v835 = vpack.c.b16 %v767, %v765
        %v836 = vpack.c.b16 %v770, %v768
        %v837 = vpack.c.b16 %v771, %v769
        %v838 = vpack.c.b16 %v774, %v772
        %v839 = vpack.c.b16 %v775, %v773
        %v840 = vpack.c.b16 %v778, %v776
        %v841 = vpack.c.b16 %v779, %v777
        %v842 = vpack.c.b16 %v782, %v780
        %v843 = vpack.c.b16 %v783, %v781
        %v844 = vpack.c.b16 %v786, %v784
        %v845 = vpack.c.b16 %v787, %v785
        %v846 = vpack.c.b16 %v790, %v788
        %v847 = vpack.c.b16 %v791, %v789
        %vm904 = vcmask 523264
        %v906 = vsel %vm904, %v620, 0
        %908 = vmatprep.subr.bf16.mxu0 %v793
        %909 = vmatpush1.bf16.msra.mxu0 %v792
        %910 = vmatprep.subr.bf16.mxu0 %v795
        %911 = vmatpush1.bf16.msra.mxu0 %v794
        %912 = vmatprep.subr.bf16.mxu0 %v797
        %913 = vmatpush1.bf16.msra.mxu0 %v796
        %914 = vmatprep.subr.bf16.mxu0 %v799
        %915 = vmatpush1.bf16.msra.mxu0 %v798
        %916 = vmatprep.subr.bf16.mxu0 %v801
        %917 = vmatpush1.bf16.msra.mxu0 %v800
        %918 = vmatprep.subr.bf16.mxu0 %v803
        %919 = vmatpush1.bf16.msra.mxu0 %v802
        %920 = vmatprep.subr.bf16.mxu0 %v805
        %921 = vmatpush1.bf16.msra.mxu0 %v804
        %922 = vmatprep.subr.bf16.mxu0 %v807
        %923 = vmatpush1.bf16.msra.mxu0 %v806
        %924 = vmatprep.subr.bf16.mxu0 %v809
        %925 = vmatpush1.bf16.msra.mxu0 %v808
        %926 = vmatprep.subr.bf16.mxu0 %v811
        %927 = vmatpush1.bf16.msra.mxu0 %v810
        %928 = vmatprep.subr.bf16.mxu0 %v813
        %929 = vmatpush1.bf16.msra.mxu0 %v812
        %930 = vmatprep.subr.bf16.mxu0 %v815
        %931 = vmatpush1.bf16.msra.mxu0 %v814
        %932 = vmatprep.subr.bf16.mxu0 %v817
        %933 = vmatpush1.bf16.msra.mxu0 %v816
        %934 = vmatprep.subr.bf16.mxu0 %v819
        %935 = vmatpush1.bf16.msra.mxu0 %v818
        %936 = vmatprep.subr.bf16.mxu0 %v821
        %937 = vmatpush1.bf16.msra.mxu0 %v820
        %938 = vmatprep.subr.bf16.mxu0 %v823
        %939 = vmatpush1.bf16.msra.mxu0 %v822
        %940 = vmatprep.mubr.bf16.mxu0 %v606
        %941 = vmatmul.mubr.bf16.gmra.mrb[0].mxu0 %v599
        %v942 = vpop.f32.mrb[0].mxu0
        %v943 = vadd.f32 0.0, %v942
        %v944 = vpop.f32.mrb[0].mxu0
        %v945 = vadd.f32 0.0, %v944
        %v946 = vpop.f32.mrb[0].mxu0
        %v947 = vpop.f32.mrb[0].mxu0
        %948 = vdwg.mxu0
        %949 = vmatprep.subr.bf16.mxu0 %v825
        %950 = vmatpush1.bf16.msra.mxu0 %v824
        %951 = vmatprep.subr.bf16.mxu0 %v827
        %952 = vmatpush1.bf16.msra.mxu0 %v826
        %953 = vmatprep.subr.bf16.mxu0 %v829
        %954 = vmatpush1.bf16.msra.mxu0 %v828
        %955 = vmatprep.subr.bf16.mxu0 %v831
        %956 = vmatpush1.bf16.msra.mxu0 %v830
        %957 = vmatprep.subr.bf16.mxu0 %v833
        %958 = vmatpush1.bf16.msra.mxu0 %v832
        %959 = vmatprep.subr.bf16.mxu0 %v835
        %960 = vmatpush1.bf16.msra.mxu0 %v834
        %961 = vmatprep.subr.bf16.mxu0 %v837
        %962 = vmatpush1.bf16.msra.mxu0 %v836
        %963 = vmatprep.subr.bf16.mxu0 %v839
        %964 = vmatpush1.bf16.msra.mxu0 %v838
        %965 = vmatprep.subr.bf16.mxu0 %v841
        %966 = vmatpush1.bf16.msra.mxu0 %v840
        %967 = vmatprep.subr.bf16.mxu0 %v843
        %968 = vmatpush1.bf16.msra.mxu0 %v842
        %969 = vmatprep.subr.bf16.mxu0 %v845
        %970 = vmatpush1.bf16.msra.mxu0 %v844
        %971 = vmatprep.subr.bf16.mxu0 %v847
        %972 = vmatpush1.bf16.msra.mxu0 %v846
        %973 = vmatprep.subr.bf16.mxu0 0
        %974 = vmatpush1.bf16.msra.mxu0 0
        %975 = vmatprep.subr.bf16.mxu0 0
        %976 = vmatpush1.bf16.msra.mxu0 0
        %977 = vmatprep.subr.bf16.mxu0 0
        %978 = vmatpush1.bf16.msra.mxu0 0
        %979 = vmatprep.subr.bf16.mxu0 0
        %980 = vmatpush1.bf16.msra.mxu0 0
        %981 = vmatprep.mubr.bf16.mxu0 %v906
        %982 = vmatmul.mubr.bf16.gmra.mrb[0].mxu0 %v613
        %v983 = vpop.f32.mrb[0].mxu0
        %v984 = vadd.f32 %v943, %v983
        %v985 = vpop.f32.mrb[0].mxu0
        %v986 = vadd.f32 %v945, %v985
        %v987 = vpop.f32.mrb[0].mxu0
        %v988 = vpop.f32.mrb[0].mxu0
        %989 = vdwg.mxu0
        %v1049 = vunpack.c.l.b16 %v414
        %v1050 = vunpack.c.h.b16 %v414
        %v1051 = vunpack.c.l.b16 %v415
        %v1052 = vunpack.c.h.b16 %v415
        %v1053 = vunpack.c.l.b16 %v416
        %v1054 = vunpack.c.h.b16 %v416
        %v1055 = vunpack.c.l.b16 %v417
        %v1056 = vunpack.c.h.b16 %v417
        %v1057 = vunpack.c.l.b16 %v418
        %v1058 = vunpack.c.h.b16 %v418
        %v1059 = vunpack.c.l.b16 %v419
        %v1060 = vunpack.c.h.b16 %v419
        %v1061 = vunpack.c.l.b16 %v420
        %v1062 = vunpack.c.h.b16 %v420
        %v1063 = vunpack.c.l.b16 %v421
        %v1064 = vunpack.c.h.b16 %v421
        %v1065 = vunpack.c.l.b16 %v422
        %v1066 = vunpack.c.h.b16 %v422
        %v1067 = vunpack.c.l.b16 %v423
        %v1068 = vunpack.c.h.b16 %v423
        %v1069 = vunpack.c.l.b16 %v424
        %v1070 = vunpack.c.h.b16 %v424
        %v1071 = vunpack.c.l.b16 %v425
        %v1072 = vunpack.c.h.b16 %v425
        %v1073 = vunpack.c.l.b16 %v426
        %v1074 = vunpack.c.h.b16 %v426
        %v1075 = vunpack.c.l.b16 %v427
        %v1076 = vunpack.c.h.b16 %v427
        %v1077 = vunpack.c.l.b16 %v428
        %v1078 = vunpack.c.h.b16 %v428
        %v1079 = vunpack.c.l.b16 %v429
        %v1080 = vunpack.c.h.b16 %v429
        %v1081 = vunpack.c.l.b16 %v430
        %v1082 = vunpack.c.h.b16 %v430
        %v1083 = vunpack.c.l.b16 %v431
        %v1084 = vunpack.c.h.b16 %v431
        %v1085 = vunpack.c.l.b16 %v432
        %v1086 = vunpack.c.h.b16 %v432
        %v1087 = vunpack.c.l.b16 %v433
        %v1088 = vunpack.c.h.b16 %v433
        %v1089 = vunpack.c.l.b16 %v434
        %v1090 = vunpack.c.h.b16 %v434
        %v1091 = vunpack.c.l.b16 %v435
        %v1092 = vunpack.c.h.b16 %v435
        %v1093 = vunpack.c.l.b16 %v436
        %v1094 = vunpack.c.h.b16 %v436
        %v1095 = vunpack.c.l.b16 %v437
        %v1096 = vunpack.c.h.b16 %v437
        %v1097 = vunpack.c.l.b16 %v438
        %v1098 = vunpack.c.h.b16 %v438
        %v1099 = vunpack.c.l.b16 %v439
        %v1100 = vunpack.c.h.b16 %v439
        %v1101 = vunpack.c.l.b16 %v440
        %v1102 = vunpack.c.h.b16 %v440
        %v1103 = vunpack.c.l.b16 %v441
        %v1104 = vunpack.c.h.b16 %v441
        %v1105 = vunpack.c.l.b16 %v442
        %v1106 = vunpack.c.h.b16 %v442
        %v1107 = vunpack.c.l.b16 %v443
        %v1108 = vunpack.c.h.b16 %v443
        %v1109 = vunpack.c.l.b16 %v444
        %v1110 = vunpack.c.h.b16 %v444
        %v1111 = vunpack.c.l.b16 %v445
        %v1112 = vunpack.c.h.b16 %v445
        %v1113 = vunpack.c.l.b16 %v446
        %v1114 = vunpack.c.h.b16 %v446
        %v1115 = vunpack.c.l.b16 %v447
        %v1116 = vunpack.c.h.b16 %v447
        %v1117 = vunpack.c.l.b16 %v448
        %v1118 = vunpack.c.h.b16 %v448
        %v1119 = vunpack.c.l.b16 %v449
        %v1120 = vunpack.c.h.b16 %v449
        %v1121 = vunpack.c.l.b16 %v450
        %v1122 = vunpack.c.h.b16 %v450
        %v1123 = vunpack.c.l.b16 %v451
        %v1124 = vunpack.c.h.b16 %v451
        %v1125 = vunpack.c.l.b16 %v452
        %v1126 = vunpack.c.h.b16 %v452
        %v1127 = vunpack.c.l.b16 %v453
        %v1128 = vunpack.c.h.b16 %v453
        %v1129 = vunpack.c.l.b16 %v454
        %v1130 = vunpack.c.h.b16 %v454
        %v1131 = vunpack.c.l.b16 %v455
        %v1132 = vunpack.c.h.b16 %v455
        %v1133 = vunpack.c.l.b16 %v456
        %v1134 = vunpack.c.h.b16 %v456
        %v1135 = vunpack.c.l.b16 %v457
        %v1136 = vunpack.c.h.b16 %v457
        %v1137 = vunpack.c.l.b16 %v458
        %v1138 = vunpack.c.h.b16 %v458
        %v1139 = vunpack.c.l.b16 %v459
        %v1140 = vunpack.c.h.b16 %v459
        %v1141 = vunpack.c.l.b16 %v460
        %v1142 = vunpack.c.h.b16 %v460
        %v1143 = vunpack.c.l.b16 %v461
        %v1144 = vunpack.c.h.b16 %v461
        %v1145 = vunpack.c.l.b16 %v462
        %v1146 = vunpack.c.h.b16 %v462
        %v1147 = vunpack.c.l.b16 %v463
        %v1148 = vunpack.c.h.b16 %v463
        %v1149 = vunpack.c.l.b16 %v464
        %v1150 = vunpack.c.h.b16 %v464
        %v1151 = vunpack.c.l.b16 %v465
        %v1152 = vunpack.c.h.b16 %v465
        %v1153 = vunpack.c.l.b16 %v466
        %v1154 = vunpack.c.h.b16 %v466
        %v1155 = vunpack.c.l.b16 %v467
        %v1156 = vunpack.c.h.b16 %v467
        %v1157 = vunpack.c.l.b16 %v468
        %v1158 = vunpack.c.h.b16 %v468
        %v1159 = vunpack.c.l.b16 %v469
        %v1160 = vunpack.c.h.b16 %v469
        %v1161 = vpack.c.b16 %v1051, %v1049
        %v1162 = vpack.c.b16 %v1052, %v1050
        %v1163 = vpack.c.b16 %v1055, %v1053
        %v1164 = vpack.c.b16 %v1056, %v1054
        %v1165 = vpack.c.b16 %v1059, %v1057
        %v1166 = vpack.c.b16 %v1060, %v1058
        %v1167 = vpack.c.b16 %v1063, %v1061
        %v1168 = vpack.c.b16 %v1064, %v1062
        %v1169 = vpack.c.b16 %v1067, %v1065
        %v1170 = vpack.c.b16 %v1068, %v1066
        %v1171 = vpack.c.b16 %v1071, %v1069
        %v1172 = vpack.c.b16 %v1072, %v1070
        %v1173 = vpack.c.b16 %v1075, %v1073
        %v1174 = vpack.c.b16 %v1076, %v1074
        %v1175 = vpack.c.b16 %v1079, %v1077
        %v1176 = vpack.c.b16 %v1080, %v1078
        %v1177 = vpack.c.b16 %v1083, %v1081
        %v1178 = vpack.c.b16 %v1084, %v1082
        %v1179 = vpack.c.b16 %v1087, %v1085
        %v1180 = vpack.c.b16 %v1088, %v1086
        %v1181 = vpack.c.b16 %v1091, %v1089
        %v1182 = vpack.c.b16 %v1092, %v1090
        %v1183 = vpack.c.b16 %v1095, %v1093
        %v1184 = vpack.c.b16 %v1096, %v1094
        %v1185 = vpack.c.b16 %v1099, %v1097
        %v1186 = vpack.c.b16 %v1100, %v1098
        %v1187 = vpack.c.b16 %v1103, %v1101
        %v1188 = vpack.c.b16 %v1104, %v1102
        %v1189 = vpack.c.b16 %v1107, %v1105
        %v1190 = vpack.c.b16 %v1108, %v1106
        %v1191 = vpack.c.b16 %v1111, %v1109
        %v1192 = vpack.c.b16 %v1112, %v1110
        %v1193 = vpack.c.b16 %v1115, %v1113
        %v1194 = vpack.c.b16 %v1116, %v1114
        %v1195 = vpack.c.b16 %v1119, %v1117
        %v1196 = vpack.c.b16 %v1120, %v1118
        %v1197 = vpack.c.b16 %v1123, %v1121
        %v1198 = vpack.c.b16 %v1124, %v1122
        %v1199 = vpack.c.b16 %v1127, %v1125
        %v1200 = vpack.c.b16 %v1128, %v1126
        %v1201 = vpack.c.b16 %v1131, %v1129
        %v1202 = vpack.c.b16 %v1132, %v1130
        %v1203 = vpack.c.b16 %v1135, %v1133
        %v1204 = vpack.c.b16 %v1136, %v1134
        %v1205 = vpack.c.b16 %v1139, %v1137
        %v1206 = vpack.c.b16 %v1140, %v1138
        %v1207 = vpack.c.b16 %v1143, %v1141
        %v1208 = vpack.c.b16 %v1144, %v1142
        %v1209 = vpack.c.b16 %v1147, %v1145
        %v1210 = vpack.c.b16 %v1148, %v1146
        %v1211 = vpack.c.b16 %v1151, %v1149
        %v1212 = vpack.c.b16 %v1152, %v1150
        %v1213 = vpack.c.b16 %v1155, %v1153
        %v1214 = vpack.c.b16 %v1156, %v1154
        %v1215 = vpack.c.b16 %v1159, %v1157
        %v1216 = vpack.c.b16 %v1160, %v1158
        %v1273 = vsel %vm904, %v592, 0
        %1275 = vmatprep.subr.bf16.mxu0 %v1162
        %1276 = vmatpush1.bf16.msra.mxu0 %v1161
        %1277 = vmatprep.subr.bf16.mxu0 %v1164
        %1278 = vmatpush1.bf16.msra.mxu0 %v1163
        %1279 = vmatprep.subr.bf16.mxu0 %v1166
        %1280 = vmatpush1.bf16.msra.mxu0 %v1165
        %1281 = vmatprep.subr.bf16.mxu0 %v1168
        %1282 = vmatpush1.bf16.msra.mxu0 %v1167
        %1283 = vmatprep.subr.bf16.mxu0 %v1170
        %1284 = vmatpush1.bf16.msra.mxu0 %v1169
        %1285 = vmatprep.subr.bf16.mxu0 %v1172
        %1286 = vmatpush1.bf16.msra.mxu0 %v1171
        %1287 = vmatprep.subr.bf16.mxu0 %v1174
        %1288 = vmatpush1.bf16.msra.mxu0 %v1173
        %1289 = vmatprep.subr.bf16.mxu0 %v1176
        %1290 = vmatpush1.bf16.msra.mxu0 %v1175
        %1291 = vmatprep.subr.bf16.mxu0 %v1178
        %1292 = vmatpush1.bf16.msra.mxu0 %v1177
        %1293 = vmatprep.subr.bf16.mxu0 %v1180
        %1294 = vmatpush1.bf16.msra.mxu0 %v1179
        %1295 = vmatprep.subr.bf16.mxu0 %v1182
        %1296 = vmatpush1.bf16.msra.mxu0 %v1181
        %1297 = vmatprep.subr.bf16.mxu0 %v1184
        %1298 = vmatpush1.bf16.msra.mxu0 %v1183
        %1299 = vmatprep.subr.bf16.mxu0 %v1186
        %1300 = vmatpush1.bf16.msra.mxu0 %v1185
        %1301 = vmatprep.subr.bf16.mxu0 %v1188
        %1302 = vmatpush1.bf16.msra.mxu0 %v1187
        %1303 = vmatprep.subr.bf16.mxu0 %v1190
        %1304 = vmatpush1.bf16.msra.mxu0 %v1189
        %1305 = vmatprep.subr.bf16.mxu0 %v1192
        %1306 = vmatpush1.bf16.msra.mxu0 %v1191
        %1307 = vmatprep.mubr.bf16.mxu0 %v590
        %1308 = vmatmul.mubr.bf16.gmra.mrb[0].mxu0 %v589
        %v1309 = vpop.f32.mrb[0].mxu0
        %v1310 = vadd.f32 %v984, %v1309
        %v1311 = vpop.f32.mrb[0].mxu0
        %v1312 = vadd.f32 %v986, %v1311
        %v1313 = vpop.f32.mrb[0].mxu0
        %v1314 = vpop.f32.mrb[0].mxu0
        %1315 = vdwg.mxu0
        %1316 = vmatprep.subr.bf16.mxu0 %v1194
        %1317 = vmatpush1.bf16.msra.mxu0 %v1193
        %1318 = vmatprep.subr.bf16.mxu0 %v1196
        %1319 = vmatpush1.bf16.msra.mxu0 %v1195
        %1320 = vmatprep.subr.bf16.mxu0 %v1198
        %1321 = vmatpush1.bf16.msra.mxu0 %v1197
        %1322 = vmatprep.subr.bf16.mxu0 %v1200
        %1323 = vmatpush1.bf16.msra.mxu0 %v1199
        %1324 = vmatprep.subr.bf16.mxu0 %v1202
        %1325 = vmatpush1.bf16.msra.mxu0 %v1201
        %1326 = vmatprep.subr.bf16.mxu0 %v1204
        %1327 = vmatpush1.bf16.msra.mxu0 %v1203
        %1328 = vmatprep.subr.bf16.mxu0 %v1206
        %1329 = vmatpush1.bf16.msra.mxu0 %v1205
        %1330 = vmatprep.subr.bf16.mxu0 %v1208
        %1331 = vmatpush1.bf16.msra.mxu0 %v1207
        %1332 = vmatprep.subr.bf16.mxu0 %v1210
        %1333 = vmatpush1.bf16.msra.mxu0 %v1209
        %1334 = vmatprep.subr.bf16.mxu0 %v1212
        %1335 = vmatpush1.bf16.msra.mxu0 %v1211
        %1336 = vmatprep.subr.bf16.mxu0 %v1214
        %1337 = vmatpush1.bf16.msra.mxu0 %v1213
        %1338 = vmatprep.subr.bf16.mxu0 %v1216
        %1339 = vmatpush1.bf16.msra.mxu0 %v1215
        %1340 = vmatprep.subr.bf16.mxu0 0
        %1341 = vmatpush1.bf16.msra.mxu0 0
        %1342 = vmatprep.subr.bf16.mxu0 0
        %1343 = vmatpush1.bf16.msra.mxu0 0
        %1344 = vmatprep.subr.bf16.mxu0 0
        %1345 = vmatpush1.bf16.msra.mxu0 0
        %1346 = vmatprep.subr.bf16.mxu0 0
        %1347 = vmatpush1.bf16.msra.mxu0 0
        %1348 = vmatprep.mubr.bf16.mxu0 %v1273
        %1349 = vmatmul.mubr.bf16.gmra.mrb[0].mxu0 %v591
        %v1350 = vpop.f32.mrb[0].mxu0
        %v1351 = vadd.f32 %v1310, %v1350
        %v1352 = vpop.f32.mrb[0].mxu0
        %v1353 = vadd.f32 %v1312, %v1352
        %v1354 = vpop.f32.mrb[0].mxu0
        %v1355 = vpop.f32.mrb[0].mxu0
        %1356 = vdwg.mxu0
        %s1357 = scalar_lea.vmem %s2, 448
        %v1358 = vld [vmem:[%s1357] sm:$0xff]
        %v1359 = vld [vmem:[%s1357 + $0x8] sm:$0xff]
        %v1360 = vld [vmem:[%s1357 + $0x10] sm:$0xff]
        %v1361 = vld [vmem:[%s1357 + $0x18] sm:$0xff]
        %v1362 = vld [vmem:[%s1357 + $0x20] sm:$0xff]
        %v1363 = vld [vmem:[%s1357 + $0x28] sm:$0xff]
        %v1364 = vld [vmem:[%s1357 + $0x30] sm:$0xff]
        %v1365 = vld [vmem:[%s1357 + $0x38] sm:$0xff]
        %v1366 = vld [vmem:[%s1357 + $0x40] sm:$0xff]
        %v1367 = vld [vmem:[%s1357 + $0x48] sm:$0xff]
        %v1368 = vld [vmem:[%s1357 + $0x50] sm:$0xff]
        %v1369 = vld [vmem:[%s1357 + $0x58] sm:$0xff]
        %v1370 = vld [vmem:[%s1357 + $0x60] sm:$0xff]
        %v1371 = vld [vmem:[%s1357 + $0x68] sm:$0xff]
        %v1372 = vld [vmem:[%s1357 + $0x70] sm:$0xff]
        %v1373 = vld [vmem:[%s1357 + $0x78] sm:$0xff]
        %v1374 = vld [vmem:[%s1357 + $0x80] sm:$0xff]
        %v1375 = vld [vmem:[%s1357 + $0x88] sm:$0xff]
        %v1376 = vld [vmem:[%s1357 + $0x90] sm:$0xff]
        %v1377 = vld [vmem:[%s1357 + $0x98] sm:$0xff]
        %v1378 = vld [vmem:[%s1357 + $0xa0] sm:$0xff]
        %v1379 = vld [vmem:[%s1357 + $0xa8] sm:$0xff]
        %v1380 = vld [vmem:[%s1357 + $0xb0] sm:$0xff]
        %v1381 = vld [vmem:[%s1357 + $0xb8] sm:$0xff]
        %v1382 = vld [vmem:[%s1357 + $0xc0] sm:$0xff]
        %v1383 = vld [vmem:[%s1357 + $0xc8] sm:$0xff]
        %v1384 = vld [vmem:[%s1357 + $0xd0] sm:$0xff]
        %v1385 = vld [vmem:[%s1357 + $0xd8] sm:$0xff]
        %v1386 = vld [vmem:[%s1357 + $0xe0] sm:$0xff]
        %v1387 = vld [vmem:[%s1357 + $0xe8] sm:$0xff]
        %v1388 = vld [vmem:[%s1357 + $0xf0] sm:$0xff]
        %v1389 = vld [vmem:[%s1357 + $0xf8] sm:$0xff]
        %v1390 = vld [vmem:[%s1357 + $0x100] sm:$0xff]
        %v1391 = vld [vmem:[%s1357 + $0x108] sm:$0xff]
        %v1392 = vld [vmem:[%s1357 + $0x110] sm:$0xff]
        %v1393 = vld [vmem:[%s1357 + $0x118] sm:$0xff]
        %v1394 = vld [vmem:[%s1357 + $0x120] sm:$0xff]
        %v1395 = vld [vmem:[%s1357 + $0x128] sm:$0xff]
        %v1396 = vld [vmem:[%s1357 + $0x130] sm:$0xff]
        %v1397 = vld [vmem:[%s1357 + $0x138] sm:$0xff]
        %v1398 = vld [vmem:[%s1357 + $0x140] sm:$0xff]
        %v1399 = vld [vmem:[%s1357 + $0x148] sm:$0xff]
        %v1400 = vld [vmem:[%s1357 + $0x150] sm:$0xff]
        %v1401 = vld [vmem:[%s1357 + $0x158] sm:$0xff]
        %v1402 = vld [vmem:[%s1357 + $0x160] sm:$0xff]
        %v1403 = vld [vmem:[%s1357 + $0x168] sm:$0xff]
        %v1404 = vld [vmem:[%s1357 + $0x170] sm:$0xff]
        %v1405 = vld [vmem:[%s1357 + $0x178] sm:$0xff]
        %v1406 = vld [vmem:[%s1357 + $0x180] sm:$0xff]
        %v1407 = vld [vmem:[%s1357 + $0x188] sm:$0xff]
        %v1408 = vld [vmem:[%s1357 + $0x190] sm:$0xff]
        %v1409 = vld [vmem:[%s1357 + $0x198] sm:$0xff]
        %v1410 = vld [vmem:[%s1357 + $0x1a0] sm:$0xff]
        %v1411 = vld [vmem:[%s1357 + $0x1a8] sm:$0xff]
        %v1412 = vld [vmem:[%s1357 + $0x1b0] sm:$0xff]
        %v1413 = vld [vmem:[%s1357 + $0x1b8] sm:$0xff]
        %v1470 = vunpack.c.l.b16 %v1358
        %v1471 = vunpack.c.h.b16 %v1358
        %v1472 = vunpack.c.l.b16 %v1359
        %v1473 = vunpack.c.h.b16 %v1359
        %v1474 = vunpack.c.l.b16 %v1360
        %v1475 = vunpack.c.h.b16 %v1360
        %v1476 = vunpack.c.l.b16 %v1361
        %v1477 = vunpack.c.h.b16 %v1361
        %v1478 = vunpack.c.l.b16 %v1362
        %v1479 = vunpack.c.h.b16 %v1362
        %v1480 = vunpack.c.l.b16 %v1363
        %v1481 = vunpack.c.h.b16 %v1363
        %v1482 = vunpack.c.l.b16 %v1364
        %v1483 = vunpack.c.h.b16 %v1364
        %v1484 = vunpack.c.l.b16 %v1365
        %v1485 = vunpack.c.h.b16 %v1365
        %v1486 = vunpack.c.l.b16 %v1366
        %v1487 = vunpack.c.h.b16 %v1366
        %v1488 = vunpack.c.l.b16 %v1367
        %v1489 = vunpack.c.h.b16 %v1367
        %v1490 = vunpack.c.l.b16 %v1368
        %v1491 = vunpack.c.h.b16 %v1368
        %v1492 = vunpack.c.l.b16 %v1369
        %v1493 = vunpack.c.h.b16 %v1369
        %v1494 = vunpack.c.l.b16 %v1370
        %v1495 = vunpack.c.h.b16 %v1370
        %v1496 = vunpack.c.l.b16 %v1371
        %v1497 = vunpack.c.h.b16 %v1371
        %v1498 = vunpack.c.l.b16 %v1372
        %v1499 = vunpack.c.h.b16 %v1372
        %v1500 = vunpack.c.l.b16 %v1373
        %v1501 = vunpack.c.h.b16 %v1373
        %v1502 = vunpack.c.l.b16 %v1374
        %v1503 = vunpack.c.h.b16 %v1374
        %v1504 = vunpack.c.l.b16 %v1375
        %v1505 = vunpack.c.h.b16 %v1375
        %v1506 = vunpack.c.l.b16 %v1376
        %v1507 = vunpack.c.h.b16 %v1376
        %v1508 = vunpack.c.l.b16 %v1377
        %v1509 = vunpack.c.h.b16 %v1377
        %v1510 = vunpack.c.l.b16 %v1378
        %v1511 = vunpack.c.h.b16 %v1378
        %v1512 = vunpack.c.l.b16 %v1379
        %v1513 = vunpack.c.h.b16 %v1379
        %v1514 = vunpack.c.l.b16 %v1380
        %v1515 = vunpack.c.h.b16 %v1380
        %v1516 = vunpack.c.l.b16 %v1381
        %v1517 = vunpack.c.h.b16 %v1381
        %v1518 = vunpack.c.l.b16 %v1382
        %v1519 = vunpack.c.h.b16 %v1382
        %v1520 = vunpack.c.l.b16 %v1383
        %v1521 = vunpack.c.h.b16 %v1383
        %v1522 = vunpack.c.l.b16 %v1384
        %v1523 = vunpack.c.h.b16 %v1384
        %v1524 = vunpack.c.l.b16 %v1385
        %v1525 = vunpack.c.h.b16 %v1385
        %v1526 = vunpack.c.l.b16 %v1386
        %v1527 = vunpack.c.h.b16 %v1386
        %v1528 = vunpack.c.l.b16 %v1387
        %v1529 = vunpack.c.h.b16 %v1387
        %v1530 = vunpack.c.l.b16 %v1388
        %v1531 = vunpack.c.h.b16 %v1388
        %v1532 = vunpack.c.l.b16 %v1389
        %v1533 = vunpack.c.h.b16 %v1389
        %v1534 = vunpack.c.l.b16 %v1390
        %v1535 = vunpack.c.h.b16 %v1390
        %v1536 = vunpack.c.l.b16 %v1391
        %v1537 = vunpack.c.h.b16 %v1391
        %v1538 = vunpack.c.l.b16 %v1392
        %v1539 = vunpack.c.h.b16 %v1392
        %v1540 = vunpack.c.l.b16 %v1393
        %v1541 = vunpack.c.h.b16 %v1393
        %v1542 = vunpack.c.l.b16 %v1394
        %v1543 = vunpack.c.h.b16 %v1394
        %v1544 = vunpack.c.l.b16 %v1395
        %v1545 = vunpack.c.h.b16 %v1395
        %v1546 = vunpack.c.l.b16 %v1396
        %v1547 = vunpack.c.h.b16 %v1396
        %v1548 = vunpack.c.l.b16 %v1397
        %v1549 = vunpack.c.h.b16 %v1397
        %v1550 = vunpack.c.l.b16 %v1398
        %v1551 = vunpack.c.h.b16 %v1398
        %v1552 = vunpack.c.l.b16 %v1399
        %v1553 = vunpack.c.h.b16 %v1399
        %v1554 = vunpack.c.l.b16 %v1400
        %v1555 = vunpack.c.h.b16 %v1400
        %v1556 = vunpack.c.l.b16 %v1401
        %v1557 = vunpack.c.h.b16 %v1401
        %v1558 = vunpack.c.l.b16 %v1402
        %v1559 = vunpack.c.h.b16 %v1402
        %v1560 = vunpack.c.l.b16 %v1403
        %v1561 = vunpack.c.h.b16 %v1403
        %v1562 = vunpack.c.l.b16 %v1404
        %v1563 = vunpack.c.h.b16 %v1404
        %v1564 = vunpack.c.l.b16 %v1405
        %v1565 = vunpack.c.h.b16 %v1405
        %v1566 = vunpack.c.l.b16 %v1406
        %v1567 = vunpack.c.h.b16 %v1406
        %v1568 = vunpack.c.l.b16 %v1407
        %v1569 = vunpack.c.h.b16 %v1407
        %v1570 = vunpack.c.l.b16 %v1408
        %v1571 = vunpack.c.h.b16 %v1408
        %v1572 = vunpack.c.l.b16 %v1409
        %v1573 = vunpack.c.h.b16 %v1409
        %v1574 = vunpack.c.l.b16 %v1410
        %v1575 = vunpack.c.h.b16 %v1410
        %v1576 = vunpack.c.l.b16 %v1411
        %v1577 = vunpack.c.h.b16 %v1411
        %v1578 = vunpack.c.l.b16 %v1412
        %v1579 = vunpack.c.h.b16 %v1412
        %v1580 = vunpack.c.l.b16 %v1413
        %v1581 = vunpack.c.h.b16 %v1413
        %v1582 = vpack.c.b16 %v1472, %v1470
        %v1583 = vpack.c.b16 %v1473, %v1471
        %v1584 = vpack.c.b16 %v1476, %v1474
        %v1585 = vpack.c.b16 %v1477, %v1475
        %v1586 = vpack.c.b16 %v1480, %v1478
        %v1587 = vpack.c.b16 %v1481, %v1479
        %v1588 = vpack.c.b16 %v1484, %v1482
        %v1589 = vpack.c.b16 %v1485, %v1483
        %v1590 = vpack.c.b16 %v1488, %v1486
        %v1591 = vpack.c.b16 %v1489, %v1487
        %v1592 = vpack.c.b16 %v1492, %v1490
        %v1593 = vpack.c.b16 %v1493, %v1491
        %v1594 = vpack.c.b16 %v1496, %v1494
        %v1595 = vpack.c.b16 %v1497, %v1495
        %v1596 = vpack.c.b16 %v1500, %v1498
        %v1597 = vpack.c.b16 %v1501, %v1499
        %v1598 = vpack.c.b16 %v1504, %v1502
        %v1599 = vpack.c.b16 %v1505, %v1503
        %v1600 = vpack.c.b16 %v1508, %v1506
        %v1601 = vpack.c.b16 %v1509, %v1507
        %v1602 = vpack.c.b16 %v1512, %v1510
        %v1603 = vpack.c.b16 %v1513, %v1511
        %v1604 = vpack.c.b16 %v1516, %v1514
        %v1605 = vpack.c.b16 %v1517, %v1515
        %v1606 = vpack.c.b16 %v1520, %v1518
        %v1607 = vpack.c.b16 %v1521, %v1519
        %v1608 = vpack.c.b16 %v1524, %v1522
        %v1609 = vpack.c.b16 %v1525, %v1523
        %v1610 = vpack.c.b16 %v1528, %v1526
        %v1611 = vpack.c.b16 %v1529, %v1527
        %v1612 = vpack.c.b16 %v1532, %v1530
        %v1613 = vpack.c.b16 %v1533, %v1531
        %v1614 = vpack.c.b16 %v1536, %v1534
        %v1615 = vpack.c.b16 %v1537, %v1535
        %v1616 = vpack.c.b16 %v1540, %v1538
        %v1617 = vpack.c.b16 %v1541, %v1539
        %v1618 = vpack.c.b16 %v1544, %v1542
        %v1619 = vpack.c.b16 %v1545, %v1543
        %v1620 = vpack.c.b16 %v1548, %v1546
        %v1621 = vpack.c.b16 %v1549, %v1547
        %v1622 = vpack.c.b16 %v1552, %v1550
        %v1623 = vpack.c.b16 %v1553, %v1551
        %v1624 = vpack.c.b16 %v1556, %v1554
        %v1625 = vpack.c.b16 %v1557, %v1555
        %v1626 = vpack.c.b16 %v1560, %v1558
        %v1627 = vpack.c.b16 %v1561, %v1559
        %v1628 = vpack.c.b16 %v1564, %v1562
        %v1629 = vpack.c.b16 %v1565, %v1563
        %v1630 = vpack.c.b16 %v1568, %v1566
        %v1631 = vpack.c.b16 %v1569, %v1567
        %v1632 = vpack.c.b16 %v1572, %v1570
        %v1633 = vpack.c.b16 %v1573, %v1571
        %v1634 = vpack.c.b16 %v1576, %v1574
        %v1635 = vpack.c.b16 %v1577, %v1575
        %v1636 = vpack.c.b16 %v1580, %v1578
        %v1637 = vpack.c.b16 %v1581, %v1579
        %1694 = vmatprep.subr.bf16.mxu0 %v1583
        %1695 = vmatpush1.bf16.msra.mxu0 %v1582
        %1696 = vmatprep.subr.bf16.mxu0 %v1585
        %1697 = vmatpush1.bf16.msra.mxu0 %v1584
        %1698 = vmatprep.subr.bf16.mxu0 %v1587
        %1699 = vmatpush1.bf16.msra.mxu0 %v1586
        %1700 = vmatprep.subr.bf16.mxu0 %v1589
        %1701 = vmatpush1.bf16.msra.mxu0 %v1588
        %1702 = vmatprep.subr.bf16.mxu0 %v1591
        %1703 = vmatpush1.bf16.msra.mxu0 %v1590
        %1704 = vmatprep.subr.bf16.mxu0 %v1593
        %1705 = vmatpush1.bf16.msra.mxu0 %v1592
        %1706 = vmatprep.subr.bf16.mxu0 %v1595
        %1707 = vmatpush1.bf16.msra.mxu0 %v1594
        %1708 = vmatprep.subr.bf16.mxu0 %v1597
        %1709 = vmatpush1.bf16.msra.mxu0 %v1596
        %1710 = vmatprep.subr.bf16.mxu0 %v1599
        %1711 = vmatpush1.bf16.msra.mxu0 %v1598
        %1712 = vmatprep.subr.bf16.mxu0 %v1601
        %1713 = vmatpush1.bf16.msra.mxu0 %v1600
        %1714 = vmatprep.subr.bf16.mxu0 %v1603
        %1715 = vmatpush1.bf16.msra.mxu0 %v1602
        %1716 = vmatprep.subr.bf16.mxu0 %v1605
        %1717 = vmatpush1.bf16.msra.mxu0 %v1604
        %1718 = vmatprep.subr.bf16.mxu0 %v1607
        %1719 = vmatpush1.bf16.msra.mxu0 %v1606
        %1720 = vmatprep.subr.bf16.mxu0 %v1609
        %1721 = vmatpush1.bf16.msra.mxu0 %v1608
        %1722 = vmatprep.subr.bf16.mxu0 %v1611
        %1723 = vmatpush1.bf16.msra.mxu0 %v1610
        %1724 = vmatprep.subr.bf16.mxu0 %v1613
        %1725 = vmatpush1.bf16.msra.mxu0 %v1612
        %1726 = vmatprep.mubr.bf16.mxu0 %v606
        %1727 = vmatmul.mubr.bf16.gmra.mrb[0].mxu0 %v599
        %v1728 = vpop.f32.mrb[0].mxu0
        %v1729 = vadd.f32 0.0, %v1728
        %v1730 = vpop.f32.mrb[0].mxu0
        %v1731 = vadd.f32 0.0, %v1730
        %v1732 = vpop.f32.mrb[0].mxu0
        %v1733 = vpop.f32.mrb[0].mxu0
        %1734 = vdwg.mxu0
        %1735 = vmatprep.subr.bf16.mxu0 %v1615
        %1736 = vmatpush1.bf16.msra.mxu0 %v1614
        %1737 = vmatprep.subr.bf16.mxu0 %v1617
        %1738 = vmatpush1.bf16.msra.mxu0 %v1616
        %1739 = vmatprep.subr.bf16.mxu0 %v1619
        %1740 = vmatpush1.bf16.msra.mxu0 %v1618
        %1741 = vmatprep.subr.bf16.mxu0 %v1621
        %1742 = vmatpush1.bf16.msra.mxu0 %v1620
        %1743 = vmatprep.subr.bf16.mxu0 %v1623
        %1744 = vmatpush1.bf16.msra.mxu0 %v1622
        %1745 = vmatprep.subr.bf16.mxu0 %v1625
        %1746 = vmatpush1.bf16.msra.mxu0 %v1624
        %1747 = vmatprep.subr.bf16.mxu0 %v1627
        %1748 = vmatpush1.bf16.msra.mxu0 %v1626
        %1749 = vmatprep.subr.bf16.mxu0 %v1629
        %1750 = vmatpush1.bf16.msra.mxu0 %v1628
        %1751 = vmatprep.subr.bf16.mxu0 %v1631
        %1752 = vmatpush1.bf16.msra.mxu0 %v1630
        %1753 = vmatprep.subr.bf16.mxu0 %v1633
        %1754 = vmatpush1.bf16.msra.mxu0 %v1632
        %1755 = vmatprep.subr.bf16.mxu0 %v1635
        %1756 = vmatpush1.bf16.msra.mxu0 %v1634
        %1757 = vmatprep.subr.bf16.mxu0 %v1637
        %1758 = vmatpush1.bf16.msra.mxu0 %v1636
        %1759 = vmatprep.subr.bf16.mxu0 0
        %1760 = vmatpush1.bf16.msra.mxu0 0
        %1761 = vmatprep.subr.bf16.mxu0 0
        %1762 = vmatpush1.bf16.msra.mxu0 0
        %1763 = vmatprep.subr.bf16.mxu0 0
        %1764 = vmatpush1.bf16.msra.mxu0 0
        %1765 = vmatprep.subr.bf16.mxu0 0
        %1766 = vmatpush1.bf16.msra.mxu0 0
        %1767 = vmatprep.mubr.bf16.mxu0 %v906
        %1768 = vmatmul.mubr.bf16.gmra.mrb[0].mxu0 %v613
        %v1769 = vpop.f32.mrb[0].mxu0
        %v1770 = vadd.f32 %v1729, %v1769
        %v1771 = vpop.f32.mrb[0].mxu0
        %v1772 = vadd.f32 %v1731, %v1771
        %v1773 = vpop.f32.mrb[0].mxu0
        %v1774 = vpop.f32.mrb[0].mxu0
        %1775 = vdwg.mxu0
        %v1832 = vunpack.c.l.b16 %v470
        %v1833 = vunpack.c.h.b16 %v470
        %v1834 = vunpack.c.l.b16 %v471
        %v1835 = vunpack.c.h.b16 %v471
        %v1836 = vunpack.c.l.b16 %v472
        %v1837 = vunpack.c.h.b16 %v472
        %v1838 = vunpack.c.l.b16 %v473
        %v1839 = vunpack.c.h.b16 %v473
        %v1840 = vunpack.c.l.b16 %v474
        %v1841 = vunpack.c.h.b16 %v474
        %v1842 = vunpack.c.l.b16 %v475
        %v1843 = vunpack.c.h.b16 %v475
        %v1844 = vunpack.c.l.b16 %v476
        %v1845 = vunpack.c.h.b16 %v476
        %v1846 = vunpack.c.l.b16 %v477
        %v1847 = vunpack.c.h.b16 %v477
        %v1848 = vunpack.c.l.b16 %v478
        %v1849 = vunpack.c.h.b16 %v478
        %v1850 = vunpack.c.l.b16 %v479
        %v1851 = vunpack.c.h.b16 %v479
        %v1852 = vunpack.c.l.b16 %v480
        %v1853 = vunpack.c.h.b16 %v480
        %v1854 = vunpack.c.l.b16 %v481
        %v1855 = vunpack.c.h.b16 %v481
        %v1856 = vunpack.c.l.b16 %v482
        %v1857 = vunpack.c.h.b16 %v482
        %v1858 = vunpack.c.l.b16 %v483
        %v1859 = vunpack.c.h.b16 %v483
        %v1860 = vunpack.c.l.b16 %v484
        %v1861 = vunpack.c.h.b16 %v484
        %v1862 = vunpack.c.l.b16 %v485
        %v1863 = vunpack.c.h.b16 %v485
        %v1864 = vunpack.c.l.b16 %v486
        %v1865 = vunpack.c.h.b16 %v486
        %v1866 = vunpack.c.l.b16 %v487
        %v1867 = vunpack.c.h.b16 %v487
        %v1868 = vunpack.c.l.b16 %v488
        %v1869 = vunpack.c.h.b16 %v488
        %v1870 = vunpack.c.l.b16 %v489
        %v1871 = vunpack.c.h.b16 %v489
        %v1872 = vunpack.c.l.b16 %v490
        %v1873 = vunpack.c.h.b16 %v490
        %v1874 = vunpack.c.l.b16 %v491
        %v1875 = vunpack.c.h.b16 %v491
        %v1876 = vunpack.c.l.b16 %v492
        %v1877 = vunpack.c.h.b16 %v492
        %v1878 = vunpack.c.l.b16 %v493
        %v1879 = vunpack.c.h.b16 %v493
        %v1880 = vunpack.c.l.b16 %v494
        %v1881 = vunpack.c.h.b16 %v494
        %v1882 = vunpack.c.l.b16 %v495
        %v1883 = vunpack.c.h.b16 %v495
        %v1884 = vunpack.c.l.b16 %v496
        %v1885 = vunpack.c.h.b16 %v496
        %v1886 = vunpack.c.l.b16 %v497
        %v1887 = vunpack.c.h.b16 %v497
        %v1888 = vunpack.c.l.b16 %v498
        %v1889 = vunpack.c.h.b16 %v498
        %v1890 = vunpack.c.l.b16 %v499
        %v1891 = vunpack.c.h.b16 %v499
        %v1892 = vunpack.c.l.b16 %v500
        %v1893 = vunpack.c.h.b16 %v500
        %v1894 = vunpack.c.l.b16 %v501
        %v1895 = vunpack.c.h.b16 %v501
        %v1896 = vunpack.c.l.b16 %v502
        %v1897 = vunpack.c.h.b16 %v502
        %v1898 = vunpack.c.l.b16 %v503
        %v1899 = vunpack.c.h.b16 %v503
        %v1900 = vunpack.c.l.b16 %v504
        %v1901 = vunpack.c.h.b16 %v504
        %v1902 = vunpack.c.l.b16 %v505
        %v1903 = vunpack.c.h.b16 %v505
        %v1904 = vunpack.c.l.b16 %v506
        %v1905 = vunpack.c.h.b16 %v506
        %v1906 = vunpack.c.l.b16 %v507
        %v1907 = vunpack.c.h.b16 %v507
        %v1908 = vunpack.c.l.b16 %v508
        %v1909 = vunpack.c.h.b16 %v508
        %v1910 = vunpack.c.l.b16 %v509
        %v1911 = vunpack.c.h.b16 %v509
        %v1912 = vunpack.c.l.b16 %v510
        %v1913 = vunpack.c.h.b16 %v510
        %v1914 = vunpack.c.l.b16 %v511
        %v1915 = vunpack.c.h.b16 %v511
        %v1916 = vunpack.c.l.b16 %v512
        %v1917 = vunpack.c.h.b16 %v512
        %v1918 = vunpack.c.l.b16 %v513
        %v1919 = vunpack.c.h.b16 %v513
        %v1920 = vunpack.c.l.b16 %v514
        %v1921 = vunpack.c.h.b16 %v514
        %v1922 = vunpack.c.l.b16 %v515
        %v1923 = vunpack.c.h.b16 %v515
        %v1924 = vunpack.c.l.b16 %v516
        %v1925 = vunpack.c.h.b16 %v516
        %v1926 = vunpack.c.l.b16 %v517
        %v1927 = vunpack.c.h.b16 %v517
        %v1928 = vunpack.c.l.b16 %v518
        %v1929 = vunpack.c.h.b16 %v518
        %v1930 = vunpack.c.l.b16 %v519
        %v1931 = vunpack.c.h.b16 %v519
        %v1932 = vunpack.c.l.b16 %v520
        %v1933 = vunpack.c.h.b16 %v520
        %v1934 = vunpack.c.l.b16 %v521
        %v1935 = vunpack.c.h.b16 %v521
        %v1936 = vunpack.c.l.b16 %v522
        %v1937 = vunpack.c.h.b16 %v522
        %v1938 = vunpack.c.l.b16 %v523
        %v1939 = vunpack.c.h.b16 %v523
        %v1940 = vunpack.c.l.b16 %v524
        %v1941 = vunpack.c.h.b16 %v524
        %v1942 = vunpack.c.l.b16 %v525
        %v1943 = vunpack.c.h.b16 %v525
        %v1944 = vpack.c.b16 %v1834, %v1832
        %v1945 = vpack.c.b16 %v1835, %v1833
        %v1946 = vpack.c.b16 %v1838, %v1836
        %v1947 = vpack.c.b16 %v1839, %v1837
        %v1948 = vpack.c.b16 %v1842, %v1840
        %v1949 = vpack.c.b16 %v1843, %v1841
        %v1950 = vpack.c.b16 %v1846, %v1844
        %v1951 = vpack.c.b16 %v1847, %v1845
        %v1952 = vpack.c.b16 %v1850, %v1848
        %v1953 = vpack.c.b16 %v1851, %v1849
        %v1954 = vpack.c.b16 %v1854, %v1852
        %v1955 = vpack.c.b16 %v1855, %v1853
        %v1956 = vpack.c.b16 %v1858, %v1856
        %v1957 = vpack.c.b16 %v1859, %v1857
        %v1958 = vpack.c.b16 %v1862, %v1860
        %v1959 = vpack.c.b16 %v1863, %v1861
        %v1960 = vpack.c.b16 %v1866, %v1864
        %v1961 = vpack.c.b16 %v1867, %v1865
        %v1962 = vpack.c.b16 %v1870, %v1868
        %v1963 = vpack.c.b16 %v1871, %v1869
        %v1964 = vpack.c.b16 %v1874, %v1872
        %v1965 = vpack.c.b16 %v1875, %v1873
        %v1966 = vpack.c.b16 %v1878, %v1876
        %v1967 = vpack.c.b16 %v1879, %v1877
        %v1968 = vpack.c.b16 %v1882, %v1880
        %v1969 = vpack.c.b16 %v1883, %v1881
        %v1970 = vpack.c.b16 %v1886, %v1884
        %v1971 = vpack.c.b16 %v1887, %v1885
        %v1972 = vpack.c.b16 %v1890, %v1888
        %v1973 = vpack.c.b16 %v1891, %v1889
        %v1974 = vpack.c.b16 %v1894, %v1892
        %v1975 = vpack.c.b16 %v1895, %v1893
        %v1976 = vpack.c.b16 %v1898, %v1896
        %v1977 = vpack.c.b16 %v1899, %v1897
        %v1978 = vpack.c.b16 %v1902, %v1900
        %v1979 = vpack.c.b16 %v1903, %v1901
        %v1980 = vpack.c.b16 %v1906, %v1904
        %v1981 = vpack.c.b16 %v1907, %v1905
        %v1982 = vpack.c.b16 %v1910, %v1908
        %v1983 = vpack.c.b16 %v1911, %v1909
        %v1984 = vpack.c.b16 %v1914, %v1912
        %v1985 = vpack.c.b16 %v1915, %v1913
        %v1986 = vpack.c.b16 %v1918, %v1916
        %v1987 = vpack.c.b16 %v1919, %v1917
        %v1988 = vpack.c.b16 %v1922, %v1920
        %v1989 = vpack.c.b16 %v1923, %v1921
        %v1990 = vpack.c.b16 %v1926, %v1924
        %v1991 = vpack.c.b16 %v1927, %v1925
        %v1992 = vpack.c.b16 %v1930, %v1928
        %v1993 = vpack.c.b16 %v1931, %v1929
        %v1994 = vpack.c.b16 %v1934, %v1932
        %v1995 = vpack.c.b16 %v1935, %v1933
        %v1996 = vpack.c.b16 %v1938, %v1936
        %v1997 = vpack.c.b16 %v1939, %v1937
        %v1998 = vpack.c.b16 %v1942, %v1940
        %v1999 = vpack.c.b16 %v1943, %v1941
        %2056 = vmatprep.subr.bf16.mxu0 %v1945
        %2057 = vmatpush1.bf16.msra.mxu0 %v1944
        %2058 = vmatprep.subr.bf16.mxu0 %v1947
        %2059 = vmatpush1.bf16.msra.mxu0 %v1946
        %2060 = vmatprep.subr.bf16.mxu0 %v1949
        %2061 = vmatpush1.bf16.msra.mxu0 %v1948
        %2062 = vmatprep.subr.bf16.mxu0 %v1951
        %2063 = vmatpush1.bf16.msra.mxu0 %v1950
        %2064 = vmatprep.subr.bf16.mxu0 %v1953
        %2065 = vmatpush1.bf16.msra.mxu0 %v1952
        %2066 = vmatprep.subr.bf16.mxu0 %v1955
        %2067 = vmatpush1.bf16.msra.mxu0 %v1954
        %2068 = vmatprep.subr.bf16.mxu0 %v1957
        %2069 = vmatpush1.bf16.msra.mxu0 %v1956
        %2070 = vmatprep.subr.bf16.mxu0 %v1959
        %2071 = vmatpush1.bf16.msra.mxu0 %v1958
        %2072 = vmatprep.subr.bf16.mxu0 %v1961
        %2073 = vmatpush1.bf16.msra.mxu0 %v1960
        %2074 = vmatprep.subr.bf16.mxu0 %v1963
        %2075 = vmatpush1.bf16.msra.mxu0 %v1962
        %2076 = vmatprep.subr.bf16.mxu0 %v1965
        %2077 = vmatpush1.bf16.msra.mxu0 %v1964
        %2078 = vmatprep.subr.bf16.mxu0 %v1967
        %2079 = vmatpush1.bf16.msra.mxu0 %v1966
        %2080 = vmatprep.subr.bf16.mxu0 %v1969
        %2081 = vmatpush1.bf16.msra.mxu0 %v1968
        %2082 = vmatprep.subr.bf16.mxu0 %v1971
        %2083 = vmatpush1.bf16.msra.mxu0 %v1970
        %2084 = vmatprep.subr.bf16.mxu0 %v1973
        %2085 = vmatpush1.bf16.msra.mxu0 %v1972
        %2086 = vmatprep.subr.bf16.mxu0 %v1975
        %2087 = vmatpush1.bf16.msra.mxu0 %v1974
        %2088 = vmatprep.mubr.bf16.mxu0 %v590
        %2089 = vmatmul.mubr.bf16.gmra.mrb[0].mxu0 %v589
        %v2090 = vpop.f32.mrb[0].mxu0
        %v2091 = vadd.f32 %v1770, %v2090
        %v2092 = vpop.f32.mrb[0].mxu0
        %v2093 = vadd.f32 %v1772, %v2092
        %v2094 = vpop.f32.mrb[0].mxu0
        %v2095 = vpop.f32.mrb[0].mxu0
        %2096 = vdwg.mxu0
        %2097 = vmatprep.subr.bf16.mxu0 %v1977
        %2098 = vmatpush1.bf16.msra.mxu0 %v1976
        %2099 = vmatprep.subr.bf16.mxu0 %v1979
        %2100 = vmatpush1.bf16.msra.mxu0 %v1978
        %2101 = vmatprep.subr.bf16.mxu0 %v1981
        %2102 = vmatpush1.bf16.msra.mxu0 %v1980
        %2103 = vmatprep.subr.bf16.mxu0 %v1983
        %2104 = vmatpush1.bf16.msra.mxu0 %v1982
        %2105 = vmatprep.subr.bf16.mxu0 %v1985
        %2106 = vmatpush1.bf16.msra.mxu0 %v1984
        %2107 = vmatprep.subr.bf16.mxu0 %v1987
        %2108 = vmatpush1.bf16.msra.mxu0 %v1986
        %2109 = vmatprep.subr.bf16.mxu0 %v1989
        %2110 = vmatpush1.bf16.msra.mxu0 %v1988
        %2111 = vmatprep.subr.bf16.mxu0 %v1991
        %2112 = vmatpush1.bf16.msra.mxu0 %v1990
        %2113 = vmatprep.subr.bf16.mxu0 %v1993
        %2114 = vmatpush1.bf16.msra.mxu0 %v1992
        %2115 = vmatprep.subr.bf16.mxu0 %v1995
        %2116 = vmatpush1.bf16.msra.mxu0 %v1994
        %2117 = vmatprep.subr.bf16.mxu0 %v1997
        %2118 = vmatpush1.bf16.msra.mxu0 %v1996
        %2119 = vmatprep.subr.bf16.mxu0 %v1999
        %2120 = vmatpush1.bf16.msra.mxu0 %v1998
        %2121 = vmatprep.subr.bf16.mxu0 0
        %2122 = vmatpush1.bf16.msra.mxu0 0
        %2123 = vmatprep.subr.bf16.mxu0 0
        %2124 = vmatpush1.bf16.msra.mxu0 0
        %2125 = vmatprep.subr.bf16.mxu0 0
        %2126 = vmatpush1.bf16.msra.mxu0 0
        %2127 = vmatprep.subr.bf16.mxu0 0
        %2128 = vmatpush1.bf16.msra.mxu0 0
        %2129 = vmatprep.mubr.bf16.mxu0 %v1273
        %2130 = vmatmul.mubr.bf16.gmra.mrb[0].mxu0 %v591
        %v2131 = vpop.f32.mrb[0].mxu0
        %v2132 = vadd.f32 %v2091, %v2131
        %v2133 = vpop.f32.mrb[0].mxu0
        %v2134 = vadd.f32 %v2093, %v2133
        %v2135 = vpop.f32.mrb[0].mxu0
        %v2136 = vpop.f32.mrb[0].mxu0
        %2137 = vdwg.mxu0
        %v2138 = vld [vmem:[%s410] sm:$0xee]
        %v2139 = vld [vmem:[%s410 + $0x8] sm:$0xee]
        %s2140 = scalar_lea.vmem %s1, 896
        %v2141 = vld [vmem:[%s2140] sm:$0xff]
        %v2142 = vld [vmem:[%s2140 + $0x8] sm:$0xff]
        %v2143 = vld [vmem:[%s2140 + $0x10] sm:$0xff]
        %v2144 = vld [vmem:[%s2140 + $0x18] sm:$0xff]
        %v2145 = vld [vmem:[%s2140 + $0x20] sm:$0xff]
        %v2146 = vld [vmem:[%s2140 + $0x28] sm:$0xff]
        %v2147 = vld [vmem:[%s2140 + $0x30] sm:$0xff]
        %v2148 = vld [vmem:[%s2140 + $0x38] sm:$0xff]
        %v2149 = vld [vmem:[%s2140 + $0x40] sm:$0xff]
        %v2150 = vld [vmem:[%s2140 + $0x48] sm:$0xff]
        %v2151 = vld [vmem:[%s2140 + $0x50] sm:$0xff]
        %v2152 = vld [vmem:[%s2140 + $0x58] sm:$0xff]
        %v2153 = vld [vmem:[%s2140 + $0x60] sm:$0xff]
        %v2154 = vld [vmem:[%s2140 + $0x68] sm:$0xff]
        %v2155 = vld [vmem:[%s2140 + $0x70] sm:$0xff]
        %v2156 = vld [vmem:[%s2140 + $0x78] sm:$0xff]
        %v2157 = vld [vmem:[%s2140 + $0x80] sm:$0xff]
        %v2158 = vld [vmem:[%s2140 + $0x88] sm:$0xff]
        %v2159 = vld [vmem:[%s2140 + $0x90] sm:$0xff]
        %v2160 = vld [vmem:[%s2140 + $0x98] sm:$0xff]
        %v2161 = vld [vmem:[%s2140 + $0xa0] sm:$0xff]
        %v2162 = vld [vmem:[%s2140 + $0xa8] sm:$0xff]
        %v2163 = vld [vmem:[%s2140 + $0xb0] sm:$0xff]
        %v2164 = vld [vmem:[%s2140 + $0xb8] sm:$0xff]
        %v2165 = vld [vmem:[%s2140 + $0xc0] sm:$0xff]
        %v2166 = vld [vmem:[%s2140 + $0xc8] sm:$0xff]
        %v2167 = vld [vmem:[%s2140 + $0xd0] sm:$0xff]
        %v2168 = vld [vmem:[%s2140 + $0xd8] sm:$0xff]
        %v2169 = vld [vmem:[%s2140 + $0xe0] sm:$0xff]
        %v2170 = vld [vmem:[%s2140 + $0xe8] sm:$0xff]
        %v2171 = vld [vmem:[%s2140 + $0xf0] sm:$0xff]
        %v2172 = vld [vmem:[%s2140 + $0xf8] sm:$0xff]
        %v2173 = vld [vmem:[%s2140 + $0x100] sm:$0xff]
        %v2174 = vld [vmem:[%s2140 + $0x108] sm:$0xff]
        %v2175 = vld [vmem:[%s2140 + $0x110] sm:$0xff]
        %v2176 = vld [vmem:[%s2140 + $0x118] sm:$0xff]
        %v2177 = vld [vmem:[%s2140 + $0x120] sm:$0xff]
        %v2178 = vld [vmem:[%s2140 + $0x128] sm:$0xff]
        %v2179 = vld [vmem:[%s2140 + $0x130] sm:$0xff]
        %v2180 = vld [vmem:[%s2140 + $0x138] sm:$0xff]
        %v2181 = vld [vmem:[%s2140 + $0x140] sm:$0xff]
        %v2182 = vld [vmem:[%s2140 + $0x148] sm:$0xff]
        %v2183 = vld [vmem:[%s2140 + $0x150] sm:$0xff]
        %v2184 = vld [vmem:[%s2140 + $0x158] sm:$0xff]
        %v2185 = vld [vmem:[%s2140 + $0x160] sm:$0xff]
        %v2186 = vld [vmem:[%s2140 + $0x168] sm:$0xff]
        %v2187 = vld [vmem:[%s2140 + $0x170] sm:$0xff]
        %v2188 = vld [vmem:[%s2140 + $0x178] sm:$0xff]
        %v2189 = vld [vmem:[%s2140 + $0x180] sm:$0xff]
        %v2190 = vld [vmem:[%s2140 + $0x188] sm:$0xff]
        %v2191 = vld [vmem:[%s2140 + $0x190] sm:$0xff]
        %v2192 = vld [vmem:[%s2140 + $0x198] sm:$0xff]
        %v2193 = vld [vmem:[%s2140 + $0x1a0] sm:$0xff]
        %v2194 = vld [vmem:[%s2140 + $0x1a8] sm:$0xff]
        %v2195 = vld [vmem:[%s2140 + $0x1b0] sm:$0xff]
        %v2196 = vld [vmem:[%s2140 + $0x1b8] sm:$0xff]
        %v2199 = vunpack.c.l.b16 %v2138
        %v2200 = vunpack.c.h.b16 %v2138
        %v2201 = vunpack.c.l.b16 %v2139
        %v2202 = vunpack.c.h.b16 %v2139
        %v2203 = vpack.c.b16 %v2199, %v2199
        %v2204 = vpack.c.b16 %v2200, %v2200
        %v2205 = vpack.c.b16 %v2201, %v2201
        %v2206 = vpack.c.b16 %v2202, %v2202
        %v2207 = vrot.slane %v2203, 1
        %v2208 = vrot.slane %v2204, 1
        %v2209 = vrot.slane %v2205, 1
        %v2210 = vrot.slane %v2206, 1
        %v2270 = vunpack.c.l.b16 %v2141
        %v2271 = vunpack.c.h.b16 %v2141
        %v2272 = vunpack.c.l.b16 %v2142
        %v2273 = vunpack.c.h.b16 %v2142
        %v2274 = vunpack.c.l.b16 %v2143
        %v2275 = vunpack.c.h.b16 %v2143
        %v2276 = vunpack.c.l.b16 %v2144
        %v2277 = vunpack.c.h.b16 %v2144
        %v2278 = vunpack.c.l.b16 %v2145
        %v2279 = vunpack.c.h.b16 %v2145
        %v2280 = vunpack.c.l.b16 %v2146
        %v2281 = vunpack.c.h.b16 %v2146
        %v2282 = vunpack.c.l.b16 %v2147
        %v2283 = vunpack.c.h.b16 %v2147
        %v2284 = vunpack.c.l.b16 %v2148
        %v2285 = vunpack.c.h.b16 %v2148
        %v2286 = vunpack.c.l.b16 %v2149
        %v2287 = vunpack.c.h.b16 %v2149
        %v2288 = vunpack.c.l.b16 %v2150
        %v2289 = vunpack.c.h.b16 %v2150
        %v2290 = vunpack.c.l.b16 %v2151
        %v2291 = vunpack.c.h.b16 %v2151
        %v2292 = vunpack.c.l.b16 %v2152
        %v2293 = vunpack.c.h.b16 %v2152
        %v2294 = vunpack.c.l.b16 %v2153
        %v2295 = vunpack.c.h.b16 %v2153
        %v2296 = vunpack.c.l.b16 %v2154
        %v2297 = vunpack.c.h.b16 %v2154
        %v2298 = vunpack.c.l.b16 %v2155
        %v2299 = vunpack.c.h.b16 %v2155
        %v2300 = vunpack.c.l.b16 %v2156
        %v2301 = vunpack.c.h.b16 %v2156
        %v2302 = vunpack.c.l.b16 %v2157
        %v2303 = vunpack.c.h.b16 %v2157
        %v2304 = vunpack.c.l.b16 %v2158
        %v2305 = vunpack.c.h.b16 %v2158
        %v2306 = vunpack.c.l.b16 %v2159
        %v2307 = vunpack.c.h.b16 %v2159
        %v2308 = vunpack.c.l.b16 %v2160
        %v2309 = vunpack.c.h.b16 %v2160
        %v2310 = vunpack.c.l.b16 %v2161
        %v2311 = vunpack.c.h.b16 %v2161
        %v2312 = vunpack.c.l.b16 %v2162
        %v2313 = vunpack.c.h.b16 %v2162
        %v2314 = vunpack.c.l.b16 %v2163
        %v2315 = vunpack.c.h.b16 %v2163
        %v2316 = vunpack.c.l.b16 %v2164
        %v2317 = vunpack.c.h.b16 %v2164
        %v2318 = vunpack.c.l.b16 %v2165
        %v2319 = vunpack.c.h.b16 %v2165
        %v2320 = vunpack.c.l.b16 %v2166
        %v2321 = vunpack.c.h.b16 %v2166
        %v2322 = vunpack.c.l.b16 %v2167
        %v2323 = vunpack.c.h.b16 %v2167
        %v2324 = vunpack.c.l.b16 %v2168
        %v2325 = vunpack.c.h.b16 %v2168
        %v2326 = vunpack.c.l.b16 %v2169
        %v2327 = vunpack.c.h.b16 %v2169
        %v2328 = vunpack.c.l.b16 %v2170
        %v2329 = vunpack.c.h.b16 %v2170
        %v2330 = vunpack.c.l.b16 %v2171
        %v2331 = vunpack.c.h.b16 %v2171
        %v2332 = vunpack.c.l.b16 %v2172
        %v2333 = vunpack.c.h.b16 %v2172
        %v2334 = vunpack.c.l.b16 %v2173
        %v2335 = vunpack.c.h.b16 %v2173
        %v2336 = vunpack.c.l.b16 %v2174
        %v2337 = vunpack.c.h.b16 %v2174
        %v2338 = vunpack.c.l.b16 %v2175
        %v2339 = vunpack.c.h.b16 %v2175
        %v2340 = vunpack.c.l.b16 %v2176
        %v2341 = vunpack.c.h.b16 %v2176
        %v2342 = vunpack.c.l.b16 %v2177
        %v2343 = vunpack.c.h.b16 %v2177
        %v2344 = vunpack.c.l.b16 %v2178
        %v2345 = vunpack.c.h.b16 %v2178
        %v2346 = vunpack.c.l.b16 %v2179
        %v2347 = vunpack.c.h.b16 %v2179
        %v2348 = vunpack.c.l.b16 %v2180
        %v2349 = vunpack.c.h.b16 %v2180
        %v2350 = vunpack.c.l.b16 %v2181
        %v2351 = vunpack.c.h.b16 %v2181
        %v2352 = vunpack.c.l.b16 %v2182
        %v2353 = vunpack.c.h.b16 %v2182
        %v2354 = vunpack.c.l.b16 %v2183
        %v2355 = vunpack.c.h.b16 %v2183
        %v2356 = vunpack.c.l.b16 %v2184
        %v2357 = vunpack.c.h.b16 %v2184
        %v2358 = vunpack.c.l.b16 %v2185
        %v2359 = vunpack.c.h.b16 %v2185
        %v2360 = vunpack.c.l.b16 %v2186
        %v2361 = vunpack.c.h.b16 %v2186
        %v2362 = vunpack.c.l.b16 %v2187
        %v2363 = vunpack.c.h.b16 %v2187
        %v2364 = vunpack.c.l.b16 %v2188
        %v2365 = vunpack.c.h.b16 %v2188
        %v2366 = vunpack.c.l.b16 %v2189
        %v2367 = vunpack.c.h.b16 %v2189
        %v2368 = vunpack.c.l.b16 %v2190
        %v2369 = vunpack.c.h.b16 %v2190
        %v2370 = vunpack.c.l.b16 %v2191
        %v2371 = vunpack.c.h.b16 %v2191
        %v2372 = vunpack.c.l.b16 %v2192
        %v2373 = vunpack.c.h.b16 %v2192
        %v2374 = vunpack.c.l.b16 %v2193
        %v2375 = vunpack.c.h.b16 %v2193
        %v2376 = vunpack.c.l.b16 %v2194
        %v2377 = vunpack.c.h.b16 %v2194
        %v2378 = vunpack.c.l.b16 %v2195
        %v2379 = vunpack.c.h.b16 %v2195
        %v2380 = vunpack.c.l.b16 %v2196
        %v2381 = vunpack.c.h.b16 %v2196
        %v2382 = vpack.c.b16 %v2272, %v2270
        %v2383 = vpack.c.b16 %v2273, %v2271
        %v2384 = vpack.c.b16 %v2276, %v2274
        %v2385 = vpack.c.b16 %v2277, %v2275
        %v2386 = vpack.c.b16 %v2280, %v2278
        %v2387 = vpack.c.b16 %v2281, %v2279
        %v2388 = vpack.c.b16 %v2284, %v2282
        %v2389 = vpack.c.b16 %v2285, %v2283
        %v2390 = vpack.c.b16 %v2288, %v2286
        %v2391 = vpack.c.b16 %v2289, %v2287
        %v2392 = vpack.c.b16 %v2292, %v2290
        %v2393 = vpack.c.b16 %v2293, %v2291
        %v2394 = vpack.c.b16 %v2296, %v2294
        %v2395 = vpack.c.b16 %v2297, %v2295
        %v2396 = vpack.c.b16 %v2300, %v2298
        %v2397 = vpack.c.b16 %v2301, %v2299
        %v2398 = vpack.c.b16 %v2304, %v2302
        %v2399 = vpack.c.b16 %v2305, %v2303
        %v2400 = vpack.c.b16 %v2308, %v2306
        %v2401 = vpack.c.b16 %v2309, %v2307
        %v2402 = vpack.c.b16 %v2312, %v2310
        %v2403 = vpack.c.b16 %v2313, %v2311
        %v2404 = vpack.c.b16 %v2316, %v2314
        %v2405 = vpack.c.b16 %v2317, %v2315
        %v2406 = vpack.c.b16 %v2320, %v2318
        %v2407 = vpack.c.b16 %v2321, %v2319
        %v2408 = vpack.c.b16 %v2324, %v2322
        %v2409 = vpack.c.b16 %v2325, %v2323
        %v2410 = vpack.c.b16 %v2328, %v2326
        %v2411 = vpack.c.b16 %v2329, %v2327
        %v2412 = vpack.c.b16 %v2332, %v2330
        %v2413 = vpack.c.b16 %v2333, %v2331
        %v2414 = vpack.c.b16 %v2336, %v2334
        %v2415 = vpack.c.b16 %v2337, %v2335
        %v2416 = vpack.c.b16 %v2340, %v2338
        %v2417 = vpack.c.b16 %v2341, %v2339
        %v2418 = vpack.c.b16 %v2344, %v2342
        %v2419 = vpack.c.b16 %v2345, %v2343
        %v2420 = vpack.c.b16 %v2348, %v2346
        %v2421 = vpack.c.b16 %v2349, %v2347
        %v2422 = vpack.c.b16 %v2352, %v2350
        %v2423 = vpack.c.b16 %v2353, %v2351
        %v2424 = vpack.c.b16 %v2356, %v2354
        %v2425 = vpack.c.b16 %v2357, %v2355
        %v2426 = vpack.c.b16 %v2360, %v2358
        %v2427 = vpack.c.b16 %v2361, %v2359
        %v2428 = vpack.c.b16 %v2364, %v2362
        %v2429 = vpack.c.b16 %v2365, %v2363
        %v2430 = vpack.c.b16 %v2368, %v2366
        %v2431 = vpack.c.b16 %v2369, %v2367
        %v2432 = vpack.c.b16 %v2372, %v2370
        %v2433 = vpack.c.b16 %v2373, %v2371
        %v2434 = vpack.c.b16 %v2376, %v2374
        %v2435 = vpack.c.b16 %v2377, %v2375
        %v2436 = vpack.c.b16 %v2380, %v2378
        %v2437 = vpack.c.b16 %v2381, %v2379
        %v2495 = vsel %vm904, %v2210, 0
        %2497 = vmatprep.subr.bf16.mxu0 %v2383
        %2498 = vmatpush1.bf16.msra.mxu0 %v2382
        %2499 = vmatprep.subr.bf16.mxu0 %v2385
        %2500 = vmatpush1.bf16.msra.mxu0 %v2384
        %2501 = vmatprep.subr.bf16.mxu0 %v2387
        %2502 = vmatpush1.bf16.msra.mxu0 %v2386
        %2503 = vmatprep.subr.bf16.mxu0 %v2389
        %2504 = vmatpush1.bf16.msra.mxu0 %v2388
        %2505 = vmatprep.subr.bf16.mxu0 %v2391
        %2506 = vmatpush1.bf16.msra.mxu0 %v2390
        %2507 = vmatprep.subr.bf16.mxu0 %v2393
        %2508 = vmatpush1.bf16.msra.mxu0 %v2392
        %2509 = vmatprep.subr.bf16.mxu0 %v2395
        %2510 = vmatpush1.bf16.msra.mxu0 %v2394
        %2511 = vmatprep.subr.bf16.mxu0 %v2397
        %2512 = vmatpush1.bf16.msra.mxu0 %v2396
        %2513 = vmatprep.subr.bf16.mxu0 %v2399
        %2514 = vmatpush1.bf16.msra.mxu0 %v2398
        %2515 = vmatprep.subr.bf16.mxu0 %v2401
        %2516 = vmatpush1.bf16.msra.mxu0 %v2400
        %2517 = vmatprep.subr.bf16.mxu0 %v2403
        %2518 = vmatpush1.bf16.msra.mxu0 %v2402
        %2519 = vmatprep.subr.bf16.mxu0 %v2405
        %2520 = vmatpush1.bf16.msra.mxu0 %v2404
        %2521 = vmatprep.subr.bf16.mxu0 %v2407
        %2522 = vmatpush1.bf16.msra.mxu0 %v2406
        %2523 = vmatprep.subr.bf16.mxu0 %v2409
        %2524 = vmatpush1.bf16.msra.mxu0 %v2408
        %2525 = vmatprep.subr.bf16.mxu0 %v2411
        %2526 = vmatpush1.bf16.msra.mxu0 %v2410
        %2527 = vmatprep.subr.bf16.mxu0 %v2413
        %2528 = vmatpush1.bf16.msra.mxu0 %v2412
        %2529 = vmatprep.mubr.bf16.mxu0 %v2208
        %2530 = vmatmul.mubr.bf16.gmra.mrb[0].mxu0 %v2207
        %v2531 = vpop.f32.mrb[0].mxu0
        %v2532 = vadd.f32 0.0, %v2531
        %v2533 = vpop.f32.mrb[0].mxu0
        %v2534 = vadd.f32 0.0, %v2533
        %v2535 = vpop.f32.mrb[0].mxu0
        %v2536 = vpop.f32.mrb[0].mxu0
        %2537 = vdwg.mxu0
        %2538 = vmatprep.subr.bf16.mxu0 %v2415
        %2539 = vmatpush1.bf16.msra.mxu0 %v2414
        %2540 = vmatprep.subr.bf16.mxu0 %v2417
        %2541 = vmatpush1.bf16.msra.mxu0 %v2416
        %2542 = vmatprep.subr.bf16.mxu0 %v2419
        %2543 = vmatpush1.bf16.msra.mxu0 %v2418
        %2544 = vmatprep.subr.bf16.mxu0 %v2421
        %2545 = vmatpush1.bf16.msra.mxu0 %v2420
        %2546 = vmatprep.subr.bf16.mxu0 %v2423
        %2547 = vmatpush1.bf16.msra.mxu0 %v2422
        %2548 = vmatprep.subr.bf16.mxu0 %v2425
        %2549 = vmatpush1.bf16.msra.mxu0 %v2424
        %2550 = vmatprep.subr.bf16.mxu0 %v2427
        %2551 = vmatpush1.bf16.msra.mxu0 %v2426
        %2552 = vmatprep.subr.bf16.mxu0 %v2429
        %2553 = vmatpush1.bf16.msra.mxu0 %v2428
        %2554 = vmatprep.subr.bf16.mxu0 %v2431
        %2555 = vmatpush1.bf16.msra.mxu0 %v2430
        %2556 = vmatprep.subr.bf16.mxu0 %v2433
        %2557 = vmatpush1.bf16.msra.mxu0 %v2432
        %2558 = vmatprep.subr.bf16.mxu0 %v2435
        %2559 = vmatpush1.bf16.msra.mxu0 %v2434
        %2560 = vmatprep.subr.bf16.mxu0 %v2437
        %2561 = vmatpush1.bf16.msra.mxu0 %v2436
        %2562 = vmatprep.subr.bf16.mxu0 0
        %2563 = vmatpush1.bf16.msra.mxu0 0
        %2564 = vmatprep.subr.bf16.mxu0 0
        %2565 = vmatpush1.bf16.msra.mxu0 0
        %2566 = vmatprep.subr.bf16.mxu0 0
        %2567 = vmatpush1.bf16.msra.mxu0 0
        %2568 = vmatprep.subr.bf16.mxu0 0
        %2569 = vmatpush1.bf16.msra.mxu0 0
        %2570 = vmatprep.mubr.bf16.mxu0 %v2495
        %2571 = vmatmul.mubr.bf16.gmra.mrb[0].mxu0 %v2209
        %v2572 = vpop.f32.mrb[0].mxu0
        %v2573 = vadd.f32 %v2532, %v2572
        %v2574 = vpop.f32.mrb[0].mxu0
        %v2575 = vadd.f32 %v2534, %v2574
        %v2576 = vpop.f32.mrb[0].mxu0
        %v2577 = vpop.f32.mrb[0].mxu0
        %2578 = vdwg.mxu0
        %v2579 = vadd.f32 %v1351, %v2573
        %v2580 = vadd.f32 %v1353, %v2575
        %s2581 = scalar_lea.vmem %s2, 896
        %v2582 = vld [vmem:[%s2581] sm:$0xff]
        %v2583 = vld [vmem:[%s2581 + $0x8] sm:$0xff]
        %v2584 = vld [vmem:[%s2581 + $0x10] sm:$0xff]
        %v2585 = vld [vmem:[%s2581 + $0x18] sm:$0xff]
        %v2586 = vld [vmem:[%s2581 + $0x20] sm:$0xff]
        %v2587 = vld [vmem:[%s2581 + $0x28] sm:$0xff]
        %v2588 = vld [vmem:[%s2581 + $0x30] sm:$0xff]
        %v2589 = vld [vmem:[%s2581 + $0x38] sm:$0xff]
        %v2590 = vld [vmem:[%s2581 + $0x40] sm:$0xff]
        %v2591 = vld [vmem:[%s2581 + $0x48] sm:$0xff]
        %v2592 = vld [vmem:[%s2581 + $0x50] sm:$0xff]
        %v2593 = vld [vmem:[%s2581 + $0x58] sm:$0xff]
        %v2594 = vld [vmem:[%s2581 + $0x60] sm:$0xff]
        %v2595 = vld [vmem:[%s2581 + $0x68] sm:$0xff]
        %v2596 = vld [vmem:[%s2581 + $0x70] sm:$0xff]
        %v2597 = vld [vmem:[%s2581 + $0x78] sm:$0xff]
        %v2598 = vld [vmem:[%s2581 + $0x80] sm:$0xff]
        %v2599 = vld [vmem:[%s2581 + $0x88] sm:$0xff]
        %v2600 = vld [vmem:[%s2581 + $0x90] sm:$0xff]
        %v2601 = vld [vmem:[%s2581 + $0x98] sm:$0xff]
        %v2602 = vld [vmem:[%s2581 + $0xa0] sm:$0xff]
        %v2603 = vld [vmem:[%s2581 + $0xa8] sm:$0xff]
        %v2604 = vld [vmem:[%s2581 + $0xb0] sm:$0xff]
        %v2605 = vld [vmem:[%s2581 + $0xb8] sm:$0xff]
        %v2606 = vld [vmem:[%s2581 + $0xc0] sm:$0xff]
        %v2607 = vld [vmem:[%s2581 + $0xc8] sm:$0xff]
        %v2608 = vld [vmem:[%s2581 + $0xd0] sm:$0xff]
        %v2609 = vld [vmem:[%s2581 + $0xd8] sm:$0xff]
        %v2610 = vld [vmem:[%s2581 + $0xe0] sm:$0xff]
        %v2611 = vld [vmem:[%s2581 + $0xe8] sm:$0xff]
        %v2612 = vld [vmem:[%s2581 + $0xf0] sm:$0xff]
        %v2613 = vld [vmem:[%s2581 + $0xf8] sm:$0xff]
        %v2614 = vld [vmem:[%s2581 + $0x100] sm:$0xff]
        %v2615 = vld [vmem:[%s2581 + $0x108] sm:$0xff]
        %v2616 = vld [vmem:[%s2581 + $0x110] sm:$0xff]
        %v2617 = vld [vmem:[%s2581 + $0x118] sm:$0xff]
        %v2618 = vld [vmem:[%s2581 + $0x120] sm:$0xff]
        %v2619 = vld [vmem:[%s2581 + $0x128] sm:$0xff]
        %v2620 = vld [vmem:[%s2581 + $0x130] sm:$0xff]
        %v2621 = vld [vmem:[%s2581 + $0x138] sm:$0xff]
        %v2622 = vld [vmem:[%s2581 + $0x140] sm:$0xff]
        %v2623 = vld [vmem:[%s2581 + $0x148] sm:$0xff]
        %v2624 = vld [vmem:[%s2581 + $0x150] sm:$0xff]
        %v2625 = vld [vmem:[%s2581 + $0x158] sm:$0xff]
        %v2626 = vld [vmem:[%s2581 + $0x160] sm:$0xff]
        %v2627 = vld [vmem:[%s2581 + $0x168] sm:$0xff]
        %v2628 = vld [vmem:[%s2581 + $0x170] sm:$0xff]
        %v2629 = vld [vmem:[%s2581 + $0x178] sm:$0xff]
        %v2630 = vld [vmem:[%s2581 + $0x180] sm:$0xff]
        %v2631 = vld [vmem:[%s2581 + $0x188] sm:$0xff]
        %v2632 = vld [vmem:[%s2581 + $0x190] sm:$0xff]
        %v2633 = vld [vmem:[%s2581 + $0x198] sm:$0xff]
        %v2634 = vld [vmem:[%s2581 + $0x1a0] sm:$0xff]
        %v2635 = vld [vmem:[%s2581 + $0x1a8] sm:$0xff]
        %v2636 = vld [vmem:[%s2581 + $0x1b0] sm:$0xff]
        %v2637 = vld [vmem:[%s2581 + $0x1b8] sm:$0xff]
        %v2694 = vunpack.c.l.b16 %v2582
        %v2695 = vunpack.c.h.b16 %v2582
        %v2696 = vunpack.c.l.b16 %v2583
        %v2697 = vunpack.c.h.b16 %v2583
        %v2698 = vunpack.c.l.b16 %v2584
        %v2699 = vunpack.c.h.b16 %v2584
        %v2700 = vunpack.c.l.b16 %v2585
        %v2701 = vunpack.c.h.b16 %v2585
        %v2702 = vunpack.c.l.b16 %v2586
        %v2703 = vunpack.c.h.b16 %v2586
        %v2704 = vunpack.c.l.b16 %v2587
        %v2705 = vunpack.c.h.b16 %v2587
        %v2706 = vunpack.c.l.b16 %v2588
        %v2707 = vunpack.c.h.b16 %v2588
        %v2708 = vunpack.c.l.b16 %v2589
        %v2709 = vunpack.c.h.b16 %v2589
        %v2710 = vunpack.c.l.b16 %v2590
        %v2711 = vunpack.c.h.b16 %v2590
        %v2712 = vunpack.c.l.b16 %v2591
        %v2713 = vunpack.c.h.b16 %v2591
        %v2714 = vunpack.c.l.b16 %v2592
        %v2715 = vunpack.c.h.b16 %v2592
        %v2716 = vunpack.c.l.b16 %v2593
        %v2717 = vunpack.c.h.b16 %v2593
        %v2718 = vunpack.c.l.b16 %v2594
        %v2719 = vunpack.c.h.b16 %v2594
        %v2720 = vunpack.c.l.b16 %v2595
        %v2721 = vunpack.c.h.b16 %v2595
        %v2722 = vunpack.c.l.b16 %v2596
        %v2723 = vunpack.c.h.b16 %v2596
        %v2724 = vunpack.c.l.b16 %v2597
        %v2725 = vunpack.c.h.b16 %v2597
        %v2726 = vunpack.c.l.b16 %v2598
        %v2727 = vunpack.c.h.b16 %v2598
        %v2728 = vunpack.c.l.b16 %v2599
        %v2729 = vunpack.c.h.b16 %v2599
        %v2730 = vunpack.c.l.b16 %v2600
        %v2731 = vunpack.c.h.b16 %v2600
        %v2732 = vunpack.c.l.b16 %v2601
        %v2733 = vunpack.c.h.b16 %v2601
        %v2734 = vunpack.c.l.b16 %v2602
        %v2735 = vunpack.c.h.b16 %v2602
        %v2736 = vunpack.c.l.b16 %v2603
        %v2737 = vunpack.c.h.b16 %v2603
        %v2738 = vunpack.c.l.b16 %v2604
        %v2739 = vunpack.c.h.b16 %v2604
        %v2740 = vunpack.c.l.b16 %v2605
        %v2741 = vunpack.c.h.b16 %v2605
        %v2742 = vunpack.c.l.b16 %v2606
        %v2743 = vunpack.c.h.b16 %v2606
        %v2744 = vunpack.c.l.b16 %v2607
        %v2745 = vunpack.c.h.b16 %v2607
        %v2746 = vunpack.c.l.b16 %v2608
        %v2747 = vunpack.c.h.b16 %v2608
        %v2748 = vunpack.c.l.b16 %v2609
        %v2749 = vunpack.c.h.b16 %v2609
        %v2750 = vunpack.c.l.b16 %v2610
        %v2751 = vunpack.c.h.b16 %v2610
        %v2752 = vunpack.c.l.b16 %v2611
        %v2753 = vunpack.c.h.b16 %v2611
        %v2754 = vunpack.c.l.b16 %v2612
        %v2755 = vunpack.c.h.b16 %v2612
        %v2756 = vunpack.c.l.b16 %v2613
        %v2757 = vunpack.c.h.b16 %v2613
        %v2758 = vunpack.c.l.b16 %v2614
        %v2759 = vunpack.c.h.b16 %v2614
        %v2760 = vunpack.c.l.b16 %v2615
        %v2761 = vunpack.c.h.b16 %v2615
        %v2762 = vunpack.c.l.b16 %v2616
        %v2763 = vunpack.c.h.b16 %v2616
        %v2764 = vunpack.c.l.b16 %v2617
        %v2765 = vunpack.c.h.b16 %v2617
        %v2766 = vunpack.c.l.b16 %v2618
        %v2767 = vunpack.c.h.b16 %v2618
        %v2768 = vunpack.c.l.b16 %v2619
        %v2769 = vunpack.c.h.b16 %v2619
        %v2770 = vunpack.c.l.b16 %v2620
        %v2771 = vunpack.c.h.b16 %v2620
        %v2772 = vunpack.c.l.b16 %v2621
        %v2773 = vunpack.c.h.b16 %v2621
        %v2774 = vunpack.c.l.b16 %v2622
        %v2775 = vunpack.c.h.b16 %v2622
        %v2776 = vunpack.c.l.b16 %v2623
        %v2777 = vunpack.c.h.b16 %v2623
        %v2778 = vunpack.c.l.b16 %v2624
        %v2779 = vunpack.c.h.b16 %v2624
        %v2780 = vunpack.c.l.b16 %v2625
        %v2781 = vunpack.c.h.b16 %v2625
        %v2782 = vunpack.c.l.b16 %v2626
        %v2783 = vunpack.c.h.b16 %v2626
        %v2784 = vunpack.c.l.b16 %v2627
        %v2785 = vunpack.c.h.b16 %v2627
        %v2786 = vunpack.c.l.b16 %v2628
        %v2787 = vunpack.c.h.b16 %v2628
        %v2788 = vunpack.c.l.b16 %v2629
        %v2789 = vunpack.c.h.b16 %v2629
        %v2790 = vunpack.c.l.b16 %v2630
        %v2791 = vunpack.c.h.b16 %v2630
        %v2792 = vunpack.c.l.b16 %v2631
        %v2793 = vunpack.c.h.b16 %v2631
        %v2794 = vunpack.c.l.b16 %v2632
        %v2795 = vunpack.c.h.b16 %v2632
        %v2796 = vunpack.c.l.b16 %v2633
        %v2797 = vunpack.c.h.b16 %v2633
        %v2798 = vunpack.c.l.b16 %v2634
        %v2799 = vunpack.c.h.b16 %v2634
        %v2800 = vunpack.c.l.b16 %v2635
        %v2801 = vunpack.c.h.b16 %v2635
        %v2802 = vunpack.c.l.b16 %v2636
        %v2803 = vunpack.c.h.b16 %v2636
        %v2804 = vunpack.c.l.b16 %v2637
        %v2805 = vunpack.c.h.b16 %v2637
        %v2806 = vpack.c.b16 %v2696, %v2694
        %v2807 = vpack.c.b16 %v2697, %v2695
        %v2808 = vpack.c.b16 %v2700, %v2698
        %v2809 = vpack.c.b16 %v2701, %v2699
        %v2810 = vpack.c.b16 %v2704, %v2702
        %v2811 = vpack.c.b16 %v2705, %v2703
        %v2812 = vpack.c.b16 %v2708, %v2706
        %v2813 = vpack.c.b16 %v2709, %v2707
        %v2814 = vpack.c.b16 %v2712, %v2710
        %v2815 = vpack.c.b16 %v2713, %v2711
        %v2816 = vpack.c.b16 %v2716, %v2714
        %v2817 = vpack.c.b16 %v2717, %v2715
        %v2818 = vpack.c.b16 %v2720, %v2718
        %v2819 = vpack.c.b16 %v2721, %v2719
        %v2820 = vpack.c.b16 %v2724, %v2722
        %v2821 = vpack.c.b16 %v2725, %v2723
        %v2822 = vpack.c.b16 %v2728, %v2726
        %v2823 = vpack.c.b16 %v2729, %v2727
        %v2824 = vpack.c.b16 %v2732, %v2730
        %v2825 = vpack.c.b16 %v2733, %v2731
        %v2826 = vpack.c.b16 %v2736, %v2734
        %v2827 = vpack.c.b16 %v2737, %v2735
        %v2828 = vpack.c.b16 %v2740, %v2738
        %v2829 = vpack.c.b16 %v2741, %v2739
        %v2830 = vpack.c.b16 %v2744, %v2742
        %v2831 = vpack.c.b16 %v2745, %v2743
        %v2832 = vpack.c.b16 %v2748, %v2746
        %v2833 = vpack.c.b16 %v2749, %v2747
        %v2834 = vpack.c.b16 %v2752, %v2750
        %v2835 = vpack.c.b16 %v2753, %v2751
        %v2836 = vpack.c.b16 %v2756, %v2754
        %v2837 = vpack.c.b16 %v2757, %v2755
        %v2838 = vpack.c.b16 %v2760, %v2758
        %v2839 = vpack.c.b16 %v2761, %v2759
        %v2840 = vpack.c.b16 %v2764, %v2762
        %v2841 = vpack.c.b16 %v2765, %v2763
        %v2842 = vpack.c.b16 %v2768, %v2766
        %v2843 = vpack.c.b16 %v2769, %v2767
        %v2844 = vpack.c.b16 %v2772, %v2770
        %v2845 = vpack.c.b16 %v2773, %v2771
        %v2846 = vpack.c.b16 %v2776, %v2774
        %v2847 = vpack.c.b16 %v2777, %v2775
        %v2848 = vpack.c.b16 %v2780, %v2778
        %v2849 = vpack.c.b16 %v2781, %v2779
        %v2850 = vpack.c.b16 %v2784, %v2782
        %v2851 = vpack.c.b16 %v2785, %v2783
        %v2852 = vpack.c.b16 %v2788, %v2786
        %v2853 = vpack.c.b16 %v2789, %v2787
        %v2854 = vpack.c.b16 %v2792, %v2790
        %v2855 = vpack.c.b16 %v2793, %v2791
        %v2856 = vpack.c.b16 %v2796, %v2794
        %v2857 = vpack.c.b16 %v2797, %v2795
        %v2858 = vpack.c.b16 %v2800, %v2798
        %v2859 = vpack.c.b16 %v2801, %v2799
        %v2860 = vpack.c.b16 %v2804, %v2802
        %v2861 = vpack.c.b16 %v2805, %v2803
        %2918 = vmatprep.subr.bf16.mxu0 %v2807
        %2919 = vmatpush1.bf16.msra.mxu0 %v2806
        %2920 = vmatprep.subr.bf16.mxu0 %v2809
        %2921 = vmatpush1.bf16.msra.mxu0 %v2808
        %2922 = vmatprep.subr.bf16.mxu0 %v2811
        %2923 = vmatpush1.bf16.msra.mxu0 %v2810
        %2924 = vmatprep.subr.bf16.mxu0 %v2813
        %2925 = vmatpush1.bf16.msra.mxu0 %v2812
        %2926 = vmatprep.subr.bf16.mxu0 %v2815
        %2927 = vmatpush1.bf16.msra.mxu0 %v2814
        %2928 = vmatprep.subr.bf16.mxu0 %v2817
        %2929 = vmatpush1.bf16.msra.mxu0 %v2816
        %2930 = vmatprep.subr.bf16.mxu0 %v2819
        %2931 = vmatpush1.bf16.msra.mxu0 %v2818
        %2932 = vmatprep.subr.bf16.mxu0 %v2821
        %2933 = vmatpush1.bf16.msra.mxu0 %v2820
        %2934 = vmatprep.subr.bf16.mxu0 %v2823
        %2935 = vmatpush1.bf16.msra.mxu0 %v2822
        %2936 = vmatprep.subr.bf16.mxu0 %v2825
        %2937 = vmatpush1.bf16.msra.mxu0 %v2824
        %2938 = vmatprep.subr.bf16.mxu0 %v2827
        %2939 = vmatpush1.bf16.msra.mxu0 %v2826
        %2940 = vmatprep.subr.bf16.mxu0 %v2829
        %2941 = vmatpush1.bf16.msra.mxu0 %v2828
        %2942 = vmatprep.subr.bf16.mxu0 %v2831
        %2943 = vmatpush1.bf16.msra.mxu0 %v2830
        %2944 = vmatprep.subr.bf16.mxu0 %v2833
        %2945 = vmatpush1.bf16.msra.mxu0 %v2832
        %2946 = vmatprep.subr.bf16.mxu0 %v2835
        %2947 = vmatpush1.bf16.msra.mxu0 %v2834
        %2948 = vmatprep.subr.bf16.mxu0 %v2837
        %2949 = vmatpush1.bf16.msra.mxu0 %v2836
        %2950 = vmatprep.mubr.bf16.mxu0 %v2208
        %2951 = vmatmul.mubr.bf16.gmra.mrb[0].mxu0 %v2207
        %v2952 = vpop.f32.mrb[0].mxu0
        %v2953 = vadd.f32 0.0, %v2952
        %v2954 = vpop.f32.mrb[0].mxu0
        %v2955 = vadd.f32 0.0, %v2954
        %v2956 = vpop.f32.mrb[0].mxu0
        %v2957 = vpop.f32.mrb[0].mxu0
        %2958 = vdwg.mxu0
        %2959 = vmatprep.subr.bf16.mxu0 %v2839
        %2960 = vmatpush1.bf16.msra.mxu0 %v2838
        %2961 = vmatprep.subr.bf16.mxu0 %v2841
        %2962 = vmatpush1.bf16.msra.mxu0 %v2840
        %2963 = vmatprep.subr.bf16.mxu0 %v2843
        %2964 = vmatpush1.bf16.msra.mxu0 %v2842
        %2965 = vmatprep.subr.bf16.mxu0 %v2845
        %2966 = vmatpush1.bf16.msra.mxu0 %v2844
        %2967 = vmatprep.subr.bf16.mxu0 %v2847
        %2968 = vmatpush1.bf16.msra.mxu0 %v2846
        %2969 = vmatprep.subr.bf16.mxu0 %v2849
        %2970 = vmatpush1.bf16.msra.mxu0 %v2848
        %2971 = vmatprep.subr.bf16.mxu0 %v2851
        %2972 = vmatpush1.bf16.msra.mxu0 %v2850
        %2973 = vmatprep.subr.bf16.mxu0 %v2853
        %2974 = vmatpush1.bf16.msra.mxu0 %v2852
        %2975 = vmatprep.subr.bf16.mxu0 %v2855
        %2976 = vmatpush1.bf16.msra.mxu0 %v2854
        %2977 = vmatprep.subr.bf16.mxu0 %v2857
        %2978 = vmatpush1.bf16.msra.mxu0 %v2856
        %2979 = vmatprep.subr.bf16.mxu0 %v2859
        %2980 = vmatpush1.bf16.msra.mxu0 %v2858
        %2981 = vmatprep.subr.bf16.mxu0 %v2861
        %2982 = vmatpush1.bf16.msra.mxu0 %v2860
        %2983 = vmatprep.subr.bf16.mxu0 0
        %2984 = vmatpush1.bf16.msra.mxu0 0
        %2985 = vmatprep.subr.bf16.mxu0 0
        %2986 = vmatpush1.bf16.msra.mxu0 0
        %2987 = vmatprep.subr.bf16.mxu0 0
        %2988 = vmatpush1.bf16.msra.mxu0 0
        %2989 = vmatprep.subr.bf16.mxu0 0
        %2990 = vmatpush1.bf16.msra.mxu0 0
        %2991 = vmatprep.mubr.bf16.mxu0 %v2495
        %2992 = vmatmul.mubr.bf16.gmra.mrb[0].mxu0 %v2209
        %v2993 = vpop.f32.mrb[0].mxu0
        %v2994 = vadd.f32 %v2953, %v2993
        %v2995 = vpop.f32.mrb[0].mxu0
        %v2996 = vadd.f32 %v2955, %v2995
        %v2997 = vpop.f32.mrb[0].mxu0
        %v2998 = vpop.f32.mrb[0].mxu0
        %2999 = vdwg.mxu0
        %v3000 = vadd.f32 %v2132, %v2994
        %v3001 = vadd.f32 %v2134, %v2996
        %v3002 = vld [vmem:[%s3] sm:$0x3]
        %v3004 = vlaneseq
        %v3005 = vshrl.u32 %v3004, 7
        %v3006 = vsub.s32 0, %v3005
        %v3007 = vrot.slane %v3002, %v3006
        %v3008 = vlaneseq
        %v3009 = vshrl.u32 %v3008, 7
        %v3010 = vsub.s32 1, %v3009
        %v3011 = vrot.slane %v3002, %v3010
        %v3014 = vadd.f32 %v2579, %v3007
        %v3015 = vadd.f32 %v2580, %v3011
        %v3016 = vmax.f32 %v3014, 0.0
        %v3017 = vmax.f32 %v3015, 0.0
        %v3018 = vadd.f32 %v3000, %v3007
        %v3019 = vadd.f32 %v3001, %v3011
        %v3020 = vmax.f32 %v3018, 0.0
        %v3021 = vmax.f32 %v3019, 0.0
        %v3022 = vmax.f32 %v3016, %v3020
        %v3023 = vmax.f32 %v3017, %v3021
        %v3024 = vpack.c.bf16 %v3022, %v3022
        %v3025 = vpack.c.bf16 %v3023, %v3023
        %v3026 = vld [vmem:[%s4] sm:$0xf]
        %v3027 = vld [vmem:[%s4 + $0x4] sm:$0xf]
        %v3028 = vld [vmem:[%s4 + $0x8] sm:$0xf]
        %v3029 = vld [vmem:[%s4 + $0xc] sm:$0xf]
        %v3030 = vld [vmem:[%s4 + $0x10] sm:$0xf]
        %v3031 = vld [vmem:[%s4 + $0x14] sm:$0xf]
        %v3032 = vld [vmem:[%s4 + $0x18] sm:$0xf]
        %v3033 = vld [vmem:[%s4 + $0x1c] sm:$0xf]
        %v3034 = vld [vmem:[%s4 + $0x20] sm:$0xf]
        %v3035 = vld [vmem:[%s4 + $0x24] sm:$0xf]
        %v3036 = vld [vmem:[%s4 + $0x28] sm:$0xf]
        %v3037 = vld [vmem:[%s4 + $0x2c] sm:$0xf]
        %v3038 = vld [vmem:[%s4 + $0x30] sm:$0xf]
        %v3039 = vld [vmem:[%s4 + $0x34] sm:$0xf]
        %v3040 = vld [vmem:[%s4 + $0x38] sm:$0xf]
        %v3041 = vld [vmem:[%s4 + $0x3c] sm:$0xf]
        %v3042 = vld [vmem:[%s4 + $0x40] sm:$0xf]
        %v3043 = vld [vmem:[%s4 + $0x44] sm:$0xf]
        %v3044 = vld [vmem:[%s4 + $0x48] sm:$0xf]
        %v3045 = vld [vmem:[%s4 + $0x4c] sm:$0xf]
        %v3066 = vunpack.c.l.b16 %v3026
        %v3067 = vunpack.c.l.b16 %v3027
        %v3068 = vunpack.c.l.b16 %v3028
        %v3069 = vunpack.c.l.b16 %v3029
        %v3070 = vunpack.c.l.b16 %v3030
        %v3071 = vunpack.c.l.b16 %v3031
        %v3072 = vunpack.c.l.b16 %v3032
        %v3073 = vunpack.c.l.b16 %v3033
        %v3074 = vunpack.c.l.b16 %v3034
        %v3075 = vunpack.c.l.b16 %v3035
        %v3076 = vunpack.c.l.b16 %v3036
        %v3077 = vunpack.c.l.b16 %v3037
        %v3078 = vunpack.c.l.b16 %v3038
        %v3079 = vunpack.c.l.b16 %v3039
        %v3080 = vunpack.c.l.b16 %v3040
        %v3081 = vunpack.c.l.b16 %v3041
        %v3082 = vunpack.c.l.b16 %v3042
        %v3083 = vunpack.c.l.b16 %v3043
        %v3084 = vunpack.c.l.b16 %v3044
        %v3085 = vunpack.c.l.b16 %v3045
        %v3086 = vpack.c.b16 %v3067, %v3066
        %v3087 = vpack.c.b16 %v3069, %v3068
        %v3088 = vpack.c.b16 %v3071, %v3070
        %v3089 = vpack.c.b16 %v3073, %v3072
        %v3090 = vpack.c.b16 %v3075, %v3074
        %v3091 = vpack.c.b16 %v3077, %v3076
        %v3092 = vpack.c.b16 %v3079, %v3078
        %v3093 = vpack.c.b16 %v3081, %v3080
        %v3094 = vpack.c.b16 %v3083, %v3082
        %v3095 = vpack.c.b16 %v3085, %v3084
        %vm3106 = vcmask 261120
        %v3108 = vsel %vm3106, %v3025, 0
        %3110 = vmatprep.subr.bf16.mxu0 0
        %3111 = vmatpush1.bf16.msra.mxu0 %v3086
        %3112 = vmatprep.subr.bf16.mxu0 0
        %3113 = vmatpush1.bf16.msra.mxu0 %v3087
        %3114 = vmatprep.subr.bf16.mxu0 0
        %3115 = vmatpush1.bf16.msra.mxu0 %v3088
        %3116 = vmatprep.subr.bf16.mxu0 0
        %3117 = vmatpush1.bf16.msra.mxu0 %v3089
        %3118 = vmatprep.subr.bf16.mxu0 0
        %3119 = vmatpush1.bf16.msra.mxu0 %v3090
        %3120 = vmatprep.subr.bf16.mxu0 0
        %3121 = vmatpush1.bf16.msra.mxu0 %v3091
        %3122 = vmatprep.subr.bf16.mxu0 0
        %3123 = vmatpush1.bf16.msra.mxu0 %v3092
        %3124 = vmatprep.subr.bf16.mxu0 0
        %3125 = vmatpush1.bf16.msra.mxu0 %v3093
        %3126 = vmatprep.subr.bf16.mxu0 0
        %3127 = vmatpush1.bf16.msra.mxu0 %v3094
        %3128 = vmatprep.subr.bf16.mxu0 0
        %3129 = vmatpush1.bf16.msra.mxu0 %v3095
        %3130 = vmatprep.subr.bf16.mxu0 0
        %3131 = vmatpush1.bf16.msra.mxu0 0
        %3132 = vmatprep.subr.bf16.mxu0 0
        %3133 = vmatpush1.bf16.msra.mxu0 0
        %3134 = vmatprep.subr.bf16.mxu0 0
        %3135 = vmatpush1.bf16.msra.mxu0 0
        %3136 = vmatprep.subr.bf16.mxu0 0
        %3137 = vmatpush1.bf16.msra.mxu0 0
        %3138 = vmatprep.subr.bf16.mxu0 0
        %3139 = vmatpush1.bf16.msra.mxu0 0
        %3140 = vmatprep.subr.bf16.mxu0 0
        %3141 = vmatpush1.bf16.msra.mxu0 0
        %3142 = vmatprep.mubr.bf16.mxu0 %v3108
        %3143 = vmatmul.mubr.bf16.gmra.mrb[0].mxu0 %v3024
        %v3144 = vpop.f32.mrb[0].mxu0
        %v3145 = vadd.f32 0.0, %v3144
        %v3146 = vpop.f32.mrb[0].mxu0
        %v3147 = vpop.f32.mrb[0].mxu0
        %v3148 = vpop.f32.mrb[0].mxu0
        %3149 = vdwg.mxu0
        %v3150 = vld [vmem:[%s5] sm:$0xf]
        %v3151 = vld [vmem:[%s5 + $0x4] sm:$0xf]
        %v3152 = vld [vmem:[%s5 + $0x8] sm:$0xf]
        %v3153 = vld [vmem:[%s5 + $0xc] sm:$0xf]
        %v3154 = vld [vmem:[%s5 + $0x10] sm:$0xf]
        %v3155 = vld [vmem:[%s5 + $0x14] sm:$0xf]
        %v3156 = vld [vmem:[%s5 + $0x18] sm:$0xf]
        %v3157 = vld [vmem:[%s5 + $0x1c] sm:$0xf]
        %v3158 = vld [vmem:[%s5 + $0x20] sm:$0xf]
        %v3159 = vld [vmem:[%s5 + $0x24] sm:$0xf]
        %v3160 = vld [vmem:[%s5 + $0x28] sm:$0xf]
        %v3161 = vld [vmem:[%s5 + $0x2c] sm:$0xf]
        %v3162 = vld [vmem:[%s5 + $0x30] sm:$0xf]
        %v3163 = vld [vmem:[%s5 + $0x34] sm:$0xf]
        %v3164 = vld [vmem:[%s5 + $0x38] sm:$0xf]
        %v3165 = vld [vmem:[%s5 + $0x3c] sm:$0xf]
        %v3166 = vld [vmem:[%s5 + $0x40] sm:$0xf]
        %v3167 = vld [vmem:[%s5 + $0x44] sm:$0xf]
        %v3168 = vld [vmem:[%s5 + $0x48] sm:$0xf]
        %v3169 = vld [vmem:[%s5 + $0x4c] sm:$0xf]
        %v3190 = vunpack.c.l.b16 %v3150
        %v3191 = vunpack.c.l.b16 %v3151
        %v3192 = vunpack.c.l.b16 %v3152
        %v3193 = vunpack.c.l.b16 %v3153
        %v3194 = vunpack.c.l.b16 %v3154
        %v3195 = vunpack.c.l.b16 %v3155
        %v3196 = vunpack.c.l.b16 %v3156
        %v3197 = vunpack.c.l.b16 %v3157
        %v3198 = vunpack.c.l.b16 %v3158
        %v3199 = vunpack.c.l.b16 %v3159
        %v3200 = vunpack.c.l.b16 %v3160
        %v3201 = vunpack.c.l.b16 %v3161
        %v3202 = vunpack.c.l.b16 %v3162
        %v3203 = vunpack.c.l.b16 %v3163
        %v3204 = vunpack.c.l.b16 %v3164
        %v3205 = vunpack.c.l.b16 %v3165
        %v3206 = vunpack.c.l.b16 %v3166
        %v3207 = vunpack.c.l.b16 %v3167
        %v3208 = vunpack.c.l.b16 %v3168
        %v3209 = vunpack.c.l.b16 %v3169
        %v3210 = vpack.c.b16 %v3191, %v3190
        %v3211 = vpack.c.b16 %v3193, %v3192
        %v3212 = vpack.c.b16 %v3195, %v3194
        %v3213 = vpack.c.b16 %v3197, %v3196
        %v3214 = vpack.c.b16 %v3199, %v3198
        %v3215 = vpack.c.b16 %v3201, %v3200
        %v3216 = vpack.c.b16 %v3203, %v3202
        %v3217 = vpack.c.b16 %v3205, %v3204
        %v3218 = vpack.c.b16 %v3207, %v3206
        %v3219 = vpack.c.b16 %v3209, %v3208
        %3230 = vmatprep.subr.bf16.mxu0 0
        %3231 = vmatpush1.bf16.msra.mxu0 %v3210
        %3232 = vmatprep.subr.bf16.mxu0 0
        %3233 = vmatpush1.bf16.msra.mxu0 %v3211
        %3234 = vmatprep.subr.bf16.mxu0 0
        %3235 = vmatpush1.bf16.msra.mxu0 %v3212
        %3236 = vmatprep.subr.bf16.mxu0 0
        %3237 = vmatpush1.bf16.msra.mxu0 %v3213
        %3238 = vmatprep.subr.bf16.mxu0 0
        %3239 = vmatpush1.bf16.msra.mxu0 %v3214
        %3240 = vmatprep.subr.bf16.mxu0 0
        %3241 = vmatpush1.bf16.msra.mxu0 %v3215
        %3242 = vmatprep.subr.bf16.mxu0 0
        %3243 = vmatpush1.bf16.msra.mxu0 %v3216
        %3244 = vmatprep.subr.bf16.mxu0 0
        %3245 = vmatpush1.bf16.msra.mxu0 %v3217
        %3246 = vmatprep.subr.bf16.mxu0 0
        %3247 = vmatpush1.bf16.msra.mxu0 %v3218
        %3248 = vmatprep.subr.bf16.mxu0 0
        %3249 = vmatpush1.bf16.msra.mxu0 %v3219
        %3250 = vmatprep.subr.bf16.mxu0 0
        %3251 = vmatpush1.bf16.msra.mxu0 0
        %3252 = vmatprep.subr.bf16.mxu0 0
        %3253 = vmatpush1.bf16.msra.mxu0 0
        %3254 = vmatprep.subr.bf16.mxu0 0
        %3255 = vmatpush1.bf16.msra.mxu0 0
        %3256 = vmatprep.subr.bf16.mxu0 0
        %3257 = vmatpush1.bf16.msra.mxu0 0
        %3258 = vmatprep.subr.bf16.mxu0 0
        %3259 = vmatpush1.bf16.msra.mxu0 0
        %3260 = vmatprep.subr.bf16.mxu0 0
        %3261 = vmatpush1.bf16.msra.mxu0 0
        %3262 = vmatprep.mubr.bf16.mxu0 %v3108
        %3263 = vmatmul.mubr.bf16.gmra.mrb[0].mxu0 %v3024
        %v3264 = vpop.f32.mrb[0].mxu0
        %v3265 = vadd.f32 0.0, %v3264
        %v3266 = vpop.f32.mrb[0].mxu0
        %v3267 = vpop.f32.mrb[0].mxu0
        %v3268 = vpop.f32.mrb[0].mxu0
        %3269 = vdwg.mxu0
        %v3270 = vmax.f32 %v3145, %v3265
        %v3271 = vpack.c.bf16 %v3270, %v3270
        %v3272 = vld [vmem:[%s7] sm:$0x1]
        %v3273 = vld [vmem:[%s6] sm:$0xf]
        %v3274 = vld [vmem:[%s6 + $0x4] sm:$0xf]
        %v3275 = vld [vmem:[%s6 + $0x8] sm:$0xf]
        %v3276 = vld [vmem:[%s6 + $0xc] sm:$0xf]
        %v3277 = vld [vmem:[%s6 + $0x10] sm:$0xf]
        %v3278 = vld [vmem:[%s6 + $0x14] sm:$0xf]
        %v3279 = vld [vmem:[%s6 + $0x18] sm:$0xf]
        %v3280 = vld [vmem:[%s6 + $0x1c] sm:$0xf]
        %v3281 = vld [vmem:[%s6 + $0x20] sm:$0xf]
        %v3282 = vld [vmem:[%s6 + $0x24] sm:$0xf]
        %v3293 = vunpack.c.l.b16 %v3273
        %v3294 = vunpack.c.l.b16 %v3274
        %v3295 = vunpack.c.l.b16 %v3275
        %v3296 = vunpack.c.l.b16 %v3276
        %v3297 = vunpack.c.l.b16 %v3277
        %v3298 = vunpack.c.l.b16 %v3278
        %v3299 = vunpack.c.l.b16 %v3279
        %v3300 = vunpack.c.l.b16 %v3280
        %v3301 = vunpack.c.l.b16 %v3281
        %v3302 = vunpack.c.l.b16 %v3282
        %v3303 = vpack.c.b16 %v3294, %v3293
        %v3304 = vpack.c.b16 %v3296, %v3295
        %v3305 = vpack.c.b16 %v3298, %v3297
        %v3306 = vpack.c.b16 %v3300, %v3299
        %v3307 = vpack.c.b16 %v3302, %v3301
        %vm3313 = vcmask 654336
        %v3315 = vsel %vm3313, %v3271, 0
        %3317 = vmatprep.subr.bf16.mxu0 0
        %3318 = vmatpush1.bf16.msra.mxu0 %v3303
        %3319 = vmatprep.subr.bf16.mxu0 0
        %3320 = vmatpush1.bf16.msra.mxu0 %v3304
        %3321 = vmatprep.subr.bf16.mxu0 0
        %3322 = vmatpush1.bf16.msra.mxu0 %v3305
        %3323 = vmatprep.subr.bf16.mxu0 0
        %3324 = vmatpush1.bf16.msra.mxu0 %v3306
        %3325 = vmatprep.subr.bf16.mxu0 0
        %3326 = vmatpush1.bf16.msra.mxu0 %v3307
        %3327 = vmatprep.subr.bf16.mxu0 0
        %3328 = vmatpush1.bf16.msra.mxu0 0
        %3329 = vmatprep.subr.bf16.mxu0 0
        %3330 = vmatpush1.bf16.msra.mxu0 0
        %3331 = vmatprep.subr.bf16.mxu0 0
        %3332 = vmatpush1.bf16.msra.mxu0 0
        %3333 = vmatprep.subr.bf16.mxu0 0
        %3334 = vmatpush1.bf16.msra.mxu0 0
        %3335 = vmatprep.subr.bf16.mxu0 0
        %3336 = vmatpush1.bf16.msra.mxu0 0
        %3337 = vmatprep.subr.bf16.mxu0 0
        %3338 = vmatpush1.bf16.msra.mxu0 0
        %3339 = vmatprep.subr.bf16.mxu0 0
        %3340 = vmatpush1.bf16.msra.mxu0 0
        %3341 = vmatprep.subr.bf16.mxu0 0
        %3342 = vmatpush1.bf16.msra.mxu0 0
        %3343 = vmatprep.subr.bf16.mxu0 0
        %3344 = vmatpush1.bf16.msra.mxu0 0
        %3345 = vmatprep.subr.bf16.mxu0 0
        %3346 = vmatpush1.bf16.msra.mxu0 0
        %3347 = vmatprep.subr.bf16.mxu0 0
        %3348 = vmatpush1.bf16.msra.mxu0 0
        %3349 = vmatprep.mubr.bf16.mxu0 0
        %3350 = vmatmul.mubr.bf16.gmra.mrb[0].mxu0 %v3315
        %v3351 = vpop.f32.mrb[0].mxu0
        %v3352 = vadd.f32 0.0, %v3351
        %v3353 = vpop.f32.mrb[0].mxu0
        %v3354 = vpop.f32.mrb[0].mxu0
        %v3355 = vpop.f32.mrb[0].mxu0
        %3356 = vdwg.mxu0
        %v3357 = vadd.f32 %v3272, %v3352
        %s3358 = scalar_lea.vmem %s6, 40
        %v3359 = vld [vmem:[%s3358] sm:$0xf]
        %v3360 = vld [vmem:[%s3358 + $0x4] sm:$0xf]
        %v3361 = vld [vmem:[%s3358 + $0x8] sm:$0xf]
        %v3362 = vld [vmem:[%s3358 + $0xc] sm:$0xf]
        %v3363 = vld [vmem:[%s3358 + $0x10] sm:$0xf]
        %v3364 = vld [vmem:[%s3358 + $0x14] sm:$0xf]
        %v3365 = vld [vmem:[%s3358 + $0x18] sm:$0xf]
        %v3366 = vld [vmem:[%s3358 + $0x1c] sm:$0xf]
        %v3367 = vld [vmem:[%s3358 + $0x20] sm:$0xf]
        %v3368 = vld [vmem:[%s3358 + $0x24] sm:$0xf]
        %v3369 = vshrl.u32 %v3271, 16
        %v3381 = vunpack.c.l.b16 %v3359
        %v3382 = vunpack.c.l.b16 %v3360
        %v3383 = vunpack.c.l.b16 %v3361
        %v3384 = vunpack.c.l.b16 %v3362
        %v3385 = vunpack.c.l.b16 %v3363
        %v3386 = vunpack.c.l.b16 %v3364
        %v3387 = vunpack.c.l.b16 %v3365
        %v3388 = vunpack.c.l.b16 %v3366
        %v3389 = vunpack.c.l.b16 %v3367
        %v3390 = vunpack.c.l.b16 %v3368
        %v3391 = vpack.c.b16 %v3382, %v3381
        %v3392 = vpack.c.b16 %v3384, %v3383
        %v3393 = vpack.c.b16 %v3386, %v3385
        %v3394 = vpack.c.b16 %v3388, %v3387
        %v3395 = vpack.c.b16 %v3390, %v3389
        %v3402 = vsel %vm3313, %v3369, 0
        %3404 = vmatprep.subr.bf16.mxu0 0
        %3405 = vmatpush1.bf16.msra.mxu0 %v3391
        %3406 = vmatprep.subr.bf16.mxu0 0
        %3407 = vmatpush1.bf16.msra.mxu0 %v3392
        %3408 = vmatprep.subr.bf16.mxu0 0
        %3409 = vmatpush1.bf16.msra.mxu0 %v3393
        %3410 = vmatprep.subr.bf16.mxu0 0
        %3411 = vmatpush1.bf16.msra.mxu0 %v3394
        %3412 = vmatprep.subr.bf16.mxu0 0
        %3413 = vmatpush1.bf16.msra.mxu0 %v3395
        %3414 = vmatprep.subr.bf16.mxu0 0
        %3415 = vmatpush1.bf16.msra.mxu0 0
        %3416 = vmatprep.subr.bf16.mxu0 0
        %3417 = vmatpush1.bf16.msra.mxu0 0
        %3418 = vmatprep.subr.bf16.mxu0 0
        %3419 = vmatpush1.bf16.msra.mxu0 0
        %3420 = vmatprep.subr.bf16.mxu0 0
        %3421 = vmatpush1.bf16.msra.mxu0 0
        %3422 = vmatprep.subr.bf16.mxu0 0
        %3423 = vmatpush1.bf16.msra.mxu0 0
        %3424 = vmatprep.subr.bf16.mxu0 0
        %3425 = vmatpush1.bf16.msra.mxu0 0
        %3426 = vmatprep.subr.bf16.mxu0 0
        %3427 = vmatpush1.bf16.msra.mxu0 0
        %3428 = vmatprep.subr.bf16.mxu0 0
        %3429 = vmatpush1.bf16.msra.mxu0 0
        %3430 = vmatprep.subr.bf16.mxu0 0
        %3431 = vmatpush1.bf16.msra.mxu0 0
        %3432 = vmatprep.subr.bf16.mxu0 0
        %3433 = vmatpush1.bf16.msra.mxu0 0
        %3434 = vmatprep.subr.bf16.mxu0 0
        %3435 = vmatpush1.bf16.msra.mxu0 0
        %3436 = vmatprep.mubr.bf16.mxu0 0
        %3437 = vmatmul.mubr.bf16.gmra.mrb[0].mxu0 %v3402
        %v3438 = vpop.f32.mrb[0].mxu0
        %v3439 = vadd.f32 0.0, %v3438
        %v3440 = vpop.f32.mrb[0].mxu0
        %v3441 = vpop.f32.mrb[0].mxu0
        %v3442 = vpop.f32.mrb[0].mxu0
        %3443 = vdwg.mxu0
        %v3444 = vadd.f32 %v3357, %v3439
        %s3445 = scalar_lea.vmem %s6, 80
        %v3446 = vld [vmem:[%s3445] sm:$0xf]
        %v3447 = vld [vmem:[%s3445 + $0x4] sm:$0xf]
        %v3448 = vld [vmem:[%s3445 + $0x8] sm:$0xf]
        %v3449 = vld [vmem:[%s3445 + $0xc] sm:$0xf]
        %v3450 = vld [vmem:[%s3445 + $0x10] sm:$0xf]
        %v3451 = vld [vmem:[%s3445 + $0x14] sm:$0xf]
        %v3452 = vld [vmem:[%s3445 + $0x18] sm:$0xf]
        %v3453 = vld [vmem:[%s3445 + $0x1c] sm:$0xf]
        %v3454 = vld [vmem:[%s3445 + $0x20] sm:$0xf]
        %v3455 = vld [vmem:[%s3445 + $0x24] sm:$0xf]
        %v3457 = vrot.slane %v3271, 1
        %v3468 = vunpack.c.l.b16 %v3446
        %v3469 = vunpack.c.l.b16 %v3447
        %v3470 = vunpack.c.l.b16 %v3448
        %v3471 = vunpack.c.l.b16 %v3449
        %v3472 = vunpack.c.l.b16 %v3450
        %v3473 = vunpack.c.l.b16 %v3451
        %v3474 = vunpack.c.l.b16 %v3452
        %v3475 = vunpack.c.l.b16 %v3453
        %v3476 = vunpack.c.l.b16 %v3454
        %v3477 = vunpack.c.l.b16 %v3455
        %v3478 = vpack.c.b16 %v3469, %v3468
        %v3479 = vpack.c.b16 %v3471, %v3470
        %v3480 = vpack.c.b16 %v3473, %v3472
        %v3481 = vpack.c.b16 %v3475, %v3474
        %v3482 = vpack.c.b16 %v3477, %v3476
        %v3489 = vsel %vm3313, %v3457, 0
        %3491 = vmatprep.subr.bf16.mxu0 0
        %3492 = vmatpush1.bf16.msra.mxu0 %v3478
        %3493 = vmatprep.subr.bf16.mxu0 0
        %3494 = vmatpush1.bf16.msra.mxu0 %v3479
        %3495 = vmatprep.subr.bf16.mxu0 0
        %3496 = vmatpush1.bf16.msra.mxu0 %v3480
        %3497 = vmatprep.subr.bf16.mxu0 0
        %3498 = vmatpush1.bf16.msra.mxu0 %v3481
        %3499 = vmatprep.subr.bf16.mxu0 0
        %3500 = vmatpush1.bf16.msra.mxu0 %v3482
        %3501 = vmatprep.subr.bf16.mxu0 0
        %3502 = vmatpush1.bf16.msra.mxu0 0
        %3503 = vmatprep.subr.bf16.mxu0 0
        %3504 = vmatpush1.bf16.msra.mxu0 0
        %3505 = vmatprep.subr.bf16.mxu0 0
        %3506 = vmatpush1.bf16.msra.mxu0 0
        %3507 = vmatprep.subr.bf16.mxu0 0
        %3508 = vmatpush1.bf16.msra.mxu0 0
        %3509 = vmatprep.subr.bf16.mxu0 0
        %3510 = vmatpush1.bf16.msra.mxu0 0
        %3511 = vmatprep.subr.bf16.mxu0 0
        %3512 = vmatpush1.bf16.msra.mxu0 0
        %3513 = vmatprep.subr.bf16.mxu0 0
        %3514 = vmatpush1.bf16.msra.mxu0 0
        %3515 = vmatprep.subr.bf16.mxu0 0
        %3516 = vmatpush1.bf16.msra.mxu0 0
        %3517 = vmatprep.subr.bf16.mxu0 0
        %3518 = vmatpush1.bf16.msra.mxu0 0
        %3519 = vmatprep.subr.bf16.mxu0 0
        %3520 = vmatpush1.bf16.msra.mxu0 0
        %3521 = vmatprep.subr.bf16.mxu0 0
        %3522 = vmatpush1.bf16.msra.mxu0 0
        %3523 = vmatprep.mubr.bf16.mxu0 0
        %3524 = vmatmul.mubr.bf16.gmra.mrb[0].mxu0 %v3489
        %v3525 = vpop.f32.mrb[0].mxu0
        %v3526 = vadd.f32 0.0, %v3525
        %v3527 = vpop.f32.mrb[0].mxu0
        %v3528 = vpop.f32.mrb[0].mxu0
        %v3529 = vpop.f32.mrb[0].mxu0
        %3530 = vdwg.mxu0
        %v3531 = vadd.f32 %v3444, %v3526
        %s3532 = scalar_lea.vmem %s6, 120
        %v3533 = vld [vmem:[%s3532] sm:$0xf]
        %v3534 = vld [vmem:[%s3532 + $0x4] sm:$0xf]
        %v3535 = vld [vmem:[%s3532 + $0x8] sm:$0xf]
        %v3536 = vld [vmem:[%s3532 + $0xc] sm:$0xf]
        %v3537 = vld [vmem:[%s3532 + $0x10] sm:$0xf]
        %v3538 = vld [vmem:[%s3532 + $0x14] sm:$0xf]
        %v3539 = vld [vmem:[%s3532 + $0x18] sm:$0xf]
        %v3540 = vld [vmem:[%s3532 + $0x1c] sm:$0xf]
        %v3541 = vld [vmem:[%s3532 + $0x20] sm:$0xf]
        %v3542 = vld [vmem:[%s3532 + $0x24] sm:$0xf]
        %v3543 = vrot.slane %v3369, 1
        %v3554 = vunpack.c.l.b16 %v3533
        %v3555 = vunpack.c.l.b16 %v3534
        %v3556 = vunpack.c.l.b16 %v3535
        %v3557 = vunpack.c.l.b16 %v3536
        %v3558 = vunpack.c.l.b16 %v3537
        %v3559 = vunpack.c.l.b16 %v3538
        %v3560 = vunpack.c.l.b16 %v3539
        %v3561 = vunpack.c.l.b16 %v3540
        %v3562 = vunpack.c.l.b16 %v3541
        %v3563 = vunpack.c.l.b16 %v3542
        %v3564 = vpack.c.b16 %v3555, %v3554
        %v3565 = vpack.c.b16 %v3557, %v3556
        %v3566 = vpack.c.b16 %v3559, %v3558
        %v3567 = vpack.c.b16 %v3561, %v3560
        %v3568 = vpack.c.b16 %v3563, %v3562
        %v3575 = vsel %vm3313, %v3543, 0
        %3577 = vmatprep.subr.bf16.mxu0 0
        %3578 = vmatpush1.bf16.msra.mxu0 %v3564
        %3579 = vmatprep.subr.bf16.mxu0 0
        %3580 = vmatpush1.bf16.msra.mxu0 %v3565
        %3581 = vmatprep.subr.bf16.mxu0 0
        %3582 = vmatpush1.bf16.msra.mxu0 %v3566
        %3583 = vmatprep.subr.bf16.mxu0 0
        %3584 = vmatpush1.bf16.msra.mxu0 %v3567
        %3585 = vmatprep.subr.bf16.mxu0 0
        %3586 = vmatpush1.bf16.msra.mxu0 %v3568
        %3587 = vmatprep.subr.bf16.mxu0 0
        %3588 = vmatpush1.bf16.msra.mxu0 0
        %3589 = vmatprep.subr.bf16.mxu0 0
        %3590 = vmatpush1.bf16.msra.mxu0 0
        %3591 = vmatprep.subr.bf16.mxu0 0
        %3592 = vmatpush1.bf16.msra.mxu0 0
        %3593 = vmatprep.subr.bf16.mxu0 0
        %3594 = vmatpush1.bf16.msra.mxu0 0
        %3595 = vmatprep.subr.bf16.mxu0 0
        %3596 = vmatpush1.bf16.msra.mxu0 0
        %3597 = vmatprep.subr.bf16.mxu0 0
        %3598 = vmatpush1.bf16.msra.mxu0 0
        %3599 = vmatprep.subr.bf16.mxu0 0
        %3600 = vmatpush1.bf16.msra.mxu0 0
        %3601 = vmatprep.subr.bf16.mxu0 0
        %3602 = vmatpush1.bf16.msra.mxu0 0
        %3603 = vmatprep.subr.bf16.mxu0 0
        %3604 = vmatpush1.bf16.msra.mxu0 0
        %3605 = vmatprep.subr.bf16.mxu0 0
        %3606 = vmatpush1.bf16.msra.mxu0 0
        %3607 = vmatprep.subr.bf16.mxu0 0
        %3608 = vmatpush1.bf16.msra.mxu0 0
        %3609 = vmatprep.mubr.bf16.mxu0 0
        %3610 = vmatmul.mubr.bf16.gmra.mrb[0].mxu0 %v3575
        %v3611 = vpop.f32.mrb[0].mxu0
        %v3612 = vadd.f32 0.0, %v3611
        %v3613 = vpop.f32.mrb[0].mxu0
        %v3614 = vpop.f32.mrb[0].mxu0
        %v3615 = vpop.f32.mrb[0].mxu0
        %3616 = vdwg.mxu0
        %v3617 = vadd.f32 %v3531, %v3612
        %s3618 = scalar_lea.vmem %s6, 160
        %v3619 = vld [vmem:[%s3618] sm:$0xf]
        %v3620 = vld [vmem:[%s3618 + $0x4] sm:$0xf]
        %v3621 = vld [vmem:[%s3618 + $0x8] sm:$0xf]
        %v3622 = vld [vmem:[%s3618 + $0xc] sm:$0xf]
        %v3623 = vld [vmem:[%s3618 + $0x10] sm:$0xf]
        %v3624 = vld [vmem:[%s3618 + $0x14] sm:$0xf]
        %v3625 = vld [vmem:[%s3618 + $0x18] sm:$0xf]
        %v3626 = vld [vmem:[%s3618 + $0x1c] sm:$0xf]
        %v3627 = vld [vmem:[%s3618 + $0x20] sm:$0xf]
        %v3628 = vld [vmem:[%s3618 + $0x24] sm:$0xf]
        %v3629 = vrot.slane %v3271, 2
        %v3640 = vunpack.c.l.b16 %v3619
        %v3641 = vunpack.c.l.b16 %v3620
        %v3642 = vunpack.c.l.b16 %v3621
        %v3643 = vunpack.c.l.b16 %v3622
        %v3644 = vunpack.c.l.b16 %v3623
        %v3645 = vunpack.c.l.b16 %v3624
        %v3646 = vunpack.c.l.b16 %v3625
        %v3647 = vunpack.c.l.b16 %v3626
        %v3648 = vunpack.c.l.b16 %v3627
        %v3649 = vunpack.c.l.b16 %v3628
        %v3650 = vpack.c.b16 %v3641, %v3640
        %v3651 = vpack.c.b16 %v3643, %v3642
        %v3652 = vpack.c.b16 %v3645, %v3644
        %v3653 = vpack.c.b16 %v3647, %v3646
        %v3654 = vpack.c.b16 %v3649, %v3648
        %v3661 = vsel %vm3313, %v3629, 0
        %3663 = vmatprep.subr.bf16.mxu0 0
        %3664 = vmatpush1.bf16.msra.mxu0 %v3650
        %3665 = vmatprep.subr.bf16.mxu0 0
        %3666 = vmatpush1.bf16.msra.mxu0 %v3651
        %3667 = vmatprep.subr.bf16.mxu0 0
        %3668 = vmatpush1.bf16.msra.mxu0 %v3652
        %3669 = vmatprep.subr.bf16.mxu0 0
        %3670 = vmatpush1.bf16.msra.mxu0 %v3653
        %3671 = vmatprep.subr.bf16.mxu0 0
        %3672 = vmatpush1.bf16.msra.mxu0 %v3654
        %3673 = vmatprep.subr.bf16.mxu0 0
        %3674 = vmatpush1.bf16.msra.mxu0 0
        %3675 = vmatprep.subr.bf16.mxu0 0
        %3676 = vmatpush1.bf16.msra.mxu0 0
        %3677 = vmatprep.subr.bf16.mxu0 0
        %3678 = vmatpush1.bf16.msra.mxu0 0
        %3679 = vmatprep.subr.bf16.mxu0 0
        %3680 = vmatpush1.bf16.msra.mxu0 0
        %3681 = vmatprep.subr.bf16.mxu0 0
        %3682 = vmatpush1.bf16.msra.mxu0 0
        %3683 = vmatprep.subr.bf16.mxu0 0
        %3684 = vmatpush1.bf16.msra.mxu0 0
        %3685 = vmatprep.subr.bf16.mxu0 0
        %3686 = vmatpush1.bf16.msra.mxu0 0
        %3687 = vmatprep.subr.bf16.mxu0 0
        %3688 = vmatpush1.bf16.msra.mxu0 0
        %3689 = vmatprep.subr.bf16.mxu0 0
        %3690 = vmatpush1.bf16.msra.mxu0 0
        %3691 = vmatprep.subr.bf16.mxu0 0
        %3692 = vmatpush1.bf16.msra.mxu0 0
        %3693 = vmatprep.subr.bf16.mxu0 0
        %3694 = vmatpush1.bf16.msra.mxu0 0
        %3695 = vmatprep.mubr.bf16.mxu0 0
        %3696 = vmatmul.mubr.bf16.gmra.mrb[0].mxu0 %v3661
        %v3697 = vpop.f32.mrb[0].mxu0
        %v3698 = vadd.f32 0.0, %v3697
        %v3699 = vpop.f32.mrb[0].mxu0
        %v3700 = vpop.f32.mrb[0].mxu0
        %v3701 = vpop.f32.mrb[0].mxu0
        %3702 = vdwg.mxu0
        %v3703 = vadd.f32 %v3617, %v3698
        %v3704 = vmax.f32 %v3703, 0.0
        %v3705 = vpack.c.bf16 %v3704, %v3704
        %v3706 = vld [vmem:[%s8] sm:$0xf]
        %v3707 = vld [vmem:[%s8 + $0x4] sm:$0xf]
        %v3708 = vld [vmem:[%s8 + $0x8] sm:$0xf]
        %v3709 = vld [vmem:[%s8 + $0xc] sm:$0xf]
        %v3710 = vld [vmem:[%s8 + $0x10] sm:$0xf]
        %v3711 = vld [vmem:[%s8 + $0x14] sm:$0xf]
        %v3712 = vld [vmem:[%s8 + $0x18] sm:$0xf]
        %v3713 = vld [vmem:[%s8 + $0x1c] sm:$0xf]
        %v3714 = vld [vmem:[%s8 + $0x20] sm:$0xf]
        %v3715 = vld [vmem:[%s8 + $0x24] sm:$0xf]
        %v3716 = vld [vmem:[%s8 + $0x28] sm:$0xf]
        %v3717 = vld [vmem:[%s8 + $0x2c] sm:$0xf]
        %v3718 = vld [vmem:[%s8 + $0x30] sm:$0xf]
        %v3719 = vld [vmem:[%s8 + $0x34] sm:$0xf]
        %v3720 = vld [vmem:[%s8 + $0x38] sm:$0xf]
        %v3721 = vld [vmem:[%s8 + $0x3c] sm:$0xf]
        %v3722 = vld [vmem:[%s9] sm:$0x1]
        %v3739 = vunpack.c.l.b16 %v3706
        %v3740 = vunpack.c.l.b16 %v3707
        %v3741 = vunpack.c.l.b16 %v3708
        %v3742 = vunpack.c.l.b16 %v3709
        %v3743 = vunpack.c.l.b16 %v3710
        %v3744 = vunpack.c.l.b16 %v3711
        %v3745 = vunpack.c.l.b16 %v3712
        %v3746 = vunpack.c.l.b16 %v3713
        %v3747 = vunpack.c.l.b16 %v3714
        %v3748 = vunpack.c.l.b16 %v3715
        %v3749 = vunpack.c.l.b16 %v3716
        %v3750 = vunpack.c.l.b16 %v3717
        %v3751 = vunpack.c.l.b16 %v3718
        %v3752 = vunpack.c.l.b16 %v3719
        %v3753 = vunpack.c.l.b16 %v3720
        %v3754 = vunpack.c.l.b16 %v3721
        %v3755 = vpack.c.b16 %v3740, %v3739
        %v3756 = vpack.c.b16 %v3742, %v3741
        %v3757 = vpack.c.b16 %v3744, %v3743
        %v3758 = vpack.c.b16 %v3746, %v3745
        %v3759 = vpack.c.b16 %v3748, %v3747
        %v3760 = vpack.c.b16 %v3750, %v3749
        %v3761 = vpack.c.b16 %v3752, %v3751
        %v3762 = vpack.c.b16 %v3754, %v3753
        %3771 = vmatprep.subr.bf16.mxu0 0
        %3772 = vmatpush1.bf16.msra.mxu0 %v3755
        %3773 = vmatprep.subr.bf16.mxu0 0
        %3774 = vmatpush1.bf16.msra.mxu0 %v3756
        %3775 = vmatprep.subr.bf16.mxu0 0
        %3776 = vmatpush1.bf16.msra.mxu0 %v3757
        %3777 = vmatprep.subr.bf16.mxu0 0
        %3778 = vmatpush1.bf16.msra.mxu0 %v3758
        %3779 = vmatprep.subr.bf16.mxu0 0
        %3780 = vmatpush1.bf16.msra.mxu0 %v3759
        %3781 = vmatprep.subr.bf16.mxu0 0
        %3782 = vmatpush1.bf16.msra.mxu0 %v3760
        %3783 = vmatprep.subr.bf16.mxu0 0
        %3784 = vmatpush1.bf16.msra.mxu0 %v3761
        %3785 = vmatprep.subr.bf16.mxu0 0
        %3786 = vmatpush1.bf16.msra.mxu0 %v3762
        %3787 = vmatprep.subr.bf16.mxu0 0
        %3788 = vmatpush1.bf16.msra.mxu0 0
        %3789 = vmatprep.subr.bf16.mxu0 0
        %3790 = vmatpush1.bf16.msra.mxu0 0
        %3791 = vmatprep.subr.bf16.mxu0 0
        %3792 = vmatpush1.bf16.msra.mxu0 0
        %3793 = vmatprep.subr.bf16.mxu0 0
        %3794 = vmatpush1.bf16.msra.mxu0 0
        %3795 = vmatprep.subr.bf16.mxu0 0
        %3796 = vmatpush1.bf16.msra.mxu0 0
        %3797 = vmatprep.subr.bf16.mxu0 0
        %3798 = vmatpush1.bf16.msra.mxu0 0
        %3799 = vmatprep.subr.bf16.mxu0 0
        %3800 = vmatpush1.bf16.msra.mxu0 0
        %3801 = vmatprep.subr.bf16.mxu0 0
        %3802 = vmatpush1.bf16.msra.mxu0 0
        %3803 = vmatprep.mubr.bf16.mxu0 0
        %3804 = vmatmul.mubr.bf16.gmra.mrb[0].mxu0 %v3705
        %v3805 = vpop.f32.mrb[0].mxu0
        %v3806 = vadd.f32 %v3722, %v3805
        %v3807 = vpop.f32.mrb[0].mxu0
        %v3808 = vpop.f32.mrb[0].mxu0
        %v3809 = vpop.f32.mrb[0].mxu0
        %3810 = vdwg.mxu0
        %v3811 = vmax.f32 %v3806, 0.0
        %v3812 = vpack.c.bf16 %v3811, %v3811
        %v3813 = vld [vmem:[%s10] sm:$0xf]
        %v3814 = vld [vmem:[%s10 + $0x4] sm:$0xf]
        %v3815 = vld [vmem:[%s10 + $0x8] sm:$0xf]
        %v3816 = vld [vmem:[%s10 + $0xc] sm:$0xf]
        %v3817 = vld [vmem:[%s10 + $0x10] sm:$0xf]
        %v3818 = vld [vmem:[%s10 + $0x14] sm:$0xf]
        %v3819 = vld [vmem:[%s10 + $0x18] sm:$0xf]
        %v3820 = vld [vmem:[%s10 + $0x1c] sm:$0xf]
        %v3821 = vld [vmem:[%s10 + $0x20] sm:$0xf]
        %v3822 = vld [vmem:[%s10 + $0x24] sm:$0xf]
        %v3823 = vld [vmem:[%s10 + $0x28] sm:$0xf]
        %v3824 = vld [vmem:[%s10 + $0x2c] sm:$0xf]
        %v3825 = vld [vmem:[%s10 + $0x30] sm:$0xf]
        %v3826 = vld [vmem:[%s10 + $0x34] sm:$0xf]
        %v3827 = vld [vmem:[%s10 + $0x38] sm:$0xf]
        %v3828 = vld [vmem:[%s10 + $0x3c] sm:$0xf]
        %v3829 = vld [vmem:[%s11] sm:$0x1]
        %v3846 = vunpack.c.l.b16 %v3813
        %v3847 = vunpack.c.l.b16 %v3814
        %v3848 = vunpack.c.l.b16 %v3815
        %v3849 = vunpack.c.l.b16 %v3816
        %v3850 = vunpack.c.l.b16 %v3817
        %v3851 = vunpack.c.l.b16 %v3818
        %v3852 = vunpack.c.l.b16 %v3819
        %v3853 = vunpack.c.l.b16 %v3820
        %v3854 = vunpack.c.l.b16 %v3821
        %v3855 = vunpack.c.l.b16 %v3822
        %v3856 = vunpack.c.l.b16 %v3823
        %v3857 = vunpack.c.l.b16 %v3824
        %v3858 = vunpack.c.l.b16 %v3825
        %v3859 = vunpack.c.l.b16 %v3826
        %v3860 = vunpack.c.l.b16 %v3827
        %v3861 = vunpack.c.l.b16 %v3828
        %v3862 = vpack.c.b16 %v3847, %v3846
        %v3863 = vpack.c.b16 %v3849, %v3848
        %v3864 = vpack.c.b16 %v3851, %v3850
        %v3865 = vpack.c.b16 %v3853, %v3852
        %v3866 = vpack.c.b16 %v3855, %v3854
        %v3867 = vpack.c.b16 %v3857, %v3856
        %v3868 = vpack.c.b16 %v3859, %v3858
        %v3869 = vpack.c.b16 %v3861, %v3860
        %3878 = vmatprep.subr.bf16.mxu0 0
        %3879 = vmatpush1.bf16.msra.mxu0 %v3862
        %3880 = vmatprep.subr.bf16.mxu0 0
        %3881 = vmatpush1.bf16.msra.mxu0 %v3863
        %3882 = vmatprep.subr.bf16.mxu0 0
        %3883 = vmatpush1.bf16.msra.mxu0 %v3864
        %3884 = vmatprep.subr.bf16.mxu0 0
        %3885 = vmatpush1.bf16.msra.mxu0 %v3865
        %3886 = vmatprep.subr.bf16.mxu0 0
        %3887 = vmatpush1.bf16.msra.mxu0 %v3866
        %3888 = vmatprep.subr.bf16.mxu0 0
        %3889 = vmatpush1.bf16.msra.mxu0 %v3867
        %3890 = vmatprep.subr.bf16.mxu0 0
        %3891 = vmatpush1.bf16.msra.mxu0 %v3868
        %3892 = vmatprep.subr.bf16.mxu0 0
        %3893 = vmatpush1.bf16.msra.mxu0 %v3869
        %3894 = vmatprep.subr.bf16.mxu0 0
        %3895 = vmatpush1.bf16.msra.mxu0 0
        %3896 = vmatprep.subr.bf16.mxu0 0
        %3897 = vmatpush1.bf16.msra.mxu0 0
        %3898 = vmatprep.subr.bf16.mxu0 0
        %3899 = vmatpush1.bf16.msra.mxu0 0
        %3900 = vmatprep.subr.bf16.mxu0 0
        %3901 = vmatpush1.bf16.msra.mxu0 0
        %3902 = vmatprep.subr.bf16.mxu0 0
        %3903 = vmatpush1.bf16.msra.mxu0 0
        %3904 = vmatprep.subr.bf16.mxu0 0
        %3905 = vmatpush1.bf16.msra.mxu0 0
        %3906 = vmatprep.subr.bf16.mxu0 0
        %3907 = vmatpush1.bf16.msra.mxu0 0
        %3908 = vmatprep.subr.bf16.mxu0 0
        %3909 = vmatpush1.bf16.msra.mxu0 0
        %3910 = vmatprep.mubr.bf16.mxu0 0
        %3911 = vmatmul.mubr.bf16.gmra.mrb[0].mxu0 %v3812
        %v3912 = vpop.f32.mrb[0].mxu0
        %v3913 = vadd.f32 %v3829, %v3912
        %v3914 = vpop.f32.mrb[0].mxu0
        %v3915 = vpop.f32.mrb[0].mxu0
        %v3916 = vpop.f32.mrb[0].mxu0
        %3917 = vdwg.mxu0
        %3918 = vst [vmem:[%s405] sm:$0x1] %v3913
        %s3919 = sand.u32 %s291, 1
        %s3920 = scalar_lea.sflag [#allocation3], %s3919
        %s3921 = sand.u32 %s291, 1
        %s3922 = scalar_lea.vmem [#allocation2], %s3921
        // Predicated region
        $region69: #{forward.3} parent=67 // pred_check
          %p3923 = pneg %p301
        $region70: #{forward.3} parent=67 // pred_check_branch
          %3925 = sbr.rel (%p3923) target = $region72
        $region71: #{forward.3} parent=67 // pred_region
          %s3927 = ssub.s32 16, 16
          %3928 = vsyncadd %s3920, %s3927
          %s3929 = smul.addr %s26, 16
          %s3930 = scalar_lea.hbm %s12, %s3929
          %s3932 = sshll.u32 %s3922, 4
          %s3933 = int_to_ptr.vmem [resolvable:$true] %s3932
          %3935 = dma.vmem_to_hbm [thread:$0]  %s3933, 16, %s3930, %s3920
        $region72: #{forward.3} parent=67 // pred_fallthru
          _
      $region68: #{forward.3} parent=5 // pred_fallthru
        _
      %p3936 = scmp.le.s32.totalorder 2, %s21
      // Predicated region
      $region73: #{forward.3} parent=5 // pred_check
        %p3937 = pneg %p3936
      $region74: #{forward.3} parent=5 // pred_check_branch
        %3939 = sbr.rel (%p3937) target = $region76
      $region75: #{forward.3} parent=5 // pred_region
        %s3940 = ssub.s32 %s21, 2
        // Predicated region
        $region77: #{forward.3} parent=75 // pred_check
          %p3941 = pneg %p307
        $region78: #{forward.3} parent=75 // pred_check_branch
          %3943 = sbr.rel (%p3941) target = $region80
        $region79: #{forward.3} parent=75 // pred_region
          %s3944 = sand.u32 %s292, 1
          %s3945 = scalar_lea.sflag [#allocation3], %s3944
          %s3946 = sand.u32 %s292, 1
          %s3947 = scalar_lea.vmem [#allocation2], %s3946
          %3948 = dma.done %s3945, 16
        $region80: #{forward.3} parent=75 // pred_fallthru
          _
      $region76: #{forward.3} parent=5 // pred_fallthru
        _
    $region6: #{forward.3} parent=1 // loop_footer
      %s25 = sadd.s32 1, %s21
    $region7: #{forward.3} parent=1 // loop_footer_branch
      %20 = sbr.rel target = $region3
    $region8: #{forward.3} parent=1 // loop_exit
      _
    %3949 = vsyncpa [#allocation3], 1
    %s3950 = scalar_lea.sflag [#allocation3], 1
    %3951 = vsyncpa %s3950, 1

</llo_original>
